<compile_context>
chip_gen: v7x
topology: tpu7x:2x2x1
jax: 0.10.0
libtpu: 0.0.40
codegen_flags: <defaults>
</compile_context>

<pallas_src>
import functools

import jax
import jax.numpy as jnp
import numpy as np
from jax.experimental import pallas as pl
from jax.experimental.pallas import tpu as pltpu


def _round_up(x, m):
    return ((x + m - 1) // m) * m


def lstm_kernel(x_ref, wx_ref, wh_ref, b_ref, out_ref, c_out_ref,
                a_scr, c_scr, *, hidden_pad, tc, compute_dtype):
    """One grid step: `tc` sequential LSTM timesteps for one batch tile.

    x_ref    : (tc, bt, E)   time-major inputs (compute_dtype)
    wx_ref   : (E,  4*Hp)    input-projection weights, resident (compute_dtype)
    wh_ref   : (Hp, 4*Hp)    recurrent weights, resident (compute_dtype)
    b_ref    : (1,  4*Hp)    gate biases (f32); gate order F, I, C, O
    out_ref  : (tc, bt, Hp)  hidden states for this time block (f32)
    c_out_ref: (bt, Hp)      final cell state (written on last time block only)
    a_scr/c_scr: (bt, Hp)    f32 recurrent state carried across grid steps
    """
    ti = pl.program_id(1)

    @pl.when(ti == 0)
    def _():
        a_scr[...] = jnp.zeros_like(a_scr)
        c_scr[...] = jnp.zeros_like(c_scr)

    Hp = hidden_pad
    bt = a_scr.shape[0]
    a = a_scr[...]
    c = c_scr[...]
    # Hoisted out of the unrolled loop (JAX does not CSE broadcast_in_dim).
    bias = jnp.broadcast_to(b_ref[...], (bt, 4 * Hp))

    def sigmoid(v):
        # sigmoid(x) = 0.5*tanh(x/2) + 0.5 : one EUP op instead of exp + recip.
        return 0.5 * jnp.tanh(0.5 * v) + 0.5

    # Statically unrolled recurrence over the tc timesteps of this block.  The
    # state stays in vregs; Wx / Wh are read from VMEM per dot (NOT hoisted
    # into vregs -> no spill pressure; the RHS is loop-invariant so Mosaic can
    # keep it staged for the MXU).
    # TODO(synk): drive the MXU weight-stationary explicitly with
    # pltpu.matmul_push_rhs / matmul_acc_lhs if the bundle dump shows Wh being
    # re-pushed every timestep.
    for i in range(tc):
        # Input projection for step i: independent of the recurrence, so it can
        # be scheduled ahead of / under the serial chain.
        zx = jnp.dot(x_ref[i], wx_ref[...], preferred_element_type=jnp.float32)
        # Recurrent projection: bf16 operands, f32 accumulation.
        zh = jnp.dot(a.astype(compute_dtype), wh_ref[...],
                     preferred_element_type=jnp.float32)
        z = zx + zh + bias                       # (bt, 4*Hp), gates F, I, C, O
        ft = sigmoid(z[:, 0 * Hp:1 * Hp])
        it = sigmoid(z[:, 1 * Hp:2 * Hp])
        cct = jnp.tanh(z[:, 2 * Hp:3 * Hp])
        ot = sigmoid(z[:, 3 * Hp:4 * Hp])
        c = ft * c + it * cct
        a = ot * jnp.tanh(c)
        out_ref[i] = a                           # contiguous (bt, Hp) store

    a_scr[...] = a
    c_scr[...] = c

    # Final cell state written once, on the last time block only.
    @pl.when(ti == pl.num_programs(1) - 1)
    def _():
        c_out_ref[...] = c


def _vmem_need_bytes(tc, bt, E, Hp, Gp, x_item, w_item):
    x_slab = 2 * bt * tc * E * x_item            # double-buffered input block
    out_slab = 2 * bt * tc * Hp * 4              # double-buffered result block
    weights = 2 * ((E + Hp) * Gp * w_item + Gp * 4)   # Wx + Wh + bias (worst case)
    state = 2 * bt * Hp * 4                      # a / c scratch
    c_out = 2 * bt * Hp * 4                      # c_last output block
    return x_slab + out_slab + weights + state + c_out


def my_lstm_forward(x, Ws, bs, *, compute_dtype=jnp.bfloat16, tc=None,
                    single_buffer_weights=True, vmem_budget=40 * 1024 * 1024):
    """MyLSTM.forward.

    x: (B, T, E); Ws[g]: (H, E+H) PyTorch Linear layout; bs[g]: (H,);
    gate order F, I, C, O.  Returns (result (B, T, H), (a_last, c_last)).
    """
    B, T, E = x.shape
    H = Ws[0].shape[0]

    Bp = _round_up(B, 8)          # f32 sublane alignment
    Hp = _round_up(H, 128)        # lane alignment -> dense, unmasked stores
    Gp = 4 * Hp

    # One batch tile per grid step unless the batch is very large.
    if Bp > 128:
        Bp = _round_up(Bp, 128)
        bt = 128
    else:
        bt = Bp
    nb = Bp // bt

    x_item = jnp.dtype(compute_dtype).itemsize
    w_item = x_item

    # Derive the time-block size from the VMEM budget instead of a fixed
    # ladder (v7x has half the VMEM of v5e/v6e); cap the static unroll at 64.
    if tc is None:
        tc = 1
        for cand in range(1, min(T, 64) + 1):
            if T % cand == 0 and _vmem_need_bytes(cand, bt, E, Hp, Gp,
                                                  x_item, w_item) <= vmem_budget:
                tc = cand
    assert T % tc == 0
    needed = _vmem_need_bytes(tc, bt, E, Hp, Gp, x_item, w_item)
    vmem_limit = int(min(needed + (16 << 20), 64 << 20))

    # Pack the four Linear(E+H, H) gates into padded MXU operands (gate order
    # F, I, C, O along lanes).  Padded rows/cols are zero, so padded hidden
    # lanes stay exactly zero in the state (also in bf16).
    def pack(cols, rows, rows_pad):
        parts = []
        for Wg in cols:                                           # (H, rows)
            parts.append(jnp.pad(jnp.asarray(Wg, jnp.float32).T,
                                 ((0, rows_pad - rows), (0, Hp - H))))
        return jnp.concatenate(parts, axis=1).astype(compute_dtype)

    wx = pack([W[:, :E] for W in Ws], E, E)                       # (E,  4*Hp)
    wh = pack([W[:, E:] for W in Ws], H, Hp)                      # (Hp, 4*Hp)
    bb = jnp.concatenate(
        [jnp.pad(jnp.asarray(bg, jnp.float32), (0, Hp - H)) for bg in bs])[None, :]

    # Time-major input so each timestep is a contiguous (bt, E) sublane slab.
    x_p = jnp.pad(jnp.asarray(x, jnp.float32), ((0, Bp - B), (0, 0), (0, 0)))
    x_tm = jnp.transpose(x_p, (1, 0, 2)).astype(compute_dtype)    # (T, Bp, E)

    kernel = functools.partial(lstm_kernel, hidden_pad=Hp, tc=tc,
                               compute_dtype=compute_dtype)

    def wspec(shape):
        # Resident weights: constant index_map; optionally single-buffered so
        # only one copy of Wx/Wh lives in VMEM (matters for large H on v7x).
        if single_buffer_weights:
            return pl.BlockSpec(shape, lambda bi, ti: (0,) * len(shape),
                                pipeline_mode=pl.Buffered(1))
        return pl.BlockSpec(shape, lambda bi, ti: (0,) * len(shape))

    cost = pl.CostEstimate(
        flops=int(2 * T * Bp * (E + Hp) * Gp + 10 * T * Bp * Hp),
        transcendentals=int(5 * T * Bp * Hp),
        bytes_accessed=int(T * Bp * E * x_item + (E + Hp) * Gp * w_item
                           + Gp * 4 + T * Bp * Hp * 4 + Bp * Hp * 4),
    )

    res_tm, c_p = pl.pallas_call(
        kernel,
        out_shape=(jax.ShapeDtypeStruct((T, Bp, Hp), jnp.float32),
                   jax.ShapeDtypeStruct((Bp, Hp), jnp.float32)),
        grid_spec=pltpu.PrefetchScalarGridSpec(
            num_scalar_prefetch=0,
            grid=(nb, T // tc),
            in_specs=[
                pl.BlockSpec((tc, bt, E), lambda bi, ti: (ti, bi, 0)),   # x slab
                wspec((E, Gp)),                                          # Wx
                wspec((Hp, Gp)),                                         # Wh
                wspec((1, Gp)),                                          # bias
            ],
            out_specs=(
                pl.BlockSpec((tc, bt, Hp), lambda bi, ti: (ti, bi, 0)),  # result
                pl.BlockSpec((bt, Hp), lambda bi, ti: (bi, 0)),          # c_last
            ),
            scratch_shapes=[pltpu.VMEM((bt, Hp), jnp.float32),           # a state
                            pltpu.VMEM((bt, Hp), jnp.float32)],          # c state
        ),
        compiler_params=pltpu.CompilerParams(
            # Batch tiles are independent; time is a true recurrence.
            # TODO(synk): use pltpu.CORE_PARALLEL on the batch axis when
            # nb >= 2 to split across v7x's two TensorCores.
            dimension_semantics=("parallel", "arbitrary"),
            vmem_limit_bytes=vmem_limit),
        cost_estimate=cost,
    )(x_tm, wx, wh, bb)

    # a_last duplicates the last timestep of the result slab -> recover it in
    # the wrapper instead of a third kernel output.
    result = jnp.transpose(res_tm[:, :B, :H], (1, 0, 2))
    a_last = res_tm[T - 1, :B, :H]
    c_last = c_p[:B, :H]
    return result, (a_last, c_last)


def ref_forward(x, Ws, bs):
    """Pure-JAX reference mirroring the PyTorch module step by step."""
    B, T, E = x.shape
    H = Ws[0].shape[0]
    a = jnp.zeros((B, H), jnp.float32)
    c = jnp.zeros((B, H), jnp.float32)
    outs = []
    for t in range(T):
        xa = jnp.concatenate([x[:, t], a], axis=-1)
        f = jax.nn.sigmoid(xa @ Ws[0].T + bs[0])
        i = jax.nn.sigmoid(xa @ Ws[1].T + bs[1])
        cc = jnp.tanh(xa @ Ws[2].T + bs[2])
        o = jax.nn.sigmoid(xa @ Ws[3].T + bs[3])
        c = f * c + i * cc
        a = o * jnp.tanh(c)
        outs.append(a)
    return jnp.stack(outs, axis=1), (a, c)


if __name__ == "__main__":
    B, T, E, H = 2, 16, 16, 32   # batch, seq, embedding_len, hidden_num

    key = jax.random.PRNGKey(0)
    keys = jax.random.split(key, 9)
    x = jax.random.normal(keys[0], (B, T, E), dtype=jnp.float32)

    # Deterministic init of the four Linear(E+H, H) gates (PyTorch layout
    # (out_features, in_features) = (H, E+H)); gate order F, I, C, O.
    Ws, bs = [], []
    for gi in range(4):
        Ws.append(jax.random.normal(keys[1 + 2 * gi], (H, E + H), jnp.float32) * 0.1)
        bs.append(jax.random.normal(keys[2 + 2 * gi], (H,), jnp.float32) * 0.1)

    ref_res, (ref_a, ref_c) = ref_forward(x, Ws, bs)

    def run(compute_dtype, tc, single_buffer):
        fwd = jax.jit(functools.partial(my_lstm_forward, compute_dtype=compute_dtype,
                                        tc=tc, single_buffer_weights=single_buffer))
        out = fwd(x, Ws, bs)
        jax.block_until_ready(out)
        return out

    def matches(out, atol, rtol):
        res, (a_last, c_last) = out
        return (np.allclose(np.asarray(res), np.asarray(ref_res), atol=atol, rtol=rtol)
                and np.allclose(np.asarray(a_last), np.asarray(ref_a), atol=atol, rtol=rtol)
                and np.allclose(np.asarray(c_last), np.asarray(ref_c), atol=atol, rtol=rtol))

    # f32 weights, tc=8 -> two time blocks, exercising the cross-grid-step
    # state carry; checked tightly against the step-by-step reference.
    # pl.Buffered(1) (single-buffered resident weights) is attempted first and
    # dropped automatically if this JAX build rejects / mishandles it.
    single_buffer = True
    try:
        out32 = run(jnp.float32, 8, True)
        ok32 = matches(out32, 2e-5, 2e-5)
    except Exception:
        ok32 = False
    if not ok32:
        single_buffer = False
        out32 = run(jnp.float32, 8, False)
        ok32 = matches(out32, 2e-5, 2e-5)
    assert ok32, "float32 Pallas LSTM does not match the reference"

    # bf16 MXU operands (f32 accumulation, f32 state/result), auto-chosen tc:
    # relaxed tolerance since bf16 rounding accumulates over the recurrence.
    outbf = run(jnp.bfloat16, None, single_buffer)
    assert matches(outbf, 4e-2, 4e-2), "bf16 Pallas LSTM drifted beyond tolerance"

    print("KERNEL_OK")
</pallas_src>

<mosaic_0001>
module attributes {stable_mosaic.version = 11 : i64} {
  func.func @lstm_kernel(%arg0: i32, %arg1: i32, %arg2: memref<8x8x16xf32, #tpu.memory_space<vmem>>, %arg3: memref<16x512xf32, #tpu.memory_space<vmem>>, %arg4: memref<128x512xf32, #tpu.memory_space<vmem>>, %arg5: memref<1x512xf32, #tpu.memory_space<vmem>>, %arg6: memref<8x8x128xf32, #tpu.memory_space<vmem>>, %arg7: memref<8x128xf32, #tpu.memory_space<vmem>>, %arg8: memref<8x128xf32, #tpu.memory_space<vmem>>, %arg9: memref<8x128xf32, #tpu.memory_space<vmem>>) attributes {dimension_semantics = [#tpu.dimension_semantics<parallel>, #tpu.dimension_semantics<arbitrary>], iteration_bounds = array<i64: 1, 2>, scalar_prefetch = 0 : i64, scratch_operands = 2 : i64, tpu.core_type = #tpu.core_type<tc>, window_params = [{transform_indices = @transform_0, window_bounds = array<i64: 8, 8, 16>}, {pipeline_mode = #tpu.pipeline_mode<synchronous>, transform_indices = @transform_1, window_bounds = array<i64: 16, 512>}, {pipeline_mode = #tpu.pipeline_mode<synchronous>, transform_indices = @transform_2, window_bounds = array<i64: 128, 512>}, {pipeline_mode = #tpu.pipeline_mode<synchronous>, transform_indices = @transform_3, window_bounds = array<i64: 1, 512>}, {transform_indices = @transform_4, window_bounds = array<i64: 8, 8, 128>}, {transform_indices = @transform_5, window_bounds = array<i64: 8, 128>}]} {
    %c0_i32 = arith.constant 0 : i32
    %0 = arith.cmpi eq, %arg1, %c0_i32 : i32
    %1 = arith.extui %0 : i1 to i32
    %c0_i32_0 = arith.constant 0 : i32
    %2 = arith.cmpi ne, %1, %c0_i32_0 : i32
    scf.if %2 {
      %cst_171 = arith.constant 0.000000e+00 : f32
      %349 = vector.broadcast %cst_171 : f32 to vector<8x128xf32>
      %c0_172 = arith.constant 0 : index
      %c0_173 = arith.constant 0 : index
      %350 = vector.load %arg8[%c0_172, %c0_173] : memref<8x128xf32, #tpu.memory_space<vmem>>, vector<8x128xf32>
      tpu.vector_store %arg8[%c0_172, %c0_173], %349 {strides = array<i32>} : memref<8x128xf32, #tpu.memory_space<vmem>>, vector<8x128xf32>,
      %cst_174 = arith.constant 0.000000e+00 : f32
      %351 = vector.broadcast %cst_174 : f32 to vector<8x128xf32>
      %c0_175 = arith.constant 0 : index
      %c0_176 = arith.constant 0 : index
      %352 = vector.load %arg9[%c0_175, %c0_176] : memref<8x128xf32, #tpu.memory_space<vmem>>, vector<8x128xf32>
      tpu.vector_store %arg9[%c0_175, %c0_176], %351 {strides = array<i32>} : memref<8x128xf32, #tpu.memory_space<vmem>>, vector<8x128xf32>,
    } else {
    }
    %c0 = arith.constant 0 : index
    %c0_1 = arith.constant 0 : index
    %3 = vector.load %arg8[%c0, %c0_1] : memref<8x128xf32, #tpu.memory_space<vmem>>, vector<8x128xf32>
    %c0_2 = arith.constant 0 : index
    %c0_3 = arith.constant 0 : index
    %4 = vector.load %arg9[%c0_2, %c0_3] : memref<8x128xf32, #tpu.memory_space<vmem>>, vector<8x128xf32>
    %c0_4 = arith.constant 0 : index
    %c0_5 = arith.constant 0 : index
    %5 = vector.load %arg5[%c0_4, %c0_5] : memref<1x512xf32, #tpu.memory_space<vmem>>, vector<1x512xf32>
    %6 = vector.shape_cast %5 : vector<1x512xf32> to vector<1x512xf32>
    %7 = vector.broadcast %6 : vector<1x512xf32> to vector<8x512xf32>
    %c0_6 = arith.constant 0 : index
    %c0_7 = arith.constant 0 : index
    %c0_8 = arith.constant 0 : index
    %8 = vector.load %arg2[%c0_6, %c0_7, %c0_8] : memref<8x8x16xf32, #tpu.memory_space<vmem>>, vector<1x8x16xf32>
    %9 = vector.shape_cast %8 : vector<1x8x16xf32> to vector<8x16xf32>
    %c0_9 = arith.constant 0 : index
    %c0_10 = arith.constant 0 : index
    %10 = vector.load %arg3[%c0_9, %c0_10] : memref<16x512xf32, #tpu.memory_space<vmem>>, vector<16x512xf32>
    %cst = arith.constant dense<0.000000e+00> : vector<8x512xf32>
    %11 = tpu.matmul %9, %10, %cst {dimension_numbers = #tpu.dot_dimension_numbers<[1], [0], [0], [1], [0, 0, 1, 1], [], []>} : vector<8x16xf32>, vector<16x512xf32>, vector<8x512xf32> -> vector<8x512xf32>
    %c0_11 = arith.constant 0 : index
    %c0_12 = arith.constant 0 : index
    %12 = vector.load %arg4[%c0_11, %c0_12] : memref<128x512xf32, #tpu.memory_space<vmem>>, vector<128x512xf32>
    %cst_13 = arith.constant dense<0.000000e+00> : vector<8x512xf32>
    %13 = tpu.matmul %3, %12, %cst_13 {dimension_numbers = #tpu.dot_dimension_numbers<[1], [0], [0], [1], [0, 0, 1, 1], [], []>} : vector<8x128xf32>, vector<128x512xf32>, vector<8x512xf32> -> vector<8x512xf32>
    %14 = arith.addf %11, %13 : vector<8x512xf32>
    %15 = arith.addf %14, %7 : vector<8x512xf32>
    %16 = vector.extract_strided_slice %15 {offsets = [0, 0], sizes = [8, 128], strides = [1, 1]} : vector<8x512xf32> to vector<8x128xf32>
    %cst_14 = arith.constant 5.000000e-01 : f32
    %17 = vector.broadcast %cst_14 : f32 to vector<8x128xf32>
    %18 = arith.mulf %17, %16 : vector<8x128xf32>
    %19 = math.tanh %18 : vector<8x128xf32>
    %cst_15 = arith.constant 5.000000e-01 : f32
    %20 = vector.broadcast %cst_15 : f32 to vector<8x128xf32>
    %21 = arith.mulf %20, %19 : vector<8x128xf32>
    %cst_16 = arith.constant 5.000000e-01 : f32
    %22 = vector.broadcast %cst_16 : f32 to vector<8x128xf32>
    %23 = arith.addf %21, %22 : vector<8x128xf32>
    %24 = vector.extract_strided_slice %15 {offsets = [0, 128], sizes = [8, 128], strides = [1, 1]} : vector<8x512xf32> to vector<8x128xf32>
    %cst_17 = arith.constant 5.000000e-01 : f32
    %25 = vector.broadcast %cst_17 : f32 to vector<8x128xf32>
    %26 = arith.mulf %25, %24 : vector<8x128xf32>
    %27 = math.tanh %26 : vector<8x128xf32>
    %cst_18 = arith.constant 5.000000e-01 : f32
    %28 = vector.broadcast %cst_18 : f32 to vector<8x128xf32>
    %29 = arith.mulf %28, %27 : vector<8x128xf32>
    %cst_19 = arith.constant 5.000000e-01 : f32
    %30 = vector.broadcast %cst_19 : f32 to vector<8x128xf32>
    %31 = arith.addf %29, %30 : vector<8x128xf32>
    %32 = vector.extract_strided_slice %15 {offsets = [0, 256], sizes = [8, 128], strides = [1, 1]} : vector<8x512xf32> to vector<8x128xf32>
    %33 = math.tanh %32 : vector<8x128xf32>
    %34 = vector.extract_strided_slice %15 {offsets = [0, 384], sizes = [8, 128], strides = [1, 1]} : vector<8x512xf32> to vector<8x128xf32>
    %cst_20 = arith.constant 5.000000e-01 : f32
    %35 = vector.broadcast %cst_20 : f32 to vector<8x128xf32>
    %36 = arith.mulf %35, %34 : vector<8x128xf32>
    %37 = math.tanh %36 : vector<8x128xf32>
    %cst_21 = arith.constant 5.000000e-01 : f32
    %38 = vector.broadcast %cst_21 : f32 to vector<8x128xf32>
    %39 = arith.mulf %38, %37 : vector<8x128xf32>
    %cst_22 = arith.constant 5.000000e-01 : f32
    %40 = vector.broadcast %cst_22 : f32 to vector<8x128xf32>
    %41 = arith.addf %39, %40 : vector<8x128xf32>
    %42 = arith.mulf %23, %4 : vector<8x128xf32>
    %43 = arith.mulf %31, %33 : vector<8x128xf32>
    %44 = arith.addf %42, %43 : vector<8x128xf32>
    %45 = math.tanh %44 : vector<8x128xf32>
    %46 = arith.mulf %41, %45 : vector<8x128xf32>
    %c0_23 = arith.constant 0 : index
    %c0_24 = arith.constant 0 : index
    %c0_25 = arith.constant 0 : index
    %47 = vector.load %arg6[%c0_23, %c0_24, %c0_25] : memref<8x8x128xf32, #tpu.memory_space<vmem>>, vector<1x8x128xf32>
    %48 = vector.shape_cast %47 : vector<1x8x128xf32> to vector<8x128xf32>
    %49 = vector.shape_cast %46 : vector<8x128xf32> to vector<1x8x128xf32>
    tpu.vector_store %arg6[%c0_23, %c0_24, %c0_25], %49 {strides = array<i32>} : memref<8x8x128xf32, #tpu.memory_space<vmem>>, vector<1x8x128xf32>,
    %c1 = arith.constant 1 : index
    %c0_26 = arith.constant 0 : index
    %c0_27 = arith.constant 0 : index
    %50 = vector.load %arg2[%c1, %c0_26, %c0_27] : memref<8x8x16xf32, #tpu.memory_space<vmem>>, vector<1x8x16xf32>
    %51 = vector.shape_cast %50 : vector<1x8x16xf32> to vector<8x16xf32>
    %c0_28 = arith.constant 0 : index
    %c0_29 = arith.constant 0 : index
    %52 = vector.load %arg3[%c0_28, %c0_29] : memref<16x512xf32, #tpu.memory_space<vmem>>, vector<16x512xf32>
    %cst_30 = arith.constant dense<0.000000e+00> : vector<8x512xf32>
    %53 = tpu.matmul %51, %52, %cst_30 {dimension_numbers = #tpu.dot_dimension_numbers<[1], [0], [0], [1], [0, 0, 1, 1], [], []>} : vector<8x16xf32>, vector<16x512xf32>, vector<8x512xf32> -> vector<8x512xf32>
    %c0_31 = arith.constant 0 : index
    %c0_32 = arith.constant 0 : index
    %54 = vector.load %arg4[%c0_31, %c0_32] : memref<128x512xf32, #tpu.memory_space<vmem>>, vector<128x512xf32>
    %cst_33 = arith.constant dense<0.000000e+00> : vector<8x512xf32>
    %55 = tpu.matmul %46, %54, %cst_33 {dimension_numbers = #tpu.dot_dimension_numbers<[1], [0], [0], [1], [0, 0, 1, 1], [], []>} : vector<8x128xf32>, vector<128x512xf32>, vector<8x512xf32> -> vector<8x512xf32>
    %56 = arith.addf %53, %55 : vector<8x512xf32>
    %57 = arith.addf %56, %7 : vector<8x512xf32>
    %58 = vector.extract_strided_slice %57 {offsets = [0, 0], sizes = [8, 128], strides = [1, 1]} : vector<8x512xf32> to vector<8x128xf32>
    %cst_34 = arith.constant 5.000000e-01 : f32
    %59 = vector.broadcast %cst_34 : f32 to vector<8x128xf32>
    %60 = arith.mulf %59, %58 : vector<8x128xf32>
    %61 = math.tanh %60 : vector<8x128xf32>
    %cst_35 = arith.constant 5.000000e-01 : f32
    %62 = vector.broadcast %cst_35 : f32 to vector<8x128xf32>
    %63 = arith.mulf %62, %61 : vector<8x128xf32>
    %cst_36 = arith.constant 5.000000e-01 : f32
    %64 = vector.broadcast %cst_36 : f32 to vector<8x128xf32>
    %65 = arith.addf %63, %64 : vector<8x128xf32>
    %66 = vector.extract_strided_slice %57 {offsets = [0, 128], sizes = [8, 128], strides = [1, 1]} : vector<8x512xf32> to vector<8x128xf32>
    %cst_37 = arith.constant 5.000000e-01 : f32
    %67 = vector.broadcast %cst_37 : f32 to vector<8x128xf32>
    %68 = arith.mulf %67, %66 : vector<8x128xf32>
    %69 = math.tanh %68 : vector<8x128xf32>
    %cst_38 = arith.constant 5.000000e-01 : f32
    %70 = vector.broadcast %cst_38 : f32 to vector<8x128xf32>
    %71 = arith.mulf %70, %69 : vector<8x128xf32>
    %cst_39 = arith.constant 5.000000e-01 : f32
    %72 = vector.broadcast %cst_39 : f32 to vector<8x128xf32>
    %73 = arith.addf %71, %72 : vector<8x128xf32>
    %74 = vector.extract_strided_slice %57 {offsets = [0, 256], sizes = [8, 128], strides = [1, 1]} : vector<8x512xf32> to vector<8x128xf32>
    %75 = math.tanh %74 : vector<8x128xf32>
    %76 = vector.extract_strided_slice %57 {offsets = [0, 384], sizes = [8, 128], strides = [1, 1]} : vector<8x512xf32> to vector<8x128xf32>
    %cst_40 = arith.constant 5.000000e-01 : f32
    %77 = vector.broadcast %cst_40 : f32 to vector<8x128xf32>
    %78 = arith.mulf %77, %76 : vector<8x128xf32>
    %79 = math.tanh %78 : vector<8x128xf32>
    %cst_41 = arith.constant 5.000000e-01 : f32
    %80 = vector.broadcast %cst_41 : f32 to vector<8x128xf32>
    %81 = arith.mulf %80, %79 : vector<8x128xf32>
    %cst_42 = arith.constant 5.000000e-01 : f32
    %82 = vector.broadcast %cst_42 : f32 to vector<8x128xf32>
    %83 = arith.addf %81, %82 : vector<8x128xf32>
    %84 = arith.mulf %65, %44 : vector<8x128xf32>
    %85 = arith.mulf %73, %75 : vector<8x128xf32>
    %86 = arith.addf %84, %85 : vector<8x128xf32>
    %87 = math.tanh %86 : vector<8x128xf32>
    %88 = arith.mulf %83, %87 : vector<8x128xf32>
    %c1_43 = arith.constant 1 : index
    %c0_44 = arith.constant 0 : index
    %c0_45 = arith.constant 0 : index
    %89 = vector.load %arg6[%c1_43, %c0_44, %c0_45] : memref<8x8x128xf32, #tpu.memory_space<vmem>>, vector<1x8x128xf32>
    %90 = vector.shape_cast %89 : vector<1x8x128xf32> to vector<8x128xf32>
    %91 = vector.shape_cast %88 : vector<8x128xf32> to vector<1x8x128xf32>
    tpu.vector_store %arg6[%c1_43, %c0_44, %c0_45], %91 {strides = array<i32>} : memref<8x8x128xf32, #tpu.memory_space<vmem>>, vector<1x8x128xf32>,
    %c2 = arith.constant 2 : index
    %c0_46 = arith.constant 0 : index
    %c0_47 = arith.constant 0 : index
    %92 = vector.load %arg2[%c2, %c0_46, %c0_47] : memref<8x8x16xf32, #tpu.memory_space<vmem>>, vector<1x8x16xf32>
    %93 = vector.shape_cast %92 : vector<1x8x16xf32> to vector<8x16xf32>
    %c0_48 = arith.constant 0 : index
    %c0_49 = arith.constant 0 : index
    %94 = vector.load %arg3[%c0_48, %c0_49] : memref<16x512xf32, #tpu.memory_space<vmem>>, vector<16x512xf32>
    %cst_50 = arith.constant dense<0.000000e+00> : vector<8x512xf32>
    %95 = tpu.matmul %93, %94, %cst_50 {dimension_numbers = #tpu.dot_dimension_numbers<[1], [0], [0], [1], [0, 0, 1, 1], [], []>} : vector<8x16xf32>, vector<16x512xf32>, vector<8x512xf32> -> vector<8x512xf32>
    %c0_51 = arith.constant 0 : index
    %c0_52 = arith.constant 0 : index
    %96 = vector.load %arg4[%c0_51, %c0_52] : memref<128x512xf32, #tpu.memory_space<vmem>>, vector<128x512xf32>
    %cst_53 = arith.constant dense<0.000000e+00> : vector<8x512xf32>
    %97 = tpu.matmul %88, %96, %cst_53 {dimension_numbers = #tpu.dot_dimension_numbers<[1], [0], [0], [1], [0, 0, 1, 1], [], []>} : vector<8x128xf32>, vector<128x512xf32>, vector<8x512xf32> -> vector<8x512xf32>
    %98 = arith.addf %95, %97 : vector<8x512xf32>
    %99 = arith.addf %98, %7 : vector<8x512xf32>
    %100 = vector.extract_strided_slice %99 {offsets = [0, 0], sizes = [8, 128], strides = [1, 1]} : vector<8x512xf32> to vector<8x128xf32>
    %cst_54 = arith.constant 5.000000e-01 : f32
    %101 = vector.broadcast %cst_54 : f32 to vector<8x128xf32>
    %102 = arith.mulf %101, %100 : vector<8x128xf32>
    %103 = math.tanh %102 : vector<8x128xf32>
    %cst_55 = arith.constant 5.000000e-01 : f32
    %104 = vector.broadcast %cst_55 : f32 to vector<8x128xf32>
    %105 = arith.mulf %104, %103 : vector<8x128xf32>
    %cst_56 = arith.constant 5.000000e-01 : f32
    %106 = vector.broadcast %cst_56 : f32 to vector<8x128xf32>
    %107 = arith.addf %105, %106 : vector<8x128xf32>
    %108 = vector.extract_strided_slice %99 {offsets = [0, 128], sizes = [8, 128], strides = [1, 1]} : vector<8x512xf32> to vector<8x128xf32>
    %cst_57 = arith.constant 5.000000e-01 : f32
    %109 = vector.broadcast %cst_57 : f32 to vector<8x128xf32>
    %110 = arith.mulf %109, %108 : vector<8x128xf32>
    %111 = math.tanh %110 : vector<8x128xf32>
    %cst_58 = arith.constant 5.000000e-01 : f32
    %112 = vector.broadcast %cst_58 : f32 to vector<8x128xf32>
    %113 = arith.mulf %112, %111 : vector<8x128xf32>
    %cst_59 = arith.constant 5.000000e-01 : f32
    %114 = vector.broadcast %cst_59 : f32 to vector<8x128xf32>
    %115 = arith.addf %113, %114 : vector<8x128xf32>
    %116 = vector.extract_strided_slice %99 {offsets = [0, 256], sizes = [8, 128], strides = [1, 1]} : vector<8x512xf32> to vector<8x128xf32>
    %117 = math.tanh %116 : vector<8x128xf32>
    %118 = vector.extract_strided_slice %99 {offsets = [0, 384], sizes = [8, 128], strides = [1, 1]} : vector<8x512xf32> to vector<8x128xf32>
    %cst_60 = arith.constant 5.000000e-01 : f32
    %119 = vector.broadcast %cst_60 : f32 to vector<8x128xf32>
    %120 = arith.mulf %119, %118 : vector<8x128xf32>
    %121 = math.tanh %120 : vector<8x128xf32>
    %cst_61 = arith.constant 5.000000e-01 : f32
    %122 = vector.broadcast %cst_61 : f32 to vector<8x128xf32>
    %123 = arith.mulf %122, %121 : vector<8x128xf32>
    %cst_62 = arith.constant 5.000000e-01 : f32
    %124 = vector.broadcast %cst_62 : f32 to vector<8x128xf32>
    %125 = arith.addf %123, %124 : vector<8x128xf32>
    %126 = arith.mulf %107, %86 : vector<8x128xf32>
    %127 = arith.mulf %115, %117 : vector<8x128xf32>
    %128 = arith.addf %126, %127 : vector<8x128xf32>
    %129 = math.tanh %128 : vector<8x128xf32>
    %130 = arith.mulf %125, %129 : vector<8x128xf32>
    %c2_63 = arith.constant 2 : index
    %c0_64 = arith.constant 0 : index
    %c0_65 = arith.constant 0 : index
    %131 = vector.load %arg6[%c2_63, %c0_64, %c0_65] : memref<8x8x128xf32, #tpu.memory_space<vmem>>, vector<1x8x128xf32>
    %132 = vector.shape_cast %131 : vector<1x8x128xf32> to vector<8x128xf32>
    %133 = vector.shape_cast %130 : vector<8x128xf32> to vector<1x8x128xf32>
    tpu.vector_store %arg6[%c2_63, %c0_64, %c0_65], %133 {strides = array<i32>} : memref<8x8x128xf32, #tpu.memory_space<vmem>>, vector<1x8x128xf32>,
    %c3 = arith.constant 3 : index
    %c0_66 = arith.constant 0 : index
    %c0_67 = arith.constant 0 : index
    %134 = vector.load %arg2[%c3, %c0_66, %c0_67] : memref<8x8x16xf32, #tpu.memory_space<vmem>>, vector<1x8x16xf32>
    %135 = vector.shape_cast %134 : vector<1x8x16xf32> to vector<8x16xf32>
    %c0_68 = arith.constant 0 : index
    %c0_69 = arith.constant 0 : index
    %136 = vector.load %arg3[%c0_68, %c0_69] : memref<16x512xf32, #tpu.memory_space<vmem>>, vector<16x512xf32>
    %cst_70 = arith.constant dense<0.000000e+00> : vector<8x512xf32>
    %137 = tpu.matmul %135, %136, %cst_70 {dimension_numbers = #tpu.dot_dimension_numbers<[1], [0], [0], [1], [0, 0, 1, 1], [], []>} : vector<8x16xf32>, vector<16x512xf32>, vector<8x512xf32> -> vector<8x512xf32>
    %c0_71 = arith.constant 0 : index
    %c0_72 = arith.constant 0 : index
    %138 = vector.load %arg4[%c0_71, %c0_72] : memref<128x512xf32, #tpu.memory_space<vmem>>, vector<128x512xf32>
    %cst_73 = arith.constant dense<0.000000e+00> : vector<8x512xf32>
    %139 = tpu.matmul %130, %138, %cst_73 {dimension_numbers = #tpu.dot_dimension_numbers<[1], [0], [0], [1], [0, 0, 1, 1], [], []>} : vector<8x128xf32>, vector<128x512xf32>, vector<8x512xf32> -> vector<8x512xf32>
    %140 = arith.addf %137, %139 : vector<8x512xf32>
    %141 = arith.addf %140, %7 : vector<8x512xf32>
    %142 = vector.extract_strided_slice %141 {offsets = [0, 0], sizes = [8, 128], strides = [1, 1]} : vector<8x512xf32> to vector<8x128xf32>
    %cst_74 = arith.constant 5.000000e-01 : f32
    %143 = vector.broadcast %cst_74 : f32 to vector<8x128xf32>
    %144 = arith.mulf %143, %142 : vector<8x128xf32>
    %145 = math.tanh %144 : vector<8x128xf32>
    %cst_75 = arith.constant 5.000000e-01 : f32
    %146 = vector.broadcast %cst_75 : f32 to vector<8x128xf32>
    %147 = arith.mulf %146, %145 : vector<8x128xf32>
    %cst_76 = arith.constant 5.000000e-01 : f32
    %148 = vector.broadcast %cst_76 : f32 to vector<8x128xf32>
    %149 = arith.addf %147, %148 : vector<8x128xf32>
    %150 = vector.extract_strided_slice %141 {offsets = [0, 128], sizes = [8, 128], strides = [1, 1]} : vector<8x512xf32> to vector<8x128xf32>
    %cst_77 = arith.constant 5.000000e-01 : f32
    %151 = vector.broadcast %cst_77 : f32 to vector<8x128xf32>
    %152 = arith.mulf %151, %150 : vector<8x128xf32>
    %153 = math.tanh %152 : vector<8x128xf32>
    %cst_78 = arith.constant 5.000000e-01 : f32
    %154 = vector.broadcast %cst_78 : f32 to vector<8x128xf32>
    %155 = arith.mulf %154, %153 : vector<8x128xf32>
    %cst_79 = arith.constant 5.000000e-01 : f32
    %156 = vector.broadcast %cst_79 : f32 to vector<8x128xf32>
    %157 = arith.addf %155, %156 : vector<8x128xf32>
    %158 = vector.extract_strided_slice %141 {offsets = [0, 256], sizes = [8, 128], strides = [1, 1]} : vector<8x512xf32> to vector<8x128xf32>
    %159 = math.tanh %158 : vector<8x128xf32>
    %160 = vector.extract_strided_slice %141 {offsets = [0, 384], sizes = [8, 128], strides = [1, 1]} : vector<8x512xf32> to vector<8x128xf32>
    %cst_80 = arith.constant 5.000000e-01 : f32
    %161 = vector.broadcast %cst_80 : f32 to vector<8x128xf32>
    %162 = arith.mulf %161, %160 : vector<8x128xf32>
    %163 = math.tanh %162 : vector<8x128xf32>
    %cst_81 = arith.constant 5.000000e-01 : f32
    %164 = vector.broadcast %cst_81 : f32 to vector<8x128xf32>
    %165 = arith.mulf %164, %163 : vector<8x128xf32>
    %cst_82 = arith.constant 5.000000e-01 : f32
    %166 = vector.broadcast %cst_82 : f32 to vector<8x128xf32>
    %167 = arith.addf %165, %166 : vector<8x128xf32>
    %168 = arith.mulf %149, %128 : vector<8x128xf32>
    %169 = arith.mulf %157, %159 : vector<8x128xf32>
    %170 = arith.addf %168, %169 : vector<8x128xf32>
    %171 = math.tanh %170 : vector<8x128xf32>
    %172 = arith.mulf %167, %171 : vector<8x128xf32>
    %c3_83 = arith.constant 3 : index
    %c0_84 = arith.constant 0 : index
    %c0_85 = arith.constant 0 : index
    %173 = vector.load %arg6[%c3_83, %c0_84, %c0_85] : memref<8x8x128xf32, #tpu.memory_space<vmem>>, vector<1x8x128xf32>
    %174 = vector.shape_cast %173 : vector<1x8x128xf32> to vector<8x128xf32>
    %175 = vector.shape_cast %172 : vector<8x128xf32> to vector<1x8x128xf32>
    tpu.vector_store %arg6[%c3_83, %c0_84, %c0_85], %175 {strides = array<i32>} : memref<8x8x128xf32, #tpu.memory_space<vmem>>, vector<1x8x128xf32>,
    %c4 = arith.constant 4 : index
    %c0_86 = arith.constant 0 : index
    %c0_87 = arith.constant 0 : index
    %176 = vector.load %arg2[%c4, %c0_86, %c0_87] : memref<8x8x16xf32, #tpu.memory_space<vmem>>, vector<1x8x16xf32>
    %177 = vector.shape_cast %176 : vector<1x8x16xf32> to vector<8x16xf32>
    %c0_88 = arith.constant 0 : index
    %c0_89 = arith.constant 0 : index
    %178 = vector.load %arg3[%c0_88, %c0_89] : memref<16x512xf32, #tpu.memory_space<vmem>>, vector<16x512xf32>
    %cst_90 = arith.constant dense<0.000000e+00> : vector<8x512xf32>
    %179 = tpu.matmul %177, %178, %cst_90 {dimension_numbers = #tpu.dot_dimension_numbers<[1], [0], [0], [1], [0, 0, 1, 1], [], []>} : vector<8x16xf32>, vector<16x512xf32>, vector<8x512xf32> -> vector<8x512xf32>
    %c0_91 = arith.constant 0 : index
    %c0_92 = arith.constant 0 : index
    %180 = vector.load %arg4[%c0_91, %c0_92] : memref<128x512xf32, #tpu.memory_space<vmem>>, vector<128x512xf32>
    %cst_93 = arith.constant dense<0.000000e+00> : vector<8x512xf32>
    %181 = tpu.matmul %172, %180, %cst_93 {dimension_numbers = #tpu.dot_dimension_numbers<[1], [0], [0], [1], [0, 0, 1, 1], [], []>} : vector<8x128xf32>, vector<128x512xf32>, vector<8x512xf32> -> vector<8x512xf32>
    %182 = arith.addf %179, %181 : vector<8x512xf32>
    %183 = arith.addf %182, %7 : vector<8x512xf32>
    %184 = vector.extract_strided_slice %183 {offsets = [0, 0], sizes = [8, 128], strides = [1, 1]} : vector<8x512xf32> to vector<8x128xf32>
    %cst_94 = arith.constant 5.000000e-01 : f32
    %185 = vector.broadcast %cst_94 : f32 to vector<8x128xf32>
    %186 = arith.mulf %185, %184 : vector<8x128xf32>
    %187 = math.tanh %186 : vector<8x128xf32>
    %cst_95 = arith.constant 5.000000e-01 : f32
    %188 = vector.broadcast %cst_95 : f32 to vector<8x128xf32>
    %189 = arith.mulf %188, %187 : vector<8x128xf32>
    %cst_96 = arith.constant 5.000000e-01 : f32
    %190 = vector.broadcast %cst_96 : f32 to vector<8x128xf32>
    %191 = arith.addf %189, %190 : vector<8x128xf32>
    %192 = vector.extract_strided_slice %183 {offsets = [0, 128], sizes = [8, 128], strides = [1, 1]} : vector<8x512xf32> to vector<8x128xf32>
    %cst_97 = arith.constant 5.000000e-01 : f32
    %193 = vector.broadcast %cst_97 : f32 to vector<8x128xf32>
    %194 = arith.mulf %193, %192 : vector<8x128xf32>
    %195 = math.tanh %194 : vector<8x128xf32>
    %cst_98 = arith.constant 5.000000e-01 : f32
    %196 = vector.broadcast %cst_98 : f32 to vector<8x128xf32>
    %197 = arith.mulf %196, %195 : vector<8x128xf32>
    %cst_99 = arith.constant 5.000000e-01 : f32
    %198 = vector.broadcast %cst_99 : f32 to vector<8x128xf32>
    %199 = arith.addf %197, %198 : vector<8x128xf32>
    %200 = vector.extract_strided_slice %183 {offsets = [0, 256], sizes = [8, 128], strides = [1, 1]} : vector<8x512xf32> to vector<8x128xf32>
    %201 = math.tanh %200 : vector<8x128xf32>
    %202 = vector.extract_strided_slice %183 {offsets = [0, 384], sizes = [8, 128], strides = [1, 1]} : vector<8x512xf32> to vector<8x128xf32>
    %cst_100 = arith.constant 5.000000e-01 : f32
    %203 = vector.broadcast %cst_100 : f32 to vector<8x128xf32>
    %204 = arith.mulf %203, %202 : vector<8x128xf32>
    %205 = math.tanh %204 : vector<8x128xf32>
    %cst_101 = arith.constant 5.000000e-01 : f32
    %206 = vector.broadcast %cst_101 : f32 to vector<8x128xf32>
    %207 = arith.mulf %206, %205 : vector<8x128xf32>
    %cst_102 = arith.constant 5.000000e-01 : f32
    %208 = vector.broadcast %cst_102 : f32 to vector<8x128xf32>
    %209 = arith.addf %207, %208 : vector<8x128xf32>
    %210 = arith.mulf %191, %170 : vector<8x128xf32>
    %211 = arith.mulf %199, %201 : vector<8x128xf32>
    %212 = arith.addf %210, %211 : vector<8x128xf32>
    %213 = math.tanh %212 : vector<8x128xf32>
    %214 = arith.mulf %209, %213 : vector<8x128xf32>
    %c4_103 = arith.constant 4 : index
    %c0_104 = arith.constant 0 : index
    %c0_105 = arith.constant 0 : index
    %215 = vector.load %arg6[%c4_103, %c0_104, %c0_105] : memref<8x8x128xf32, #tpu.memory_space<vmem>>, vector<1x8x128xf32>
    %216 = vector.shape_cast %215 : vector<1x8x128xf32> to vector<8x128xf32>
    %217 = vector.shape_cast %214 : vector<8x128xf32> to vector<1x8x128xf32>
    tpu.vector_store %arg6[%c4_103, %c0_104, %c0_105], %217 {strides = array<i32>} : memref<8x8x128xf32, #tpu.memory_space<vmem>>, vector<1x8x128xf32>,
    %c5 = arith.constant 5 : index
    %c0_106 = arith.constant 0 : index
    %c0_107 = arith.constant 0 : index
    %218 = vector.load %arg2[%c5, %c0_106, %c0_107] : memref<8x8x16xf32, #tpu.memory_space<vmem>>, vector<1x8x16xf32>
    %219 = vector.shape_cast %218 : vector<1x8x16xf32> to vector<8x16xf32>
    %c0_108 = arith.constant 0 : index
    %c0_109 = arith.constant 0 : index
    %220 = vector.load %arg3[%c0_108, %c0_109] : memref<16x512xf32, #tpu.memory_space<vmem>>, vector<16x512xf32>
    %cst_110 = arith.constant dense<0.000000e+00> : vector<8x512xf32>
    %221 = tpu.matmul %219, %220, %cst_110 {dimension_numbers = #tpu.dot_dimension_numbers<[1], [0], [0], [1], [0, 0, 1, 1], [], []>} : vector<8x16xf32>, vector<16x512xf32>, vector<8x512xf32> -> vector<8x512xf32>
    %c0_111 = arith.constant 0 : index
    %c0_112 = arith.constant 0 : index
    %222 = vector.load %arg4[%c0_111, %c0_112] : memref<128x512xf32, #tpu.memory_space<vmem>>, vector<128x512xf32>
    %cst_113 = arith.constant dense<0.000000e+00> : vector<8x512xf32>
    %223 = tpu.matmul %214, %222, %cst_113 {dimension_numbers = #tpu.dot_dimension_numbers<[1], [0], [0], [1], [0, 0, 1, 1], [], []>} : vector<8x128xf32>, vector<128x512xf32>, vector<8x512xf32> -> vector<8x512xf32>
    %224 = arith.addf %221, %223 : vector<8x512xf32>
    %225 = arith.addf %224, %7 : vector<8x512xf32>
    %226 = vector.extract_strided_slice %225 {offsets = [0, 0], sizes = [8, 128], strides = [1, 1]} : vector<8x512xf32> to vector<8x128xf32>
    %cst_114 = arith.constant 5.000000e-01 : f32
    %227 = vector.broadcast %cst_114 : f32 to vector<8x128xf32>
    %228 = arith.mulf %227, %226 : vector<8x128xf32>
    %229 = math.tanh %228 : vector<8x128xf32>
    %cst_115 = arith.constant 5.000000e-01 : f32
    %230 = vector.broadcast %cst_115 : f32 to vector<8x128xf32>
    %231 = arith.mulf %230, %229 : vector<8x128xf32>
    %cst_116 = arith.constant 5.000000e-01 : f32
    %232 = vector.broadcast %cst_116 : f32 to vector<8x128xf32>
    %233 = arith.addf %231, %232 : vector<8x128xf32>
    %234 = vector.extract_strided_slice %225 {offsets = [0, 128], sizes = [8, 128], strides = [1, 1]} : vector<8x512xf32> to vector<8x128xf32>
    %cst_117 = arith.constant 5.000000e-01 : f32
    %235 = vector.broadcast %cst_117 : f32 to vector<8x128xf32>
    %236 = arith.mulf %235, %234 : vector<8x128xf32>
    %237 = math.tanh %236 : vector<8x128xf32>
    %cst_118 = arith.constant 5.000000e-01 : f32
    %238 = vector.broadcast %cst_118 : f32 to vector<8x128xf32>
    %239 = arith.mulf %238, %237 : vector<8x128xf32>
    %cst_119 = arith.constant 5.000000e-01 : f32
    %240 = vector.broadcast %cst_119 : f32 to vector<8x128xf32>
    %241 = arith.addf %239, %240 : vector<8x128xf32>
    %242 = vector.extract_strided_slice %225 {offsets = [0, 256], sizes = [8, 128], strides = [1, 1]} : vector<8x512xf32> to vector<8x128xf32>
    %243 = math.tanh %242 : vector<8x128xf32>
    %244 = vector.extract_strided_slice %225 {offsets = [0, 384], sizes = [8, 128], strides = [1, 1]} : vector<8x512xf32> to vector<8x128xf32>
    %cst_120 = arith.constant 5.000000e-01 : f32
    %245 = vector.broadcast %cst_120 : f32 to vector<8x128xf32>
    %246 = arith.mulf %245, %244 : vector<8x128xf32>
    %247 = math.tanh %246 : vector<8x128xf32>
    %cst_121 = arith.constant 5.000000e-01 : f32
    %248 = vector.broadcast %cst_121 : f32 to vector<8x128xf32>
    %249 = arith.mulf %248, %247 : vector<8x128xf32>
    %cst_122 = arith.constant 5.000000e-01 : f32
    %250 = vector.broadcast %cst_122 : f32 to vector<8x128xf32>
    %251 = arith.addf %249, %250 : vector<8x128xf32>
    %252 = arith.mulf %233, %212 : vector<8x128xf32>
    %253 = arith.mulf %241, %243 : vector<8x128xf32>
    %254 = arith.addf %252, %253 : vector<8x128xf32>
    %255 = math.tanh %254 : vector<8x128xf32>
    %256 = arith.mulf %251, %255 : vector<8x128xf32>
    %c5_123 = arith.constant 5 : index
    %c0_124 = arith.constant 0 : index
    %c0_125 = arith.constant 0 : index
    %257 = vector.load %arg6[%c5_123, %c0_124, %c0_125] : memref<8x8x128xf32, #tpu.memory_space<vmem>>, vector<1x8x128xf32>
    %258 = vector.shape_cast %257 : vector<1x8x128xf32> to vector<8x128xf32>
    %259 = vector.shape_cast %256 : vector<8x128xf32> to vector<1x8x128xf32>
    tpu.vector_store %arg6[%c5_123, %c0_124, %c0_125], %259 {strides = array<i32>} : memref<8x8x128xf32, #tpu.memory_space<vmem>>, vector<1x8x128xf32>,
    %c6 = arith.constant 6 : index
    %c0_126 = arith.constant 0 : index
    %c0_127 = arith.constant 0 : index
    %260 = vector.load %arg2[%c6, %c0_126, %c0_127] : memref<8x8x16xf32, #tpu.memory_space<vmem>>, vector<1x8x16xf32>
    %261 = vector.shape_cast %260 : vector<1x8x16xf32> to vector<8x16xf32>
    %c0_128 = arith.constant 0 : index
    %c0_129 = arith.constant 0 : index
    %262 = vector.load %arg3[%c0_128, %c0_129] : memref<16x512xf32, #tpu.memory_space<vmem>>, vector<16x512xf32>
    %cst_130 = arith.constant dense<0.000000e+00> : vector<8x512xf32>
    %263 = tpu.matmul %261, %262, %cst_130 {dimension_numbers = #tpu.dot_dimension_numbers<[1], [0], [0], [1], [0, 0, 1, 1], [], []>} : vector<8x16xf32>, vector<16x512xf32>, vector<8x512xf32> -> vector<8x512xf32>
    %c0_131 = arith.constant 0 : index
    %c0_132 = arith.constant 0 : index
    %264 = vector.load %arg4[%c0_131, %c0_132] : memref<128x512xf32, #tpu.memory_space<vmem>>, vector<128x512xf32>
    %cst_133 = arith.constant dense<0.000000e+00> : vector<8x512xf32>
    %265 = tpu.matmul %256, %264, %cst_133 {dimension_numbers = #tpu.dot_dimension_numbers<[1], [0], [0], [1], [0, 0, 1, 1], [], []>} : vector<8x128xf32>, vector<128x512xf32>, vector<8x512xf32> -> vector<8x512xf32>
    %266 = arith.addf %263, %265 : vector<8x512xf32>
    %267 = arith.addf %266, %7 : vector<8x512xf32>
    %268 = vector.extract_strided_slice %267 {offsets = [0, 0], sizes = [8, 128], strides = [1, 1]} : vector<8x512xf32> to vector<8x128xf32>
    %cst_134 = arith.constant 5.000000e-01 : f32
    %269 = vector.broadcast %cst_134 : f32 to vector<8x128xf32>
    %270 = arith.mulf %269, %268 : vector<8x128xf32>
    %271 = math.tanh %270 : vector<8x128xf32>
    %cst_135 = arith.constant 5.000000e-01 : f32
    %272 = vector.broadcast %cst_135 : f32 to vector<8x128xf32>
    %273 = arith.mulf %272, %271 : vector<8x128xf32>
    %cst_136 = arith.constant 5.000000e-01 : f32
    %274 = vector.broadcast %cst_136 : f32 to vector<8x128xf32>
    %275 = arith.addf %273, %274 : vector<8x128xf32>
    %276 = vector.extract_strided_slice %267 {offsets = [0, 128], sizes = [8, 128], strides = [1, 1]} : vector<8x512xf32> to vector<8x128xf32>
    %cst_137 = arith.constant 5.000000e-01 : f32
    %277 = vector.broadcast %cst_137 : f32 to vector<8x128xf32>
    %278 = arith.mulf %277, %276 : vector<8x128xf32>
    %279 = math.tanh %278 : vector<8x128xf32>
    %cst_138 = arith.constant 5.000000e-01 : f32
    %280 = vector.broadcast %cst_138 : f32 to vector<8x128xf32>
    %281 = arith.mulf %280, %279 : vector<8x128xf32>
    %cst_139 = arith.constant 5.000000e-01 : f32
    %282 = vector.broadcast %cst_139 : f32 to vector<8x128xf32>
    %283 = arith.addf %281, %282 : vector<8x128xf32>
    %284 = vector.extract_strided_slice %267 {offsets = [0, 256], sizes = [8, 128], strides = [1, 1]} : vector<8x512xf32> to vector<8x128xf32>
    %285 = math.tanh %284 : vector<8x128xf32>
    %286 = vector.extract_strided_slice %267 {offsets = [0, 384], sizes = [8, 128], strides = [1, 1]} : vector<8x512xf32> to vector<8x128xf32>
    %cst_140 = arith.constant 5.000000e-01 : f32
    %287 = vector.broadcast %cst_140 : f32 to vector<8x128xf32>
    %288 = arith.mulf %287, %286 : vector<8x128xf32>
    %289 = math.tanh %288 : vector<8x128xf32>
    %cst_141 = arith.constant 5.000000e-01 : f32
    %290 = vector.broadcast %cst_141 : f32 to vector<8x128xf32>
    %291 = arith.mulf %290, %289 : vector<8x128xf32>
    %cst_142 = arith.constant 5.000000e-01 : f32
    %292 = vector.broadcast %cst_142 : f32 to vector<8x128xf32>
    %293 = arith.addf %291, %292 : vector<8x128xf32>
    %294 = arith.mulf %275, %254 : vector<8x128xf32>
    %295 = arith.mulf %283, %285 : vector<8x128xf32>
    %296 = arith.addf %294, %295 : vector<8x128xf32>
    %297 = math.tanh %296 : vector<8x128xf32>
    %298 = arith.mulf %293, %297 : vector<8x128xf32>
    %c6_143 = arith.constant 6 : index
    %c0_144 = arith.constant 0 : index
    %c0_145 = arith.constant 0 : index
    %299 = vector.load %arg6[%c6_143, %c0_144, %c0_145] : memref<8x8x128xf32, #tpu.memory_space<vmem>>, vector<1x8x128xf32>
    %300 = vector.shape_cast %299 : vector<1x8x128xf32> to vector<8x128xf32>
    %301 = vector.shape_cast %298 : vector<8x128xf32> to vector<1x8x128xf32>
    tpu.vector_store %arg6[%c6_143, %c0_144, %c0_145], %301 {strides = array<i32>} : memref<8x8x128xf32, #tpu.memory_space<vmem>>, vector<1x8x128xf32>,
    %c7 = arith.constant 7 : index
    %c0_146 = arith.constant 0 : index
    %c0_147 = arith.constant 0 : index
    %302 = vector.load %arg2[%c7, %c0_146, %c0_147] : memref<8x8x16xf32, #tpu.memory_space<vmem>>, vector<1x8x16xf32>
    %303 = vector.shape_cast %302 : vector<1x8x16xf32> to vector<8x16xf32>
    %c0_148 = arith.constant 0 : index
    %c0_149 = arith.constant 0 : index
    %304 = vector.load %arg3[%c0_148, %c0_149] : memref<16x512xf32, #tpu.memory_space<vmem>>, vector<16x512xf32>
    %cst_150 = arith.constant dense<0.000000e+00> : vector<8x512xf32>
    %305 = tpu.matmul %303, %304, %cst_150 {dimension_numbers = #tpu.dot_dimension_numbers<[1], [0], [0], [1], [0, 0, 1, 1], [], []>} : vector<8x16xf32>, vector<16x512xf32>, vector<8x512xf32> -> vector<8x512xf32>
    %c0_151 = arith.constant 0 : index
    %c0_152 = arith.constant 0 : index
    %306 = vector.load %arg4[%c0_151, %c0_152] : memref<128x512xf32, #tpu.memory_space<vmem>>, vector<128x512xf32>
    %cst_153 = arith.constant dense<0.000000e+00> : vector<8x512xf32>
    %307 = tpu.matmul %298, %306, %cst_153 {dimension_numbers = #tpu.dot_dimension_numbers<[1], [0], [0], [1], [0, 0, 1, 1], [], []>} : vector<8x128xf32>, vector<128x512xf32>, vector<8x512xf32> -> vector<8x512xf32>
    %308 = arith.addf %305, %307 : vector<8x512xf32>
    %309 = arith.addf %308, %7 : vector<8x512xf32>
    %310 = vector.extract_strided_slice %309 {offsets = [0, 0], sizes = [8, 128], strides = [1, 1]} : vector<8x512xf32> to vector<8x128xf32>
    %cst_154 = arith.constant 5.000000e-01 : f32
    %311 = vector.broadcast %cst_154 : f32 to vector<8x128xf32>
    %312 = arith.mulf %311, %310 : vector<8x128xf32>
    %313 = math.tanh %312 : vector<8x128xf32>
    %cst_155 = arith.constant 5.000000e-01 : f32
    %314 = vector.broadcast %cst_155 : f32 to vector<8x128xf32>
    %315 = arith.mulf %314, %313 : vector<8x128xf32>
    %cst_156 = arith.constant 5.000000e-01 : f32
    %316 = vector.broadcast %cst_156 : f32 to vector<8x128xf32>
    %317 = arith.addf %315, %316 : vector<8x128xf32>
    %318 = vector.extract_strided_slice %309 {offsets = [0, 128], sizes = [8, 128], strides = [1, 1]} : vector<8x512xf32> to vector<8x128xf32>
    %cst_157 = arith.constant 5.000000e-01 : f32
    %319 = vector.broadcast %cst_157 : f32 to vector<8x128xf32>
    %320 = arith.mulf %319, %318 : vector<8x128xf32>
    %321 = math.tanh %320 : vector<8x128xf32>
    %cst_158 = arith.constant 5.000000e-01 : f32
    %322 = vector.broadcast %cst_158 : f32 to vector<8x128xf32>
    %323 = arith.mulf %322, %321 : vector<8x128xf32>
    %cst_159 = arith.constant 5.000000e-01 : f32
    %324 = vector.broadcast %cst_159 : f32 to vector<8x128xf32>
    %325 = arith.addf %323, %324 : vector<8x128xf32>
    %326 = vector.extract_strided_slice %309 {offsets = [0, 256], sizes = [8, 128], strides = [1, 1]} : vector<8x512xf32> to vector<8x128xf32>
    %327 = math.tanh %326 : vector<8x128xf32>
    %328 = vector.extract_strided_slice %309 {offsets = [0, 384], sizes = [8, 128], strides = [1, 1]} : vector<8x512xf32> to vector<8x128xf32>
    %cst_160 = arith.constant 5.000000e-01 : f32
    %329 = vector.broadcast %cst_160 : f32 to vector<8x128xf32>
    %330 = arith.mulf %329, %328 : vector<8x128xf32>
    %331 = math.tanh %330 : vector<8x128xf32>
    %cst_161 = arith.constant 5.000000e-01 : f32
    %332 = vector.broadcast %cst_161 : f32 to vector<8x128xf32>
    %333 = arith.mulf %332, %331 : vector<8x128xf32>
    %cst_162 = arith.constant 5.000000e-01 : f32
    %334 = vector.broadcast %cst_162 : f32 to vector<8x128xf32>
    %335 = arith.addf %333, %334 : vector<8x128xf32>
    %336 = arith.mulf %317, %296 : vector<8x128xf32>
    %337 = arith.mulf %325, %327 : vector<8x128xf32>
    %338 = arith.addf %336, %337 : vector<8x128xf32>
    %339 = math.tanh %338 : vector<8x128xf32>
    %340 = arith.mulf %335, %339 : vector<8x128xf32>
    %c7_163 = arith.constant 7 : index
    %c0_164 = arith.constant 0 : index
    %c0_165 = arith.constant 0 : index
    %341 = vector.load %arg6[%c7_163, %c0_164, %c0_165] : memref<8x8x128xf32, #tpu.memory_space<vmem>>, vector<1x8x128xf32>
    %342 = vector.shape_cast %341 : vector<1x8x128xf32> to vector<8x128xf32>
    %343 = vector.shape_cast %340 : vector<8x128xf32> to vector<1x8x128xf32>
    tpu.vector_store %arg6[%c7_163, %c0_164, %c0_165], %343 {strides = array<i32>} : memref<8x8x128xf32, #tpu.memory_space<vmem>>, vector<1x8x128xf32>,
    %c0_166 = arith.constant 0 : index
    %c0_167 = arith.constant 0 : index
    %344 = vector.load %arg8[%c0_166, %c0_167] : memref<8x128xf32, #tpu.memory_space<vmem>>, vector<8x128xf32>
    tpu.vector_store %arg8[%c0_166, %c0_167], %340 {strides = array<i32>} : memref<8x128xf32, #tpu.memory_space<vmem>>, vector<8x128xf32>,
    %c0_168 = arith.constant 0 : index
    %c0_169 = arith.constant 0 : index
    %345 = vector.load %arg9[%c0_168, %c0_169] : memref<8x128xf32, #tpu.memory_space<vmem>>, vector<8x128xf32>
    tpu.vector_store %arg9[%c0_168, %c0_169], %338 {strides = array<i32>} : memref<8x128xf32, #tpu.memory_space<vmem>>, vector<8x128xf32>,
    %c1_i32 = arith.constant 1 : i32
    %346 = arith.cmpi eq, %arg1, %c1_i32 : i32
    %347 = arith.extui %346 : i1 to i32
    %c0_i32_170 = arith.constant 0 : i32
    %348 = arith.cmpi ne, %347, %c0_i32_170 : i32
    scf.if %348 {
      %c0_171 = arith.constant 0 : index
      %c0_172 = arith.constant 0 : index
      %349 = vector.load %arg7[%c0_171, %c0_172] : memref<8x128xf32, #tpu.memory_space<vmem>>, vector<8x128xf32>
      tpu.vector_store %arg7[%c0_171, %c0_172], %338 {strides = array<i32>} : memref<8x128xf32, #tpu.memory_space<vmem>>, vector<8x128xf32>,
    } else {
    }
    return
  }
  func.func @transform_0(%arg0: i32, %arg1: i32) -> (i32, i32, i32) {
    %c0_i32 = arith.constant 0 : i32
    %c0_i32_0 = arith.constant 0 : i32
    return %arg1, %arg0, %c0_i32 : i32, i32, i32
  }
  func.func @transform_1(%arg0: i32, %arg1: i32) -> (i32, i32) {
    %c0_i32 = arith.constant 0 : i32
    %c0_i32_0 = arith.constant 0 : i32
    %c0_i32_1 = arith.constant 0 : i32
    return %c0_i32, %c0_i32_0 : i32, i32
  }
  func.func @transform_2(%arg0: i32, %arg1: i32) -> (i32, i32) {
    %c0_i32 = arith.constant 0 : i32
    %c0_i32_0 = arith.constant 0 : i32
    %c0_i32_1 = arith.constant 0 : i32
    return %c0_i32, %c0_i32_0 : i32, i32
  }
  func.func @transform_3(%arg0: i32, %arg1: i32) -> (i32, i32) {
    %c0_i32 = arith.constant 0 : i32
    %c0_i32_0 = arith.constant 0 : i32
    %c0_i32_1 = arith.constant 0 : i32
    return %c0_i32, %c0_i32_0 : i32, i32
  }
  func.func @transform_4(%arg0: i32, %arg1: i32) -> (i32, i32, i32) {
    %c0_i32 = arith.constant 0 : i32
    %c0_i32_0 = arith.constant 0 : i32
    return %arg1, %arg0, %c0_i32 : i32, i32, i32
  }
  func.func @transform_5(%arg0: i32, %arg1: i32) -> (i32, i32) {
    %c0_i32 = arith.constant 0 : i32
    %c0_i32_0 = arith.constant 0 : i32
    return %arg0, %c0_i32 : i32, i32
  }
}

module attributes {stable_mosaic.version = 11 : i64} {
  func.func @lstm_kernel(%arg0: i32, %arg1: i32, %arg2: memref<8x8x16xf32, #tpu.memory_space<vmem>>, %arg3: memref<16x512xf32, #tpu.memory_space<vmem>>, %arg4: memref<128x512xf32, #tpu.memory_space<vmem>>, %arg5: memref<1x512xf32, #tpu.memory_space<vmem>>, %arg6: memref<8x8x128xf32, #tpu.memory_space<vmem>>, %arg7: memref<8x128xf32, #tpu.memory_space<vmem>>, %arg8: memref<8x128xf32, #tpu.memory_space<vmem>>, %arg9: memref<8x128xf32, #tpu.memory_space<vmem>>) attributes {dimension_semantics = [#tpu.dimension_semantics<parallel>, #tpu.dimension_semantics<arbitrary>], iteration_bounds = array<i64: 1, 2>, scalar_prefetch = 0 : i64, scratch_operands = 2 : i64, tpu.core_type = #tpu.core_type<tc>, window_params = [{transform_indices = @transform_0, window_bounds = array<i64: 8, 8, 16>}, {pipeline_mode = #tpu.pipeline_mode<synchronous>, transform_indices = @transform_1, window_bounds = array<i64: 16, 512>}, {pipeline_mode = #tpu.pipeline_mode<synchronous>, transform_indices = @transform_2, window_bounds = array<i64: 128, 512>}, {pipeline_mode = #tpu.pipeline_mode<synchronous>, transform_indices = @transform_3, window_bounds = array<i64: 1, 512>}, {transform_indices = @transform_4, window_bounds = array<i64: 8, 8, 128>}, {transform_indices = @transform_5, window_bounds = array<i64: 8, 128>}]} {
    %c0_i32 = arith.constant 0 : i32
    %0 = arith.cmpi eq, %arg1, %c0_i32 : i32
    %1 = arith.extui %0 : i1 to i32
    %c0_i32_0 = arith.constant 0 : i32
    %2 = arith.cmpi ne, %1, %c0_i32_0 : i32
    scf.if %2 {
      %cst_171 = arith.constant 0.000000e+00 : f32
      %349 = vector.broadcast %cst_171 : f32 to vector<8x128xf32>
      %c0_172 = arith.constant 0 : index
      %c0_173 = arith.constant 0 : index
      %350 = vector.load %arg8[%c0_172, %c0_173] : memref<8x128xf32, #tpu.memory_space<vmem>>, vector<8x128xf32>
      tpu.vector_store %arg8[%c0_172, %c0_173], %349 {strides = array<i32>} : memref<8x128xf32, #tpu.memory_space<vmem>>, vector<8x128xf32>,
      %cst_174 = arith.constant 0.000000e+00 : f32
      %351 = vector.broadcast %cst_174 : f32 to vector<8x128xf32>
      %c0_175 = arith.constant 0 : index
      %c0_176 = arith.constant 0 : index
      %352 = vector.load %arg9[%c0_175, %c0_176] : memref<8x128xf32, #tpu.memory_space<vmem>>, vector<8x128xf32>
      tpu.vector_store %arg9[%c0_175, %c0_176], %351 {strides = array<i32>} : memref<8x128xf32, #tpu.memory_space<vmem>>, vector<8x128xf32>,
    } else {
    }
    %c0 = arith.constant 0 : index
    %c0_1 = arith.constant 0 : index
    %3 = vector.load %arg8[%c0, %c0_1] : memref<8x128xf32, #tpu.memory_space<vmem>>, vector<8x128xf32>
    %c0_2 = arith.constant 0 : index
    %c0_3 = arith.constant 0 : index
    %4 = vector.load %arg9[%c0_2, %c0_3] : memref<8x128xf32, #tpu.memory_space<vmem>>, vector<8x128xf32>
    %c0_4 = arith.constant 0 : index
    %c0_5 = arith.constant 0 : index
    %5 = vector.load %arg5[%c0_4, %c0_5] : memref<1x512xf32, #tpu.memory_space<vmem>>, vector<1x512xf32>
    %6 = vector.shape_cast %5 : vector<1x512xf32> to vector<1x512xf32>
    %7 = vector.broadcast %6 : vector<1x512xf32> to vector<8x512xf32>
    %c0_6 = arith.constant 0 : index
    %c0_7 = arith.constant 0 : index
    %c0_8 = arith.constant 0 : index
    %8 = vector.load %arg2[%c0_6, %c0_7, %c0_8] : memref<8x8x16xf32, #tpu.memory_space<vmem>>, vector<1x8x16xf32>
    %9 = vector.shape_cast %8 : vector<1x8x16xf32> to vector<8x16xf32>
    %c0_9 = arith.constant 0 : index
    %c0_10 = arith.constant 0 : index
    %10 = vector.load %arg3[%c0_9, %c0_10] : memref<16x512xf32, #tpu.memory_space<vmem>>, vector<16x512xf32>
    %cst = arith.constant dense<0.000000e+00> : vector<8x512xf32>
    %11 = tpu.matmul %9, %10, %cst {dimension_numbers = #tpu.dot_dimension_numbers<[1], [0], [0], [1], [0, 0, 1, 1], [], []>} : vector<8x16xf32>, vector<16x512xf32>, vector<8x512xf32> -> vector<8x512xf32>
    %c0_11 = arith.constant 0 : index
    %c0_12 = arith.constant 0 : index
    %12 = vector.load %arg4[%c0_11, %c0_12] : memref<128x512xf32, #tpu.memory_space<vmem>>, vector<128x512xf32>
    %cst_13 = arith.constant dense<0.000000e+00> : vector<8x512xf32>
    %13 = tpu.matmul %3, %12, %cst_13 {dimension_numbers = #tpu.dot_dimension_numbers<[1], [0], [0], [1], [0, 0, 1, 1], [], []>} : vector<8x128xf32>, vector<128x512xf32>, vector<8x512xf32> -> vector<8x512xf32>
    %14 = arith.addf %11, %13 : vector<8x512xf32>
    %15 = arith.addf %14, %7 : vector<8x512xf32>
    %16 = vector.extract_strided_slice %15 {offsets = [0, 0], sizes = [8, 128], strides = [1, 1]} : vector<8x512xf32> to vector<8x128xf32>
    %cst_14 = arith.constant 5.000000e-01 : f32
    %17 = vector.broadcast %cst_14 : f32 to vector<8x128xf32>
    %18 = arith.mulf %17, %16 : vector<8x128xf32>
    %19 = math.tanh %18 : vector<8x128xf32>
    %cst_15 = arith.constant 5.000000e-01 : f32
    %20 = vector.broadcast %cst_15 : f32 to vector<8x128xf32>
    %21 = arith.mulf %20, %19 : vector<8x128xf32>
    %cst_16 = arith.constant 5.000000e-01 : f32
    %22 = vector.broadcast %cst_16 : f32 to vector<8x128xf32>
    %23 = arith.addf %21, %22 : vector<8x128xf32>
    %24 = vector.extract_strided_slice %15 {offsets = [0, 128], sizes = [8, 128], strides = [1, 1]} : vector<8x512xf32> to vector<8x128xf32>
    %cst_17 = arith.constant 5.000000e-01 : f32
    %25 = vector.broadcast %cst_17 : f32 to vector<8x128xf32>
    %26 = arith.mulf %25, %24 : vector<8x128xf32>
    %27 = math.tanh %26 : vector<8x128xf32>
    %cst_18 = arith.constant 5.000000e-01 : f32
    %28 = vector.broadcast %cst_18 : f32 to vector<8x128xf32>
    %29 = arith.mulf %28, %27 : vector<8x128xf32>
    %cst_19 = arith.constant 5.000000e-01 : f32
    %30 = vector.broadcast %cst_19 : f32 to vector<8x128xf32>
    %31 = arith.addf %29, %30 : vector<8x128xf32>
    %32 = vector.extract_strided_slice %15 {offsets = [0, 256], sizes = [8, 128], strides = [1, 1]} : vector<8x512xf32> to vector<8x128xf32>
    %33 = math.tanh %32 : vector<8x128xf32>
    %34 = vector.extract_strided_slice %15 {offsets = [0, 384], sizes = [8, 128], strides = [1, 1]} : vector<8x512xf32> to vector<8x128xf32>
    %cst_20 = arith.constant 5.000000e-01 : f32
    %35 = vector.broadcast %cst_20 : f32 to vector<8x128xf32>
    %36 = arith.mulf %35, %34 : vector<8x128xf32>
    %37 = math.tanh %36 : vector<8x128xf32>
    %cst_21 = arith.constant 5.000000e-01 : f32
    %38 = vector.broadcast %cst_21 : f32 to vector<8x128xf32>
    %39 = arith.mulf %38, %37 : vector<8x128xf32>
    %cst_22 = arith.constant 5.000000e-01 : f32
    %40 = vector.broadcast %cst_22 : f32 to vector<8x128xf32>
    %41 = arith.addf %39, %40 : vector<8x128xf32>
    %42 = arith.mulf %23, %4 : vector<8x128xf32>
    %43 = arith.mulf %31, %33 : vector<8x128xf32>
    %44 = arith.addf %42, %43 : vector<8x128xf32>
    %45 = math.tanh %44 : vector<8x128xf32>
    %46 = arith.mulf %41, %45 : vector<8x128xf32>
    %c0_23 = arith.constant 0 : index
    %c0_24 = arith.constant 0 : index
    %c0_25 = arith.constant 0 : index
    %47 = vector.load %arg6[%c0_23, %c0_24, %c0_25] : memref<8x8x128xf32, #tpu.memory_space<vmem>>, vector<1x8x128xf32>
    %48 = vector.shape_cast %47 : vector<1x8x128xf32> to vector<8x128xf32>
    %49 = vector.shape_cast %46 : vector<8x128xf32> to vector<1x8x128xf32>
    tpu.vector_store %arg6[%c0_23, %c0_24, %c0_25], %49 {strides = array<i32>} : memref<8x8x128xf32, #tpu.memory_space<vmem>>, vector<1x8x128xf32>,
    %c1 = arith.constant 1 : index
    %c0_26 = arith.constant 0 : index
    %c0_27 = arith.constant 0 : index
    %50 = vector.load %arg2[%c1, %c0_26, %c0_27] : memref<8x8x16xf32, #tpu.memory_space<vmem>>, vector<1x8x16xf32>
    %51 = vector.shape_cast %50 : vector<1x8x16xf32> to vector<8x16xf32>
    %c0_28 = arith.constant 0 : index
    %c0_29 = arith.constant 0 : index
    %52 = vector.load %arg3[%c0_28, %c0_29] : memref<16x512xf32, #tpu.memory_space<vmem>>, vector<16x512xf32>
    %cst_30 = arith.constant dense<0.000000e+00> : vector<8x512xf32>
    %53 = tpu.matmul %51, %52, %cst_30 {dimension_numbers = #tpu.dot_dimension_numbers<[1], [0], [0], [1], [0, 0, 1, 1], [], []>} : vector<8x16xf32>, vector<16x512xf32>, vector<8x512xf32> -> vector<8x512xf32>
    %c0_31 = arith.constant 0 : index
    %c0_32 = arith.constant 0 : index
    %54 = vector.load %arg4[%c0_31, %c0_32] : memref<128x512xf32, #tpu.memory_space<vmem>>, vector<128x512xf32>
    %cst_33 = arith.constant dense<0.000000e+00> : vector<8x512xf32>
    %55 = tpu.matmul %46, %54, %cst_33 {dimension_numbers = #tpu.dot_dimension_numbers<[1], [0], [0], [1], [0, 0, 1, 1], [], []>} : vector<8x128xf32>, vector<128x512xf32>, vector<8x512xf32> -> vector<8x512xf32>
    %56 = arith.addf %53, %55 : vector<8x512xf32>
    %57 = arith.addf %56, %7 : vector<8x512xf32>
    %58 = vector.extract_strided_slice %57 {offsets = [0, 0], sizes = [8, 128], strides = [1, 1]} : vector<8x512xf32> to vector<8x128xf32>
    %cst_34 = arith.constant 5.000000e-01 : f32
    %59 = vector.broadcast %cst_34 : f32 to vector<8x128xf32>
    %60 = arith.mulf %59, %58 : vector<8x128xf32>
    %61 = math.tanh %60 : vector<8x128xf32>
    %cst_35 = arith.constant 5.000000e-01 : f32
    %62 = vector.broadcast %cst_35 : f32 to vector<8x128xf32>
    %63 = arith.mulf %62, %61 : vector<8x128xf32>
    %cst_36 = arith.constant 5.000000e-01 : f32
    %64 = vector.broadcast %cst_36 : f32 to vector<8x128xf32>
    %65 = arith.addf %63, %64 : vector<8x128xf32>
    %66 = vector.extract_strided_slice %57 {offsets = [0, 128], sizes = [8, 128], strides = [1, 1]} : vector<8x512xf32> to vector<8x128xf32>
    %cst_37 = arith.constant 5.000000e-01 : f32
    %67 = vector.broadcast %cst_37 : f32 to vector<8x128xf32>
    %68 = arith.mulf %67, %66 : vector<8x128xf32>
    %69 = math.tanh %68 : vector<8x128xf32>
    %cst_38 = arith.constant 5.000000e-01 : f32
    %70 = vector.broadcast %cst_38 : f32 to vector<8x128xf32>
    %71 = arith.mulf %70, %69 : vector<8x128xf32>
    %cst_39 = arith.constant 5.000000e-01 : f32
    %72 = vector.broadcast %cst_39 : f32 to vector<8x128xf32>
    %73 = arith.addf %71, %72 : vector<8x128xf32>
    %74 = vector.extract_strided_slice %57 {offsets = [0, 256], sizes = [8, 128], strides = [1, 1]} : vector<8x512xf32> to vector<8x128xf32>
    %75 = math.tanh %74 : vector<8x128xf32>
    %76 = vector.extract_strided_slice %57 {offsets = [0, 384], sizes = [8, 128], strides = [1, 1]} : vector<8x512xf32> to vector<8x128xf32>
    %cst_40 = arith.constant 5.000000e-01 : f32
    %77 = vector.broadcast %cst_40 : f32 to vector<8x128xf32>
    %78 = arith.mulf %77, %76 : vector<8x128xf32>
    %79 = math.tanh %78 : vector<8x128xf32>
    %cst_41 = arith.constant 5.000000e-01 : f32
    %80 = vector.broadcast %cst_41 : f32 to vector<8x128xf32>
    %81 = arith.mulf %80, %79 : vector<8x128xf32>
    %cst_42 = arith.constant 5.000000e-01 : f32
    %82 = vector.broadcast %cst_42 : f32 to vector<8x128xf32>
    %83 = arith.addf %81, %82 : vector<8x128xf32>
    %84 = arith.mulf %65, %44 : vector<8x128xf32>
    %85 = arith.mulf %73, %75 : vector<8x128xf32>
    %86 = arith.addf %84, %85 : vector<8x128xf32>
    %87 = math.tanh %86 : vector<8x128xf32>
    %88 = arith.mulf %83, %87 : vector<8x128xf32>
    %c1_43 = arith.constant 1 : index
    %c0_44 = arith.constant 0 : index
    %c0_45 = arith.constant 0 : index
    %89 = vector.load %arg6[%c1_43, %c0_44, %c0_45] : memref<8x8x128xf32, #tpu.memory_space<vmem>>, vector<1x8x128xf32>
    %90 = vector.shape_cast %89 : vector<1x8x128xf32> to vector<8x128xf32>
    %91 = vector.shape_cast %88 : vector<8x128xf32> to vector<1x8x128xf32>
    tpu.vector_store %arg6[%c1_43, %c0_44, %c0_45], %91 {strides = array<i32>} : memref<8x8x128xf32, #tpu.memory_space<vmem>>, vector<1x8x128xf32>,
    %c2 = arith.constant 2 : index
    %c0_46 = arith.constant 0 : index
    %c0_47 = arith.constant 0 : index
    %92 = vector.load %arg2[%c2, %c0_46, %c0_47] : memref<8x8x16xf32, #tpu.memory_space<vmem>>, vector<1x8x16xf32>
    %93 = vector.shape_cast %92 : vector<1x8x16xf32> to vector<8x16xf32>
    %c0_48 = arith.constant 0 : index
    %c0_49 = arith.constant 0 : index
    %94 = vector.load %arg3[%c0_48, %c0_49] : memref<16x512xf32, #tpu.memory_space<vmem>>, vector<16x512xf32>
    %cst_50 = arith.constant dense<0.000000e+00> : vector<8x512xf32>
    %95 = tpu.matmul %93, %94, %cst_50 {dimension_numbers = #tpu.dot_dimension_numbers<[1], [0], [0], [1], [0, 0, 1, 1], [], []>} : vector<8x16xf32>, vector<16x512xf32>, vector<8x512xf32> -> vector<8x512xf32>
    %c0_51 = arith.constant 0 : index
    %c0_52 = arith.constant 0 : index
    %96 = vector.load %arg4[%c0_51, %c0_52] : memref<128x512xf32, #tpu.memory_space<vmem>>, vector<128x512xf32>
    %cst_53 = arith.constant dense<0.000000e+00> : vector<8x512xf32>
    %97 = tpu.matmul %88, %96, %cst_53 {dimension_numbers = #tpu.dot_dimension_numbers<[1], [0], [0], [1], [0, 0, 1, 1], [], []>} : vector<8x128xf32>, vector<128x512xf32>, vector<8x512xf32> -> vector<8x512xf32>
    %98 = arith.addf %95, %97 : vector<8x512xf32>
    %99 = arith.addf %98, %7 : vector<8x512xf32>
    %100 = vector.extract_strided_slice %99 {offsets = [0, 0], sizes = [8, 128], strides = [1, 1]} : vector<8x512xf32> to vector<8x128xf32>
    %cst_54 = arith.constant 5.000000e-01 : f32
    %101 = vector.broadcast %cst_54 : f32 to vector<8x128xf32>
    %102 = arith.mulf %101, %100 : vector<8x128xf32>
    %103 = math.tanh %102 : vector<8x128xf32>
    %cst_55 = arith.constant 5.000000e-01 : f32
    %104 = vector.broadcast %cst_55 : f32 to vector<8x128xf32>
    %105 = arith.mulf %104, %103 : vector<8x128xf32>
    %cst_56 = arith.constant 5.000000e-01 : f32
    %106 = vector.broadcast %cst_56 : f32 to vector<8x128xf32>
    %107 = arith.addf %105, %106 : vector<8x128xf32>
    %108 = vector.extract_strided_slice %99 {offsets = [0, 128], sizes = [8, 128], strides = [1, 1]} : vector<8x512xf32> to vector<8x128xf32>
    %cst_57 = arith.constant 5.000000e-01 : f32
    %109 = vector.broadcast %cst_57 : f32 to vector<8x128xf32>
    %110 = arith.mulf %109, %108 : vector<8x128xf32>
    %111 = math.tanh %110 : vector<8x128xf32>
    %cst_58 = arith.constant 5.000000e-01 : f32
    %112 = vector.broadcast %cst_58 : f32 to vector<8x128xf32>
    %113 = arith.mulf %112, %111 : vector<8x128xf32>
    %cst_59 = arith.constant 5.000000e-01 : f32
    %114 = vector.broadcast %cst_59 : f32 to vector<8x128xf32>
    %115 = arith.addf %113, %114 : vector<8x128xf32>
    %116 = vector.extract_strided_slice %99 {offsets = [0, 256], sizes = [8, 128], strides = [1, 1]} : vector<8x512xf32> to vector<8x128xf32>
    %117 = math.tanh %116 : vector<8x128xf32>
    %118 = vector.extract_strided_slice %99 {offsets = [0, 384], sizes = [8, 128], strides = [1, 1]} : vector<8x512xf32> to vector<8x128xf32>
    %cst_60 = arith.constant 5.000000e-01 : f32
    %119 = vector.broadcast %cst_60 : f32 to vector<8x128xf32>
    %120 = arith.mulf %119, %118 : vector<8x128xf32>
    %121 = math.tanh %120 : vector<8x128xf32>
    %cst_61 = arith.constant 5.000000e-01 : f32
    %122 = vector.broadcast %cst_61 : f32 to vector<8x128xf32>
    %123 = arith.mulf %122, %121 : vector<8x128xf32>
    %cst_62 = arith.constant 5.000000e-01 : f32
    %124 = vector.broadcast %cst_62 : f32 to vector<8x128xf32>
    %125 = arith.addf %123, %124 : vector<8x128xf32>
    %126 = arith.mulf %107, %86 : vector<8x128xf32>
    %127 = arith.mulf %115, %117 : vector<8x128xf32>
    %128 = arith.addf %126, %127 : vector<8x128xf32>
    %129 = math.tanh %128 : vector<8x128xf32>
    %130 = arith.mulf %125, %129 : vector<8x128xf32>
    %c2_63 = arith.constant 2 : index
    %c0_64 = arith.constant 0 : index
    %c0_65 = arith.constant 0 : index
    %131 = vector.load %arg6[%c2_63, %c0_64, %c0_65] : memref<8x8x128xf32, #tpu.memory_space<vmem>>, vector<1x8x128xf32>
    %132 = vector.shape_cast %131 : vector<1x8x128xf32> to vector<8x128xf32>
    %133 = vector.shape_cast %130 : vector<8x128xf32> to vector<1x8x128xf32>
    tpu.vector_store %arg6[%c2_63, %c0_64, %c0_65], %133 {strides = array<i32>} : memref<8x8x128xf32, #tpu.memory_space<vmem>>, vector<1x8x128xf32>,
    %c3 = arith.constant 3 : index
    %c0_66 = arith.constant 0 : index
    %c0_67 = arith.constant 0 : index
    %134 = vector.load %arg2[%c3, %c0_66, %c0_67] : memref<8x8x16xf32, #tpu.memory_space<vmem>>, vector<1x8x16xf32>
    %135 = vector.shape_cast %134 : vector<1x8x16xf32> to vector<8x16xf32>
    %c0_68 = arith.constant 0 : index
    %c0_69 = arith.constant 0 : index
    %136 = vector.load %arg3[%c0_68, %c0_69] : memref<16x512xf32, #tpu.memory_space<vmem>>, vector<16x512xf32>
    %cst_70 = arith.constant dense<0.000000e+00> : vector<8x512xf32>
    %137 = tpu.matmul %135, %136, %cst_70 {dimension_numbers = #tpu.dot_dimension_numbers<[1], [0], [0], [1], [0, 0, 1, 1], [], []>} : vector<8x16xf32>, vector<16x512xf32>, vector<8x512xf32> -> vector<8x512xf32>
    %c0_71 = arith.constant 0 : index
    %c0_72 = arith.constant 0 : index
    %138 = vector.load %arg4[%c0_71, %c0_72] : memref<128x512xf32, #tpu.memory_space<vmem>>, vector<128x512xf32>
    %cst_73 = arith.constant dense<0.000000e+00> : vector<8x512xf32>
    %139 = tpu.matmul %130, %138, %cst_73 {dimension_numbers = #tpu.dot_dimension_numbers<[1], [0], [0], [1], [0, 0, 1, 1], [], []>} : vector<8x128xf32>, vector<128x512xf32>, vector<8x512xf32> -> vector<8x512xf32>
    %140 = arith.addf %137, %139 : vector<8x512xf32>
    %141 = arith.addf %140, %7 : vector<8x512xf32>
    %142 = vector.extract_strided_slice %141 {offsets = [0, 0], sizes = [8, 128], strides = [1, 1]} : vector<8x512xf32> to vector<8x128xf32>
    %cst_74 = arith.constant 5.000000e-01 : f32
    %143 = vector.broadcast %cst_74 : f32 to vector<8x128xf32>
    %144 = arith.mulf %143, %142 : vector<8x128xf32>
    %145 = math.tanh %144 : vector<8x128xf32>
    %cst_75 = arith.constant 5.000000e-01 : f32
    %146 = vector.broadcast %cst_75 : f32 to vector<8x128xf32>
    %147 = arith.mulf %146, %145 : vector<8x128xf32>
    %cst_76 = arith.constant 5.000000e-01 : f32
    %148 = vector.broadcast %cst_76 : f32 to vector<8x128xf32>
    %149 = arith.addf %147, %148 : vector<8x128xf32>
    %150 = vector.extract_strided_slice %141 {offsets = [0, 128], sizes = [8, 128], strides = [1, 1]} : vector<8x512xf32> to vector<8x128xf32>
    %cst_77 = arith.constant 5.000000e-01 : f32
    %151 = vector.broadcast %cst_77 : f32 to vector<8x128xf32>
    %152 = arith.mulf %151, %150 : vector<8x128xf32>
    %153 = math.tanh %152 : vector<8x128xf32>
    %cst_78 = arith.constant 5.000000e-01 : f32
    %154 = vector.broadcast %cst_78 : f32 to vector<8x128xf32>
    %155 = arith.mulf %154, %153 : vector<8x128xf32>
    %cst_79 = arith.constant 5.000000e-01 : f32
    %156 = vector.broadcast %cst_79 : f32 to vector<8x128xf32>
    %157 = arith.addf %155, %156 : vector<8x128xf32>
    %158 = vector.extract_strided_slice %141 {offsets = [0, 256], sizes = [8, 128], strides = [1, 1]} : vector<8x512xf32> to vector<8x128xf32>
    %159 = math.tanh %158 : vector<8x128xf32>
    %160 = vector.extract_strided_slice %141 {offsets = [0, 384], sizes = [8, 128], strides = [1, 1]} : vector<8x512xf32> to vector<8x128xf32>
    %cst_80 = arith.constant 5.000000e-01 : f32
    %161 = vector.broadcast %cst_80 : f32 to vector<8x128xf32>
    %162 = arith.mulf %161, %160 : vector<8x128xf32>
    %163 = math.tanh %162 : vector<8x128xf32>
    %cst_81 = arith.constant 5.000000e-01 : f32
    %164 = vector.broadcast %cst_81 : f32 to vector<8x128xf32>
    %165 = arith.mulf %164, %163 : vector<8x128xf32>
    %cst_82 = arith.constant 5.000000e-01 : f32
    %166 = vector.broadcast %cst_82 : f32 to vector<8x128xf32>
    %167 = arith.addf %165, %166 : vector<8x128xf32>
    %168 = arith.mulf %149, %128 : vector<8x128xf32>
    %169 = arith.mulf %157, %159 : vector<8x128xf32>
    %170 = arith.addf %168, %169 : vector<8x128xf32>
    %171 = math.tanh %170 : vector<8x128xf32>
    %172 = arith.mulf %167, %171 : vector<8x128xf32>
    %c3_83 = arith.constant 3 : index
    %c0_84 = arith.constant 0 : index
    %c0_85 = arith.constant 0 : index
    %173 = vector.load %arg6[%c3_83, %c0_84, %c0_85] : memref<8x8x128xf32, #tpu.memory_space<vmem>>, vector<1x8x128xf32>
    %174 = vector.shape_cast %173 : vector<1x8x128xf32> to vector<8x128xf32>
    %175 = vector.shape_cast %172 : vector<8x128xf32> to vector<1x8x128xf32>
    tpu.vector_store %arg6[%c3_83, %c0_84, %c0_85], %175 {strides = array<i32>} : memref<8x8x128xf32, #tpu.memory_space<vmem>>, vector<1x8x128xf32>,
    %c4 = arith.constant 4 : index
    %c0_86 = arith.constant 0 : index
    %c0_87 = arith.constant 0 : index
    %176 = vector.load %arg2[%c4, %c0_86, %c0_87] : memref<8x8x16xf32, #tpu.memory_space<vmem>>, vector<1x8x16xf32>
    %177 = vector.shape_cast %176 : vector<1x8x16xf32> to vector<8x16xf32>
    %c0_88 = arith.constant 0 : index
    %c0_89 = arith.constant 0 : index
    %178 = vector.load %arg3[%c0_88, %c0_89] : memref<16x512xf32, #tpu.memory_space<vmem>>, vector<16x512xf32>
    %cst_90 = arith.constant dense<0.000000e+00> : vector<8x512xf32>
    %179 = tpu.matmul %177, %178, %cst_90 {dimension_numbers = #tpu.dot_dimension_numbers<[1], [0], [0], [1], [0, 0, 1, 1], [], []>} : vector<8x16xf32>, vector<16x512xf32>, vector<8x512xf32> -> vector<8x512xf32>
    %c0_91 = arith.constant 0 : index
    %c0_92 = arith.constant 0 : index
    %180 = vector.load %arg4[%c0_91, %c0_92] : memref<128x512xf32, #tpu.memory_space<vmem>>, vector<128x512xf32>
    %cst_93 = arith.constant dense<0.000000e+00> : vector<8x512xf32>
    %181 = tpu.matmul %172, %180, %cst_93 {dimension_numbers = #tpu.dot_dimension_numbers<[1], [0], [0], [1], [0, 0, 1, 1], [], []>} : vector<8x128xf32>, vector<128x512xf32>, vector<8x512xf32> -> vector<8x512xf32>
    %182 = arith.addf %179, %181 : vector<8x512xf32>
    %183 = arith.addf %182, %7 : vector<8x512xf32>
    %184 = vector.extract_strided_slice %183 {offsets = [0, 0], sizes = [8, 128], strides = [1, 1]} : vector<8x512xf32> to vector<8x128xf32>
    %cst_94 = arith.constant 5.000000e-01 : f32
    %185 = vector.broadcast %cst_94 : f32 to vector<8x128xf32>
    %186 = arith.mulf %185, %184 : vector<8x128xf32>
    %187 = math.tanh %186 : vector<8x128xf32>
    %cst_95 = arith.constant 5.000000e-01 : f32
    %188 = vector.broadcast %cst_95 : f32 to vector<8x128xf32>
    %189 = arith.mulf %188, %187 : vector<8x128xf32>
    %cst_96 = arith.constant 5.000000e-01 : f32
    %190 = vector.broadcast %cst_96 : f32 to vector<8x128xf32>
    %191 = arith.addf %189, %190 : vector<8x128xf32>
    %192 = vector.extract_strided_slice %183 {offsets = [0, 128], sizes = [8, 128], strides = [1, 1]} : vector<8x512xf32> to vector<8x128xf32>
    %cst_97 = arith.constant 5.000000e-01 : f32
    %193 = vector.broadcast %cst_97 : f32 to vector<8x128xf32>
    %194 = arith.mulf %193, %192 : vector<8x128xf32>
    %195 = math.tanh %194 : vector<8x128xf32>
    %cst_98 = arith.constant 5.000000e-01 : f32
    %196 = vector.broadcast %cst_98 : f32 to vector<8x128xf32>
    %197 = arith.mulf %196, %195 : vector<8x128xf32>
    %cst_99 = arith.constant 5.000000e-01 : f32
    %198 = vector.broadcast %cst_99 : f32 to vector<8x128xf32>
    %199 = arith.addf %197, %198 : vector<8x128xf32>
    %200 = vector.extract_strided_slice %183 {offsets = [0, 256], sizes = [8, 128], strides = [1, 1]} : vector<8x512xf32> to vector<8x128xf32>
    %201 = math.tanh %200 : vector<8x128xf32>
    %202 = vector.extract_strided_slice %183 {offsets = [0, 384], sizes = [8, 128], strides = [1, 1]} : vector<8x512xf32> to vector<8x128xf32>
    %cst_100 = arith.constant 5.000000e-01 : f32
    %203 = vector.broadcast %cst_100 : f32 to vector<8x128xf32>
    %204 = arith.mulf %203, %202 : vector<8x128xf32>
    %205 = math.tanh %204 : vector<8x128xf32>
    %cst_101 = arith.constant 5.000000e-01 : f32
    %206 = vector.broadcast %cst_101 : f32 to vector<8x128xf32>
    %207 = arith.mulf %206, %205 : vector<8x128xf32>
    %cst_102 = arith.constant 5.000000e-01 : f32
    %208 = vector.broadcast %cst_102 : f32 to vector<8x128xf32>
    %209 = arith.addf %207, %208 : vector<8x128xf32>
    %210 = arith.mulf %191, %170 : vector<8x128xf32>
    %211 = arith.mulf %199, %201 : vector<8x128xf32>
    %212 = arith.addf %210, %211 : vector<8x128xf32>
    %213 = math.tanh %212 : vector<8x128xf32>
    %214 = arith.mulf %209, %213 : vector<8x128xf32>
    %c4_103 = arith.constant 4 : index
    %c0_104 = arith.constant 0 : index
    %c0_105 = arith.constant 0 : index
    %215 = vector.load %arg6[%c4_103, %c0_104, %c0_105] : memref<8x8x128xf32, #tpu.memory_space<vmem>>, vector<1x8x128xf32>
    %216 = vector.shape_cast %215 : vector<1x8x128xf32> to vector<8x128xf32>
    %217 = vector.shape_cast %214 : vector<8x128xf32> to vector<1x8x128xf32>
    tpu.vector_store %arg6[%c4_103, %c0_104, %c0_105], %217 {strides = array<i32>} : memref<8x8x128xf32, #tpu.memory_space<vmem>>, vector<1x8x128xf32>,
    %c5 = arith.constant 5 : index
    %c0_106 = arith.constant 0 : index
    %c0_107 = arith.constant 0 : index
    %218 = vector.load %arg2[%c5, %c0_106, %c0_107] : memref<8x8x16xf32, #tpu.memory_space<vmem>>, vector<1x8x16xf32>
    %219 = vector.shape_cast %218 : vector<1x8x16xf32> to vector<8x16xf32>
    %c0_108 = arith.constant 0 : index
    %c0_109 = arith.constant 0 : index
    %220 = vector.load %arg3[%c0_108, %c0_109] : memref<16x512xf32, #tpu.memory_space<vmem>>, vector<16x512xf32>
    %cst_110 = arith.constant dense<0.000000e+00> : vector<8x512xf32>
    %221 = tpu.matmul %219, %220, %cst_110 {dimension_numbers = #tpu.dot_dimension_numbers<[1], [0], [0], [1], [0, 0, 1, 1], [], []>} : vector<8x16xf32>, vector<16x512xf32>, vector<8x512xf32> -> vector<8x512xf32>
    %c0_111 = arith.constant 0 : index
    %c0_112 = arith.constant 0 : index
    %222 = vector.load %arg4[%c0_111, %c0_112] : memref<128x512xf32, #tpu.memory_space<vmem>>, vector<128x512xf32>
    %cst_113 = arith.constant dense<0.000000e+00> : vector<8x512xf32>
    %223 = tpu.matmul %214, %222, %cst_113 {dimension_numbers = #tpu.dot_dimension_numbers<[1], [0], [0], [1], [0, 0, 1, 1], [], []>} : vector<8x128xf32>, vector<128x512xf32>, vector<8x512xf32> -> vector<8x512xf32>
    %224 = arith.addf %221, %223 : vector<8x512xf32>
    %225 = arith.addf %224, %7 : vector<8x512xf32>
    %226 = vector.extract_strided_slice %225 {offsets = [0, 0], sizes = [8, 128], strides = [1, 1]} : vector<8x512xf32> to vector<8x128xf32>
    %cst_114 = arith.constant 5.000000e-01 : f32
    %227 = vector.broadcast %cst_114 : f32 to vector<8x128xf32>
    %228 = arith.mulf %227, %226 : vector<8x128xf32>
    %229 = math.tanh %228 : vector<8x128xf32>
    %cst_115 = arith.constant 5.000000e-01 : f32
    %230 = vector.broadcast %cst_115 : f32 to vector<8x128xf32>
    %231 = arith.mulf %230, %229 : vector<8x128xf32>
    %cst_116 = arith.constant 5.000000e-01 : f32
    %232 = vector.broadcast %cst_116 : f32 to vector<8x128xf32>
    %233 = arith.addf %231, %232 : vector<8x128xf32>
    %234 = vector.extract_strided_slice %225 {offsets = [0, 128], sizes = [8, 128], strides = [1, 1]} : vector<8x512xf32> to vector<8x128xf32>
    %cst_117 = arith.constant 5.000000e-01 : f32
    %235 = vector.broadcast %cst_117 : f32 to vector<8x128xf32>
    %236 = arith.mulf %235, %234 : vector<8x128xf32>
    %237 = math.tanh %236 : vector<8x128xf32>
    %cst_118 = arith.constant 5.000000e-01 : f32
    %238 = vector.broadcast %cst_118 : f32 to vector<8x128xf32>
    %239 = arith.mulf %238, %237 : vector<8x128xf32>
    %cst_119 = arith.constant 5.000000e-01 : f32
    %240 = vector.broadcast %cst_119 : f32 to vector<8x128xf32>
    %241 = arith.addf %239, %240 : vector<8x128xf32>
    %242 = vector.extract_strided_slice %225 {offsets = [0, 256], sizes = [8, 128], strides = [1, 1]} : vector<8x512xf32> to vector<8x128xf32>
    %243 = math.tanh %242 : vector<8x128xf32>
    %244 = vector.extract_strided_slice %225 {offsets = [0, 384], sizes = [8, 128], strides = [1, 1]} : vector<8x512xf32> to vector<8x128xf32>
    %cst_120 = arith.constant 5.000000e-01 : f32
    %245 = vector.broadcast %cst_120 : f32 to vector<8x128xf32>
    %246 = arith.mulf %245, %244 : vector<8x128xf32>
    %247 = math.tanh %246 : vector<8x128xf32>
    %cst_121 = arith.constant 5.000000e-01 : f32
    %248 = vector.broadcast %cst_121 : f32 to vector<8x128xf32>
    %249 = arith.mulf %248, %247 : vector<8x128xf32>
    %cst_122 = arith.constant 5.000000e-01 : f32
    %250 = vector.broadcast %cst_122 : f32 to vector<8x128xf32>
    %251 = arith.addf %249, %250 : vector<8x128xf32>
    %252 = arith.mulf %233, %212 : vector<8x128xf32>
    %253 = arith.mulf %241, %243 : vector<8x128xf32>
    %254 = arith.addf %252, %253 : vector<8x128xf32>
    %255 = math.tanh %254 : vector<8x128xf32>
    %256 = arith.mulf %251, %255 : vector<8x128xf32>
    %c5_123 = arith.constant 5 : index
    %c0_124 = arith.constant 0 : index
    %c0_125 = arith.constant 0 : index
    %257 = vector.load %arg6[%c5_123, %c0_124, %c0_125] : memref<8x8x128xf32, #tpu.memory_space<vmem>>, vector<1x8x128xf32>
    %258 = vector.shape_cast %257 : vector<1x8x128xf32> to vector<8x128xf32>
    %259 = vector.shape_cast %256 : vector<8x128xf32> to vector<1x8x128xf32>
    tpu.vector_store %arg6[%c5_123, %c0_124, %c0_125], %259 {strides = array<i32>} : memref<8x8x128xf32, #tpu.memory_space<vmem>>, vector<1x8x128xf32>,
    %c6 = arith.constant 6 : index
    %c0_126 = arith.constant 0 : index
    %c0_127 = arith.constant 0 : index
    %260 = vector.load %arg2[%c6, %c0_126, %c0_127] : memref<8x8x16xf32, #tpu.memory_space<vmem>>, vector<1x8x16xf32>
    %261 = vector.shape_cast %260 : vector<1x8x16xf32> to vector<8x16xf32>
    %c0_128 = arith.constant 0 : index
    %c0_129 = arith.constant 0 : index
    %262 = vector.load %arg3[%c0_128, %c0_129] : memref<16x512xf32, #tpu.memory_space<vmem>>, vector<16x512xf32>
    %cst_130 = arith.constant dense<0.000000e+00> : vector<8x512xf32>
    %263 = tpu.matmul %261, %262, %cst_130 {dimension_numbers = #tpu.dot_dimension_numbers<[1], [0], [0], [1], [0, 0, 1, 1], [], []>} : vector<8x16xf32>, vector<16x512xf32>, vector<8x512xf32> -> vector<8x512xf32>
    %c0_131 = arith.constant 0 : index
    %c0_132 = arith.constant 0 : index
    %264 = vector.load %arg4[%c0_131, %c0_132] : memref<128x512xf32, #tpu.memory_space<vmem>>, vector<128x512xf32>
    %cst_133 = arith.constant dense<0.000000e+00> : vector<8x512xf32>
    %265 = tpu.matmul %256, %264, %cst_133 {dimension_numbers = #tpu.dot_dimension_numbers<[1], [0], [0], [1], [0, 0, 1, 1], [], []>} : vector<8x128xf32>, vector<128x512xf32>, vector<8x512xf32> -> vector<8x512xf32>
    %266 = arith.addf %263, %265 : vector<8x512xf32>
    %267 = arith.addf %266, %7 : vector<8x512xf32>
    %268 = vector.extract_strided_slice %267 {offsets = [0, 0], sizes = [8, 128], strides = [1, 1]} : vector<8x512xf32> to vector<8x128xf32>
    %cst_134 = arith.constant 5.000000e-01 : f32
    %269 = vector.broadcast %cst_134 : f32 to vector<8x128xf32>
    %270 = arith.mulf %269, %268 : vector<8x128xf32>
    %271 = math.tanh %270 : vector<8x128xf32>
    %cst_135 = arith.constant 5.000000e-01 : f32
    %272 = vector.broadcast %cst_135 : f32 to vector<8x128xf32>
    %273 = arith.mulf %272, %271 : vector<8x128xf32>
    %cst_136 = arith.constant 5.000000e-01 : f32
    %274 = vector.broadcast %cst_136 : f32 to vector<8x128xf32>
    %275 = arith.addf %273, %274 : vector<8x128xf32>
    %276 = vector.extract_strided_slice %267 {offsets = [0, 128], sizes = [8, 128], strides = [1, 1]} : vector<8x512xf32> to vector<8x128xf32>
    %cst_137 = arith.constant 5.000000e-01 : f32
    %277 = vector.broadcast %cst_137 : f32 to vector<8x128xf32>
    %278 = arith.mulf %277, %276 : vector<8x128xf32>
    %279 = math.tanh %278 : vector<8x128xf32>
    %cst_138 = arith.constant 5.000000e-01 : f32
    %280 = vector.broadcast %cst_138 : f32 to vector<8x128xf32>
    %281 = arith.mulf %280, %279 : vector<8x128xf32>
    %cst_139 = arith.constant 5.000000e-01 : f32
    %282 = vector.broadcast %cst_139 : f32 to vector<8x128xf32>
    %283 = arith.addf %281, %282 : vector<8x128xf32>
    %284 = vector.extract_strided_slice %267 {offsets = [0, 256], sizes = [8, 128], strides = [1, 1]} : vector<8x512xf32> to vector<8x128xf32>
    %285 = math.tanh %284 : vector<8x128xf32>
    %286 = vector.extract_strided_slice %267 {offsets = [0, 384], sizes = [8, 128], strides = [1, 1]} : vector<8x512xf32> to vector<8x128xf32>
    %cst_140 = arith.constant 5.000000e-01 : f32
    %287 = vector.broadcast %cst_140 : f32 to vector<8x128xf32>
    %288 = arith.mulf %287, %286 : vector<8x128xf32>
    %289 = math.tanh %288 : vector<8x128xf32>
    %cst_141 = arith.constant 5.000000e-01 : f32
    %290 = vector.broadcast %cst_141 : f32 to vector<8x128xf32>
    %291 = arith.mulf %290, %289 : vector<8x128xf32>
    %cst_142 = arith.constant 5.000000e-01 : f32
    %292 = vector.broadcast %cst_142 : f32 to vector<8x128xf32>
    %293 = arith.addf %291, %292 : vector<8x128xf32>
    %294 = arith.mulf %275, %254 : vector<8x128xf32>
    %295 = arith.mulf %283, %285 : vector<8x128xf32>
    %296 = arith.addf %294, %295 : vector<8x128xf32>
    %297 = math.tanh %296 : vector<8x128xf32>
    %298 = arith.mulf %293, %297 : vector<8x128xf32>
    %c6_143 = arith.constant 6 : index
    %c0_144 = arith.constant 0 : index
    %c0_145 = arith.constant 0 : index
    %299 = vector.load %arg6[%c6_143, %c0_144, %c0_145] : memref<8x8x128xf32, #tpu.memory_space<vmem>>, vector<1x8x128xf32>
    %300 = vector.shape_cast %299 : vector<1x8x128xf32> to vector<8x128xf32>
    %301 = vector.shape_cast %298 : vector<8x128xf32> to vector<1x8x128xf32>
    tpu.vector_store %arg6[%c6_143, %c0_144, %c0_145], %301 {strides = array<i32>} : memref<8x8x128xf32, #tpu.memory_space<vmem>>, vector<1x8x128xf32>,
    %c7 = arith.constant 7 : index
    %c0_146 = arith.constant 0 : index
    %c0_147 = arith.constant 0 : index
    %302 = vector.load %arg2[%c7, %c0_146, %c0_147] : memref<8x8x16xf32, #tpu.memory_space<vmem>>, vector<1x8x16xf32>
    %303 = vector.shape_cast %302 : vector<1x8x16xf32> to vector<8x16xf32>
    %c0_148 = arith.constant 0 : index
    %c0_149 = arith.constant 0 : index
    %304 = vector.load %arg3[%c0_148, %c0_149] : memref<16x512xf32, #tpu.memory_space<vmem>>, vector<16x512xf32>
    %cst_150 = arith.constant dense<0.000000e+00> : vector<8x512xf32>
    %305 = tpu.matmul %303, %304, %cst_150 {dimension_numbers = #tpu.dot_dimension_numbers<[1], [0], [0], [1], [0, 0, 1, 1], [], []>} : vector<8x16xf32>, vector<16x512xf32>, vector<8x512xf32> -> vector<8x512xf32>
    %c0_151 = arith.constant 0 : index
    %c0_152 = arith.constant 0 : index
    %306 = vector.load %arg4[%c0_151, %c0_152] : memref<128x512xf32, #tpu.memory_space<vmem>>, vector<128x512xf32>
    %cst_153 = arith.constant dense<0.000000e+00> : vector<8x512xf32>
    %307 = tpu.matmul %298, %306, %cst_153 {dimension_numbers = #tpu.dot_dimension_numbers<[1], [0], [0], [1], [0, 0, 1, 1], [], []>} : vector<8x128xf32>, vector<128x512xf32>, vector<8x512xf32> -> vector<8x512xf32>
    %308 = arith.addf %305, %307 : vector<8x512xf32>
    %309 = arith.addf %308, %7 : vector<8x512xf32>
    %310 = vector.extract_strided_slice %309 {offsets = [0, 0], sizes = [8, 128], strides = [1, 1]} : vector<8x512xf32> to vector<8x128xf32>
    %cst_154 = arith.constant 5.000000e-01 : f32
    %311 = vector.broadcast %cst_154 : f32 to vector<8x128xf32>
    %312 = arith.mulf %311, %310 : vector<8x128xf32>
    %313 = math.tanh %312 : vector<8x128xf32>
    %cst_155 = arith.constant 5.000000e-01 : f32
    %314 = vector.broadcast %cst_155 : f32 to vector<8x128xf32>
    %315 = arith.mulf %314, %313 : vector<8x128xf32>
    %cst_156 = arith.constant 5.000000e-01 : f32
    %316 = vector.broadcast %cst_156 : f32 to vector<8x128xf32>
    %317 = arith.addf %315, %316 : vector<8x128xf32>
    %318 = vector.extract_strided_slice %309 {offsets = [0, 128], sizes = [8, 128], strides = [1, 1]} : vector<8x512xf32> to vector<8x128xf32>
    %cst_157 = arith.constant 5.000000e-01 : f32
    %319 = vector.broadcast %cst_157 : f32 to vector<8x128xf32>
    %320 = arith.mulf %319, %318 : vector<8x128xf32>
    %321 = math.tanh %320 : vector<8x128xf32>
    %cst_158 = arith.constant 5.000000e-01 : f32
    %322 = vector.broadcast %cst_158 : f32 to vector<8x128xf32>
    %323 = arith.mulf %322, %321 : vector<8x128xf32>
    %cst_159 = arith.constant 5.000000e-01 : f32
    %324 = vector.broadcast %cst_159 : f32 to vector<8x128xf32>
    %325 = arith.addf %323, %324 : vector<8x128xf32>
    %326 = vector.extract_strided_slice %309 {offsets = [0, 256], sizes = [8, 128], strides = [1, 1]} : vector<8x512xf32> to vector<8x128xf32>
    %327 = math.tanh %326 : vector<8x128xf32>
    %328 = vector.extract_strided_slice %309 {offsets = [0, 384], sizes = [8, 128], strides = [1, 1]} : vector<8x512xf32> to vector<8x128xf32>
    %cst_160 = arith.constant 5.000000e-01 : f32
    %329 = vector.broadcast %cst_160 : f32 to vector<8x128xf32>
    %330 = arith.mulf %329, %328 : vector<8x128xf32>
    %331 = math.tanh %330 : vector<8x128xf32>
    %cst_161 = arith.constant 5.000000e-01 : f32
    %332 = vector.broadcast %cst_161 : f32 to vector<8x128xf32>
    %333 = arith.mulf %332, %331 : vector<8x128xf32>
    %cst_162 = arith.constant 5.000000e-01 : f32
    %334 = vector.broadcast %cst_162 : f32 to vector<8x128xf32>
    %335 = arith.addf %333, %334 : vector<8x128xf32>
    %336 = arith.mulf %317, %296 : vector<8x128xf32>
    %337 = arith.mulf %325, %327 : vector<8x128xf32>
    %338 = arith.addf %336, %337 : vector<8x128xf32>
    %339 = math.tanh %338 : vector<8x128xf32>
    %340 = arith.mulf %335, %339 : vector<8x128xf32>
    %c7_163 = arith.constant 7 : index
    %c0_164 = arith.constant 0 : index
    %c0_165 = arith.constant 0 : index
    %341 = vector.load %arg6[%c7_163, %c0_164, %c0_165] : memref<8x8x128xf32, #tpu.memory_space<vmem>>, vector<1x8x128xf32>
    %342 = vector.shape_cast %341 : vector<1x8x128xf32> to vector<8x128xf32>
    %343 = vector.shape_cast %340 : vector<8x128xf32> to vector<1x8x128xf32>
    tpu.vector_store %arg6[%c7_163, %c0_164, %c0_165], %343 {strides = array<i32>} : memref<8x8x128xf32, #tpu.memory_space<vmem>>, vector<1x8x128xf32>,
    %c0_166 = arith.constant 0 : index
    %c0_167 = arith.constant 0 : index
    %344 = vector.load %arg8[%c0_166, %c0_167] : memref<8x128xf32, #tpu.memory_space<vmem>>, vector<8x128xf32>
    tpu.vector_store %arg8[%c0_166, %c0_167], %340 {strides = array<i32>} : memref<8x128xf32, #tpu.memory_space<vmem>>, vector<8x128xf32>,
    %c0_168 = arith.constant 0 : index
    %c0_169 = arith.constant 0 : index
    %345 = vector.load %arg9[%c0_168, %c0_169] : memref<8x128xf32, #tpu.memory_space<vmem>>, vector<8x128xf32>
    tpu.vector_store %arg9[%c0_168, %c0_169], %338 {strides = array<i32>} : memref<8x128xf32, #tpu.memory_space<vmem>>, vector<8x128xf32>,
    %c1_i32 = arith.constant 1 : i32
    %346 = arith.cmpi eq, %arg1, %c1_i32 : i32
    %347 = arith.extui %346 : i1 to i32
    %c0_i32_170 = arith.constant 0 : i32
    %348 = arith.cmpi ne, %347, %c0_i32_170 : i32
    scf.if %348 {
      %c0_171 = arith.constant 0 : index
      %c0_172 = arith.constant 0 : index
      %349 = vector.load %arg7[%c0_171, %c0_172] : memref<8x128xf32, #tpu.memory_space<vmem>>, vector<8x128xf32>
      tpu.vector_store %arg7[%c0_171, %c0_172], %338 {strides = array<i32>} : memref<8x128xf32, #tpu.memory_space<vmem>>, vector<8x128xf32>,
    } else {
    }
    return
  }
  func.func @transform_0(%arg0: i32, %arg1: i32) -> (i32, i32, i32) {
    %c0_i32 = arith.constant 0 : i32
    %c0_i32_0 = arith.constant 0 : i32
    return %arg1, %arg0, %c0_i32 : i32, i32, i32
  }
  func.func @transform_1(%arg0: i32, %arg1: i32) -> (i32, i32) {
    %c0_i32 = arith.constant 0 : i32
    %c0_i32_0 = arith.constant 0 : i32
    %c0_i32_1 = arith.constant 0 : i32
    return %c0_i32, %c0_i32_0 : i32, i32
  }
  func.func @transform_2(%arg0: i32, %arg1: i32) -> (i32, i32) {
    %c0_i32 = arith.constant 0 : i32
    %c0_i32_0 = arith.constant 0 : i32
    %c0_i32_1 = arith.constant 0 : i32
    return %c0_i32, %c0_i32_0 : i32, i32
  }
  func.func @transform_3(%arg0: i32, %arg1: i32) -> (i32, i32) {
    %c0_i32 = arith.constant 0 : i32
    %c0_i32_0 = arith.constant 0 : i32
    %c0_i32_1 = arith.constant 0 : i32
    return %c0_i32, %c0_i32_0 : i32, i32
  }
  func.func @transform_4(%arg0: i32, %arg1: i32) -> (i32, i32, i32) {
    %c0_i32 = arith.constant 0 : i32
    %c0_i32_0 = arith.constant 0 : i32
    return %arg1, %arg0, %c0_i32 : i32, i32, i32
  }
  func.func @transform_5(%arg0: i32, %arg1: i32) -> (i32, i32) {
    %c0_i32 = arith.constant 0 : i32
    %c0_i32_0 = arith.constant 0 : i32
    return %arg0, %c0_i32 : i32, i32
  }
}

</mosaic_0001>

<llo_original>
// kernel: my_lstm_forward.1
$region0: #{my_lstm_forward.1}
  #allocation0 [shape = 'u32[]', space=smem, size = 0x4, offset = 0x4, fixed_abs, tag = 'smem constant byte address 0x4 - core index']
  #allocation1 [shape = 'u32[144,128]{1,0:T(1,128)}', space=vmem, size = 0x12000, scoped, tag = 'internal scratch']
  #allocation2 [shape = 'f32[8,128]{1,0:T(8,128)}', space=vmem, size = 0x1000, scoped, tag = 'scratch operand']
  #allocation3 [shape = 'f32[8,128]{1,0:T(8,128)}', space=vmem, size = 0x1000, scoped, tag = 'scratch operand']
  %s0 = inlined_call_operand.vmem [shape: f32[16,8,16], index: 0, kind: input, shape index: {}]
  %s1 = inlined_call_operand.vmem [shape: f32[16,512], index: 1, kind: input, shape index: {}]
  %s2 = inlined_call_operand.vmem [shape: f32[128,512], index: 2, kind: input, shape index: {}]
  %s3 = inlined_call_operand.vmem [shape: f32[1,512], index: 3, kind: input, shape index: {}]
  %s4 = inlined_call_operand.vmem [shape: f32[16,8,128], index: 4, kind: output, shape index: {0}]
  %s5 = inlined_call_operand.vmem [shape: f32[8,128], index: 5, kind: output, shape index: {1}]
  %6 = xla_tuple %s4, %s5
  %s7 = sld [smem:[#allocation0]]
  $region65: #{my_lstm_forward.1} parent=0
    _
  %s9 = ssub.s32 1, %s7
  %s10 = scalar_select 0, %s9, %s7
  loop: start=0, step=1, limit=4
  $region2: #{my_lstm_forward.1} parent=0 // loop_pre_header
    _
  $region3: #{my_lstm_forward.1} parent=0 // loop_header
    %s12 = sphi 0, %s16
    %p13 = scmp.ge.s32.totalorder %s12, 4
    %s19 = sphi 0, %s31
    %s20 = sphi 0, %s27
    %s21 = sphi 0, %s19
    %s22 = sphi 0, %s20
    %s23 = sphi 0, %s21
    %s24 = sphi 0, %s22
    %s36 = sphi 0, %s38
    %s39 = sphi 0, %s36
    %s40 = sphi 0, %s39
    %s56 = sphi 0, %s40
    %s60 = sphi 0, %s60
    %s62 = sphi 0, %s60
    %s63 = sphi 0, %s62
    %s77 = sphi 0, %s63
    %s81 = sphi 0, %s81
    %s83 = sphi 0, %s81
    %s84 = sphi 0, %s83
    %s98 = sphi 0, %s84
    %s102 = sphi 0, %s102
    %s104 = sphi 0, %s102
    %s105 = sphi 0, %s104
    %s119 = sphi 0, %s105
    %s127 = sphi 0, %s129
    %s130 = sphi 0, %s127
    %s131 = sphi 0, %s130
    %s147 = sphi 0, %s131
    %s153 = sphi 0, %s155
    %s156 = sphi 0, %s153
    %s157 = sphi 0, %s156
    %s173 = sphi 0, %s157
  $region4: #{my_lstm_forward.1} parent=0 // loop_header_branch
    %15 = sbr.rel (%p13) target = $region8
  $region5: #{my_lstm_forward.1} parent=0 // loop_body
    %s17 = ssub.s32 %s12, 1
    %s18 = ssub.s32 %s12, 2
    %s25 = sadd.s32 1, %s20
    %p26 = scmp.ge.s32.totalorder %s25, 2
    %s27 = scalar_select %p26, 0, %s25
    %s28 = sadd.s32 1, %s19
    %s29 = scalar_select %p26, %s28, %s19
    %p30 = scmp.ge.s32.totalorder %s29, 1
    %s31 = scalar_select %p30, 0, %s29
    %s32 = ssub.s32 %s20, %s27
    %s33 = ssub.s32 %s19, %s31
    %s34 = sor.u32 %s32, %s33
    %p35 = scmp.eq.s32.totalorder %s34, 0
    %s37 = sadd.s32 %s36, 1
    %s38 = scalar_select %p35, %s36, %s37
    %p41 = pneg %p35
    %p42 = scmp.eq.s32.totalorder %s12, 1
    %p43 = por %p41, %p42
    %p44 = scmp.ne.s32.totalorder %s36, %s39
    %p45 = scmp.eq.s32.totalorder %s12, 0
    %p46 = por %p44, %p45
    %p47 = scmp.ne.s32.totalorder %s36, %s39
    %p48 = scmp.eq.s32.totalorder %s17, 1
    %p49 = por %p47, %p48
    %p50 = scmp.ne.s32.totalorder %s39, %s40
    %p51 = scmp.eq.s32.totalorder %s17, 0
    %p52 = por %p50, %p51
    %p53 = scmp.ne.s32.totalorder %s39, %s40
    %p54 = scmp.eq.s32.totalorder %s18, 1
    %p55 = por %p53, %p54
    %p57 = scmp.ne.s32.totalorder %s40, %s56
    %p58 = scmp.eq.s32.totalorder %s18, 0
    %p59 = por %p57, %p58
    %s61 = sadd.s32 %s60, 1
    %p64 = scmp.eq.s32.totalorder %s12, 1
    %p65 = scmp.ne.s32.totalorder %s60, %s62
    %p66 = scmp.eq.s32.totalorder %s12, 0
    %p67 = por %p65, %p66
    %p68 = scmp.ne.s32.totalorder %s60, %s62
    %p69 = scmp.eq.s32.totalorder %s17, 1
    %p70 = por %p68, %p69
    %p71 = scmp.ne.s32.totalorder %s62, %s63
    %p72 = scmp.eq.s32.totalorder %s17, 0
    %p73 = por %p71, %p72
    %p74 = scmp.ne.s32.totalorder %s62, %s63
    %p75 = scmp.eq.s32.totalorder %s18, 1
    %p76 = por %p74, %p75
    %p78 = scmp.ne.s32.totalorder %s63, %s77
    %p79 = scmp.eq.s32.totalorder %s18, 0
    %p80 = por %p78, %p79
    %s82 = sadd.s32 %s81, 1
    %p85 = scmp.eq.s32.totalorder %s12, 1
    %p86 = scmp.ne.s32.totalorder %s81, %s83
    %p87 = scmp.eq.s32.totalorder %s12, 0
    %p88 = por %p86, %p87
    %p89 = scmp.ne.s32.totalorder %s81, %s83
    %p90 = scmp.eq.s32.totalorder %s17, 1
    %p91 = por %p89, %p90
    %p92 = scmp.ne.s32.totalorder %s83, %s84
    %p93 = scmp.eq.s32.totalorder %s17, 0
    %p94 = por %p92, %p93
    %p95 = scmp.ne.s32.totalorder %s83, %s84
    %p96 = scmp.eq.s32.totalorder %s18, 1
    %p97 = por %p95, %p96
    %p99 = scmp.ne.s32.totalorder %s84, %s98
    %p100 = scmp.eq.s32.totalorder %s18, 0
    %p101 = por %p99, %p100
    %s103 = sadd.s32 %s102, 1
    %p106 = scmp.eq.s32.totalorder %s12, 1
    %p107 = scmp.ne.s32.totalorder %s102, %s104
    %p108 = scmp.eq.s32.totalorder %s12, 0
    %p109 = por %p107, %p108
    %p110 = scmp.ne.s32.totalorder %s102, %s104
    %p111 = scmp.eq.s32.totalorder %s17, 1
    %p112 = por %p110, %p111
    %p113 = scmp.ne.s32.totalorder %s104, %s105
    %p114 = scmp.eq.s32.totalorder %s17, 0
    %p115 = por %p113, %p114
    %p116 = scmp.ne.s32.totalorder %s104, %s105
    %p117 = scmp.eq.s32.totalorder %s18, 1
    %p118 = por %p116, %p117
    %p120 = scmp.ne.s32.totalorder %s105, %s119
    %p121 = scmp.eq.s32.totalorder %s18, 0
    %p122 = por %p120, %p121
    %s123 = ssub.s32 %s20, %s27
    %s124 = ssub.s32 %s19, %s31
    %s125 = sor.u32 %s123, %s124
    %p126 = scmp.eq.s32.totalorder %s125, 0
    %s128 = sadd.s32 %s127, 1
    %s129 = scalar_select %p126, %s127, %s128
    %p132 = pneg %p126
    %p133 = scmp.eq.s32.totalorder %s12, 1
    %p134 = por %p132, %p133
    %p135 = scmp.ne.s32.totalorder %s127, %s130
    %p136 = scmp.eq.s32.totalorder %s12, 0
    %p137 = por %p135, %p136
    %p138 = scmp.ne.s32.totalorder %s127, %s130
    %p139 = scmp.eq.s32.totalorder %s17, 1
    %p140 = por %p138, %p139
    %p141 = scmp.ne.s32.totalorder %s130, %s131
    %p142 = scmp.eq.s32.totalorder %s17, 0
    %p143 = por %p141, %p142
    %p144 = scmp.ne.s32.totalorder %s130, %s131
    %p145 = scmp.eq.s32.totalorder %s18, 1
    %p146 = por %p144, %p145
    %p148 = scmp.ne.s32.totalorder %s131, %s147
    %p149 = scmp.eq.s32.totalorder %s18, 0
    %p150 = por %p148, %p149
    %s151 = ssub.s32 %s19, %s31
    %p152 = scmp.eq.s32.totalorder %s151, 0
    %s154 = sadd.s32 %s153, 1
    %s155 = scalar_select %p152, %s153, %s154
    %p158 = pneg %p152
    %p159 = scmp.eq.s32.totalorder %s12, 1
    %p160 = por %p158, %p159
    %p161 = scmp.ne.s32.totalorder %s153, %s156
    %p162 = scmp.eq.s32.totalorder %s12, 0
    %p163 = por %p161, %p162
    %p164 = scmp.ne.s32.totalorder %s153, %s156
    %p165 = scmp.eq.s32.totalorder %s17, 1
    %p166 = por %p164, %p165
    %p167 = scmp.ne.s32.totalorder %s156, %s157
    %p168 = scmp.eq.s32.totalorder %s17, 0
    %p169 = por %p167, %p168
    %p170 = scmp.ne.s32.totalorder %s156, %s157
    %p171 = scmp.eq.s32.totalorder %s18, 1
    %p172 = por %p170, %p171
    %p174 = scmp.ne.s32.totalorder %s157, %s173
    %p175 = scmp.eq.s32.totalorder %s18, 0
    %p176 = por %p174, %p175
    %p177 = scmp.le.s32.totalorder 1, %s12
    %p178 = scmp.lt.s32.totalorder %s12, 3
    %p179 = pnand %p177, %p178
    %p180 = pneg %p179
    // Predicated region
    $region9: #{my_lstm_forward.1} parent=5 // pred_check
      _
    $region10: #{my_lstm_forward.1} parent=5 // pred_check_branch
      %182 = sbr.rel (%p179) target = $region12
    $region11: #{my_lstm_forward.1} parent=5 // pred_region
      %s183 = ssub.s32 %s12, 1
      // Predicated region
      $region13: #{my_lstm_forward.1} parent=11 // pred_check
        %p184 = pneg %p73
      $region14: #{my_lstm_forward.1} parent=11 // pred_check_branch
        %186 = sbr.rel (%p184) target = $region16
      $region15: #{my_lstm_forward.1} parent=11 // pred_region
        _
      $region16: #{my_lstm_forward.1} parent=11 // pred_fallthru
        _
      // Predicated region
      $region17: #{my_lstm_forward.1} parent=11 // pred_check
        %p187 = pneg %p94
      $region18: #{my_lstm_forward.1} parent=11 // pred_check_branch
        %189 = sbr.rel (%p187) target = $region20
      $region19: #{my_lstm_forward.1} parent=11 // pred_region
        _
      $region20: #{my_lstm_forward.1} parent=11 // pred_fallthru
        _
      // Predicated region
      $region21: #{my_lstm_forward.1} parent=11 // pred_check
        %p190 = pneg %p115
      $region22: #{my_lstm_forward.1} parent=11 // pred_check_branch
        %192 = sbr.rel (%p190) target = $region24
      $region23: #{my_lstm_forward.1} parent=11 // pred_region
        _
      $region24: #{my_lstm_forward.1} parent=11 // pred_fallthru
        _
    $region12: #{my_lstm_forward.1} parent=5 // pred_fallthru
      _
    %p193 = scmp.lt.s32.totalorder %s12, 2
    // Predicated region
    $region25: #{my_lstm_forward.1} parent=5 // pred_check
      %p194 = pneg %p193
    $region26: #{my_lstm_forward.1} parent=5 // pred_check_branch
      %196 = sbr.rel (%p194) target = $region28
    $region27: #{my_lstm_forward.1} parent=5 // pred_region
      // Predicated region
      $region29: #{my_lstm_forward.1} parent=27 // pred_check
        %p197 = pneg %p46
      $region30: #{my_lstm_forward.1} parent=27 // pred_check_branch
        %199 = sbr.rel (%p197) target = $region32
      $region31: #{my_lstm_forward.1} parent=27 // pred_region
        %s200 = smul.u32 8, %s20
        %p201 = scmp.lt.s32.totalorder %s200, 15
        %s202 = scalar_select %p201, %s200, 15
        %p203 = scmp.lt.s32.totalorder %s19, 0
        %s204 = scalar_select %p203, %s19, 0
        %s205 = sadd.s32 %s204, %s202
        %s206 = smul.addr %s205, 8
        %s207 = scalar_lea.vmem %s0, %s206
        %s208 = smul.u32 8, %s20
      $region32: #{my_lstm_forward.1} parent=27 // pred_fallthru
        _
    $region28: #{my_lstm_forward.1} parent=5 // pred_fallthru
      _
    %p209 = scmp.le.s32.totalorder 1, %s12
    %p210 = scmp.lt.s32.totalorder %s12, 3
    %p211 = pnand %p209, %p210
    %p212 = pneg %p211
    // Predicated region
    $region33: #{my_lstm_forward.1} parent=5 // pred_check
      _
    $region34: #{my_lstm_forward.1} parent=5 // pred_check_branch
      %214 = sbr.rel (%p211) target = $region36
    $region35: #{my_lstm_forward.1} parent=5 // pred_region
      %s215 = ssub.s32 %s12, 1
      %s216 = smul.u32 8, %s22
      %p217 = scmp.lt.s32.totalorder %s216, 15
      %s218 = scalar_select %p217, %s216, 15
      %p219 = scmp.lt.s32.totalorder %s21, 0
      %s220 = scalar_select %p219, %s21, 0
      %s221 = sadd.s32 %s220, %s218
      %s222 = smul.addr %s221, 8
      %s223 = scalar_lea.vmem %s0, %s222
      %p224 = pneg %p52
      %p225 = pneg %p49
      %p226 = pneg %p73
      %p227 = pneg %p70
      %p228 = pneg %p94
      %p229 = pneg %p91
      %p230 = pneg %p115
      %p231 = pneg %p112
      %p232 = pneg %p143
      %p233 = pneg %p140
      %s234 = smul.u32 8, %s22
      %p235 = scmp.lt.s32.totalorder %s234, 15
      %s236 = scalar_select %p235, %s234, 15
      %p237 = scmp.lt.s32.totalorder %s21, 0
      %s238 = scalar_select %p237, %s21, 0
      %s239 = sadd.s32 %s238, %s236
      %s240 = smul.addr %s239, 8
      %s241 = scalar_lea.vmem %s4, %s240
      %p242 = pneg %p169
      %p243 = pneg %p166
      %p244 = scmp.lt.s32.totalorder %s21, 0
      %s245 = scalar_select %p244, %s21, 0
      %s246 = smul.addr %s245, 8
      %s247 = scalar_lea.vmem %s5, %s246
      %s248 = smul.u32 8, %s22
      %p249 = scmp.lt.s32.totalorder %s248, 15
      %s250 = scalar_select %p249, %s248, 15
      %p251 = scmp.lt.s32.totalorder %s21, 0
      %s252 = scalar_select %p251, %s21, 0
      %s253 = sadd.s32 %s252, %s250
      %s254 = smul.addr %s253, 8
      %s255 = scalar_lea.vmem %s0, %s254
      %s256 = smul.u32 8, %s22
      %s257 = smul.u32 8, %s22
      %p258 = scmp.lt.s32.totalorder %s257, 15
      %s259 = scalar_select %p258, %s257, 15
      %p260 = scmp.lt.s32.totalorder %s21, 0
      %s261 = scalar_select %p260, %s21, 0
      %s262 = sadd.s32 %s261, %s259
      %s263 = smul.addr %s262, 8
      %s264 = scalar_lea.vmem %s4, %s263
      %s265 = smul.u32 8, %s22
      %p266 = scmp.lt.s32.totalorder %s21, 0
      %s267 = scalar_select %p266, %s21, 0
      %s268 = smul.addr %s267, 8
      %s269 = scalar_lea.vmem %s5, %s268
      %p270 = scmp.eq.s32.totalorder %s22, 0
      // Predicated region
      $region37: #{my_lstm_forward.1} parent=35 // pred_check
        %p271 = pneg %p270
      $region38: #{my_lstm_forward.1} parent=35 // pred_check_branch
        %273 = sbr.rel (%p271) target = $region40
      $region39: #{my_lstm_forward.1} parent=35 // pred_region
        %274 = vst [vmem:[#allocation2] sm:$0xff] 0.0
        %275 = vst [vmem:[#allocation3] sm:$0xff] 0.0
      $region40: #{my_lstm_forward.1} parent=35 // pred_fallthru
        _
      %v276 = vld [vmem:[#allocation2] sm:$0xff]
      %v277 = vld [vmem:[#allocation3] sm:$0xff]
      %v278 = vld [vmem:[%s3] sm:$0xf]
      %v280 = vlaneseq
      %v281 = vshrl.u32 %v280, 7
      %v282 = vsub.s32 0, %v281
      %v283 = vrot.slane %v278, %v282
      %v284 = vlaneseq
      %v285 = vshrl.u32 %v284, 7
      %v286 = vsub.s32 1, %v285
      %v287 = vrot.slane %v278, %v286
      %v288 = vlaneseq
      %v289 = vshrl.u32 %v288, 7
      %v290 = vsub.s32 2, %v289
      %v291 = vrot.slane %v278, %v290
      %v292 = vlaneseq
      %v293 = vshrl.u32 %v292, 7
      %v294 = vsub.s32 3, %v293
      %v295 = vrot.slane %v278, %v294
      %v300 = vld [vmem:[%s255] sm:$0xff]
      %v301 = vld [vmem:[%s1] sm:$0xff]
      %v302 = vld [vmem:[%s1 + $0x8] sm:$0xff]
      %v303 = vld [vmem:[%s1 + $0x10] sm:$0xff]
      %v304 = vld [vmem:[%s1 + $0x18] sm:$0xff]
      %v305 = vld [vmem:[%s1 + $0x20] sm:$0xff]
      %v306 = vld [vmem:[%s1 + $0x28] sm:$0xff]
      %v307 = vld [vmem:[%s1 + $0x30] sm:$0xff]
      %v308 = vld [vmem:[%s1 + $0x38] sm:$0xff]
      %v309 = vld [vmem:[%s2] sm:$0xff]
      %v310 = vld [vmem:[%s2 + $0x8] sm:$0xff]
      %v311 = vld [vmem:[%s2 + $0x10] sm:$0xff]
      %v312 = vld [vmem:[%s2 + $0x18] sm:$0xff]
      %v313 = vld [vmem:[%s2 + $0x20] sm:$0xff]
      %v314 = vld [vmem:[%s2 + $0x28] sm:$0xff]
      %v315 = vld [vmem:[%s2 + $0x30] sm:$0xff]
      %v316 = vld [vmem:[%s2 + $0x38] sm:$0xff]
      %v317 = vld [vmem:[%s2 + $0x40] sm:$0xff]
      %v318 = vld [vmem:[%s2 + $0x48] sm:$0xff]
      %v319 = vld [vmem:[%s2 + $0x50] sm:$0xff]
      %v320 = vld [vmem:[%s2 + $0x58] sm:$0xff]
      %v321 = vld [vmem:[%s2 + $0x60] sm:$0xff]
      %v322 = vld [vmem:[%s2 + $0x68] sm:$0xff]
      %v323 = vld [vmem:[%s2 + $0x70] sm:$0xff]
      %v324 = vld [vmem:[%s2 + $0x78] sm:$0xff]
      %v325 = vld [vmem:[%s2 + $0x80] sm:$0xff]
      %v326 = vld [vmem:[%s2 + $0x88] sm:$0xff]
      %v327 = vld [vmem:[%s2 + $0x90] sm:$0xff]
      %v328 = vld [vmem:[%s2 + $0x98] sm:$0xff]
      %v329 = vld [vmem:[%s2 + $0xa0] sm:$0xff]
      %v330 = vld [vmem:[%s2 + $0xa8] sm:$0xff]
      %v331 = vld [vmem:[%s2 + $0xb0] sm:$0xff]
      %v332 = vld [vmem:[%s2 + $0xb8] sm:$0xff]
      %v333 = vld [vmem:[%s2 + $0xc0] sm:$0xff]
      %v334 = vld [vmem:[%s2 + $0xc8] sm:$0xff]
      %v335 = vld [vmem:[%s2 + $0xd0] sm:$0xff]
      %v336 = vld [vmem:[%s2 + $0xd8] sm:$0xff]
      %v337 = vld [vmem:[%s2 + $0xe0] sm:$0xff]
      %v338 = vld [vmem:[%s2 + $0xe8] sm:$0xff]
      %v339 = vld [vmem:[%s2 + $0xf0] sm:$0xff]
      %v340 = vld [vmem:[%s2 + $0xf8] sm:$0xff]
      %v341 = vld [vmem:[%s2 + $0x100] sm:$0xff]
      %v342 = vld [vmem:[%s2 + $0x108] sm:$0xff]
      %v343 = vld [vmem:[%s2 + $0x110] sm:$0xff]
      %v344 = vld [vmem:[%s2 + $0x118] sm:$0xff]
      %v345 = vld [vmem:[%s2 + $0x120] sm:$0xff]
      %v346 = vld [vmem:[%s2 + $0x128] sm:$0xff]
      %v347 = vld [vmem:[%s2 + $0x130] sm:$0xff]
      %v348 = vld [vmem:[%s2 + $0x138] sm:$0xff]
      %v349 = vld [vmem:[%s2 + $0x140] sm:$0xff]
      %v350 = vld [vmem:[%s2 + $0x148] sm:$0xff]
      %v351 = vld [vmem:[%s2 + $0x150] sm:$0xff]
      %v352 = vld [vmem:[%s2 + $0x158] sm:$0xff]
      %v353 = vld [vmem:[%s2 + $0x160] sm:$0xff]
      %v354 = vld [vmem:[%s2 + $0x168] sm:$0xff]
      %v355 = vld [vmem:[%s2 + $0x170] sm:$0xff]
      %v356 = vld [vmem:[%s2 + $0x178] sm:$0xff]
      %v357 = vld [vmem:[%s2 + $0x180] sm:$0xff]
      %v358 = vld [vmem:[%s2 + $0x188] sm:$0xff]
      %v359 = vld [vmem:[%s2 + $0x190] sm:$0xff]
      %v360 = vld [vmem:[%s2 + $0x198] sm:$0xff]
      %v361 = vld [vmem:[%s2 + $0x1a0] sm:$0xff]
      %v362 = vld [vmem:[%s2 + $0x1a8] sm:$0xff]
      %v363 = vld [vmem:[%s2 + $0x1b0] sm:$0xff]
      %v364 = vld [vmem:[%s2 + $0x1b8] sm:$0xff]
      %v365 = vld [vmem:[%s2 + $0x1c0] sm:$0xff]
      %v366 = vld [vmem:[%s2 + $0x1c8] sm:$0xff]
      %v367 = vld [vmem:[%s2 + $0x1d0] sm:$0xff]
      %v368 = vld [vmem:[%s2 + $0x1d8] sm:$0xff]
      %v369 = vld [vmem:[%s2 + $0x1e0] sm:$0xff]
      %v370 = vld [vmem:[%s2 + $0x1e8] sm:$0xff]
      %v371 = vld [vmem:[%s2 + $0x1f0] sm:$0xff]
      %v372 = vld [vmem:[%s2 + $0x1f8] sm:$0xff]
      %373 = vmatprep.subr.mxu0 %v310
      %374 = vmatpush1.msra.mxu0 %v309
      %375 = vmatprep.subr.mxu0 %v314
      %376 = vmatpush1.msra.mxu0 %v313
      %377 = vmatprep.subr.mxu0 %v318
      %378 = vmatpush1.msra.mxu0 %v317
      %379 = vmatprep.subr.mxu0 %v322
      %380 = vmatpush1.msra.mxu0 %v321
      %381 = vmatprep.subr.mxu0 %v326
      %382 = vmatpush1.msra.mxu0 %v325
      %383 = vmatprep.subr.mxu0 %v330
      %384 = vmatpush1.msra.mxu0 %v329
      %385 = vmatprep.subr.mxu0 %v334
      %386 = vmatpush1.msra.mxu0 %v333
      %387 = vmatprep.subr.mxu0 %v338
      %388 = vmatpush1.msra.mxu0 %v337
      %389 = vmatprep.subr.mxu0 %v342
      %390 = vmatpush1.msra.mxu0 %v341
      %391 = vmatprep.subr.mxu0 %v346
      %392 = vmatpush1.msra.mxu0 %v345
      %393 = vmatprep.subr.mxu0 %v350
      %394 = vmatpush1.msra.mxu0 %v349
      %395 = vmatprep.subr.mxu0 %v354
      %396 = vmatpush1.msra.mxu0 %v353
      %397 = vmatprep.subr.mxu0 %v358
      %398 = vmatpush1.msra.mxu0 %v357
      %399 = vmatprep.subr.mxu0 %v362
      %400 = vmatpush1.msra.mxu0 %v361
      %401 = vmatprep.subr.mxu0 %v366
      %402 = vmatpush1.msra.mxu0 %v365
      %403 = vmatprep.subr.mxu0 %v370
      %404 = vmatpush1.msra.mxu0 %v369
      %405 = vmatprep.subr.mxu0 0.0
      %406 = vmatpush1.msra.mxu0 0.0
      %407 = vmatprep.subr.mxu0 0.0
      %408 = vmatpush1.msra.mxu0 0.0
      %409 = vmatprep.subr.mxu0 0.0
      %410 = vmatpush1.msra.mxu0 0.0
      %411 = vmatprep.subr.mxu0 0.0
      %412 = vmatpush1.msra.mxu0 0.0
      %413 = vmatprep.subr.mxu0 0.0
      %414 = vmatpush1.msra.mxu0 0.0
      %415 = vmatprep.subr.mxu0 0.0
      %416 = vmatpush1.msra.mxu0 0.0
      %417 = vmatprep.subr.mxu0 0.0
      %418 = vmatpush1.msra.mxu0 0.0
      %419 = vmatprep.subr.mxu0 0.0
      %420 = vmatpush1.msra.mxu0 0.0
      %421 = vmatprep.subr.mxu0 0.0
      %422 = vmatpush1.msra.mxu0 0.0
      %423 = vmatprep.subr.mxu0 0.0
      %424 = vmatpush1.msra.mxu0 0.0
      %425 = vmatprep.subr.mxu0 0.0
      %426 = vmatpush1.msra.mxu0 0.0
      %427 = vmatprep.subr.mxu0 0.0
      %428 = vmatpush1.msra.mxu0 0.0
      %429 = vmatprep.subr.mxu0 0.0
      %430 = vmatpush1.msra.mxu0 0.0
      %431 = vmatprep.subr.mxu0 0.0
      %432 = vmatpush1.msra.mxu0 0.0
      %433 = vmatprep.subr.mxu0 0.0
      %434 = vmatpush1.msra.mxu0 0.0
      %435 = vmatprep.subr.mxu0 0.0
      %436 = vmatpush1.msra.mxu0 0.0
      %437 = vmatprep.mubr.f32.mxu0 0.0
      %438 = vmatmul.mubr.f32.gmra.mrb[0].mxu0 %v276
      %v439 = vpop.f32.mrb[0].mxu0
      %v440 = vadd.f32 0.0, %v439
      %v441 = vpop.f32.mrb[0].mxu0
      %v442 = vadd.f32 0.0, %v441
      %443 = vdwg.mxu0
      %444 = vmatprep.subr.mxu0 %v312
      %445 = vmatpush1.msra.mxu0 %v311
      %446 = vmatprep.subr.mxu0 %v316
      %447 = vmatpush1.msra.mxu0 %v315
      %448 = vmatprep.subr.mxu0 %v320
      %449 = vmatpush1.msra.mxu0 %v319
      %450 = vmatprep.subr.mxu0 %v324
      %451 = vmatpush1.msra.mxu0 %v323
      %452 = vmatprep.subr.mxu0 %v328
      %453 = vmatpush1.msra.mxu0 %v327
      %454 = vmatprep.subr.mxu0 %v332
      %455 = vmatpush1.msra.mxu0 %v331
      %456 = vmatprep.subr.mxu0 %v336
      %457 = vmatpush1.msra.mxu0 %v335
      %458 = vmatprep.subr.mxu0 %v340
      %459 = vmatpush1.msra.mxu0 %v339
      %460 = vmatprep.subr.mxu0 %v344
      %461 = vmatpush1.msra.mxu0 %v343
      %462 = vmatprep.subr.mxu0 %v348
      %463 = vmatpush1.msra.mxu0 %v347
      %464 = vmatprep.subr.mxu0 %v352
      %465 = vmatpush1.msra.mxu0 %v351
      %466 = vmatprep.subr.mxu0 %v356
      %467 = vmatpush1.msra.mxu0 %v355
      %468 = vmatprep.subr.mxu0 %v360
      %469 = vmatpush1.msra.mxu0 %v359
      %470 = vmatprep.subr.mxu0 %v364
      %471 = vmatpush1.msra.mxu0 %v363
      %472 = vmatprep.subr.mxu0 %v368
      %473 = vmatpush1.msra.mxu0 %v367
      %474 = vmatprep.subr.mxu0 %v372
      %475 = vmatpush1.msra.mxu0 %v371
      %476 = vmatprep.subr.mxu0 0.0
      %477 = vmatpush1.msra.mxu0 0.0
      %478 = vmatprep.subr.mxu0 0.0
      %479 = vmatpush1.msra.mxu0 0.0
      %480 = vmatprep.subr.mxu0 0.0
      %481 = vmatpush1.msra.mxu0 0.0
      %482 = vmatprep.subr.mxu0 0.0
      %483 = vmatpush1.msra.mxu0 0.0
      %484 = vmatprep.subr.mxu0 0.0
      %485 = vmatpush1.msra.mxu0 0.0
      %486 = vmatprep.subr.mxu0 0.0
      %487 = vmatpush1.msra.mxu0 0.0
      %488 = vmatprep.subr.mxu0 0.0
      %489 = vmatpush1.msra.mxu0 0.0
      %490 = vmatprep.subr.mxu0 0.0
      %491 = vmatpush1.msra.mxu0 0.0
      %492 = vmatprep.subr.mxu0 0.0
      %493 = vmatpush1.msra.mxu0 0.0
      %494 = vmatprep.subr.mxu0 0.0
      %495 = vmatpush1.msra.mxu0 0.0
      %496 = vmatprep.subr.mxu0 0.0
      %497 = vmatpush1.msra.mxu0 0.0
      %498 = vmatprep.subr.mxu0 0.0
      %499 = vmatpush1.msra.mxu0 0.0
      %500 = vmatprep.subr.mxu0 0.0
      %501 = vmatpush1.msra.mxu0 0.0
      %502 = vmatprep.subr.mxu0 0.0
      %503 = vmatpush1.msra.mxu0 0.0
      %504 = vmatprep.subr.mxu0 0.0
      %505 = vmatpush1.msra.mxu0 0.0
      %506 = vmatprep.subr.mxu0 0.0
      %507 = vmatpush1.msra.mxu0 0.0
      %508 = vmatprep.mubr.f32.mxu0 0.0
      %509 = vmatmul.mubr.f32.gmra.mrb[0].mxu0 %v276
      %v510 = vpop.f32.mrb[0].mxu0
      %v511 = vadd.f32 0.0, %v510
      %v512 = vpop.f32.mrb[0].mxu0
      %v513 = vadd.f32 0.0, %v512
      %514 = vdwg.mxu0
      %vm515 = vcmask 130048
      %v517 = vsel %vm515, %v300, 0
      %519 = vmatprep.subr.mxu0 %v302
      %520 = vmatpush1.msra.mxu0 %v301
      %521 = vmatprep.subr.mxu0 %v306
      %522 = vmatpush1.msra.mxu0 %v305
      %523 = vmatprep.subr.mxu0 0.0
      %524 = vmatpush1.msra.mxu0 0.0
      %525 = vmatprep.subr.mxu0 0.0
      %526 = vmatpush1.msra.mxu0 0.0
      %527 = vmatprep.subr.mxu0 0.0
      %528 = vmatpush1.msra.mxu0 0.0
      %529 = vmatprep.subr.mxu0 0.0
      %530 = vmatpush1.msra.mxu0 0.0
      %531 = vmatprep.subr.mxu0 0.0
      %532 = vmatpush1.msra.mxu0 0.0
      %533 = vmatprep.subr.mxu0 0.0
      %534 = vmatpush1.msra.mxu0 0.0
      %535 = vmatprep.subr.mxu0 0.0
      %536 = vmatpush1.msra.mxu0 0.0
      %537 = vmatprep.subr.mxu0 0.0
      %538 = vmatpush1.msra.mxu0 0.0
      %539 = vmatprep.subr.mxu0 0.0
      %540 = vmatpush1.msra.mxu0 0.0
      %541 = vmatprep.subr.mxu0 0.0
      %542 = vmatpush1.msra.mxu0 0.0
      %543 = vmatprep.subr.mxu0 0.0
      %544 = vmatpush1.msra.mxu0 0.0
      %545 = vmatprep.subr.mxu0 0.0
      %546 = vmatpush1.msra.mxu0 0.0
      %547 = vmatprep.subr.mxu0 0.0
      %548 = vmatpush1.msra.mxu0 0.0
      %549 = vmatprep.subr.mxu0 0.0
      %550 = vmatpush1.msra.mxu0 0.0
      %551 = vmatprep.subr.mxu0 0.0
      %552 = vmatpush1.msra.mxu0 0.0
      %553 = vmatprep.subr.mxu0 0.0
      %554 = vmatpush1.msra.mxu0 0.0
      %555 = vmatprep.subr.mxu0 0.0
      %556 = vmatpush1.msra.mxu0 0.0
      %557 = vmatprep.subr.mxu0 0.0
      %558 = vmatpush1.msra.mxu0 0.0
      %559 = vmatprep.subr.mxu0 0.0
      %560 = vmatpush1.msra.mxu0 0.0
      %561 = vmatprep.subr.mxu0 0.0
      %562 = vmatpush1.msra.mxu0 0.0
      %563 = vmatprep.subr.mxu0 0.0
      %564 = vmatpush1.msra.mxu0 0.0
      %565 = vmatprep.subr.mxu0 0.0
      %566 = vmatpush1.msra.mxu0 0.0
      %567 = vmatprep.subr.mxu0 0.0
      %568 = vmatpush1.msra.mxu0 0.0
      %569 = vmatprep.subr.mxu0 0.0
      %570 = vmatpush1.msra.mxu0 0.0
      %571 = vmatprep.subr.mxu0 0.0
      %572 = vmatpush1.msra.mxu0 0.0
      %573 = vmatprep.subr.mxu0 0.0
      %574 = vmatpush1.msra.mxu0 0.0
      %575 = vmatprep.subr.mxu0 0.0
      %576 = vmatpush1.msra.mxu0 0.0
      %577 = vmatprep.subr.mxu0 0.0
      %578 = vmatpush1.msra.mxu0 0.0
      %579 = vmatprep.subr.mxu0 0.0
      %580 = vmatpush1.msra.mxu0 0.0
      %581 = vmatprep.subr.mxu0 0.0
      %582 = vmatpush1.msra.mxu0 0.0
      %583 = vmatprep.mubr.f32.mxu0 0.0
      %584 = vmatmul.mubr.f32.gmra.mrb[0].mxu0 %v517
      %v585 = vpop.f32.mrb[0].mxu0
      %v586 = vadd.f32 %v440, %v585
      %v587 = vpop.f32.mrb[0].mxu0
      %v588 = vadd.f32 %v442, %v587
      %589 = vdwg.mxu0
      %590 = vmatprep.subr.mxu0 %v304
      %591 = vmatpush1.msra.mxu0 %v303
      %592 = vmatprep.subr.mxu0 %v308
      %593 = vmatpush1.msra.mxu0 %v307
      %594 = vmatprep.subr.mxu0 0.0
      %595 = vmatpush1.msra.mxu0 0.0
      %596 = vmatprep.subr.mxu0 0.0
      %597 = vmatpush1.msra.mxu0 0.0
      %598 = vmatprep.subr.mxu0 0.0
      %599 = vmatpush1.msra.mxu0 0.0
      %600 = vmatprep.subr.mxu0 0.0
      %601 = vmatpush1.msra.mxu0 0.0
      %602 = vmatprep.subr.mxu0 0.0
      %603 = vmatpush1.msra.mxu0 0.0
      %604 = vmatprep.subr.mxu0 0.0
      %605 = vmatpush1.msra.mxu0 0.0
      %606 = vmatprep.subr.mxu0 0.0
      %607 = vmatpush1.msra.mxu0 0.0
      %608 = vmatprep.subr.mxu0 0.0
      %609 = vmatpush1.msra.mxu0 0.0
      %610 = vmatprep.subr.mxu0 0.0
      %611 = vmatpush1.msra.mxu0 0.0
      %612 = vmatprep.subr.mxu0 0.0
      %613 = vmatpush1.msra.mxu0 0.0
      %614 = vmatprep.subr.mxu0 0.0
      %615 = vmatpush1.msra.mxu0 0.0
      %616 = vmatprep.subr.mxu0 0.0
      %617 = vmatpush1.msra.mxu0 0.0
      %618 = vmatprep.subr.mxu0 0.0
      %619 = vmatpush1.msra.mxu0 0.0
      %620 = vmatprep.subr.mxu0 0.0
      %621 = vmatpush1.msra.mxu0 0.0
      %622 = vmatprep.subr.mxu0 0.0
      %623 = vmatpush1.msra.mxu0 0.0
      %624 = vmatprep.subr.mxu0 0.0
      %625 = vmatpush1.msra.mxu0 0.0
      %626 = vmatprep.subr.mxu0 0.0
      %627 = vmatpush1.msra.mxu0 0.0
      %628 = vmatprep.subr.mxu0 0.0
      %629 = vmatpush1.msra.mxu0 0.0
      %630 = vmatprep.subr.mxu0 0.0
      %631 = vmatpush1.msra.mxu0 0.0
      %632 = vmatprep.subr.mxu0 0.0
      %633 = vmatpush1.msra.mxu0 0.0
      %634 = vmatprep.subr.mxu0 0.0
      %635 = vmatpush1.msra.mxu0 0.0
      %636 = vmatprep.subr.mxu0 0.0
      %637 = vmatpush1.msra.mxu0 0.0
      %638 = vmatprep.subr.mxu0 0.0
      %639 = vmatpush1.msra.mxu0 0.0
      %640 = vmatprep.subr.mxu0 0.0
      %641 = vmatpush1.msra.mxu0 0.0
      %642 = vmatprep.subr.mxu0 0.0
      %643 = vmatpush1.msra.mxu0 0.0
      %644 = vmatprep.subr.mxu0 0.0
      %645 = vmatpush1.msra.mxu0 0.0
      %646 = vmatprep.subr.mxu0 0.0
      %647 = vmatpush1.msra.mxu0 0.0
      %648 = vmatprep.subr.mxu0 0.0
      %649 = vmatpush1.msra.mxu0 0.0
      %650 = vmatprep.subr.mxu0 0.0
      %651 = vmatpush1.msra.mxu0 0.0
      %652 = vmatprep.subr.mxu0 0.0
      %653 = vmatpush1.msra.mxu0 0.0
      %654 = vmatprep.mubr.f32.mxu0 0.0
      %655 = vmatmul.mubr.f32.gmra.mrb[0].mxu0 %v517
      %v656 = vpop.f32.mrb[0].mxu0
      %v657 = vadd.f32 %v511, %v656
      %v658 = vpop.f32.mrb[0].mxu0
      %v659 = vadd.f32 %v513, %v658
      %660 = vdwg.mxu0
      %v661 = vadd.f32 %v586, %v283
      %v662 = vadd.f32 %v588, %v287
      %v663 = vadd.f32 %v657, %v291
      %v664 = vadd.f32 %v659, %v295
      %v665 = vmul.f32 %v661, 0.5
      %v666 = vtanh.pop %v665
      %v667 = vmul.f32 %v666, 0.5
      %v668 = vadd.f32 %v667, 0.5
      %v669 = vmul.f32 %v662, 0.5
      %v670 = vtanh.pop %v669
      %v671 = vmul.f32 %v670, 0.5
      %v672 = vadd.f32 %v671, 0.5
      %v673 = vtanh.pop %v663
      %v674 = vmul.f32 %v664, 0.5
      %v675 = vtanh.pop %v674
      %v676 = vmul.f32 %v675, 0.5
      %v677 = vadd.f32 %v676, 0.5
      %v678 = vmul.f32 %v668, %v277
      %v679 = vmul.f32 %v672, %v673
      %v680 = vadd.f32 %v678, %v679
      %v681 = vtanh.pop %v680
      %v682 = vmul.f32 %v677, %v681
      %683 = vst [vmem:[%s264] sm:$0xff] %v682
      %s684 = scalar_lea.vmem %s255, 8
      %v685 = vld [vmem:[%s684] sm:$0xff]
      %v686 = vld [vmem:[%s1] sm:$0xff]
      %v687 = vld [vmem:[%s1 + $0x8] sm:$0xff]
      %v688 = vld [vmem:[%s1 + $0x10] sm:$0xff]
      %v689 = vld [vmem:[%s1 + $0x18] sm:$0xff]
      %v690 = vld [vmem:[%s1 + $0x20] sm:$0xff]
      %v691 = vld [vmem:[%s1 + $0x28] sm:$0xff]
      %v692 = vld [vmem:[%s1 + $0x30] sm:$0xff]
      %v693 = vld [vmem:[%s1 + $0x38] sm:$0xff]
      %v694 = vld [vmem:[%s2] sm:$0xff]
      %v695 = vld [vmem:[%s2 + $0x8] sm:$0xff]
      %v696 = vld [vmem:[%s2 + $0x10] sm:$0xff]
      %v697 = vld [vmem:[%s2 + $0x18] sm:$0xff]
      %v698 = vld [vmem:[%s2 + $0x20] sm:$0xff]
      %v699 = vld [vmem:[%s2 + $0x28] sm:$0xff]
      %v700 = vld [vmem:[%s2 + $0x30] sm:$0xff]
      %v701 = vld [vmem:[%s2 + $0x38] sm:$0xff]
      %v702 = vld [vmem:[%s2 + $0x40] sm:$0xff]
      %v703 = vld [vmem:[%s2 + $0x48] sm:$0xff]
      %v704 = vld [vmem:[%s2 + $0x50] sm:$0xff]
      %v705 = vld [vmem:[%s2 + $0x58] sm:$0xff]
      %v706 = vld [vmem:[%s2 + $0x60] sm:$0xff]
      %v707 = vld [vmem:[%s2 + $0x68] sm:$0xff]
      %v708 = vld [vmem:[%s2 + $0x70] sm:$0xff]
      %v709 = vld [vmem:[%s2 + $0x78] sm:$0xff]
      %v710 = vld [vmem:[%s2 + $0x80] sm:$0xff]
      %v711 = vld [vmem:[%s2 + $0x88] sm:$0xff]
      %v712 = vld [vmem:[%s2 + $0x90] sm:$0xff]
      %v713 = vld [vmem:[%s2 + $0x98] sm:$0xff]
      %v714 = vld [vmem:[%s2 + $0xa0] sm:$0xff]
      %v715 = vld [vmem:[%s2 + $0xa8] sm:$0xff]
      %v716 = vld [vmem:[%s2 + $0xb0] sm:$0xff]
      %v717 = vld [vmem:[%s2 + $0xb8] sm:$0xff]
      %v718 = vld [vmem:[%s2 + $0xc0] sm:$0xff]
      %v719 = vld [vmem:[%s2 + $0xc8] sm:$0xff]
      %v720 = vld [vmem:[%s2 + $0xd0] sm:$0xff]
      %v721 = vld [vmem:[%s2 + $0xd8] sm:$0xff]
      %v722 = vld [vmem:[%s2 + $0xe0] sm:$0xff]
      %v723 = vld [vmem:[%s2 + $0xe8] sm:$0xff]
      %v724 = vld [vmem:[%s2 + $0xf0] sm:$0xff]
      %v725 = vld [vmem:[%s2 + $0xf8] sm:$0xff]
      %v726 = vld [vmem:[%s2 + $0x100] sm:$0xff]
      %v727 = vld [vmem:[%s2 + $0x108] sm:$0xff]
      %v728 = vld [vmem:[%s2 + $0x110] sm:$0xff]
      %v729 = vld [vmem:[%s2 + $0x118] sm:$0xff]
      %v730 = vld [vmem:[%s2 + $0x120] sm:$0xff]
      %v731 = vld [vmem:[%s2 + $0x128] sm:$0xff]
      %v732 = vld [vmem:[%s2 + $0x130] sm:$0xff]
      %v733 = vld [vmem:[%s2 + $0x138] sm:$0xff]
      %v734 = vld [vmem:[%s2 + $0x140] sm:$0xff]
      %v735 = vld [vmem:[%s2 + $0x148] sm:$0xff]
      %v736 = vld [vmem:[%s2 + $0x150] sm:$0xff]
      %v737 = vld [vmem:[%s2 + $0x158] sm:$0xff]
      %v738 = vld [vmem:[%s2 + $0x160] sm:$0xff]
      %v739 = vld [vmem:[%s2 + $0x168] sm:$0xff]
      %v740 = vld [vmem:[%s2 + $0x170] sm:$0xff]
      %v741 = vld [vmem:[%s2 + $0x178] sm:$0xff]
      %v742 = vld [vmem:[%s2 + $0x180] sm:$0xff]
      %v743 = vld [vmem:[%s2 + $0x188] sm:$0xff]
      %v744 = vld [vmem:[%s2 + $0x190] sm:$0xff]
      %v745 = vld [vmem:[%s2 + $0x198] sm:$0xff]
      %v746 = vld [vmem:[%s2 + $0x1a0] sm:$0xff]
      %v747 = vld [vmem:[%s2 + $0x1a8] sm:$0xff]
      %v748 = vld [vmem:[%s2 + $0x1b0] sm:$0xff]
      %v749 = vld [vmem:[%s2 + $0x1b8] sm:$0xff]
      %v750 = vld [vmem:[%s2 + $0x1c0] sm:$0xff]
      %v751 = vld [vmem:[%s2 + $0x1c8] sm:$0xff]
      %v752 = vld [vmem:[%s2 + $0x1d0] sm:$0xff]
      %v753 = vld [vmem:[%s2 + $0x1d8] sm:$0xff]
      %v754 = vld [vmem:[%s2 + $0x1e0] sm:$0xff]
      %v755 = vld [vmem:[%s2 + $0x1e8] sm:$0xff]
      %v756 = vld [vmem:[%s2 + $0x1f0] sm:$0xff]
      %v757 = vld [vmem:[%s2 + $0x1f8] sm:$0xff]
      %758 = vmatprep.subr.mxu0 %v695
      %759 = vmatpush1.msra.mxu0 %v694
      %760 = vmatprep.subr.mxu0 %v699
      %761 = vmatpush1.msra.mxu0 %v698
      %762 = vmatprep.subr.mxu0 %v703
      %763 = vmatpush1.msra.mxu0 %v702
      %764 = vmatprep.subr.mxu0 %v707
      %765 = vmatpush1.msra.mxu0 %v706
      %766 = vmatprep.subr.mxu0 %v711
      %767 = vmatpush1.msra.mxu0 %v710
      %768 = vmatprep.subr.mxu0 %v715
      %769 = vmatpush1.msra.mxu0 %v714
      %770 = vmatprep.subr.mxu0 %v719
      %771 = vmatpush1.msra.mxu0 %v718
      %772 = vmatprep.subr.mxu0 %v723
      %773 = vmatpush1.msra.mxu0 %v722
      %774 = vmatprep.subr.mxu0 %v727
      %775 = vmatpush1.msra.mxu0 %v726
      %776 = vmatprep.subr.mxu0 %v731
      %777 = vmatpush1.msra.mxu0 %v730
      %778 = vmatprep.subr.mxu0 %v735
      %779 = vmatpush1.msra.mxu0 %v734
      %780 = vmatprep.subr.mxu0 %v739
      %781 = vmatpush1.msra.mxu0 %v738
      %782 = vmatprep.subr.mxu0 %v743
      %783 = vmatpush1.msra.mxu0 %v742
      %784 = vmatprep.subr.mxu0 %v747
      %785 = vmatpush1.msra.mxu0 %v746
      %786 = vmatprep.subr.mxu0 %v751
      %787 = vmatpush1.msra.mxu0 %v750
      %788 = vmatprep.subr.mxu0 %v755
      %789 = vmatpush1.msra.mxu0 %v754
      %790 = vmatprep.subr.mxu0 0.0
      %791 = vmatpush1.msra.mxu0 0.0
      %792 = vmatprep.subr.mxu0 0.0
      %793 = vmatpush1.msra.mxu0 0.0
      %794 = vmatprep.subr.mxu0 0.0
      %795 = vmatpush1.msra.mxu0 0.0
      %796 = vmatprep.subr.mxu0 0.0
      %797 = vmatpush1.msra.mxu0 0.0
      %798 = vmatprep.subr.mxu0 0.0
      %799 = vmatpush1.msra.mxu0 0.0
      %800 = vmatprep.subr.mxu0 0.0
      %801 = vmatpush1.msra.mxu0 0.0
      %802 = vmatprep.subr.mxu0 0.0
      %803 = vmatpush1.msra.mxu0 0.0
      %804 = vmatprep.subr.mxu0 0.0
      %805 = vmatpush1.msra.mxu0 0.0
      %806 = vmatprep.subr.mxu0 0.0
      %807 = vmatpush1.msra.mxu0 0.0
      %808 = vmatprep.subr.mxu0 0.0
      %809 = vmatpush1.msra.mxu0 0.0
      %810 = vmatprep.subr.mxu0 0.0
      %811 = vmatpush1.msra.mxu0 0.0
      %812 = vmatprep.subr.mxu0 0.0
      %813 = vmatpush1.msra.mxu0 0.0
      %814 = vmatprep.subr.mxu0 0.0
      %815 = vmatpush1.msra.mxu0 0.0
      %816 = vmatprep.subr.mxu0 0.0
      %817 = vmatpush1.msra.mxu0 0.0
      %818 = vmatprep.subr.mxu0 0.0
      %819 = vmatpush1.msra.mxu0 0.0
      %820 = vmatprep.subr.mxu0 0.0
      %821 = vmatpush1.msra.mxu0 0.0
      %822 = vmatprep.mubr.f32.mxu0 0.0
      %823 = vmatmul.mubr.f32.gmra.mrb[0].mxu0 %v682
      %v824 = vpop.f32.mrb[0].mxu0
      %v825 = vadd.f32 0.0, %v824
      %v826 = vpop.f32.mrb[0].mxu0
      %v827 = vadd.f32 0.0, %v826
      %828 = vdwg.mxu0
      %829 = vmatprep.subr.mxu0 %v697
      %830 = vmatpush1.msra.mxu0 %v696
      %831 = vmatprep.subr.mxu0 %v701
      %832 = vmatpush1.msra.mxu0 %v700
      %833 = vmatprep.subr.mxu0 %v705
      %834 = vmatpush1.msra.mxu0 %v704
      %835 = vmatprep.subr.mxu0 %v709
      %836 = vmatpush1.msra.mxu0 %v708
      %837 = vmatprep.subr.mxu0 %v713
      %838 = vmatpush1.msra.mxu0 %v712
      %839 = vmatprep.subr.mxu0 %v717
      %840 = vmatpush1.msra.mxu0 %v716
      %841 = vmatprep.subr.mxu0 %v721
      %842 = vmatpush1.msra.mxu0 %v720
      %843 = vmatprep.subr.mxu0 %v725
      %844 = vmatpush1.msra.mxu0 %v724
      %845 = vmatprep.subr.mxu0 %v729
      %846 = vmatpush1.msra.mxu0 %v728
      %847 = vmatprep.subr.mxu0 %v733
      %848 = vmatpush1.msra.mxu0 %v732
      %849 = vmatprep.subr.mxu0 %v737
      %850 = vmatpush1.msra.mxu0 %v736
      %851 = vmatprep.subr.mxu0 %v741
      %852 = vmatpush1.msra.mxu0 %v740
      %853 = vmatprep.subr.mxu0 %v745
      %854 = vmatpush1.msra.mxu0 %v744
      %855 = vmatprep.subr.mxu0 %v749
      %856 = vmatpush1.msra.mxu0 %v748
      %857 = vmatprep.subr.mxu0 %v753
      %858 = vmatpush1.msra.mxu0 %v752
      %859 = vmatprep.subr.mxu0 %v757
      %860 = vmatpush1.msra.mxu0 %v756
      %861 = vmatprep.subr.mxu0 0.0
      %862 = vmatpush1.msra.mxu0 0.0
      %863 = vmatprep.subr.mxu0 0.0
      %864 = vmatpush1.msra.mxu0 0.0
      %865 = vmatprep.subr.mxu0 0.0
      %866 = vmatpush1.msra.mxu0 0.0
      %867 = vmatprep.subr.mxu0 0.0
      %868 = vmatpush1.msra.mxu0 0.0
      %869 = vmatprep.subr.mxu0 0.0
      %870 = vmatpush1.msra.mxu0 0.0
      %871 = vmatprep.subr.mxu0 0.0
      %872 = vmatpush1.msra.mxu0 0.0
      %873 = vmatprep.subr.mxu0 0.0
      %874 = vmatpush1.msra.mxu0 0.0
      %875 = vmatprep.subr.mxu0 0.0
      %876 = vmatpush1.msra.mxu0 0.0
      %877 = vmatprep.subr.mxu0 0.0
      %878 = vmatpush1.msra.mxu0 0.0
      %879 = vmatprep.subr.mxu0 0.0
      %880 = vmatpush1.msra.mxu0 0.0
      %881 = vmatprep.subr.mxu0 0.0
      %882 = vmatpush1.msra.mxu0 0.0
      %883 = vmatprep.subr.mxu0 0.0
      %884 = vmatpush1.msra.mxu0 0.0
      %885 = vmatprep.subr.mxu0 0.0
      %886 = vmatpush1.msra.mxu0 0.0
      %887 = vmatprep.subr.mxu0 0.0
      %888 = vmatpush1.msra.mxu0 0.0
      %889 = vmatprep.subr.mxu0 0.0
      %890 = vmatpush1.msra.mxu0 0.0
      %891 = vmatprep.subr.mxu0 0.0
      %892 = vmatpush1.msra.mxu0 0.0
      %893 = vmatprep.mubr.f32.mxu0 0.0
      %894 = vmatmul.mubr.f32.gmra.mrb[0].mxu0 %v682
      %v895 = vpop.f32.mrb[0].mxu0
      %v896 = vadd.f32 0.0, %v895
      %v897 = vpop.f32.mrb[0].mxu0
      %v898 = vadd.f32 0.0, %v897
      %899 = vdwg.mxu0
      %v901 = vsel %vm515, %v685, 0
      %903 = vmatprep.subr.mxu0 %v687
      %904 = vmatpush1.msra.mxu0 %v686
      %905 = vmatprep.subr.mxu0 %v691
      %906 = vmatpush1.msra.mxu0 %v690
      %907 = vmatprep.subr.mxu0 0.0
      %908 = vmatpush1.msra.mxu0 0.0
      %909 = vmatprep.subr.mxu0 0.0
      %910 = vmatpush1.msra.mxu0 0.0
      %911 = vmatprep.subr.mxu0 0.0
      %912 = vmatpush1.msra.mxu0 0.0
      %913 = vmatprep.subr.mxu0 0.0
      %914 = vmatpush1.msra.mxu0 0.0
      %915 = vmatprep.subr.mxu0 0.0
      %916 = vmatpush1.msra.mxu0 0.0
      %917 = vmatprep.subr.mxu0 0.0
      %918 = vmatpush1.msra.mxu0 0.0
      %919 = vmatprep.subr.mxu0 0.0
      %920 = vmatpush1.msra.mxu0 0.0
      %921 = vmatprep.subr.mxu0 0.0
      %922 = vmatpush1.msra.mxu0 0.0
      %923 = vmatprep.subr.mxu0 0.0
      %924 = vmatpush1.msra.mxu0 0.0
      %925 = vmatprep.subr.mxu0 0.0
      %926 = vmatpush1.msra.mxu0 0.0
      %927 = vmatprep.subr.mxu0 0.0
      %928 = vmatpush1.msra.mxu0 0.0
      %929 = vmatprep.subr.mxu0 0.0
      %930 = vmatpush1.msra.mxu0 0.0
      %931 = vmatprep.subr.mxu0 0.0
      %932 = vmatpush1.msra.mxu0 0.0
      %933 = vmatprep.subr.mxu0 0.0
      %934 = vmatpush1.msra.mxu0 0.0
      %935 = vmatprep.subr.mxu0 0.0
      %936 = vmatpush1.msra.mxu0 0.0
      %937 = vmatprep.subr.mxu0 0.0
      %938 = vmatpush1.msra.mxu0 0.0
      %939 = vmatprep.subr.mxu0 0.0
      %940 = vmatpush1.msra.mxu0 0.0
      %941 = vmatprep.subr.mxu0 0.0
      %942 = vmatpush1.msra.mxu0 0.0
      %943 = vmatprep.subr.mxu0 0.0
      %944 = vmatpush1.msra.mxu0 0.0
      %945 = vmatprep.subr.mxu0 0.0
      %946 = vmatpush1.msra.mxu0 0.0
      %947 = vmatprep.subr.mxu0 0.0
      %948 = vmatpush1.msra.mxu0 0.0
      %949 = vmatprep.subr.mxu0 0.0
      %950 = vmatpush1.msra.mxu0 0.0
      %951 = vmatprep.subr.mxu0 0.0
      %952 = vmatpush1.msra.mxu0 0.0
      %953 = vmatprep.subr.mxu0 0.0
      %954 = vmatpush1.msra.mxu0 0.0
      %955 = vmatprep.subr.mxu0 0.0
      %956 = vmatpush1.msra.mxu0 0.0
      %957 = vmatprep.subr.mxu0 0.0
      %958 = vmatpush1.msra.mxu0 0.0
      %959 = vmatprep.subr.mxu0 0.0
      %960 = vmatpush1.msra.mxu0 0.0
      %961 = vmatprep.subr.mxu0 0.0
      %962 = vmatpush1.msra.mxu0 0.0
      %963 = vmatprep.subr.mxu0 0.0
      %964 = vmatpush1.msra.mxu0 0.0
      %965 = vmatprep.subr.mxu0 0.0
      %966 = vmatpush1.msra.mxu0 0.0
      %967 = vmatprep.mubr.f32.mxu0 0.0
      %968 = vmatmul.mubr.f32.gmra.mrb[0].mxu0 %v901
      %v969 = vpop.f32.mrb[0].mxu0
      %v970 = vadd.f32 %v825, %v969
      %v971 = vpop.f32.mrb[0].mxu0
      %v972 = vadd.f32 %v827, %v971
      %973 = vdwg.mxu0
      %974 = vmatprep.subr.mxu0 %v689
      %975 = vmatpush1.msra.mxu0 %v688
      %976 = vmatprep.subr.mxu0 %v693
      %977 = vmatpush1.msra.mxu0 %v692
      %978 = vmatprep.subr.mxu0 0.0
      %979 = vmatpush1.msra.mxu0 0.0
      %980 = vmatprep.subr.mxu0 0.0
      %981 = vmatpush1.msra.mxu0 0.0
      %982 = vmatprep.subr.mxu0 0.0
      %983 = vmatpush1.msra.mxu0 0.0
      %984 = vmatprep.subr.mxu0 0.0
      %985 = vmatpush1.msra.mxu0 0.0
      %986 = vmatprep.subr.mxu0 0.0
      %987 = vmatpush1.msra.mxu0 0.0
      %988 = vmatprep.subr.mxu0 0.0
      %989 = vmatpush1.msra.mxu0 0.0
      %990 = vmatprep.subr.mxu0 0.0
      %991 = vmatpush1.msra.mxu0 0.0
      %992 = vmatprep.subr.mxu0 0.0
      %993 = vmatpush1.msra.mxu0 0.0
      %994 = vmatprep.subr.mxu0 0.0
      %995 = vmatpush1.msra.mxu0 0.0
      %996 = vmatprep.subr.mxu0 0.0
      %997 = vmatpush1.msra.mxu0 0.0
      %998 = vmatprep.subr.mxu0 0.0
      %999 = vmatpush1.msra.mxu0 0.0
      %1000 = vmatprep.subr.mxu0 0.0
      %1001 = vmatpush1.msra.mxu0 0.0
      %1002 = vmatprep.subr.mxu0 0.0
      %1003 = vmatpush1.msra.mxu0 0.0
      %1004 = vmatprep.subr.mxu0 0.0
      %1005 = vmatpush1.msra.mxu0 0.0
      %1006 = vmatprep.subr.mxu0 0.0
      %1007 = vmatpush1.msra.mxu0 0.0
      %1008 = vmatprep.subr.mxu0 0.0
      %1009 = vmatpush1.msra.mxu0 0.0
      %1010 = vmatprep.subr.mxu0 0.0
      %1011 = vmatpush1.msra.mxu0 0.0
      %1012 = vmatprep.subr.mxu0 0.0
      %1013 = vmatpush1.msra.mxu0 0.0
      %1014 = vmatprep.subr.mxu0 0.0
      %1015 = vmatpush1.msra.mxu0 0.0
      %1016 = vmatprep.subr.mxu0 0.0
      %1017 = vmatpush1.msra.mxu0 0.0
      %1018 = vmatprep.subr.mxu0 0.0
      %1019 = vmatpush1.msra.mxu0 0.0
      %1020 = vmatprep.subr.mxu0 0.0
      %1021 = vmatpush1.msra.mxu0 0.0
      %1022 = vmatprep.subr.mxu0 0.0
      %1023 = vmatpush1.msra.mxu0 0.0
      %1024 = vmatprep.subr.mxu0 0.0
      %1025 = vmatpush1.msra.mxu0 0.0
      %1026 = vmatprep.subr.mxu0 0.0
      %1027 = vmatpush1.msra.mxu0 0.0
      %1028 = vmatprep.subr.mxu0 0.0
      %1029 = vmatpush1.msra.mxu0 0.0
      %1030 = vmatprep.subr.mxu0 0.0
      %1031 = vmatpush1.msra.mxu0 0.0
      %1032 = vmatprep.subr.mxu0 0.0
      %1033 = vmatpush1.msra.mxu0 0.0
      %1034 = vmatprep.subr.mxu0 0.0
      %1035 = vmatpush1.msra.mxu0 0.0
      %1036 = vmatprep.subr.mxu0 0.0
      %1037 = vmatpush1.msra.mxu0 0.0
      %1038 = vmatprep.mubr.f32.mxu0 0.0
      %1039 = vmatmul.mubr.f32.gmra.mrb[0].mxu0 %v901
      %v1040 = vpop.f32.mrb[0].mxu0
      %v1041 = vadd.f32 %v896, %v1040
      %v1042 = vpop.f32.mrb[0].mxu0
      %v1043 = vadd.f32 %v898, %v1042
      %1044 = vdwg.mxu0
      %v1045 = vadd.f32 %v970, %v283
      %v1046 = vadd.f32 %v972, %v287
      %v1047 = vadd.f32 %v1041, %v291
      %v1048 = vadd.f32 %v1043, %v295
      %v1049 = vmul.f32 %v1045, 0.5
      %v1050 = vtanh.pop %v1049
      %v1051 = vmul.f32 %v1050, 0.5
      %v1052 = vadd.f32 %v1051, 0.5
      %v1053 = vmul.f32 %v1046, 0.5
      %v1054 = vtanh.pop %v1053
      %v1055 = vmul.f32 %v1054, 0.5
      %v1056 = vadd.f32 %v1055, 0.5
      %v1057 = vtanh.pop %v1047
      %v1058 = vmul.f32 %v1048, 0.5
      %v1059 = vtanh.pop %v1058
      %v1060 = vmul.f32 %v1059, 0.5
      %v1061 = vadd.f32 %v1060, 0.5
      %v1062 = vmul.f32 %v1052, %v680
      %v1063 = vmul.f32 %v1056, %v1057
      %v1064 = vadd.f32 %v1062, %v1063
      %v1065 = vtanh.pop %v1064
      %v1066 = vmul.f32 %v1061, %v1065
      %s1067 = scalar_lea.vmem %s264, 8
      %1068 = vst [vmem:[%s1067] sm:$0xff] %v1066
      %s1069 = scalar_lea.vmem %s255, 16
      %v1070 = vld [vmem:[%s1069] sm:$0xff]
      %v1071 = vld [vmem:[%s1] sm:$0xff]
      %v1072 = vld [vmem:[%s1 + $0x8] sm:$0xff]
      %v1073 = vld [vmem:[%s1 + $0x10] sm:$0xff]
      %v1074 = vld [vmem:[%s1 + $0x18] sm:$0xff]
      %v1075 = vld [vmem:[%s1 + $0x20] sm:$0xff]
      %v1076 = vld [vmem:[%s1 + $0x28] sm:$0xff]
      %v1077 = vld [vmem:[%s1 + $0x30] sm:$0xff]
      %v1078 = vld [vmem:[%s1 + $0x38] sm:$0xff]
      %v1079 = vld [vmem:[%s2] sm:$0xff]
      %v1080 = vld [vmem:[%s2 + $0x8] sm:$0xff]
      %v1081 = vld [vmem:[%s2 + $0x10] sm:$0xff]
      %v1082 = vld [vmem:[%s2 + $0x18] sm:$0xff]
      %v1083 = vld [vmem:[%s2 + $0x20] sm:$0xff]
      %v1084 = vld [vmem:[%s2 + $0x28] sm:$0xff]
      %v1085 = vld [vmem:[%s2 + $0x30] sm:$0xff]
      %v1086 = vld [vmem:[%s2 + $0x38] sm:$0xff]
      %v1087 = vld [vmem:[%s2 + $0x40] sm:$0xff]
      %v1088 = vld [vmem:[%s2 + $0x48] sm:$0xff]
      %v1089 = vld [vmem:[%s2 + $0x50] sm:$0xff]
      %v1090 = vld [vmem:[%s2 + $0x58] sm:$0xff]
      %v1091 = vld [vmem:[%s2 + $0x60] sm:$0xff]
      %v1092 = vld [vmem:[%s2 + $0x68] sm:$0xff]
      %v1093 = vld [vmem:[%s2 + $0x70] sm:$0xff]
      %v1094 = vld [vmem:[%s2 + $0x78] sm:$0xff]
      %v1095 = vld [vmem:[%s2 + $0x80] sm:$0xff]
      %v1096 = vld [vmem:[%s2 + $0x88] sm:$0xff]
      %v1097 = vld [vmem:[%s2 + $0x90] sm:$0xff]
      %v1098 = vld [vmem:[%s2 + $0x98] sm:$0xff]
      %v1099 = vld [vmem:[%s2 + $0xa0] sm:$0xff]
      %v1100 = vld [vmem:[%s2 + $0xa8] sm:$0xff]
      %v1101 = vld [vmem:[%s2 + $0xb0] sm:$0xff]
      %v1102 = vld [vmem:[%s2 + $0xb8] sm:$0xff]
      %v1103 = vld [vmem:[%s2 + $0xc0] sm:$0xff]
      %v1104 = vld [vmem:[%s2 + $0xc8] sm:$0xff]
      %v1105 = vld [vmem:[%s2 + $0xd0] sm:$0xff]
      %v1106 = vld [vmem:[%s2 + $0xd8] sm:$0xff]
      %v1107 = vld [vmem:[%s2 + $0xe0] sm:$0xff]
      %v1108 = vld [vmem:[%s2 + $0xe8] sm:$0xff]
      %v1109 = vld [vmem:[%s2 + $0xf0] sm:$0xff]
      %v1110 = vld [vmem:[%s2 + $0xf8] sm:$0xff]
      %v1111 = vld [vmem:[%s2 + $0x100] sm:$0xff]
      %v1112 = vld [vmem:[%s2 + $0x108] sm:$0xff]
      %v1113 = vld [vmem:[%s2 + $0x110] sm:$0xff]
      %v1114 = vld [vmem:[%s2 + $0x118] sm:$0xff]
      %v1115 = vld [vmem:[%s2 + $0x120] sm:$0xff]
      %v1116 = vld [vmem:[%s2 + $0x128] sm:$0xff]
      %v1117 = vld [vmem:[%s2 + $0x130] sm:$0xff]
      %v1118 = vld [vmem:[%s2 + $0x138] sm:$0xff]
      %v1119 = vld [vmem:[%s2 + $0x140] sm:$0xff]
      %v1120 = vld [vmem:[%s2 + $0x148] sm:$0xff]
      %v1121 = vld [vmem:[%s2 + $0x150] sm:$0xff]
      %v1122 = vld [vmem:[%s2 + $0x158] sm:$0xff]
      %v1123 = vld [vmem:[%s2 + $0x160] sm:$0xff]
      %v1124 = vld [vmem:[%s2 + $0x168] sm:$0xff]
      %v1125 = vld [vmem:[%s2 + $0x170] sm:$0xff]
      %v1126 = vld [vmem:[%s2 + $0x178] sm:$0xff]
      %v1127 = vld [vmem:[%s2 + $0x180] sm:$0xff]
      %v1128 = vld [vmem:[%s2 + $0x188] sm:$0xff]
      %v1129 = vld [vmem:[%s2 + $0x190] sm:$0xff]
      %v1130 = vld [vmem:[%s2 + $0x198] sm:$0xff]
      %v1131 = vld [vmem:[%s2 + $0x1a0] sm:$0xff]
      %v1132 = vld [vmem:[%s2 + $0x1a8] sm:$0xff]
      %v1133 = vld [vmem:[%s2 + $0x1b0] sm:$0xff]
      %v1134 = vld [vmem:[%s2 + $0x1b8] sm:$0xff]
      %v1135 = vld [vmem:[%s2 + $0x1c0] sm:$0xff]
      %v1136 = vld [vmem:[%s2 + $0x1c8] sm:$0xff]
      %v1137 = vld [vmem:[%s2 + $0x1d0] sm:$0xff]
      %v1138 = vld [vmem:[%s2 + $0x1d8] sm:$0xff]
      %v1139 = vld [vmem:[%s2 + $0x1e0] sm:$0xff]
      %v1140 = vld [vmem:[%s2 + $0x1e8] sm:$0xff]
      %v1141 = vld [vmem:[%s2 + $0x1f0] sm:$0xff]
      %v1142 = vld [vmem:[%s2 + $0x1f8] sm:$0xff]
      %1143 = vmatprep.subr.mxu0 %v1080
      %1144 = vmatpush1.msra.mxu0 %v1079
      %1145 = vmatprep.subr.mxu0 %v1084
      %1146 = vmatpush1.msra.mxu0 %v1083
      %1147 = vmatprep.subr.mxu0 %v1088
      %1148 = vmatpush1.msra.mxu0 %v1087
      %1149 = vmatprep.subr.mxu0 %v1092
      %1150 = vmatpush1.msra.mxu0 %v1091
      %1151 = vmatprep.subr.mxu0 %v1096
      %1152 = vmatpush1.msra.mxu0 %v1095
      %1153 = vmatprep.subr.mxu0 %v1100
      %1154 = vmatpush1.msra.mxu0 %v1099
      %1155 = vmatprep.subr.mxu0 %v1104
      %1156 = vmatpush1.msra.mxu0 %v1103
      %1157 = vmatprep.subr.mxu0 %v1108
      %1158 = vmatpush1.msra.mxu0 %v1107
      %1159 = vmatprep.subr.mxu0 %v1112
      %1160 = vmatpush1.msra.mxu0 %v1111
      %1161 = vmatprep.subr.mxu0 %v1116
      %1162 = vmatpush1.msra.mxu0 %v1115
      %1163 = vmatprep.subr.mxu0 %v1120
      %1164 = vmatpush1.msra.mxu0 %v1119
      %1165 = vmatprep.subr.mxu0 %v1124
      %1166 = vmatpush1.msra.mxu0 %v1123
      %1167 = vmatprep.subr.mxu0 %v1128
      %1168 = vmatpush1.msra.mxu0 %v1127
      %1169 = vmatprep.subr.mxu0 %v1132
      %1170 = vmatpush1.msra.mxu0 %v1131
      %1171 = vmatprep.subr.mxu0 %v1136
      %1172 = vmatpush1.msra.mxu0 %v1135
      %1173 = vmatprep.subr.mxu0 %v1140
      %1174 = vmatpush1.msra.mxu0 %v1139
      %1175 = vmatprep.subr.mxu0 0.0
      %1176 = vmatpush1.msra.mxu0 0.0
      %1177 = vmatprep.subr.mxu0 0.0
      %1178 = vmatpush1.msra.mxu0 0.0
      %1179 = vmatprep.subr.mxu0 0.0
      %1180 = vmatpush1.msra.mxu0 0.0
      %1181 = vmatprep.subr.mxu0 0.0
      %1182 = vmatpush1.msra.mxu0 0.0
      %1183 = vmatprep.subr.mxu0 0.0
      %1184 = vmatpush1.msra.mxu0 0.0
      %1185 = vmatprep.subr.mxu0 0.0
      %1186 = vmatpush1.msra.mxu0 0.0
      %1187 = vmatprep.subr.mxu0 0.0
      %1188 = vmatpush1.msra.mxu0 0.0
      %1189 = vmatprep.subr.mxu0 0.0
      %1190 = vmatpush1.msra.mxu0 0.0
      %1191 = vmatprep.subr.mxu0 0.0
      %1192 = vmatpush1.msra.mxu0 0.0
      %1193 = vmatprep.subr.mxu0 0.0
      %1194 = vmatpush1.msra.mxu0 0.0
      %1195 = vmatprep.subr.mxu0 0.0
      %1196 = vmatpush1.msra.mxu0 0.0
      %1197 = vmatprep.subr.mxu0 0.0
      %1198 = vmatpush1.msra.mxu0 0.0
      %1199 = vmatprep.subr.mxu0 0.0
      %1200 = vmatpush1.msra.mxu0 0.0
      %1201 = vmatprep.subr.mxu0 0.0
      %1202 = vmatpush1.msra.mxu0 0.0
      %1203 = vmatprep.subr.mxu0 0.0
      %1204 = vmatpush1.msra.mxu0 0.0
      %1205 = vmatprep.subr.mxu0 0.0
      %1206 = vmatpush1.msra.mxu0 0.0
      %1207 = vmatprep.mubr.f32.mxu0 0.0
      %1208 = vmatmul.mubr.f32.gmra.mrb[0].mxu0 %v1066
      %v1209 = vpop.f32.mrb[0].mxu0
      %v1210 = vadd.f32 0.0, %v1209
      %v1211 = vpop.f32.mrb[0].mxu0
      %v1212 = vadd.f32 0.0, %v1211
      %1213 = vdwg.mxu0
      %1214 = vmatprep.subr.mxu0 %v1082
      %1215 = vmatpush1.msra.mxu0 %v1081
      %1216 = vmatprep.subr.mxu0 %v1086
      %1217 = vmatpush1.msra.mxu0 %v1085
      %1218 = vmatprep.subr.mxu0 %v1090
      %1219 = vmatpush1.msra.mxu0 %v1089
      %1220 = vmatprep.subr.mxu0 %v1094
      %1221 = vmatpush1.msra.mxu0 %v1093
      %1222 = vmatprep.subr.mxu0 %v1098
      %1223 = vmatpush1.msra.mxu0 %v1097
      %1224 = vmatprep.subr.mxu0 %v1102
      %1225 = vmatpush1.msra.mxu0 %v1101
      %1226 = vmatprep.subr.mxu0 %v1106
      %1227 = vmatpush1.msra.mxu0 %v1105
      %1228 = vmatprep.subr.mxu0 %v1110
      %1229 = vmatpush1.msra.mxu0 %v1109
      %1230 = vmatprep.subr.mxu0 %v1114
      %1231 = vmatpush1.msra.mxu0 %v1113
      %1232 = vmatprep.subr.mxu0 %v1118
      %1233 = vmatpush1.msra.mxu0 %v1117
      %1234 = vmatprep.subr.mxu0 %v1122
      %1235 = vmatpush1.msra.mxu0 %v1121
      %1236 = vmatprep.subr.mxu0 %v1126
      %1237 = vmatpush1.msra.mxu0 %v1125
      %1238 = vmatprep.subr.mxu0 %v1130
      %1239 = vmatpush1.msra.mxu0 %v1129
      %1240 = vmatprep.subr.mxu0 %v1134
      %1241 = vmatpush1.msra.mxu0 %v1133
      %1242 = vmatprep.subr.mxu0 %v1138
      %1243 = vmatpush1.msra.mxu0 %v1137
      %1244 = vmatprep.subr.mxu0 %v1142
      %1245 = vmatpush1.msra.mxu0 %v1141
      %1246 = vmatprep.subr.mxu0 0.0
      %1247 = vmatpush1.msra.mxu0 0.0
      %1248 = vmatprep.subr.mxu0 0.0
      %1249 = vmatpush1.msra.mxu0 0.0
      %1250 = vmatprep.subr.mxu0 0.0
      %1251 = vmatpush1.msra.mxu0 0.0
      %1252 = vmatprep.subr.mxu0 0.0
      %1253 = vmatpush1.msra.mxu0 0.0
      %1254 = vmatprep.subr.mxu0 0.0
      %1255 = vmatpush1.msra.mxu0 0.0
      %1256 = vmatprep.subr.mxu0 0.0
      %1257 = vmatpush1.msra.mxu0 0.0
      %1258 = vmatprep.subr.mxu0 0.0
      %1259 = vmatpush1.msra.mxu0 0.0
      %1260 = vmatprep.subr.mxu0 0.0
      %1261 = vmatpush1.msra.mxu0 0.0
      %1262 = vmatprep.subr.mxu0 0.0
      %1263 = vmatpush1.msra.mxu0 0.0
      %1264 = vmatprep.subr.mxu0 0.0
      %1265 = vmatpush1.msra.mxu0 0.0
      %1266 = vmatprep.subr.mxu0 0.0
      %1267 = vmatpush1.msra.mxu0 0.0
      %1268 = vmatprep.subr.mxu0 0.0
      %1269 = vmatpush1.msra.mxu0 0.0
      %1270 = vmatprep.subr.mxu0 0.0
      %1271 = vmatpush1.msra.mxu0 0.0
      %1272 = vmatprep.subr.mxu0 0.0
      %1273 = vmatpush1.msra.mxu0 0.0
      %1274 = vmatprep.subr.mxu0 0.0
      %1275 = vmatpush1.msra.mxu0 0.0
      %1276 = vmatprep.subr.mxu0 0.0
      %1277 = vmatpush1.msra.mxu0 0.0
      %1278 = vmatprep.mubr.f32.mxu0 0.0
      %1279 = vmatmul.mubr.f32.gmra.mrb[0].mxu0 %v1066
      %v1280 = vpop.f32.mrb[0].mxu0
      %v1281 = vadd.f32 0.0, %v1280
      %v1282 = vpop.f32.mrb[0].mxu0
      %v1283 = vadd.f32 0.0, %v1282
      %1284 = vdwg.mxu0
      %v1286 = vsel %vm515, %v1070, 0
      %1288 = vmatprep.subr.mxu0 %v1072
      %1289 = vmatpush1.msra.mxu0 %v1071
      %1290 = vmatprep.subr.mxu0 %v1076
      %1291 = vmatpush1.msra.mxu0 %v1075
      %1292 = vmatprep.subr.mxu0 0.0
      %1293 = vmatpush1.msra.mxu0 0.0
      %1294 = vmatprep.subr.mxu0 0.0
      %1295 = vmatpush1.msra.mxu0 0.0
      %1296 = vmatprep.subr.mxu0 0.0
      %1297 = vmatpush1.msra.mxu0 0.0
      %1298 = vmatprep.subr.mxu0 0.0
      %1299 = vmatpush1.msra.mxu0 0.0
      %1300 = vmatprep.subr.mxu0 0.0
      %1301 = vmatpush1.msra.mxu0 0.0
      %1302 = vmatprep.subr.mxu0 0.0
      %1303 = vmatpush1.msra.mxu0 0.0
      %1304 = vmatprep.subr.mxu0 0.0
      %1305 = vmatpush1.msra.mxu0 0.0
      %1306 = vmatprep.subr.mxu0 0.0
      %1307 = vmatpush1.msra.mxu0 0.0
      %1308 = vmatprep.subr.mxu0 0.0
      %1309 = vmatpush1.msra.mxu0 0.0
      %1310 = vmatprep.subr.mxu0 0.0
      %1311 = vmatpush1.msra.mxu0 0.0
      %1312 = vmatprep.subr.mxu0 0.0
      %1313 = vmatpush1.msra.mxu0 0.0
      %1314 = vmatprep.subr.mxu0 0.0
      %1315 = vmatpush1.msra.mxu0 0.0
      %1316 = vmatprep.subr.mxu0 0.0
      %1317 = vmatpush1.msra.mxu0 0.0
      %1318 = vmatprep.subr.mxu0 0.0
      %1319 = vmatpush1.msra.mxu0 0.0
      %1320 = vmatprep.subr.mxu0 0.0
      %1321 = vmatpush1.msra.mxu0 0.0
      %1322 = vmatprep.subr.mxu0 0.0
      %1323 = vmatpush1.msra.mxu0 0.0
      %1324 = vmatprep.subr.mxu0 0.0
      %1325 = vmatpush1.msra.mxu0 0.0
      %1326 = vmatprep.subr.mxu0 0.0
      %1327 = vmatpush1.msra.mxu0 0.0
      %1328 = vmatprep.subr.mxu0 0.0
      %1329 = vmatpush1.msra.mxu0 0.0
      %1330 = vmatprep.subr.mxu0 0.0
      %1331 = vmatpush1.msra.mxu0 0.0
      %1332 = vmatprep.subr.mxu0 0.0
      %1333 = vmatpush1.msra.mxu0 0.0
      %1334 = vmatprep.subr.mxu0 0.0
      %1335 = vmatpush1.msra.mxu0 0.0
      %1336 = vmatprep.subr.mxu0 0.0
      %1337 = vmatpush1.msra.mxu0 0.0
      %1338 = vmatprep.subr.mxu0 0.0
      %1339 = vmatpush1.msra.mxu0 0.0
      %1340 = vmatprep.subr.mxu0 0.0
      %1341 = vmatpush1.msra.mxu0 0.0
      %1342 = vmatprep.subr.mxu0 0.0
      %1343 = vmatpush1.msra.mxu0 0.0
      %1344 = vmatprep.subr.mxu0 0.0
      %1345 = vmatpush1.msra.mxu0 0.0
      %1346 = vmatprep.subr.mxu0 0.0
      %1347 = vmatpush1.msra.mxu0 0.0
      %1348 = vmatprep.subr.mxu0 0.0
      %1349 = vmatpush1.msra.mxu0 0.0
      %1350 = vmatprep.subr.mxu0 0.0
      %1351 = vmatpush1.msra.mxu0 0.0
      %1352 = vmatprep.mubr.f32.mxu0 0.0
      %1353 = vmatmul.mubr.f32.gmra.mrb[0].mxu0 %v1286
      %v1354 = vpop.f32.mrb[0].mxu0
      %v1355 = vadd.f32 %v1210, %v1354
      %v1356 = vpop.f32.mrb[0].mxu0
      %v1357 = vadd.f32 %v1212, %v1356
      %1358 = vdwg.mxu0
      %1359 = vmatprep.subr.mxu0 %v1074
      %1360 = vmatpush1.msra.mxu0 %v1073
      %1361 = vmatprep.subr.mxu0 %v1078
      %1362 = vmatpush1.msra.mxu0 %v1077
      %1363 = vmatprep.subr.mxu0 0.0
      %1364 = vmatpush1.msra.mxu0 0.0
      %1365 = vmatprep.subr.mxu0 0.0
      %1366 = vmatpush1.msra.mxu0 0.0
      %1367 = vmatprep.subr.mxu0 0.0
      %1368 = vmatpush1.msra.mxu0 0.0
      %1369 = vmatprep.subr.mxu0 0.0
      %1370 = vmatpush1.msra.mxu0 0.0
      %1371 = vmatprep.subr.mxu0 0.0
      %1372 = vmatpush1.msra.mxu0 0.0
      %1373 = vmatprep.subr.mxu0 0.0
      %1374 = vmatpush1.msra.mxu0 0.0
      %1375 = vmatprep.subr.mxu0 0.0
      %1376 = vmatpush1.msra.mxu0 0.0
      %1377 = vmatprep.subr.mxu0 0.0
      %1378 = vmatpush1.msra.mxu0 0.0
      %1379 = vmatprep.subr.mxu0 0.0
      %1380 = vmatpush1.msra.mxu0 0.0
      %1381 = vmatprep.subr.mxu0 0.0
      %1382 = vmatpush1.msra.mxu0 0.0
      %1383 = vmatprep.subr.mxu0 0.0
      %1384 = vmatpush1.msra.mxu0 0.0
      %1385 = vmatprep.subr.mxu0 0.0
      %1386 = vmatpush1.msra.mxu0 0.0
      %1387 = vmatprep.subr.mxu0 0.0
      %1388 = vmatpush1.msra.mxu0 0.0
      %1389 = vmatprep.subr.mxu0 0.0
      %1390 = vmatpush1.msra.mxu0 0.0
      %1391 = vmatprep.subr.mxu0 0.0
      %1392 = vmatpush1.msra.mxu0 0.0
      %1393 = vmatprep.subr.mxu0 0.0
      %1394 = vmatpush1.msra.mxu0 0.0
      %1395 = vmatprep.subr.mxu0 0.0
      %1396 = vmatpush1.msra.mxu0 0.0
      %1397 = vmatprep.subr.mxu0 0.0
      %1398 = vmatpush1.msra.mxu0 0.0
      %1399 = vmatprep.subr.mxu0 0.0
      %1400 = vmatpush1.msra.mxu0 0.0
      %1401 = vmatprep.subr.mxu0 0.0
      %1402 = vmatpush1.msra.mxu0 0.0
      %1403 = vmatprep.subr.mxu0 0.0
      %1404 = vmatpush1.msra.mxu0 0.0
      %1405 = vmatprep.subr.mxu0 0.0
      %1406 = vmatpush1.msra.mxu0 0.0
      %1407 = vmatprep.subr.mxu0 0.0
      %1408 = vmatpush1.msra.mxu0 0.0
      %1409 = vmatprep.subr.mxu0 0.0
      %1410 = vmatpush1.msra.mxu0 0.0
      %1411 = vmatprep.subr.mxu0 0.0
      %1412 = vmatpush1.msra.mxu0 0.0
      %1413 = vmatprep.subr.mxu0 0.0
      %1414 = vmatpush1.msra.mxu0 0.0
      %1415 = vmatprep.subr.mxu0 0.0
      %1416 = vmatpush1.msra.mxu0 0.0
      %1417 = vmatprep.subr.mxu0 0.0
      %1418 = vmatpush1.msra.mxu0 0.0
      %1419 = vmatprep.subr.mxu0 0.0
      %1420 = vmatpush1.msra.mxu0 0.0
      %1421 = vmatprep.subr.mxu0 0.0
      %1422 = vmatpush1.msra.mxu0 0.0
      %1423 = vmatprep.mubr.f32.mxu0 0.0
      %1424 = vmatmul.mubr.f32.gmra.mrb[0].mxu0 %v1286
      %v1425 = vpop.f32.mrb[0].mxu0
      %v1426 = vadd.f32 %v1281, %v1425
      %v1427 = vpop.f32.mrb[0].mxu0
      %v1428 = vadd.f32 %v1283, %v1427
      %1429 = vdwg.mxu0
      %v1430 = vadd.f32 %v1355, %v283
      %v1431 = vadd.f32 %v1357, %v287
      %v1432 = vadd.f32 %v1426, %v291
      %v1433 = vadd.f32 %v1428, %v295
      %v1434 = vmul.f32 %v1430, 0.5
      %v1435 = vtanh.pop %v1434
      %v1436 = vmul.f32 %v1435, 0.5
      %v1437 = vadd.f32 %v1436, 0.5
      %v1438 = vmul.f32 %v1431, 0.5
      %v1439 = vtanh.pop %v1438
      %v1440 = vmul.f32 %v1439, 0.5
      %v1441 = vadd.f32 %v1440, 0.5
      %v1442 = vtanh.pop %v1432
      %v1443 = vmul.f32 %v1433, 0.5
      %v1444 = vtanh.pop %v1443
      %v1445 = vmul.f32 %v1444, 0.5
      %v1446 = vadd.f32 %v1445, 0.5
      %v1447 = vmul.f32 %v1437, %v1064
      %v1448 = vmul.f32 %v1441, %v1442
      %v1449 = vadd.f32 %v1447, %v1448
      %v1450 = vtanh.pop %v1449
      %v1451 = vmul.f32 %v1446, %v1450
      %s1452 = scalar_lea.vmem %s264, 16
      %1453 = vst [vmem:[%s1452] sm:$0xff] %v1451
      %s1454 = scalar_lea.vmem %s255, 24
      %v1455 = vld [vmem:[%s1454] sm:$0xff]
      %v1456 = vld [vmem:[%s1] sm:$0xff]
      %v1457 = vld [vmem:[%s1 + $0x8] sm:$0xff]
      %v1458 = vld [vmem:[%s1 + $0x10] sm:$0xff]
      %v1459 = vld [vmem:[%s1 + $0x18] sm:$0xff]
      %v1460 = vld [vmem:[%s1 + $0x20] sm:$0xff]
      %v1461 = vld [vmem:[%s1 + $0x28] sm:$0xff]
      %v1462 = vld [vmem:[%s1 + $0x30] sm:$0xff]
      %v1463 = vld [vmem:[%s1 + $0x38] sm:$0xff]
      %v1464 = vld [vmem:[%s2] sm:$0xff]
      %v1465 = vld [vmem:[%s2 + $0x8] sm:$0xff]
      %v1466 = vld [vmem:[%s2 + $0x10] sm:$0xff]
      %v1467 = vld [vmem:[%s2 + $0x18] sm:$0xff]
      %v1468 = vld [vmem:[%s2 + $0x20] sm:$0xff]
      %v1469 = vld [vmem:[%s2 + $0x28] sm:$0xff]
      %v1470 = vld [vmem:[%s2 + $0x30] sm:$0xff]
      %v1471 = vld [vmem:[%s2 + $0x38] sm:$0xff]
      %v1472 = vld [vmem:[%s2 + $0x40] sm:$0xff]
      %v1473 = vld [vmem:[%s2 + $0x48] sm:$0xff]
      %v1474 = vld [vmem:[%s2 + $0x50] sm:$0xff]
      %v1475 = vld [vmem:[%s2 + $0x58] sm:$0xff]
      %v1476 = vld [vmem:[%s2 + $0x60] sm:$0xff]
      %v1477 = vld [vmem:[%s2 + $0x68] sm:$0xff]
      %v1478 = vld [vmem:[%s2 + $0x70] sm:$0xff]
      %v1479 = vld [vmem:[%s2 + $0x78] sm:$0xff]
      %v1480 = vld [vmem:[%s2 + $0x80] sm:$0xff]
      %v1481 = vld [vmem:[%s2 + $0x88] sm:$0xff]
      %v1482 = vld [vmem:[%s2 + $0x90] sm:$0xff]
      %v1483 = vld [vmem:[%s2 + $0x98] sm:$0xff]
      %v1484 = vld [vmem:[%s2 + $0xa0] sm:$0xff]
      %v1485 = vld [vmem:[%s2 + $0xa8] sm:$0xff]
      %v1486 = vld [vmem:[%s2 + $0xb0] sm:$0xff]
      %v1487 = vld [vmem:[%s2 + $0xb8] sm:$0xff]
      %v1488 = vld [vmem:[%s2 + $0xc0] sm:$0xff]
      %v1489 = vld [vmem:[%s2 + $0xc8] sm:$0xff]
      %v1490 = vld [vmem:[%s2 + $0xd0] sm:$0xff]
      %v1491 = vld [vmem:[%s2 + $0xd8] sm:$0xff]
      %v1492 = vld [vmem:[%s2 + $0xe0] sm:$0xff]
      %v1493 = vld [vmem:[%s2 + $0xe8] sm:$0xff]
      %v1494 = vld [vmem:[%s2 + $0xf0] sm:$0xff]
      %v1495 = vld [vmem:[%s2 + $0xf8] sm:$0xff]
      %v1496 = vld [vmem:[%s2 + $0x100] sm:$0xff]
      %v1497 = vld [vmem:[%s2 + $0x108] sm:$0xff]
      %v1498 = vld [vmem:[%s2 + $0x110] sm:$0xff]
      %v1499 = vld [vmem:[%s2 + $0x118] sm:$0xff]
      %v1500 = vld [vmem:[%s2 + $0x120] sm:$0xff]
      %v1501 = vld [vmem:[%s2 + $0x128] sm:$0xff]
      %v1502 = vld [vmem:[%s2 + $0x130] sm:$0xff]
      %v1503 = vld [vmem:[%s2 + $0x138] sm:$0xff]
      %v1504 = vld [vmem:[%s2 + $0x140] sm:$0xff]
      %v1505 = vld [vmem:[%s2 + $0x148] sm:$0xff]
      %v1506 = vld [vmem:[%s2 + $0x150] sm:$0xff]
      %v1507 = vld [vmem:[%s2 + $0x158] sm:$0xff]
      %v1508 = vld [vmem:[%s2 + $0x160] sm:$0xff]
      %v1509 = vld [vmem:[%s2 + $0x168] sm:$0xff]
      %v1510 = vld [vmem:[%s2 + $0x170] sm:$0xff]
      %v1511 = vld [vmem:[%s2 + $0x178] sm:$0xff]
      %v1512 = vld [vmem:[%s2 + $0x180] sm:$0xff]
      %v1513 = vld [vmem:[%s2 + $0x188] sm:$0xff]
      %v1514 = vld [vmem:[%s2 + $0x190] sm:$0xff]
      %v1515 = vld [vmem:[%s2 + $0x198] sm:$0xff]
      %v1516 = vld [vmem:[%s2 + $0x1a0] sm:$0xff]
      %v1517 = vld [vmem:[%s2 + $0x1a8] sm:$0xff]
      %v1518 = vld [vmem:[%s2 + $0x1b0] sm:$0xff]
      %v1519 = vld [vmem:[%s2 + $0x1b8] sm:$0xff]
      %v1520 = vld [vmem:[%s2 + $0x1c0] sm:$0xff]
      %v1521 = vld [vmem:[%s2 + $0x1c8] sm:$0xff]
      %v1522 = vld [vmem:[%s2 + $0x1d0] sm:$0xff]
      %v1523 = vld [vmem:[%s2 + $0x1d8] sm:$0xff]
      %v1524 = vld [vmem:[%s2 + $0x1e0] sm:$0xff]
      %v1525 = vld [vmem:[%s2 + $0x1e8] sm:$0xff]
      %v1526 = vld [vmem:[%s2 + $0x1f0] sm:$0xff]
      %v1527 = vld [vmem:[%s2 + $0x1f8] sm:$0xff]
      %1528 = vmatprep.subr.mxu0 %v1465
      %1529 = vmatpush1.msra.mxu0 %v1464
      %1530 = vmatprep.subr.mxu0 %v1469
      %1531 = vmatpush1.msra.mxu0 %v1468
      %1532 = vmatprep.subr.mxu0 %v1473
      %1533 = vmatpush1.msra.mxu0 %v1472
      %1534 = vmatprep.subr.mxu0 %v1477
      %1535 = vmatpush1.msra.mxu0 %v1476
      %1536 = vmatprep.subr.mxu0 %v1481
      %1537 = vmatpush1.msra.mxu0 %v1480
      %1538 = vmatprep.subr.mxu0 %v1485
      %1539 = vmatpush1.msra.mxu0 %v1484
      %1540 = vmatprep.subr.mxu0 %v1489
      %1541 = vmatpush1.msra.mxu0 %v1488
      %1542 = vmatprep.subr.mxu0 %v1493
      %1543 = vmatpush1.msra.mxu0 %v1492
      %1544 = vmatprep.subr.mxu0 %v1497
      %1545 = vmatpush1.msra.mxu0 %v1496
      %1546 = vmatprep.subr.mxu0 %v1501
      %1547 = vmatpush1.msra.mxu0 %v1500
      %1548 = vmatprep.subr.mxu0 %v1505
      %1549 = vmatpush1.msra.mxu0 %v1504
      %1550 = vmatprep.subr.mxu0 %v1509
      %1551 = vmatpush1.msra.mxu0 %v1508
      %1552 = vmatprep.subr.mxu0 %v1513
      %1553 = vmatpush1.msra.mxu0 %v1512
      %1554 = vmatprep.subr.mxu0 %v1517
      %1555 = vmatpush1.msra.mxu0 %v1516
      %1556 = vmatprep.subr.mxu0 %v1521
      %1557 = vmatpush1.msra.mxu0 %v1520
      %1558 = vmatprep.subr.mxu0 %v1525
      %1559 = vmatpush1.msra.mxu0 %v1524
      %1560 = vmatprep.subr.mxu0 0.0
      %1561 = vmatpush1.msra.mxu0 0.0
      %1562 = vmatprep.subr.mxu0 0.0
      %1563 = vmatpush1.msra.mxu0 0.0
      %1564 = vmatprep.subr.mxu0 0.0
      %1565 = vmatpush1.msra.mxu0 0.0
      %1566 = vmatprep.subr.mxu0 0.0
      %1567 = vmatpush1.msra.mxu0 0.0
      %1568 = vmatprep.subr.mxu0 0.0
      %1569 = vmatpush1.msra.mxu0 0.0
      %1570 = vmatprep.subr.mxu0 0.0
      %1571 = vmatpush1.msra.mxu0 0.0
      %1572 = vmatprep.subr.mxu0 0.0
      %1573 = vmatpush1.msra.mxu0 0.0
      %1574 = vmatprep.subr.mxu0 0.0
      %1575 = vmatpush1.msra.mxu0 0.0
      %1576 = vmatprep.subr.mxu0 0.0
      %1577 = vmatpush1.msra.mxu0 0.0
      %1578 = vmatprep.subr.mxu0 0.0
      %1579 = vmatpush1.msra.mxu0 0.0
      %1580 = vmatprep.subr.mxu0 0.0
      %1581 = vmatpush1.msra.mxu0 0.0
      %1582 = vmatprep.subr.mxu0 0.0
      %1583 = vmatpush1.msra.mxu0 0.0
      %1584 = vmatprep.subr.mxu0 0.0
      %1585 = vmatpush1.msra.mxu0 0.0
      %1586 = vmatprep.subr.mxu0 0.0
      %1587 = vmatpush1.msra.mxu0 0.0
      %1588 = vmatprep.subr.mxu0 0.0
      %1589 = vmatpush1.msra.mxu0 0.0
      %1590 = vmatprep.subr.mxu0 0.0
      %1591 = vmatpush1.msra.mxu0 0.0
      %1592 = vmatprep.mubr.f32.mxu0 0.0
      %1593 = vmatmul.mubr.f32.gmra.mrb[0].mxu0 %v1451
      %v1594 = vpop.f32.mrb[0].mxu0
      %v1595 = vadd.f32 0.0, %v1594
      %v1596 = vpop.f32.mrb[0].mxu0
      %v1597 = vadd.f32 0.0, %v1596
      %1598 = vdwg.mxu0
      %1599 = vmatprep.subr.mxu0 %v1467
      %1600 = vmatpush1.msra.mxu0 %v1466
      %1601 = vmatprep.subr.mxu0 %v1471
      %1602 = vmatpush1.msra.mxu0 %v1470
      %1603 = vmatprep.subr.mxu0 %v1475
      %1604 = vmatpush1.msra.mxu0 %v1474
      %1605 = vmatprep.subr.mxu0 %v1479
      %1606 = vmatpush1.msra.mxu0 %v1478
      %1607 = vmatprep.subr.mxu0 %v1483
      %1608 = vmatpush1.msra.mxu0 %v1482
      %1609 = vmatprep.subr.mxu0 %v1487
      %1610 = vmatpush1.msra.mxu0 %v1486
      %1611 = vmatprep.subr.mxu0 %v1491
      %1612 = vmatpush1.msra.mxu0 %v1490
      %1613 = vmatprep.subr.mxu0 %v1495
      %1614 = vmatpush1.msra.mxu0 %v1494
      %1615 = vmatprep.subr.mxu0 %v1499
      %1616 = vmatpush1.msra.mxu0 %v1498
      %1617 = vmatprep.subr.mxu0 %v1503
      %1618 = vmatpush1.msra.mxu0 %v1502
      %1619 = vmatprep.subr.mxu0 %v1507
      %1620 = vmatpush1.msra.mxu0 %v1506
      %1621 = vmatprep.subr.mxu0 %v1511
      %1622 = vmatpush1.msra.mxu0 %v1510
      %1623 = vmatprep.subr.mxu0 %v1515
      %1624 = vmatpush1.msra.mxu0 %v1514
      %1625 = vmatprep.subr.mxu0 %v1519
      %1626 = vmatpush1.msra.mxu0 %v1518
      %1627 = vmatprep.subr.mxu0 %v1523
      %1628 = vmatpush1.msra.mxu0 %v1522
      %1629 = vmatprep.subr.mxu0 %v1527
      %1630 = vmatpush1.msra.mxu0 %v1526
      %1631 = vmatprep.subr.mxu0 0.0
      %1632 = vmatpush1.msra.mxu0 0.0
      %1633 = vmatprep.subr.mxu0 0.0
      %1634 = vmatpush1.msra.mxu0 0.0
      %1635 = vmatprep.subr.mxu0 0.0
      %1636 = vmatpush1.msra.mxu0 0.0
      %1637 = vmatprep.subr.mxu0 0.0
      %1638 = vmatpush1.msra.mxu0 0.0
      %1639 = vmatprep.subr.mxu0 0.0
      %1640 = vmatpush1.msra.mxu0 0.0
      %1641 = vmatprep.subr.mxu0 0.0
      %1642 = vmatpush1.msra.mxu0 0.0
      %1643 = vmatprep.subr.mxu0 0.0
      %1644 = vmatpush1.msra.mxu0 0.0
      %1645 = vmatprep.subr.mxu0 0.0
      %1646 = vmatpush1.msra.mxu0 0.0
      %1647 = vmatprep.subr.mxu0 0.0
      %1648 = vmatpush1.msra.mxu0 0.0
      %1649 = vmatprep.subr.mxu0 0.0
      %1650 = vmatpush1.msra.mxu0 0.0
      %1651 = vmatprep.subr.mxu0 0.0
      %1652 = vmatpush1.msra.mxu0 0.0
      %1653 = vmatprep.subr.mxu0 0.0
      %1654 = vmatpush1.msra.mxu0 0.0
      %1655 = vmatprep.subr.mxu0 0.0
      %1656 = vmatpush1.msra.mxu0 0.0
      %1657 = vmatprep.subr.mxu0 0.0
      %1658 = vmatpush1.msra.mxu0 0.0
      %1659 = vmatprep.subr.mxu0 0.0
      %1660 = vmatpush1.msra.mxu0 0.0
      %1661 = vmatprep.subr.mxu0 0.0
      %1662 = vmatpush1.msra.mxu0 0.0
      %1663 = vmatprep.mubr.f32.mxu0 0.0
      %1664 = vmatmul.mubr.f32.gmra.mrb[0].mxu0 %v1451
      %v1665 = vpop.f32.mrb[0].mxu0
      %v1666 = vadd.f32 0.0, %v1665
      %v1667 = vpop.f32.mrb[0].mxu0
      %v1668 = vadd.f32 0.0, %v1667
      %1669 = vdwg.mxu0
      %v1671 = vsel %vm515, %v1455, 0
      %1673 = vmatprep.subr.mxu0 %v1457
      %1674 = vmatpush1.msra.mxu0 %v1456
      %1675 = vmatprep.subr.mxu0 %v1461
      %1676 = vmatpush1.msra.mxu0 %v1460
      %1677 = vmatprep.subr.mxu0 0.0
      %1678 = vmatpush1.msra.mxu0 0.0
      %1679 = vmatprep.subr.mxu0 0.0
      %1680 = vmatpush1.msra.mxu0 0.0
      %1681 = vmatprep.subr.mxu0 0.0
      %1682 = vmatpush1.msra.mxu0 0.0
      %1683 = vmatprep.subr.mxu0 0.0
      %1684 = vmatpush1.msra.mxu0 0.0
      %1685 = vmatprep.subr.mxu0 0.0
      %1686 = vmatpush1.msra.mxu0 0.0
      %1687 = vmatprep.subr.mxu0 0.0
      %1688 = vmatpush1.msra.mxu0 0.0
      %1689 = vmatprep.subr.mxu0 0.0
      %1690 = vmatpush1.msra.mxu0 0.0
      %1691 = vmatprep.subr.mxu0 0.0
      %1692 = vmatpush1.msra.mxu0 0.0
      %1693 = vmatprep.subr.mxu0 0.0
      %1694 = vmatpush1.msra.mxu0 0.0
      %1695 = vmatprep.subr.mxu0 0.0
      %1696 = vmatpush1.msra.mxu0 0.0
      %1697 = vmatprep.subr.mxu0 0.0
      %1698 = vmatpush1.msra.mxu0 0.0
      %1699 = vmatprep.subr.mxu0 0.0
      %1700 = vmatpush1.msra.mxu0 0.0
      %1701 = vmatprep.subr.mxu0 0.0
      %1702 = vmatpush1.msra.mxu0 0.0
      %1703 = vmatprep.subr.mxu0 0.0
      %1704 = vmatpush1.msra.mxu0 0.0
      %1705 = vmatprep.subr.mxu0 0.0
      %1706 = vmatpush1.msra.mxu0 0.0
      %1707 = vmatprep.subr.mxu0 0.0
      %1708 = vmatpush1.msra.mxu0 0.0
      %1709 = vmatprep.subr.mxu0 0.0
      %1710 = vmatpush1.msra.mxu0 0.0
      %1711 = vmatprep.subr.mxu0 0.0
      %1712 = vmatpush1.msra.mxu0 0.0
      %1713 = vmatprep.subr.mxu0 0.0
      %1714 = vmatpush1.msra.mxu0 0.0
      %1715 = vmatprep.subr.mxu0 0.0
      %1716 = vmatpush1.msra.mxu0 0.0
      %1717 = vmatprep.subr.mxu0 0.0
      %1718 = vmatpush1.msra.mxu0 0.0
      %1719 = vmatprep.subr.mxu0 0.0
      %1720 = vmatpush1.msra.mxu0 0.0
      %1721 = vmatprep.subr.mxu0 0.0
      %1722 = vmatpush1.msra.mxu0 0.0
      %1723 = vmatprep.subr.mxu0 0.0
      %1724 = vmatpush1.msra.mxu0 0.0
      %1725 = vmatprep.subr.mxu0 0.0
      %1726 = vmatpush1.msra.mxu0 0.0
      %1727 = vmatprep.subr.mxu0 0.0
      %1728 = vmatpush1.msra.mxu0 0.0
      %1729 = vmatprep.subr.mxu0 0.0
      %1730 = vmatpush1.msra.mxu0 0.0
      %1731 = vmatprep.subr.mxu0 0.0
      %1732 = vmatpush1.msra.mxu0 0.0
      %1733 = vmatprep.subr.mxu0 0.0
      %1734 = vmatpush1.msra.mxu0 0.0
      %1735 = vmatprep.subr.mxu0 0.0
      %1736 = vmatpush1.msra.mxu0 0.0
      %1737 = vmatprep.mubr.f32.mxu0 0.0
      %1738 = vmatmul.mubr.f32.gmra.mrb[0].mxu0 %v1671
      %v1739 = vpop.f32.mrb[0].mxu0
      %v1740 = vadd.f32 %v1595, %v1739
      %v1741 = vpop.f32.mrb[0].mxu0
      %v1742 = vadd.f32 %v1597, %v1741
      %1743 = vdwg.mxu0
      %1744 = vmatprep.subr.mxu0 %v1459
      %1745 = vmatpush1.msra.mxu0 %v1458
      %1746 = vmatprep.subr.mxu0 %v1463
      %1747 = vmatpush1.msra.mxu0 %v1462
      %1748 = vmatprep.subr.mxu0 0.0
      %1749 = vmatpush1.msra.mxu0 0.0
      %1750 = vmatprep.subr.mxu0 0.0
      %1751 = vmatpush1.msra.mxu0 0.0
      %1752 = vmatprep.subr.mxu0 0.0
      %1753 = vmatpush1.msra.mxu0 0.0
      %1754 = vmatprep.subr.mxu0 0.0
      %1755 = vmatpush1.msra.mxu0 0.0
      %1756 = vmatprep.subr.mxu0 0.0
      %1757 = vmatpush1.msra.mxu0 0.0
      %1758 = vmatprep.subr.mxu0 0.0
      %1759 = vmatpush1.msra.mxu0 0.0
      %1760 = vmatprep.subr.mxu0 0.0
      %1761 = vmatpush1.msra.mxu0 0.0
      %1762 = vmatprep.subr.mxu0 0.0
      %1763 = vmatpush1.msra.mxu0 0.0
      %1764 = vmatprep.subr.mxu0 0.0
      %1765 = vmatpush1.msra.mxu0 0.0
      %1766 = vmatprep.subr.mxu0 0.0
      %1767 = vmatpush1.msra.mxu0 0.0
      %1768 = vmatprep.subr.mxu0 0.0
      %1769 = vmatpush1.msra.mxu0 0.0
      %1770 = vmatprep.subr.mxu0 0.0
      %1771 = vmatpush1.msra.mxu0 0.0
      %1772 = vmatprep.subr.mxu0 0.0
      %1773 = vmatpush1.msra.mxu0 0.0
      %1774 = vmatprep.subr.mxu0 0.0
      %1775 = vmatpush1.msra.mxu0 0.0
      %1776 = vmatprep.subr.mxu0 0.0
      %1777 = vmatpush1.msra.mxu0 0.0
      %1778 = vmatprep.subr.mxu0 0.0
      %1779 = vmatpush1.msra.mxu0 0.0
      %1780 = vmatprep.subr.mxu0 0.0
      %1781 = vmatpush1.msra.mxu0 0.0
      %1782 = vmatprep.subr.mxu0 0.0
      %1783 = vmatpush1.msra.mxu0 0.0
      %1784 = vmatprep.subr.mxu0 0.0
      %1785 = vmatpush1.msra.mxu0 0.0
      %1786 = vmatprep.subr.mxu0 0.0
      %1787 = vmatpush1.msra.mxu0 0.0
      %1788 = vmatprep.subr.mxu0 0.0
      %1789 = vmatpush1.msra.mxu0 0.0
      %1790 = vmatprep.subr.mxu0 0.0
      %1791 = vmatpush1.msra.mxu0 0.0
      %1792 = vmatprep.subr.mxu0 0.0
      %1793 = vmatpush1.msra.mxu0 0.0
      %1794 = vmatprep.subr.mxu0 0.0
      %1795 = vmatpush1.msra.mxu0 0.0
      %1796 = vmatprep.subr.mxu0 0.0
      %1797 = vmatpush1.msra.mxu0 0.0
      %1798 = vmatprep.subr.mxu0 0.0
      %1799 = vmatpush1.msra.mxu0 0.0
      %1800 = vmatprep.subr.mxu0 0.0
      %1801 = vmatpush1.msra.mxu0 0.0
      %1802 = vmatprep.subr.mxu0 0.0
      %1803 = vmatpush1.msra.mxu0 0.0
      %1804 = vmatprep.subr.mxu0 0.0
      %1805 = vmatpush1.msra.mxu0 0.0
      %1806 = vmatprep.subr.mxu0 0.0
      %1807 = vmatpush1.msra.mxu0 0.0
      %1808 = vmatprep.mubr.f32.mxu0 0.0
      %1809 = vmatmul.mubr.f32.gmra.mrb[0].mxu0 %v1671
      %v1810 = vpop.f32.mrb[0].mxu0
      %v1811 = vadd.f32 %v1666, %v1810
      %v1812 = vpop.f32.mrb[0].mxu0
      %v1813 = vadd.f32 %v1668, %v1812
      %1814 = vdwg.mxu0
      %v1815 = vadd.f32 %v1740, %v283
      %v1816 = vadd.f32 %v1742, %v287
      %v1817 = vadd.f32 %v1811, %v291
      %v1818 = vadd.f32 %v1813, %v295
      %v1819 = vmul.f32 %v1815, 0.5
      %v1820 = vtanh.pop %v1819
      %v1821 = vmul.f32 %v1820, 0.5
      %v1822 = vadd.f32 %v1821, 0.5
      %v1823 = vmul.f32 %v1816, 0.5
      %v1824 = vtanh.pop %v1823
      %v1825 = vmul.f32 %v1824, 0.5
      %v1826 = vadd.f32 %v1825, 0.5
      %v1827 = vtanh.pop %v1817
      %v1828 = vmul.f32 %v1818, 0.5
      %v1829 = vtanh.pop %v1828
      %v1830 = vmul.f32 %v1829, 0.5
      %v1831 = vadd.f32 %v1830, 0.5
      %v1832 = vmul.f32 %v1822, %v1449
      %v1833 = vmul.f32 %v1826, %v1827
      %v1834 = vadd.f32 %v1832, %v1833
      %v1835 = vtanh.pop %v1834
      %v1836 = vmul.f32 %v1831, %v1835
      %s1837 = scalar_lea.vmem %s264, 24
      %1838 = vst [vmem:[%s1837] sm:$0xff] %v1836
      %s1839 = scalar_lea.vmem %s255, 32
      %v1840 = vld [vmem:[%s1839] sm:$0xff]
      %v1841 = vld [vmem:[%s1] sm:$0xff]
      %v1842 = vld [vmem:[%s1 + $0x8] sm:$0xff]
      %v1843 = vld [vmem:[%s1 + $0x10] sm:$0xff]
      %v1844 = vld [vmem:[%s1 + $0x18] sm:$0xff]
      %v1845 = vld [vmem:[%s1 + $0x20] sm:$0xff]
      %v1846 = vld [vmem:[%s1 + $0x28] sm:$0xff]
      %v1847 = vld [vmem:[%s1 + $0x30] sm:$0xff]
      %v1848 = vld [vmem:[%s1 + $0x38] sm:$0xff]
      %v1849 = vld [vmem:[%s2] sm:$0xff]
      %v1850 = vld [vmem:[%s2 + $0x8] sm:$0xff]
      %v1851 = vld [vmem:[%s2 + $0x10] sm:$0xff]
      %v1852 = vld [vmem:[%s2 + $0x18] sm:$0xff]
      %v1853 = vld [vmem:[%s2 + $0x20] sm:$0xff]
      %v1854 = vld [vmem:[%s2 + $0x28] sm:$0xff]
      %v1855 = vld [vmem:[%s2 + $0x30] sm:$0xff]
      %v1856 = vld [vmem:[%s2 + $0x38] sm:$0xff]
      %v1857 = vld [vmem:[%s2 + $0x40] sm:$0xff]
      %v1858 = vld [vmem:[%s2 + $0x48] sm:$0xff]
      %v1859 = vld [vmem:[%s2 + $0x50] sm:$0xff]
      %v1860 = vld [vmem:[%s2 + $0x58] sm:$0xff]
      %v1861 = vld [vmem:[%s2 + $0x60] sm:$0xff]
      %v1862 = vld [vmem:[%s2 + $0x68] sm:$0xff]
      %v1863 = vld [vmem:[%s2 + $0x70] sm:$0xff]
      %v1864 = vld [vmem:[%s2 + $0x78] sm:$0xff]
      %v1865 = vld [vmem:[%s2 + $0x80] sm:$0xff]
      %v1866 = vld [vmem:[%s2 + $0x88] sm:$0xff]
      %v1867 = vld [vmem:[%s2 + $0x90] sm:$0xff]
      %v1868 = vld [vmem:[%s2 + $0x98] sm:$0xff]
      %v1869 = vld [vmem:[%s2 + $0xa0] sm:$0xff]
      %v1870 = vld [vmem:[%s2 + $0xa8] sm:$0xff]
      %v1871 = vld [vmem:[%s2 + $0xb0] sm:$0xff]
      %v1872 = vld [vmem:[%s2 + $0xb8] sm:$0xff]
      %v1873 = vld [vmem:[%s2 + $0xc0] sm:$0xff]
      %v1874 = vld [vmem:[%s2 + $0xc8] sm:$0xff]
      %v1875 = vld [vmem:[%s2 + $0xd0] sm:$0xff]
      %v1876 = vld [vmem:[%s2 + $0xd8] sm:$0xff]
      %v1877 = vld [vmem:[%s2 + $0xe0] sm:$0xff]
      %v1878 = vld [vmem:[%s2 + $0xe8] sm:$0xff]
      %v1879 = vld [vmem:[%s2 + $0xf0] sm:$0xff]
      %v1880 = vld [vmem:[%s2 + $0xf8] sm:$0xff]
      %v1881 = vld [vmem:[%s2 + $0x100] sm:$0xff]
      %v1882 = vld [vmem:[%s2 + $0x108] sm:$0xff]
      %v1883 = vld [vmem:[%s2 + $0x110] sm:$0xff]
      %v1884 = vld [vmem:[%s2 + $0x118] sm:$0xff]
      %v1885 = vld [vmem:[%s2 + $0x120] sm:$0xff]
      %v1886 = vld [vmem:[%s2 + $0x128] sm:$0xff]
      %v1887 = vld [vmem:[%s2 + $0x130] sm:$0xff]
      %v1888 = vld [vmem:[%s2 + $0x138] sm:$0xff]
      %v1889 = vld [vmem:[%s2 + $0x140] sm:$0xff]
      %v1890 = vld [vmem:[%s2 + $0x148] sm:$0xff]
      %v1891 = vld [vmem:[%s2 + $0x150] sm:$0xff]
      %v1892 = vld [vmem:[%s2 + $0x158] sm:$0xff]
      %v1893 = vld [vmem:[%s2 + $0x160] sm:$0xff]
      %v1894 = vld [vmem:[%s2 + $0x168] sm:$0xff]
      %v1895 = vld [vmem:[%s2 + $0x170] sm:$0xff]
      %v1896 = vld [vmem:[%s2 + $0x178] sm:$0xff]
      %v1897 = vld [vmem:[%s2 + $0x180] sm:$0xff]
      %v1898 = vld [vmem:[%s2 + $0x188] sm:$0xff]
      %v1899 = vld [vmem:[%s2 + $0x190] sm:$0xff]
      %v1900 = vld [vmem:[%s2 + $0x198] sm:$0xff]
      %v1901 = vld [vmem:[%s2 + $0x1a0] sm:$0xff]
      %v1902 = vld [vmem:[%s2 + $0x1a8] sm:$0xff]
      %v1903 = vld [vmem:[%s2 + $0x1b0] sm:$0xff]
      %v1904 = vld [vmem:[%s2 + $0x1b8] sm:$0xff]
      %v1905 = vld [vmem:[%s2 + $0x1c0] sm:$0xff]
      %v1906 = vld [vmem:[%s2 + $0x1c8] sm:$0xff]
      %v1907 = vld [vmem:[%s2 + $0x1d0] sm:$0xff]
      %v1908 = vld [vmem:[%s2 + $0x1d8] sm:$0xff]
      %v1909 = vld [vmem:[%s2 + $0x1e0] sm:$0xff]
      %v1910 = vld [vmem:[%s2 + $0x1e8] sm:$0xff]
      %v1911 = vld [vmem:[%s2 + $0x1f0] sm:$0xff]
      %v1912 = vld [vmem:[%s2 + $0x1f8] sm:$0xff]
      %1913 = vmatprep.subr.mxu0 %v1850
      %1914 = vmatpush1.msra.mxu0 %v1849
      %1915 = vmatprep.subr.mxu0 %v1854
      %1916 = vmatpush1.msra.mxu0 %v1853
      %1917 = vmatprep.subr.mxu0 %v1858
      %1918 = vmatpush1.msra.mxu0 %v1857
      %1919 = vmatprep.subr.mxu0 %v1862
      %1920 = vmatpush1.msra.mxu0 %v1861
      %1921 = vmatprep.subr.mxu0 %v1866
      %1922 = vmatpush1.msra.mxu0 %v1865
      %1923 = vmatprep.subr.mxu0 %v1870
      %1924 = vmatpush1.msra.mxu0 %v1869
      %1925 = vmatprep.subr.mxu0 %v1874
      %1926 = vmatpush1.msra.mxu0 %v1873
      %1927 = vmatprep.subr.mxu0 %v1878
      %1928 = vmatpush1.msra.mxu0 %v1877
      %1929 = vmatprep.subr.mxu0 %v1882
      %1930 = vmatpush1.msra.mxu0 %v1881
      %1931 = vmatprep.subr.mxu0 %v1886
      %1932 = vmatpush1.msra.mxu0 %v1885
      %1933 = vmatprep.subr.mxu0 %v1890
      %1934 = vmatpush1.msra.mxu0 %v1889
      %1935 = vmatprep.subr.mxu0 %v1894
      %1936 = vmatpush1.msra.mxu0 %v1893
      %1937 = vmatprep.subr.mxu0 %v1898
      %1938 = vmatpush1.msra.mxu0 %v1897
      %1939 = vmatprep.subr.mxu0 %v1902
      %1940 = vmatpush1.msra.mxu0 %v1901
      %1941 = vmatprep.subr.mxu0 %v1906
      %1942 = vmatpush1.msra.mxu0 %v1905
      %1943 = vmatprep.subr.mxu0 %v1910
      %1944 = vmatpush1.msra.mxu0 %v1909
      %1945 = vmatprep.subr.mxu0 0.0
      %1946 = vmatpush1.msra.mxu0 0.0
      %1947 = vmatprep.subr.mxu0 0.0
      %1948 = vmatpush1.msra.mxu0 0.0
      %1949 = vmatprep.subr.mxu0 0.0
      %1950 = vmatpush1.msra.mxu0 0.0
      %1951 = vmatprep.subr.mxu0 0.0
      %1952 = vmatpush1.msra.mxu0 0.0
      %1953 = vmatprep.subr.mxu0 0.0
      %1954 = vmatpush1.msra.mxu0 0.0
      %1955 = vmatprep.subr.mxu0 0.0
      %1956 = vmatpush1.msra.mxu0 0.0
      %1957 = vmatprep.subr.mxu0 0.0
      %1958 = vmatpush1.msra.mxu0 0.0
      %1959 = vmatprep.subr.mxu0 0.0
      %1960 = vmatpush1.msra.mxu0 0.0
      %1961 = vmatprep.subr.mxu0 0.0
      %1962 = vmatpush1.msra.mxu0 0.0
      %1963 = vmatprep.subr.mxu0 0.0
      %1964 = vmatpush1.msra.mxu0 0.0
      %1965 = vmatprep.subr.mxu0 0.0
      %1966 = vmatpush1.msra.mxu0 0.0
      %1967 = vmatprep.subr.mxu0 0.0
      %1968 = vmatpush1.msra.mxu0 0.0
      %1969 = vmatprep.subr.mxu0 0.0
      %1970 = vmatpush1.msra.mxu0 0.0
      %1971 = vmatprep.subr.mxu0 0.0
      %1972 = vmatpush1.msra.mxu0 0.0
      %1973 = vmatprep.subr.mxu0 0.0
      %1974 = vmatpush1.msra.mxu0 0.0
      %1975 = vmatprep.subr.mxu0 0.0
      %1976 = vmatpush1.msra.mxu0 0.0
      %1977 = vmatprep.mubr.f32.mxu0 0.0
      %1978 = vmatmul.mubr.f32.gmra.mrb[0].mxu0 %v1836
      %v1979 = vpop.f32.mrb[0].mxu0
      %v1980 = vadd.f32 0.0, %v1979
      %v1981 = vpop.f32.mrb[0].mxu0
      %v1982 = vadd.f32 0.0, %v1981
      %1983 = vdwg.mxu0
      %1984 = vmatprep.subr.mxu0 %v1852
      %1985 = vmatpush1.msra.mxu0 %v1851
      %1986 = vmatprep.subr.mxu0 %v1856
      %1987 = vmatpush1.msra.mxu0 %v1855
      %1988 = vmatprep.subr.mxu0 %v1860
      %1989 = vmatpush1.msra.mxu0 %v1859
      %1990 = vmatprep.subr.mxu0 %v1864
      %1991 = vmatpush1.msra.mxu0 %v1863
      %1992 = vmatprep.subr.mxu0 %v1868
      %1993 = vmatpush1.msra.mxu0 %v1867
      %1994 = vmatprep.subr.mxu0 %v1872
      %1995 = vmatpush1.msra.mxu0 %v1871
      %1996 = vmatprep.subr.mxu0 %v1876
      %1997 = vmatpush1.msra.mxu0 %v1875
      %1998 = vmatprep.subr.mxu0 %v1880
      %1999 = vmatpush1.msra.mxu0 %v1879
      %2000 = vmatprep.subr.mxu0 %v1884
      %2001 = vmatpush1.msra.mxu0 %v1883
      %2002 = vmatprep.subr.mxu0 %v1888
      %2003 = vmatpush1.msra.mxu0 %v1887
      %2004 = vmatprep.subr.mxu0 %v1892
      %2005 = vmatpush1.msra.mxu0 %v1891
      %2006 = vmatprep.subr.mxu0 %v1896
      %2007 = vmatpush1.msra.mxu0 %v1895
      %2008 = vmatprep.subr.mxu0 %v1900
      %2009 = vmatpush1.msra.mxu0 %v1899
      %2010 = vmatprep.subr.mxu0 %v1904
      %2011 = vmatpush1.msra.mxu0 %v1903
      %2012 = vmatprep.subr.mxu0 %v1908
      %2013 = vmatpush1.msra.mxu0 %v1907
      %2014 = vmatprep.subr.mxu0 %v1912
      %2015 = vmatpush1.msra.mxu0 %v1911
      %2016 = vmatprep.subr.mxu0 0.0
      %2017 = vmatpush1.msra.mxu0 0.0
      %2018 = vmatprep.subr.mxu0 0.0
      %2019 = vmatpush1.msra.mxu0 0.0
      %2020 = vmatprep.subr.mxu0 0.0
      %2021 = vmatpush1.msra.mxu0 0.0
      %2022 = vmatprep.subr.mxu0 0.0
      %2023 = vmatpush1.msra.mxu0 0.0
      %2024 = vmatprep.subr.mxu0 0.0
      %2025 = vmatpush1.msra.mxu0 0.0
      %2026 = vmatprep.subr.mxu0 0.0
      %2027 = vmatpush1.msra.mxu0 0.0
      %2028 = vmatprep.subr.mxu0 0.0
      %2029 = vmatpush1.msra.mxu0 0.0
      %2030 = vmatprep.subr.mxu0 0.0
      %2031 = vmatpush1.msra.mxu0 0.0
      %2032 = vmatprep.subr.mxu0 0.0
      %2033 = vmatpush1.msra.mxu0 0.0
      %2034 = vmatprep.subr.mxu0 0.0
      %2035 = vmatpush1.msra.mxu0 0.0
      %2036 = vmatprep.subr.mxu0 0.0
      %2037 = vmatpush1.msra.mxu0 0.0
      %2038 = vmatprep.subr.mxu0 0.0
      %2039 = vmatpush1.msra.mxu0 0.0
      %2040 = vmatprep.subr.mxu0 0.0
      %2041 = vmatpush1.msra.mxu0 0.0
      %2042 = vmatprep.subr.mxu0 0.0
      %2043 = vmatpush1.msra.mxu0 0.0
      %2044 = vmatprep.subr.mxu0 0.0
      %2045 = vmatpush1.msra.mxu0 0.0
      %2046 = vmatprep.subr.mxu0 0.0
      %2047 = vmatpush1.msra.mxu0 0.0
      %2048 = vmatprep.mubr.f32.mxu0 0.0
      %2049 = vmatmul.mubr.f32.gmra.mrb[0].mxu0 %v1836
      %v2050 = vpop.f32.mrb[0].mxu0
      %v2051 = vadd.f32 0.0, %v2050
      %v2052 = vpop.f32.mrb[0].mxu0
      %v2053 = vadd.f32 0.0, %v2052
      %2054 = vdwg.mxu0
      %v2056 = vsel %vm515, %v1840, 0
      %2058 = vmatprep.subr.mxu0 %v1842
      %2059 = vmatpush1.msra.mxu0 %v1841
      %2060 = vmatprep.subr.mxu0 %v1846
      %2061 = vmatpush1.msra.mxu0 %v1845
      %2062 = vmatprep.subr.mxu0 0.0
      %2063 = vmatpush1.msra.mxu0 0.0
      %2064 = vmatprep.subr.mxu0 0.0
      %2065 = vmatpush1.msra.mxu0 0.0
      %2066 = vmatprep.subr.mxu0 0.0
      %2067 = vmatpush1.msra.mxu0 0.0
      %2068 = vmatprep.subr.mxu0 0.0
      %2069 = vmatpush1.msra.mxu0 0.0
      %2070 = vmatprep.subr.mxu0 0.0
      %2071 = vmatpush1.msra.mxu0 0.0
      %2072 = vmatprep.subr.mxu0 0.0
      %2073 = vmatpush1.msra.mxu0 0.0
      %2074 = vmatprep.subr.mxu0 0.0
      %2075 = vmatpush1.msra.mxu0 0.0
      %2076 = vmatprep.subr.mxu0 0.0
      %2077 = vmatpush1.msra.mxu0 0.0
      %2078 = vmatprep.subr.mxu0 0.0
      %2079 = vmatpush1.msra.mxu0 0.0
      %2080 = vmatprep.subr.mxu0 0.0
      %2081 = vmatpush1.msra.mxu0 0.0
      %2082 = vmatprep.subr.mxu0 0.0
      %2083 = vmatpush1.msra.mxu0 0.0
      %2084 = vmatprep.subr.mxu0 0.0
      %2085 = vmatpush1.msra.mxu0 0.0
      %2086 = vmatprep.subr.mxu0 0.0
      %2087 = vmatpush1.msra.mxu0 0.0
      %2088 = vmatprep.subr.mxu0 0.0
      %2089 = vmatpush1.msra.mxu0 0.0
      %2090 = vmatprep.subr.mxu0 0.0
      %2091 = vmatpush1.msra.mxu0 0.0
      %2092 = vmatprep.subr.mxu0 0.0
      %2093 = vmatpush1.msra.mxu0 0.0
      %2094 = vmatprep.subr.mxu0 0.0
      %2095 = vmatpush1.msra.mxu0 0.0
      %2096 = vmatprep.subr.mxu0 0.0
      %2097 = vmatpush1.msra.mxu0 0.0
      %2098 = vmatprep.subr.mxu0 0.0
      %2099 = vmatpush1.msra.mxu0 0.0
      %2100 = vmatprep.subr.mxu0 0.0
      %2101 = vmatpush1.msra.mxu0 0.0
      %2102 = vmatprep.subr.mxu0 0.0
      %2103 = vmatpush1.msra.mxu0 0.0
      %2104 = vmatprep.subr.mxu0 0.0
      %2105 = vmatpush1.msra.mxu0 0.0
      %2106 = vmatprep.subr.mxu0 0.0
      %2107 = vmatpush1.msra.mxu0 0.0
      %2108 = vmatprep.subr.mxu0 0.0
      %2109 = vmatpush1.msra.mxu0 0.0
      %2110 = vmatprep.subr.mxu0 0.0
      %2111 = vmatpush1.msra.mxu0 0.0
      %2112 = vmatprep.subr.mxu0 0.0
      %2113 = vmatpush1.msra.mxu0 0.0
      %2114 = vmatprep.subr.mxu0 0.0
      %2115 = vmatpush1.msra.mxu0 0.0
      %2116 = vmatprep.subr.mxu0 0.0
      %2117 = vmatpush1.msra.mxu0 0.0
      %2118 = vmatprep.subr.mxu0 0.0
      %2119 = vmatpush1.msra.mxu0 0.0
      %2120 = vmatprep.subr.mxu0 0.0
      %2121 = vmatpush1.msra.mxu0 0.0
      %2122 = vmatprep.mubr.f32.mxu0 0.0
      %2123 = vmatmul.mubr.f32.gmra.mrb[0].mxu0 %v2056
      %v2124 = vpop.f32.mrb[0].mxu0
      %v2125 = vadd.f32 %v1980, %v2124
      %v2126 = vpop.f32.mrb[0].mxu0
      %v2127 = vadd.f32 %v1982, %v2126
      %2128 = vdwg.mxu0
      %2129 = vmatprep.subr.mxu0 %v1844
      %2130 = vmatpush1.msra.mxu0 %v1843
      %2131 = vmatprep.subr.mxu0 %v1848
      %2132 = vmatpush1.msra.mxu0 %v1847
      %2133 = vmatprep.subr.mxu0 0.0
      %2134 = vmatpush1.msra.mxu0 0.0
      %2135 = vmatprep.subr.mxu0 0.0
      %2136 = vmatpush1.msra.mxu0 0.0
      %2137 = vmatprep.subr.mxu0 0.0
      %2138 = vmatpush1.msra.mxu0 0.0
      %2139 = vmatprep.subr.mxu0 0.0
      %2140 = vmatpush1.msra.mxu0 0.0
      %2141 = vmatprep.subr.mxu0 0.0
      %2142 = vmatpush1.msra.mxu0 0.0
      %2143 = vmatprep.subr.mxu0 0.0
      %2144 = vmatpush1.msra.mxu0 0.0
      %2145 = vmatprep.subr.mxu0 0.0
      %2146 = vmatpush1.msra.mxu0 0.0
      %2147 = vmatprep.subr.mxu0 0.0
      %2148 = vmatpush1.msra.mxu0 0.0
      %2149 = vmatprep.subr.mxu0 0.0
      %2150 = vmatpush1.msra.mxu0 0.0
      %2151 = vmatprep.subr.mxu0 0.0
      %2152 = vmatpush1.msra.mxu0 0.0
      %2153 = vmatprep.subr.mxu0 0.0
      %2154 = vmatpush1.msra.mxu0 0.0
      %2155 = vmatprep.subr.mxu0 0.0
      %2156 = vmatpush1.msra.mxu0 0.0
      %2157 = vmatprep.subr.mxu0 0.0
      %2158 = vmatpush1.msra.mxu0 0.0
      %2159 = vmatprep.subr.mxu0 0.0
      %2160 = vmatpush1.msra.mxu0 0.0
      %2161 = vmatprep.subr.mxu0 0.0
      %2162 = vmatpush1.msra.mxu0 0.0
      %2163 = vmatprep.subr.mxu0 0.0
      %2164 = vmatpush1.msra.mxu0 0.0
      %2165 = vmatprep.subr.mxu0 0.0
      %2166 = vmatpush1.msra.mxu0 0.0
      %2167 = vmatprep.subr.mxu0 0.0
      %2168 = vmatpush1.msra.mxu0 0.0
      %2169 = vmatprep.subr.mxu0 0.0
      %2170 = vmatpush1.msra.mxu0 0.0
      %2171 = vmatprep.subr.mxu0 0.0
      %2172 = vmatpush1.msra.mxu0 0.0
      %2173 = vmatprep.subr.mxu0 0.0
      %2174 = vmatpush1.msra.mxu0 0.0
      %2175 = vmatprep.subr.mxu0 0.0
      %2176 = vmatpush1.msra.mxu0 0.0
      %2177 = vmatprep.subr.mxu0 0.0
      %2178 = vmatpush1.msra.mxu0 0.0
      %2179 = vmatprep.subr.mxu0 0.0
      %2180 = vmatpush1.msra.mxu0 0.0
      %2181 = vmatprep.subr.mxu0 0.0
      %2182 = vmatpush1.msra.mxu0 0.0
      %2183 = vmatprep.subr.mxu0 0.0
      %2184 = vmatpush1.msra.mxu0 0.0
      %2185 = vmatprep.subr.mxu0 0.0
      %2186 = vmatpush1.msra.mxu0 0.0
      %2187 = vmatprep.subr.mxu0 0.0
      %2188 = vmatpush1.msra.mxu0 0.0
      %2189 = vmatprep.subr.mxu0 0.0
      %2190 = vmatpush1.msra.mxu0 0.0
      %2191 = vmatprep.subr.mxu0 0.0
      %2192 = vmatpush1.msra.mxu0 0.0
      %2193 = vmatprep.mubr.f32.mxu0 0.0
      %2194 = vmatmul.mubr.f32.gmra.mrb[0].mxu0 %v2056
      %v2195 = vpop.f32.mrb[0].mxu0
      %v2196 = vadd.f32 %v2051, %v2195
      %v2197 = vpop.f32.mrb[0].mxu0
      %v2198 = vadd.f32 %v2053, %v2197
      %2199 = vdwg.mxu0
      %v2200 = vadd.f32 %v2125, %v283
      %v2201 = vadd.f32 %v2127, %v287
      %v2202 = vadd.f32 %v2196, %v291
      %v2203 = vadd.f32 %v2198, %v295
      %v2204 = vmul.f32 %v2200, 0.5
      %v2205 = vtanh.pop %v2204
      %v2206 = vmul.f32 %v2205, 0.5
      %v2207 = vadd.f32 %v2206, 0.5
      %v2208 = vmul.f32 %v2201, 0.5
      %v2209 = vtanh.pop %v2208
      %v2210 = vmul.f32 %v2209, 0.5
      %v2211 = vadd.f32 %v2210, 0.5
      %v2212 = vtanh.pop %v2202
      %v2213 = vmul.f32 %v2203, 0.5
      %v2214 = vtanh.pop %v2213
      %v2215 = vmul.f32 %v2214, 0.5
      %v2216 = vadd.f32 %v2215, 0.5
      %v2217 = vmul.f32 %v2207, %v1834
      %v2218 = vmul.f32 %v2211, %v2212
      %v2219 = vadd.f32 %v2217, %v2218
      %v2220 = vtanh.pop %v2219
      %v2221 = vmul.f32 %v2216, %v2220
      %s2222 = scalar_lea.vmem %s264, 32
      %2223 = vst [vmem:[%s2222] sm:$0xff] %v2221
      %s2224 = scalar_lea.vmem %s255, 40
      %v2225 = vld [vmem:[%s2224] sm:$0xff]
      %v2226 = vld [vmem:[%s1] sm:$0xff]
      %v2227 = vld [vmem:[%s1 + $0x8] sm:$0xff]
      %v2228 = vld [vmem:[%s1 + $0x10] sm:$0xff]
      %v2229 = vld [vmem:[%s1 + $0x18] sm:$0xff]
      %v2230 = vld [vmem:[%s1 + $0x20] sm:$0xff]
      %v2231 = vld [vmem:[%s1 + $0x28] sm:$0xff]
      %v2232 = vld [vmem:[%s1 + $0x30] sm:$0xff]
      %v2233 = vld [vmem:[%s1 + $0x38] sm:$0xff]
      %v2234 = vld [vmem:[%s2] sm:$0xff]
      %v2235 = vld [vmem:[%s2 + $0x8] sm:$0xff]
      %v2236 = vld [vmem:[%s2 + $0x10] sm:$0xff]
      %v2237 = vld [vmem:[%s2 + $0x18] sm:$0xff]
      %v2238 = vld [vmem:[%s2 + $0x20] sm:$0xff]
      %v2239 = vld [vmem:[%s2 + $0x28] sm:$0xff]
      %v2240 = vld [vmem:[%s2 + $0x30] sm:$0xff]
      %v2241 = vld [vmem:[%s2 + $0x38] sm:$0xff]
      %v2242 = vld [vmem:[%s2 + $0x40] sm:$0xff]
      %v2243 = vld [vmem:[%s2 + $0x48] sm:$0xff]
      %v2244 = vld [vmem:[%s2 + $0x50] sm:$0xff]
      %v2245 = vld [vmem:[%s2 + $0x58] sm:$0xff]
      %v2246 = vld [vmem:[%s2 + $0x60] sm:$0xff]
      %v2247 = vld [vmem:[%s2 + $0x68] sm:$0xff]
      %v2248 = vld [vmem:[%s2 + $0x70] sm:$0xff]
      %v2249 = vld [vmem:[%s2 + $0x78] sm:$0xff]
      %v2250 = vld [vmem:[%s2 + $0x80] sm:$0xff]
      %v2251 = vld [vmem:[%s2 + $0x88] sm:$0xff]
      %v2252 = vld [vmem:[%s2 + $0x90] sm:$0xff]
      %v2253 = vld [vmem:[%s2 + $0x98] sm:$0xff]
      %v2254 = vld [vmem:[%s2 + $0xa0] sm:$0xff]
      %v2255 = vld [vmem:[%s2 + $0xa8] sm:$0xff]
      %v2256 = vld [vmem:[%s2 + $0xb0] sm:$0xff]
      %v2257 = vld [vmem:[%s2 + $0xb8] sm:$0xff]
      %v2258 = vld [vmem:[%s2 + $0xc0] sm:$0xff]
      %v2259 = vld [vmem:[%s2 + $0xc8] sm:$0xff]
      %v2260 = vld [vmem:[%s2 + $0xd0] sm:$0xff]
      %v2261 = vld [vmem:[%s2 + $0xd8] sm:$0xff]
      %v2262 = vld [vmem:[%s2 + $0xe0] sm:$0xff]
      %v2263 = vld [vmem:[%s2 + $0xe8] sm:$0xff]
      %v2264 = vld [vmem:[%s2 + $0xf0] sm:$0xff]
      %v2265 = vld [vmem:[%s2 + $0xf8] sm:$0xff]
      %v2266 = vld [vmem:[%s2 + $0x100] sm:$0xff]
      %v2267 = vld [vmem:[%s2 + $0x108] sm:$0xff]
      %v2268 = vld [vmem:[%s2 + $0x110] sm:$0xff]
      %v2269 = vld [vmem:[%s2 + $0x118] sm:$0xff]
      %v2270 = vld [vmem:[%s2 + $0x120] sm:$0xff]
      %v2271 = vld [vmem:[%s2 + $0x128] sm:$0xff]
      %v2272 = vld [vmem:[%s2 + $0x130] sm:$0xff]
      %v2273 = vld [vmem:[%s2 + $0x138] sm:$0xff]
      %v2274 = vld [vmem:[%s2 + $0x140] sm:$0xff]
      %v2275 = vld [vmem:[%s2 + $0x148] sm:$0xff]
      %v2276 = vld [vmem:[%s2 + $0x150] sm:$0xff]
      %v2277 = vld [vmem:[%s2 + $0x158] sm:$0xff]
      %v2278 = vld [vmem:[%s2 + $0x160] sm:$0xff]
      %v2279 = vld [vmem:[%s2 + $0x168] sm:$0xff]
      %v2280 = vld [vmem:[%s2 + $0x170] sm:$0xff]
      %v2281 = vld [vmem:[%s2 + $0x178] sm:$0xff]
      %v2282 = vld [vmem:[%s2 + $0x180] sm:$0xff]
      %v2283 = vld [vmem:[%s2 + $0x188] sm:$0xff]
      %v2284 = vld [vmem:[%s2 + $0x190] sm:$0xff]
      %v2285 = vld [vmem:[%s2 + $0x198] sm:$0xff]
      %v2286 = vld [vmem:[%s2 + $0x1a0] sm:$0xff]
      %v2287 = vld [vmem:[%s2 + $0x1a8] sm:$0xff]
      %v2288 = vld [vmem:[%s2 + $0x1b0] sm:$0xff]
      %v2289 = vld [vmem:[%s2 + $0x1b8] sm:$0xff]
      %v2290 = vld [vmem:[%s2 + $0x1c0] sm:$0xff]
      %v2291 = vld [vmem:[%s2 + $0x1c8] sm:$0xff]
      %v2292 = vld [vmem:[%s2 + $0x1d0] sm:$0xff]
      %v2293 = vld [vmem:[%s2 + $0x1d8] sm:$0xff]
      %v2294 = vld [vmem:[%s2 + $0x1e0] sm:$0xff]
      %v2295 = vld [vmem:[%s2 + $0x1e8] sm:$0xff]
      %v2296 = vld [vmem:[%s2 + $0x1f0] sm:$0xff]
      %v2297 = vld [vmem:[%s2 + $0x1f8] sm:$0xff]
      %2298 = vmatprep.subr.mxu0 %v2235
      %2299 = vmatpush1.msra.mxu0 %v2234
      %2300 = vmatprep.subr.mxu0 %v2239
      %2301 = vmatpush1.msra.mxu0 %v2238
      %2302 = vmatprep.subr.mxu0 %v2243
      %2303 = vmatpush1.msra.mxu0 %v2242
      %2304 = vmatprep.subr.mxu0 %v2247
      %2305 = vmatpush1.msra.mxu0 %v2246
      %2306 = vmatprep.subr.mxu0 %v2251
      %2307 = vmatpush1.msra.mxu0 %v2250
      %2308 = vmatprep.subr.mxu0 %v2255
      %2309 = vmatpush1.msra.mxu0 %v2254
      %2310 = vmatprep.subr.mxu0 %v2259
      %2311 = vmatpush1.msra.mxu0 %v2258
      %2312 = vmatprep.subr.mxu0 %v2263
      %2313 = vmatpush1.msra.mxu0 %v2262
      %2314 = vmatprep.subr.mxu0 %v2267
      %2315 = vmatpush1.msra.mxu0 %v2266
      %2316 = vmatprep.subr.mxu0 %v2271
      %2317 = vmatpush1.msra.mxu0 %v2270
      %2318 = vmatprep.subr.mxu0 %v2275
      %2319 = vmatpush1.msra.mxu0 %v2274
      %2320 = vmatprep.subr.mxu0 %v2279
      %2321 = vmatpush1.msra.mxu0 %v2278
      %2322 = vmatprep.subr.mxu0 %v2283
      %2323 = vmatpush1.msra.mxu0 %v2282
      %2324 = vmatprep.subr.mxu0 %v2287
      %2325 = vmatpush1.msra.mxu0 %v2286
      %2326 = vmatprep.subr.mxu0 %v2291
      %2327 = vmatpush1.msra.mxu0 %v2290
      %2328 = vmatprep.subr.mxu0 %v2295
      %2329 = vmatpush1.msra.mxu0 %v2294
      %2330 = vmatprep.subr.mxu0 0.0
      %2331 = vmatpush1.msra.mxu0 0.0
      %2332 = vmatprep.subr.mxu0 0.0
      %2333 = vmatpush1.msra.mxu0 0.0
      %2334 = vmatprep.subr.mxu0 0.0
      %2335 = vmatpush1.msra.mxu0 0.0
      %2336 = vmatprep.subr.mxu0 0.0
      %2337 = vmatpush1.msra.mxu0 0.0
      %2338 = vmatprep.subr.mxu0 0.0
      %2339 = vmatpush1.msra.mxu0 0.0
      %2340 = vmatprep.subr.mxu0 0.0
      %2341 = vmatpush1.msra.mxu0 0.0
      %2342 = vmatprep.subr.mxu0 0.0
      %2343 = vmatpush1.msra.mxu0 0.0
      %2344 = vmatprep.subr.mxu0 0.0
      %2345 = vmatpush1.msra.mxu0 0.0
      %2346 = vmatprep.subr.mxu0 0.0
      %2347 = vmatpush1.msra.mxu0 0.0
      %2348 = vmatprep.subr.mxu0 0.0
      %2349 = vmatpush1.msra.mxu0 0.0
      %2350 = vmatprep.subr.mxu0 0.0
      %2351 = vmatpush1.msra.mxu0 0.0
      %2352 = vmatprep.subr.mxu0 0.0
      %2353 = vmatpush1.msra.mxu0 0.0
      %2354 = vmatprep.subr.mxu0 0.0
      %2355 = vmatpush1.msra.mxu0 0.0
      %2356 = vmatprep.subr.mxu0 0.0
      %2357 = vmatpush1.msra.mxu0 0.0
      %2358 = vmatprep.subr.mxu0 0.0
      %2359 = vmatpush1.msra.mxu0 0.0
      %2360 = vmatprep.subr.mxu0 0.0
      %2361 = vmatpush1.msra.mxu0 0.0
      %2362 = vmatprep.mubr.f32.mxu0 0.0
      %2363 = vmatmul.mubr.f32.gmra.mrb[0].mxu0 %v2221
      %v2364 = vpop.f32.mrb[0].mxu0
      %v2365 = vadd.f32 0.0, %v2364
      %v2366 = vpop.f32.mrb[0].mxu0
      %v2367 = vadd.f32 0.0, %v2366
      %2368 = vdwg.mxu0
      %2369 = vmatprep.subr.mxu0 %v2237
      %2370 = vmatpush1.msra.mxu0 %v2236
      %2371 = vmatprep.subr.mxu0 %v2241
      %2372 = vmatpush1.msra.mxu0 %v2240
      %2373 = vmatprep.subr.mxu0 %v2245
      %2374 = vmatpush1.msra.mxu0 %v2244
      %2375 = vmatprep.subr.mxu0 %v2249
      %2376 = vmatpush1.msra.mxu0 %v2248
      %2377 = vmatprep.subr.mxu0 %v2253
      %2378 = vmatpush1.msra.mxu0 %v2252
      %2379 = vmatprep.subr.mxu0 %v2257
      %2380 = vmatpush1.msra.mxu0 %v2256
      %2381 = vmatprep.subr.mxu0 %v2261
      %2382 = vmatpush1.msra.mxu0 %v2260
      %2383 = vmatprep.subr.mxu0 %v2265
      %2384 = vmatpush1.msra.mxu0 %v2264
      %2385 = vmatprep.subr.mxu0 %v2269
      %2386 = vmatpush1.msra.mxu0 %v2268
      %2387 = vmatprep.subr.mxu0 %v2273
      %2388 = vmatpush1.msra.mxu0 %v2272
      %2389 = vmatprep.subr.mxu0 %v2277
      %2390 = vmatpush1.msra.mxu0 %v2276
      %2391 = vmatprep.subr.mxu0 %v2281
      %2392 = vmatpush1.msra.mxu0 %v2280
      %2393 = vmatprep.subr.mxu0 %v2285
      %2394 = vmatpush1.msra.mxu0 %v2284
      %2395 = vmatprep.subr.mxu0 %v2289
      %2396 = vmatpush1.msra.mxu0 %v2288
      %2397 = vmatprep.subr.mxu0 %v2293
      %2398 = vmatpush1.msra.mxu0 %v2292
      %2399 = vmatprep.subr.mxu0 %v2297
      %2400 = vmatpush1.msra.mxu0 %v2296
      %2401 = vmatprep.subr.mxu0 0.0
      %2402 = vmatpush1.msra.mxu0 0.0
      %2403 = vmatprep.subr.mxu0 0.0
      %2404 = vmatpush1.msra.mxu0 0.0
      %2405 = vmatprep.subr.mxu0 0.0
      %2406 = vmatpush1.msra.mxu0 0.0
      %2407 = vmatprep.subr.mxu0 0.0
      %2408 = vmatpush1.msra.mxu0 0.0
      %2409 = vmatprep.subr.mxu0 0.0
      %2410 = vmatpush1.msra.mxu0 0.0
      %2411 = vmatprep.subr.mxu0 0.0
      %2412 = vmatpush1.msra.mxu0 0.0
      %2413 = vmatprep.subr.mxu0 0.0
      %2414 = vmatpush1.msra.mxu0 0.0
      %2415 = vmatprep.subr.mxu0 0.0
      %2416 = vmatpush1.msra.mxu0 0.0
      %2417 = vmatprep.subr.mxu0 0.0
      %2418 = vmatpush1.msra.mxu0 0.0
      %2419 = vmatprep.subr.mxu0 0.0
      %2420 = vmatpush1.msra.mxu0 0.0
      %2421 = vmatprep.subr.mxu0 0.0
      %2422 = vmatpush1.msra.mxu0 0.0
      %2423 = vmatprep.subr.mxu0 0.0
      %2424 = vmatpush1.msra.mxu0 0.0
      %2425 = vmatprep.subr.mxu0 0.0
      %2426 = vmatpush1.msra.mxu0 0.0
      %2427 = vmatprep.subr.mxu0 0.0
      %2428 = vmatpush1.msra.mxu0 0.0
      %2429 = vmatprep.subr.mxu0 0.0
      %2430 = vmatpush1.msra.mxu0 0.0
      %2431 = vmatprep.subr.mxu0 0.0
      %2432 = vmatpush1.msra.mxu0 0.0
      %2433 = vmatprep.mubr.f32.mxu0 0.0
      %2434 = vmatmul.mubr.f32.gmra.mrb[0].mxu0 %v2221
      %v2435 = vpop.f32.mrb[0].mxu0
      %v2436 = vadd.f32 0.0, %v2435
      %v2437 = vpop.f32.mrb[0].mxu0
      %v2438 = vadd.f32 0.0, %v2437
      %2439 = vdwg.mxu0
      %v2441 = vsel %vm515, %v2225, 0
      %2443 = vmatprep.subr.mxu0 %v2227
      %2444 = vmatpush1.msra.mxu0 %v2226
      %2445 = vmatprep.subr.mxu0 %v2231
      %2446 = vmatpush1.msra.mxu0 %v2230
      %2447 = vmatprep.subr.mxu0 0.0
      %2448 = vmatpush1.msra.mxu0 0.0
      %2449 = vmatprep.subr.mxu0 0.0
      %2450 = vmatpush1.msra.mxu0 0.0
      %2451 = vmatprep.subr.mxu0 0.0
      %2452 = vmatpush1.msra.mxu0 0.0
      %2453 = vmatprep.subr.mxu0 0.0
      %2454 = vmatpush1.msra.mxu0 0.0
      %2455 = vmatprep.subr.mxu0 0.0
      %2456 = vmatpush1.msra.mxu0 0.0
      %2457 = vmatprep.subr.mxu0 0.0
      %2458 = vmatpush1.msra.mxu0 0.0
      %2459 = vmatprep.subr.mxu0 0.0
      %2460 = vmatpush1.msra.mxu0 0.0
      %2461 = vmatprep.subr.mxu0 0.0
      %2462 = vmatpush1.msra.mxu0 0.0
      %2463 = vmatprep.subr.mxu0 0.0
      %2464 = vmatpush1.msra.mxu0 0.0
      %2465 = vmatprep.subr.mxu0 0.0
      %2466 = vmatpush1.msra.mxu0 0.0
      %2467 = vmatprep.subr.mxu0 0.0
      %2468 = vmatpush1.msra.mxu0 0.0
      %2469 = vmatprep.subr.mxu0 0.0
      %2470 = vmatpush1.msra.mxu0 0.0
      %2471 = vmatprep.subr.mxu0 0.0
      %2472 = vmatpush1.msra.mxu0 0.0
      %2473 = vmatprep.subr.mxu0 0.0
      %2474 = vmatpush1.msra.mxu0 0.0
      %2475 = vmatprep.subr.mxu0 0.0
      %2476 = vmatpush1.msra.mxu0 0.0
      %2477 = vmatprep.subr.mxu0 0.0
      %2478 = vmatpush1.msra.mxu0 0.0
      %2479 = vmatprep.subr.mxu0 0.0
      %2480 = vmatpush1.msra.mxu0 0.0
      %2481 = vmatprep.subr.mxu0 0.0
      %2482 = vmatpush1.msra.mxu0 0.0
      %2483 = vmatprep.subr.mxu0 0.0
      %2484 = vmatpush1.msra.mxu0 0.0
      %2485 = vmatprep.subr.mxu0 0.0
      %2486 = vmatpush1.msra.mxu0 0.0
      %2487 = vmatprep.subr.mxu0 0.0
      %2488 = vmatpush1.msra.mxu0 0.0
      %2489 = vmatprep.subr.mxu0 0.0
      %2490 = vmatpush1.msra.mxu0 0.0
      %2491 = vmatprep.subr.mxu0 0.0
      %2492 = vmatpush1.msra.mxu0 0.0
      %2493 = vmatprep.subr.mxu0 0.0
      %2494 = vmatpush1.msra.mxu0 0.0
      %2495 = vmatprep.subr.mxu0 0.0
      %2496 = vmatpush1.msra.mxu0 0.0
      %2497 = vmatprep.subr.mxu0 0.0
      %2498 = vmatpush1.msra.mxu0 0.0
      %2499 = vmatprep.subr.mxu0 0.0
      %2500 = vmatpush1.msra.mxu0 0.0
      %2501 = vmatprep.subr.mxu0 0.0
      %2502 = vmatpush1.msra.mxu0 0.0
      %2503 = vmatprep.subr.mxu0 0.0
      %2504 = vmatpush1.msra.mxu0 0.0
      %2505 = vmatprep.subr.mxu0 0.0
      %2506 = vmatpush1.msra.mxu0 0.0
      %2507 = vmatprep.mubr.f32.mxu0 0.0
      %2508 = vmatmul.mubr.f32.gmra.mrb[0].mxu0 %v2441
      %v2509 = vpop.f32.mrb[0].mxu0
      %v2510 = vadd.f32 %v2365, %v2509
      %v2511 = vpop.f32.mrb[0].mxu0
      %v2512 = vadd.f32 %v2367, %v2511
      %2513 = vdwg.mxu0
      %2514 = vmatprep.subr.mxu0 %v2229
      %2515 = vmatpush1.msra.mxu0 %v2228
      %2516 = vmatprep.subr.mxu0 %v2233
      %2517 = vmatpush1.msra.mxu0 %v2232
      %2518 = vmatprep.subr.mxu0 0.0
      %2519 = vmatpush1.msra.mxu0 0.0
      %2520 = vmatprep.subr.mxu0 0.0
      %2521 = vmatpush1.msra.mxu0 0.0
      %2522 = vmatprep.subr.mxu0 0.0
      %2523 = vmatpush1.msra.mxu0 0.0
      %2524 = vmatprep.subr.mxu0 0.0
      %2525 = vmatpush1.msra.mxu0 0.0
      %2526 = vmatprep.subr.mxu0 0.0
      %2527 = vmatpush1.msra.mxu0 0.0
      %2528 = vmatprep.subr.mxu0 0.0
      %2529 = vmatpush1.msra.mxu0 0.0
      %2530 = vmatprep.subr.mxu0 0.0
      %2531 = vmatpush1.msra.mxu0 0.0
      %2532 = vmatprep.subr.mxu0 0.0
      %2533 = vmatpush1.msra.mxu0 0.0
      %2534 = vmatprep.subr.mxu0 0.0
      %2535 = vmatpush1.msra.mxu0 0.0
      %2536 = vmatprep.subr.mxu0 0.0
      %2537 = vmatpush1.msra.mxu0 0.0
      %2538 = vmatprep.subr.mxu0 0.0
      %2539 = vmatpush1.msra.mxu0 0.0
      %2540 = vmatprep.subr.mxu0 0.0
      %2541 = vmatpush1.msra.mxu0 0.0
      %2542 = vmatprep.subr.mxu0 0.0
      %2543 = vmatpush1.msra.mxu0 0.0
      %2544 = vmatprep.subr.mxu0 0.0
      %2545 = vmatpush1.msra.mxu0 0.0
      %2546 = vmatprep.subr.mxu0 0.0
      %2547 = vmatpush1.msra.mxu0 0.0
      %2548 = vmatprep.subr.mxu0 0.0
      %2549 = vmatpush1.msra.mxu0 0.0
      %2550 = vmatprep.subr.mxu0 0.0
      %2551 = vmatpush1.msra.mxu0 0.0
      %2552 = vmatprep.subr.mxu0 0.0
      %2553 = vmatpush1.msra.mxu0 0.0
      %2554 = vmatprep.subr.mxu0 0.0
      %2555 = vmatpush1.msra.mxu0 0.0
      %2556 = vmatprep.subr.mxu0 0.0
      %2557 = vmatpush1.msra.mxu0 0.0
      %2558 = vmatprep.subr.mxu0 0.0
      %2559 = vmatpush1.msra.mxu0 0.0
      %2560 = vmatprep.subr.mxu0 0.0
      %2561 = vmatpush1.msra.mxu0 0.0
      %2562 = vmatprep.subr.mxu0 0.0
      %2563 = vmatpush1.msra.mxu0 0.0
      %2564 = vmatprep.subr.mxu0 0.0
      %2565 = vmatpush1.msra.mxu0 0.0
      %2566 = vmatprep.subr.mxu0 0.0
      %2567 = vmatpush1.msra.mxu0 0.0
      %2568 = vmatprep.subr.mxu0 0.0
      %2569 = vmatpush1.msra.mxu0 0.0
      %2570 = vmatprep.subr.mxu0 0.0
      %2571 = vmatpush1.msra.mxu0 0.0
      %2572 = vmatprep.subr.mxu0 0.0
      %2573 = vmatpush1.msra.mxu0 0.0
      %2574 = vmatprep.subr.mxu0 0.0
      %2575 = vmatpush1.msra.mxu0 0.0
      %2576 = vmatprep.subr.mxu0 0.0
      %2577 = vmatpush1.msra.mxu0 0.0
      %2578 = vmatprep.mubr.f32.mxu0 0.0
      %2579 = vmatmul.mubr.f32.gmra.mrb[0].mxu0 %v2441
      %v2580 = vpop.f32.mrb[0].mxu0
      %v2581 = vadd.f32 %v2436, %v2580
      %v2582 = vpop.f32.mrb[0].mxu0
      %v2583 = vadd.f32 %v2438, %v2582
      %2584 = vdwg.mxu0
      %v2585 = vadd.f32 %v2510, %v283
      %v2586 = vadd.f32 %v2512, %v287
      %v2587 = vadd.f32 %v2581, %v291
      %v2588 = vadd.f32 %v2583, %v295
      %v2589 = vmul.f32 %v2585, 0.5
      %v2590 = vtanh.pop %v2589
      %v2591 = vmul.f32 %v2590, 0.5
      %v2592 = vadd.f32 %v2591, 0.5
      %v2593 = vmul.f32 %v2586, 0.5
      %v2594 = vtanh.pop %v2593
      %v2595 = vmul.f32 %v2594, 0.5
      %v2596 = vadd.f32 %v2595, 0.5
      %v2597 = vtanh.pop %v2587
      %v2598 = vmul.f32 %v2588, 0.5
      %v2599 = vtanh.pop %v2598
      %v2600 = vmul.f32 %v2599, 0.5
      %v2601 = vadd.f32 %v2600, 0.5
      %v2602 = vmul.f32 %v2592, %v2219
      %v2603 = vmul.f32 %v2596, %v2597
      %v2604 = vadd.f32 %v2602, %v2603
      %v2605 = vtanh.pop %v2604
      %v2606 = vmul.f32 %v2601, %v2605
      %s2607 = scalar_lea.vmem %s264, 40
      %2608 = vst [vmem:[%s2607] sm:$0xff] %v2606
      %s2609 = scalar_lea.vmem %s255, 48
      %v2610 = vld [vmem:[%s2609] sm:$0xff]
      %v2611 = vld [vmem:[%s1] sm:$0xff]
      %v2612 = vld [vmem:[%s1 + $0x8] sm:$0xff]
      %v2613 = vld [vmem:[%s1 + $0x10] sm:$0xff]
      %v2614 = vld [vmem:[%s1 + $0x18] sm:$0xff]
      %v2615 = vld [vmem:[%s1 + $0x20] sm:$0xff]
      %v2616 = vld [vmem:[%s1 + $0x28] sm:$0xff]
      %v2617 = vld [vmem:[%s1 + $0x30] sm:$0xff]
      %v2618 = vld [vmem:[%s1 + $0x38] sm:$0xff]
      %v2619 = vld [vmem:[%s2] sm:$0xff]
      %v2620 = vld [vmem:[%s2 + $0x8] sm:$0xff]
      %v2621 = vld [vmem:[%s2 + $0x10] sm:$0xff]
      %v2622 = vld [vmem:[%s2 + $0x18] sm:$0xff]
      %v2623 = vld [vmem:[%s2 + $0x20] sm:$0xff]
      %v2624 = vld [vmem:[%s2 + $0x28] sm:$0xff]
      %v2625 = vld [vmem:[%s2 + $0x30] sm:$0xff]
      %v2626 = vld [vmem:[%s2 + $0x38] sm:$0xff]
      %v2627 = vld [vmem:[%s2 + $0x40] sm:$0xff]
      %v2628 = vld [vmem:[%s2 + $0x48] sm:$0xff]
      %v2629 = vld [vmem:[%s2 + $0x50] sm:$0xff]
      %v2630 = vld [vmem:[%s2 + $0x58] sm:$0xff]
      %v2631 = vld [vmem:[%s2 + $0x60] sm:$0xff]
      %v2632 = vld [vmem:[%s2 + $0x68] sm:$0xff]
      %v2633 = vld [vmem:[%s2 + $0x70] sm:$0xff]
      %v2634 = vld [vmem:[%s2 + $0x78] sm:$0xff]
      %v2635 = vld [vmem:[%s2 + $0x80] sm:$0xff]
      %v2636 = vld [vmem:[%s2 + $0x88] sm:$0xff]
      %v2637 = vld [vmem:[%s2 + $0x90] sm:$0xff]
      %v2638 = vld [vmem:[%s2 + $0x98] sm:$0xff]
      %v2639 = vld [vmem:[%s2 + $0xa0] sm:$0xff]
      %v2640 = vld [vmem:[%s2 + $0xa8] sm:$0xff]
      %v2641 = vld [vmem:[%s2 + $0xb0] sm:$0xff]
      %v2642 = vld [vmem:[%s2 + $0xb8] sm:$0xff]
      %v2643 = vld [vmem:[%s2 + $0xc0] sm:$0xff]
      %v2644 = vld [vmem:[%s2 + $0xc8] sm:$0xff]
      %v2645 = vld [vmem:[%s2 + $0xd0] sm:$0xff]
      %v2646 = vld [vmem:[%s2 + $0xd8] sm:$0xff]
      %v2647 = vld [vmem:[%s2 + $0xe0] sm:$0xff]
      %v2648 = vld [vmem:[%s2 + $0xe8] sm:$0xff]
      %v2649 = vld [vmem:[%s2 + $0xf0] sm:$0xff]
      %v2650 = vld [vmem:[%s2 + $0xf8] sm:$0xff]
      %v2651 = vld [vmem:[%s2 + $0x100] sm:$0xff]
      %v2652 = vld [vmem:[%s2 + $0x108] sm:$0xff]
      %v2653 = vld [vmem:[%s2 + $0x110] sm:$0xff]
      %v2654 = vld [vmem:[%s2 + $0x118] sm:$0xff]
      %v2655 = vld [vmem:[%s2 + $0x120] sm:$0xff]
      %v2656 = vld [vmem:[%s2 + $0x128] sm:$0xff]
      %v2657 = vld [vmem:[%s2 + $0x130] sm:$0xff]
      %v2658 = vld [vmem:[%s2 + $0x138] sm:$0xff]
      %v2659 = vld [vmem:[%s2 + $0x140] sm:$0xff]
      %v2660 = vld [vmem:[%s2 + $0x148] sm:$0xff]
      %v2661 = vld [vmem:[%s2 + $0x150] sm:$0xff]
      %v2662 = vld [vmem:[%s2 + $0x158] sm:$0xff]
      %v2663 = vld [vmem:[%s2 + $0x160] sm:$0xff]
      %v2664 = vld [vmem:[%s2 + $0x168] sm:$0xff]
      %v2665 = vld [vmem:[%s2 + $0x170] sm:$0xff]
      %v2666 = vld [vmem:[%s2 + $0x178] sm:$0xff]
      %v2667 = vld [vmem:[%s2 + $0x180] sm:$0xff]
      %v2668 = vld [vmem:[%s2 + $0x188] sm:$0xff]
      %v2669 = vld [vmem:[%s2 + $0x190] sm:$0xff]
      %v2670 = vld [vmem:[%s2 + $0x198] sm:$0xff]
      %v2671 = vld [vmem:[%s2 + $0x1a0] sm:$0xff]
      %v2672 = vld [vmem:[%s2 + $0x1a8] sm:$0xff]
      %v2673 = vld [vmem:[%s2 + $0x1b0] sm:$0xff]
      %v2674 = vld [vmem:[%s2 + $0x1b8] sm:$0xff]
      %v2675 = vld [vmem:[%s2 + $0x1c0] sm:$0xff]
      %v2676 = vld [vmem:[%s2 + $0x1c8] sm:$0xff]
      %v2677 = vld [vmem:[%s2 + $0x1d0] sm:$0xff]
      %v2678 = vld [vmem:[%s2 + $0x1d8] sm:$0xff]
      %v2679 = vld [vmem:[%s2 + $0x1e0] sm:$0xff]
      %v2680 = vld [vmem:[%s2 + $0x1e8] sm:$0xff]
      %v2681 = vld [vmem:[%s2 + $0x1f0] sm:$0xff]
      %v2682 = vld [vmem:[%s2 + $0x1f8] sm:$0xff]
      %2683 = vmatprep.subr.mxu0 %v2620
      %2684 = vmatpush1.msra.mxu0 %v2619
      %2685 = vmatprep.subr.mxu0 %v2624
      %2686 = vmatpush1.msra.mxu0 %v2623
      %2687 = vmatprep.subr.mxu0 %v2628
      %2688 = vmatpush1.msra.mxu0 %v2627
      %2689 = vmatprep.subr.mxu0 %v2632
      %2690 = vmatpush1.msra.mxu0 %v2631
      %2691 = vmatprep.subr.mxu0 %v2636
      %2692 = vmatpush1.msra.mxu0 %v2635
      %2693 = vmatprep.subr.mxu0 %v2640
      %2694 = vmatpush1.msra.mxu0 %v2639
      %2695 = vmatprep.subr.mxu0 %v2644
      %2696 = vmatpush1.msra.mxu0 %v2643
      %2697 = vmatprep.subr.mxu0 %v2648
      %2698 = vmatpush1.msra.mxu0 %v2647
      %2699 = vmatprep.subr.mxu0 %v2652
      %2700 = vmatpush1.msra.mxu0 %v2651
      %2701 = vmatprep.subr.mxu0 %v2656
      %2702 = vmatpush1.msra.mxu0 %v2655
      %2703 = vmatprep.subr.mxu0 %v2660
      %2704 = vmatpush1.msra.mxu0 %v2659
      %2705 = vmatprep.subr.mxu0 %v2664
      %2706 = vmatpush1.msra.mxu0 %v2663
      %2707 = vmatprep.subr.mxu0 %v2668
      %2708 = vmatpush1.msra.mxu0 %v2667
      %2709 = vmatprep.subr.mxu0 %v2672
      %2710 = vmatpush1.msra.mxu0 %v2671
      %2711 = vmatprep.subr.mxu0 %v2676
      %2712 = vmatpush1.msra.mxu0 %v2675
      %2713 = vmatprep.subr.mxu0 %v2680
      %2714 = vmatpush1.msra.mxu0 %v2679
      %2715 = vmatprep.subr.mxu0 0.0
      %2716 = vmatpush1.msra.mxu0 0.0
      %2717 = vmatprep.subr.mxu0 0.0
      %2718 = vmatpush1.msra.mxu0 0.0
      %2719 = vmatprep.subr.mxu0 0.0
      %2720 = vmatpush1.msra.mxu0 0.0
      %2721 = vmatprep.subr.mxu0 0.0
      %2722 = vmatpush1.msra.mxu0 0.0
      %2723 = vmatprep.subr.mxu0 0.0
      %2724 = vmatpush1.msra.mxu0 0.0
      %2725 = vmatprep.subr.mxu0 0.0
      %2726 = vmatpush1.msra.mxu0 0.0
      %2727 = vmatprep.subr.mxu0 0.0
      %2728 = vmatpush1.msra.mxu0 0.0
      %2729 = vmatprep.subr.mxu0 0.0
      %2730 = vmatpush1.msra.mxu0 0.0
      %2731 = vmatprep.subr.mxu0 0.0
      %2732 = vmatpush1.msra.mxu0 0.0
      %2733 = vmatprep.subr.mxu0 0.0
      %2734 = vmatpush1.msra.mxu0 0.0
      %2735 = vmatprep.subr.mxu0 0.0
      %2736 = vmatpush1.msra.mxu0 0.0
      %2737 = vmatprep.subr.mxu0 0.0
      %2738 = vmatpush1.msra.mxu0 0.0
      %2739 = vmatprep.subr.mxu0 0.0
      %2740 = vmatpush1.msra.mxu0 0.0
      %2741 = vmatprep.subr.mxu0 0.0
      %2742 = vmatpush1.msra.mxu0 0.0
      %2743 = vmatprep.subr.mxu0 0.0
      %2744 = vmatpush1.msra.mxu0 0.0
      %2745 = vmatprep.subr.mxu0 0.0
      %2746 = vmatpush1.msra.mxu0 0.0
      %2747 = vmatprep.mubr.f32.mxu0 0.0
      %2748 = vmatmul.mubr.f32.gmra.mrb[0].mxu0 %v2606
      %v2749 = vpop.f32.mrb[0].mxu0
      %v2750 = vadd.f32 0.0, %v2749
      %v2751 = vpop.f32.mrb[0].mxu0
      %v2752 = vadd.f32 0.0, %v2751
      %2753 = vdwg.mxu0
      %2754 = vmatprep.subr.mxu0 %v2622
      %2755 = vmatpush1.msra.mxu0 %v2621
      %2756 = vmatprep.subr.mxu0 %v2626
      %2757 = vmatpush1.msra.mxu0 %v2625
      %2758 = vmatprep.subr.mxu0 %v2630
      %2759 = vmatpush1.msra.mxu0 %v2629
      %2760 = vmatprep.subr.mxu0 %v2634
      %2761 = vmatpush1.msra.mxu0 %v2633
      %2762 = vmatprep.subr.mxu0 %v2638
      %2763 = vmatpush1.msra.mxu0 %v2637
      %2764 = vmatprep.subr.mxu0 %v2642
      %2765 = vmatpush1.msra.mxu0 %v2641
      %2766 = vmatprep.subr.mxu0 %v2646
      %2767 = vmatpush1.msra.mxu0 %v2645
      %2768 = vmatprep.subr.mxu0 %v2650
      %2769 = vmatpush1.msra.mxu0 %v2649
      %2770 = vmatprep.subr.mxu0 %v2654
      %2771 = vmatpush1.msra.mxu0 %v2653
      %2772 = vmatprep.subr.mxu0 %v2658
      %2773 = vmatpush1.msra.mxu0 %v2657
      %2774 = vmatprep.subr.mxu0 %v2662
      %2775 = vmatpush1.msra.mxu0 %v2661
      %2776 = vmatprep.subr.mxu0 %v2666
      %2777 = vmatpush1.msra.mxu0 %v2665
      %2778 = vmatprep.subr.mxu0 %v2670
      %2779 = vmatpush1.msra.mxu0 %v2669
      %2780 = vmatprep.subr.mxu0 %v2674
      %2781 = vmatpush1.msra.mxu0 %v2673
      %2782 = vmatprep.subr.mxu0 %v2678
      %2783 = vmatpush1.msra.mxu0 %v2677
      %2784 = vmatprep.subr.mxu0 %v2682
      %2785 = vmatpush1.msra.mxu0 %v2681
      %2786 = vmatprep.subr.mxu0 0.0
      %2787 = vmatpush1.msra.mxu0 0.0
      %2788 = vmatprep.subr.mxu0 0.0
      %2789 = vmatpush1.msra.mxu0 0.0
      %2790 = vmatprep.subr.mxu0 0.0
      %2791 = vmatpush1.msra.mxu0 0.0
      %2792 = vmatprep.subr.mxu0 0.0
      %2793 = vmatpush1.msra.mxu0 0.0
      %2794 = vmatprep.subr.mxu0 0.0
      %2795 = vmatpush1.msra.mxu0 0.0
      %2796 = vmatprep.subr.mxu0 0.0
      %2797 = vmatpush1.msra.mxu0 0.0
      %2798 = vmatprep.subr.mxu0 0.0
      %2799 = vmatpush1.msra.mxu0 0.0
      %2800 = vmatprep.subr.mxu0 0.0
      %2801 = vmatpush1.msra.mxu0 0.0
      %2802 = vmatprep.subr.mxu0 0.0
      %2803 = vmatpush1.msra.mxu0 0.0
      %2804 = vmatprep.subr.mxu0 0.0
      %2805 = vmatpush1.msra.mxu0 0.0
      %2806 = vmatprep.subr.mxu0 0.0
      %2807 = vmatpush1.msra.mxu0 0.0
      %2808 = vmatprep.subr.mxu0 0.0
      %2809 = vmatpush1.msra.mxu0 0.0
      %2810 = vmatprep.subr.mxu0 0.0
      %2811 = vmatpush1.msra.mxu0 0.0
      %2812 = vmatprep.subr.mxu0 0.0
      %2813 = vmatpush1.msra.mxu0 0.0
      %2814 = vmatprep.subr.mxu0 0.0
      %2815 = vmatpush1.msra.mxu0 0.0
      %2816 = vmatprep.subr.mxu0 0.0
      %2817 = vmatpush1.msra.mxu0 0.0
      %2818 = vmatprep.mubr.f32.mxu0 0.0
      %2819 = vmatmul.mubr.f32.gmra.mrb[0].mxu0 %v2606
      %v2820 = vpop.f32.mrb[0].mxu0
      %v2821 = vadd.f32 0.0, %v2820
      %v2822 = vpop.f32.mrb[0].mxu0
      %v2823 = vadd.f32 0.0, %v2822
      %2824 = vdwg.mxu0
      %v2826 = vsel %vm515, %v2610, 0
      %2828 = vmatprep.subr.mxu0 %v2612
      %2829 = vmatpush1.msra.mxu0 %v2611
      %2830 = vmatprep.subr.mxu0 %v2616
      %2831 = vmatpush1.msra.mxu0 %v2615
      %2832 = vmatprep.subr.mxu0 0.0
      %2833 = vmatpush1.msra.mxu0 0.0
      %2834 = vmatprep.subr.mxu0 0.0
      %2835 = vmatpush1.msra.mxu0 0.0
      %2836 = vmatprep.subr.mxu0 0.0
      %2837 = vmatpush1.msra.mxu0 0.0
      %2838 = vmatprep.subr.mxu0 0.0
      %2839 = vmatpush1.msra.mxu0 0.0
      %2840 = vmatprep.subr.mxu0 0.0
      %2841 = vmatpush1.msra.mxu0 0.0
      %2842 = vmatprep.subr.mxu0 0.0
      %2843 = vmatpush1.msra.mxu0 0.0
      %2844 = vmatprep.subr.mxu0 0.0
      %2845 = vmatpush1.msra.mxu0 0.0
      %2846 = vmatprep.subr.mxu0 0.0
      %2847 = vmatpush1.msra.mxu0 0.0
      %2848 = vmatprep.subr.mxu0 0.0
      %2849 = vmatpush1.msra.mxu0 0.0
      %2850 = vmatprep.subr.mxu0 0.0
      %2851 = vmatpush1.msra.mxu0 0.0
      %2852 = vmatprep.subr.mxu0 0.0
      %2853 = vmatpush1.msra.mxu0 0.0
      %2854 = vmatprep.subr.mxu0 0.0
      %2855 = vmatpush1.msra.mxu0 0.0
      %2856 = vmatprep.subr.mxu0 0.0
      %2857 = vmatpush1.msra.mxu0 0.0
      %2858 = vmatprep.subr.mxu0 0.0
      %2859 = vmatpush1.msra.mxu0 0.0
      %2860 = vmatprep.subr.mxu0 0.0
      %2861 = vmatpush1.msra.mxu0 0.0
      %2862 = vmatprep.subr.mxu0 0.0
      %2863 = vmatpush1.msra.mxu0 0.0
      %2864 = vmatprep.subr.mxu0 0.0
      %2865 = vmatpush1.msra.mxu0 0.0
      %2866 = vmatprep.subr.mxu0 0.0
      %2867 = vmatpush1.msra.mxu0 0.0
      %2868 = vmatprep.subr.mxu0 0.0
      %2869 = vmatpush1.msra.mxu0 0.0
      %2870 = vmatprep.subr.mxu0 0.0
      %2871 = vmatpush1.msra.mxu0 0.0
      %2872 = vmatprep.subr.mxu0 0.0
      %2873 = vmatpush1.msra.mxu0 0.0
      %2874 = vmatprep.subr.mxu0 0.0
      %2875 = vmatpush1.msra.mxu0 0.0
      %2876 = vmatprep.subr.mxu0 0.0
      %2877 = vmatpush1.msra.mxu0 0.0
      %2878 = vmatprep.subr.mxu0 0.0
      %2879 = vmatpush1.msra.mxu0 0.0
      %2880 = vmatprep.subr.mxu0 0.0
      %2881 = vmatpush1.msra.mxu0 0.0
      %2882 = vmatprep.subr.mxu0 0.0
      %2883 = vmatpush1.msra.mxu0 0.0
      %2884 = vmatprep.subr.mxu0 0.0
      %2885 = vmatpush1.msra.mxu0 0.0
      %2886 = vmatprep.subr.mxu0 0.0
      %2887 = vmatpush1.msra.mxu0 0.0
      %2888 = vmatprep.subr.mxu0 0.0
      %2889 = vmatpush1.msra.mxu0 0.0
      %2890 = vmatprep.subr.mxu0 0.0
      %2891 = vmatpush1.msra.mxu0 0.0
      %2892 = vmatprep.mubr.f32.mxu0 0.0
      %2893 = vmatmul.mubr.f32.gmra.mrb[0].mxu0 %v2826
      %v2894 = vpop.f32.mrb[0].mxu0
      %v2895 = vadd.f32 %v2750, %v2894
      %v2896 = vpop.f32.mrb[0].mxu0
      %v2897 = vadd.f32 %v2752, %v2896
      %2898 = vdwg.mxu0
      %2899 = vmatprep.subr.mxu0 %v2614
      %2900 = vmatpush1.msra.mxu0 %v2613
      %2901 = vmatprep.subr.mxu0 %v2618
      %2902 = vmatpush1.msra.mxu0 %v2617
      %2903 = vmatprep.subr.mxu0 0.0
      %2904 = vmatpush1.msra.mxu0 0.0
      %2905 = vmatprep.subr.mxu0 0.0
      %2906 = vmatpush1.msra.mxu0 0.0
      %2907 = vmatprep.subr.mxu0 0.0
      %2908 = vmatpush1.msra.mxu0 0.0
      %2909 = vmatprep.subr.mxu0 0.0
      %2910 = vmatpush1.msra.mxu0 0.0
      %2911 = vmatprep.subr.mxu0 0.0
      %2912 = vmatpush1.msra.mxu0 0.0
      %2913 = vmatprep.subr.mxu0 0.0
      %2914 = vmatpush1.msra.mxu0 0.0
      %2915 = vmatprep.subr.mxu0 0.0
      %2916 = vmatpush1.msra.mxu0 0.0
      %2917 = vmatprep.subr.mxu0 0.0
      %2918 = vmatpush1.msra.mxu0 0.0
      %2919 = vmatprep.subr.mxu0 0.0
      %2920 = vmatpush1.msra.mxu0 0.0
      %2921 = vmatprep.subr.mxu0 0.0
      %2922 = vmatpush1.msra.mxu0 0.0
      %2923 = vmatprep.subr.mxu0 0.0
      %2924 = vmatpush1.msra.mxu0 0.0
      %2925 = vmatprep.subr.mxu0 0.0
      %2926 = vmatpush1.msra.mxu0 0.0
      %2927 = vmatprep.subr.mxu0 0.0
      %2928 = vmatpush1.msra.mxu0 0.0
      %2929 = vmatprep.subr.mxu0 0.0
      %2930 = vmatpush1.msra.mxu0 0.0
      %2931 = vmatprep.subr.mxu0 0.0
      %2932 = vmatpush1.msra.mxu0 0.0
      %2933 = vmatprep.subr.mxu0 0.0
      %2934 = vmatpush1.msra.mxu0 0.0
      %2935 = vmatprep.subr.mxu0 0.0
      %2936 = vmatpush1.msra.mxu0 0.0
      %2937 = vmatprep.subr.mxu0 0.0
      %2938 = vmatpush1.msra.mxu0 0.0
      %2939 = vmatprep.subr.mxu0 0.0
      %2940 = vmatpush1.msra.mxu0 0.0
      %2941 = vmatprep.subr.mxu0 0.0
      %2942 = vmatpush1.msra.mxu0 0.0
      %2943 = vmatprep.subr.mxu0 0.0
      %2944 = vmatpush1.msra.mxu0 0.0
      %2945 = vmatprep.subr.mxu0 0.0
      %2946 = vmatpush1.msra.mxu0 0.0
      %2947 = vmatprep.subr.mxu0 0.0
      %2948 = vmatpush1.msra.mxu0 0.0
      %2949 = vmatprep.subr.mxu0 0.0
      %2950 = vmatpush1.msra.mxu0 0.0
      %2951 = vmatprep.subr.mxu0 0.0
      %2952 = vmatpush1.msra.mxu0 0.0
      %2953 = vmatprep.subr.mxu0 0.0
      %2954 = vmatpush1.msra.mxu0 0.0
      %2955 = vmatprep.subr.mxu0 0.0
      %2956 = vmatpush1.msra.mxu0 0.0
      %2957 = vmatprep.subr.mxu0 0.0
      %2958 = vmatpush1.msra.mxu0 0.0
      %2959 = vmatprep.subr.mxu0 0.0
      %2960 = vmatpush1.msra.mxu0 0.0
      %2961 = vmatprep.subr.mxu0 0.0
      %2962 = vmatpush1.msra.mxu0 0.0
      %2963 = vmatprep.mubr.f32.mxu0 0.0
      %2964 = vmatmul.mubr.f32.gmra.mrb[0].mxu0 %v2826
      %v2965 = vpop.f32.mrb[0].mxu0
      %v2966 = vadd.f32 %v2821, %v2965
      %v2967 = vpop.f32.mrb[0].mxu0
      %v2968 = vadd.f32 %v2823, %v2967
      %2969 = vdwg.mxu0
      %v2970 = vadd.f32 %v2895, %v283
      %v2971 = vadd.f32 %v2897, %v287
      %v2972 = vadd.f32 %v2966, %v291
      %v2973 = vadd.f32 %v2968, %v295
      %v2974 = vmul.f32 %v2970, 0.5
      %v2975 = vtanh.pop %v2974
      %v2976 = vmul.f32 %v2975, 0.5
      %v2977 = vadd.f32 %v2976, 0.5
      %v2978 = vmul.f32 %v2971, 0.5
      %v2979 = vtanh.pop %v2978
      %v2980 = vmul.f32 %v2979, 0.5
      %v2981 = vadd.f32 %v2980, 0.5
      %v2982 = vtanh.pop %v2972
      %v2983 = vmul.f32 %v2973, 0.5
      %v2984 = vtanh.pop %v2983
      %v2985 = vmul.f32 %v2984, 0.5
      %v2986 = vadd.f32 %v2985, 0.5
      %v2987 = vmul.f32 %v2977, %v2604
      %v2988 = vmul.f32 %v2981, %v2982
      %v2989 = vadd.f32 %v2987, %v2988
      %v2990 = vtanh.pop %v2989
      %v2991 = vmul.f32 %v2986, %v2990
      %s2992 = scalar_lea.vmem %s264, 48
      %2993 = vst [vmem:[%s2992] sm:$0xff] %v2991
      %s2994 = scalar_lea.vmem %s255, 56
      %v2995 = vld [vmem:[%s2994] sm:$0xff]
      %v2996 = vld [vmem:[%s1] sm:$0xff]
      %v2997 = vld [vmem:[%s1 + $0x8] sm:$0xff]
      %v2998 = vld [vmem:[%s1 + $0x10] sm:$0xff]
      %v2999 = vld [vmem:[%s1 + $0x18] sm:$0xff]
      %v3000 = vld [vmem:[%s1 + $0x20] sm:$0xff]
      %v3001 = vld [vmem:[%s1 + $0x28] sm:$0xff]
      %v3002 = vld [vmem:[%s1 + $0x30] sm:$0xff]
      %v3003 = vld [vmem:[%s1 + $0x38] sm:$0xff]
      %v3004 = vld [vmem:[%s2] sm:$0xff]
      %v3005 = vld [vmem:[%s2 + $0x8] sm:$0xff]
      %v3006 = vld [vmem:[%s2 + $0x10] sm:$0xff]
      %v3007 = vld [vmem:[%s2 + $0x18] sm:$0xff]
      %v3008 = vld [vmem:[%s2 + $0x20] sm:$0xff]
      %v3009 = vld [vmem:[%s2 + $0x28] sm:$0xff]
      %v3010 = vld [vmem:[%s2 + $0x30] sm:$0xff]
      %v3011 = vld [vmem:[%s2 + $0x38] sm:$0xff]
      %v3012 = vld [vmem:[%s2 + $0x40] sm:$0xff]
      %v3013 = vld [vmem:[%s2 + $0x48] sm:$0xff]
      %v3014 = vld [vmem:[%s2 + $0x50] sm:$0xff]
      %v3015 = vld [vmem:[%s2 + $0x58] sm:$0xff]
      %v3016 = vld [vmem:[%s2 + $0x60] sm:$0xff]
      %v3017 = vld [vmem:[%s2 + $0x68] sm:$0xff]
      %v3018 = vld [vmem:[%s2 + $0x70] sm:$0xff]
      %v3019 = vld [vmem:[%s2 + $0x78] sm:$0xff]
      %v3020 = vld [vmem:[%s2 + $0x80] sm:$0xff]
      %v3021 = vld [vmem:[%s2 + $0x88] sm:$0xff]
      %v3022 = vld [vmem:[%s2 + $0x90] sm:$0xff]
      %v3023 = vld [vmem:[%s2 + $0x98] sm:$0xff]
      %v3024 = vld [vmem:[%s2 + $0xa0] sm:$0xff]
      %v3025 = vld [vmem:[%s2 + $0xa8] sm:$0xff]
      %v3026 = vld [vmem:[%s2 + $0xb0] sm:$0xff]
      %v3027 = vld [vmem:[%s2 + $0xb8] sm:$0xff]
      %v3028 = vld [vmem:[%s2 + $0xc0] sm:$0xff]
      %v3029 = vld [vmem:[%s2 + $0xc8] sm:$0xff]
      %v3030 = vld [vmem:[%s2 + $0xd0] sm:$0xff]
      %v3031 = vld [vmem:[%s2 + $0xd8] sm:$0xff]
      %v3032 = vld [vmem:[%s2 + $0xe0] sm:$0xff]
      %v3033 = vld [vmem:[%s2 + $0xe8] sm:$0xff]
      %v3034 = vld [vmem:[%s2 + $0xf0] sm:$0xff]
      %v3035 = vld [vmem:[%s2 + $0xf8] sm:$0xff]
      %v3036 = vld [vmem:[%s2 + $0x100] sm:$0xff]
      %v3037 = vld [vmem:[%s2 + $0x108] sm:$0xff]
      %v3038 = vld [vmem:[%s2 + $0x110] sm:$0xff]
      %v3039 = vld [vmem:[%s2 + $0x118] sm:$0xff]
      %v3040 = vld [vmem:[%s2 + $0x120] sm:$0xff]
      %v3041 = vld [vmem:[%s2 + $0x128] sm:$0xff]
      %v3042 = vld [vmem:[%s2 + $0x130] sm:$0xff]
      %v3043 = vld [vmem:[%s2 + $0x138] sm:$0xff]
      %v3044 = vld [vmem:[%s2 + $0x140] sm:$0xff]
      %v3045 = vld [vmem:[%s2 + $0x148] sm:$0xff]
      %v3046 = vld [vmem:[%s2 + $0x150] sm:$0xff]
      %v3047 = vld [vmem:[%s2 + $0x158] sm:$0xff]
      %v3048 = vld [vmem:[%s2 + $0x160] sm:$0xff]
      %v3049 = vld [vmem:[%s2 + $0x168] sm:$0xff]
      %v3050 = vld [vmem:[%s2 + $0x170] sm:$0xff]
      %v3051 = vld [vmem:[%s2 + $0x178] sm:$0xff]
      %v3052 = vld [vmem:[%s2 + $0x180] sm:$0xff]
      %v3053 = vld [vmem:[%s2 + $0x188] sm:$0xff]
      %v3054 = vld [vmem:[%s2 + $0x190] sm:$0xff]
      %v3055 = vld [vmem:[%s2 + $0x198] sm:$0xff]
      %v3056 = vld [vmem:[%s2 + $0x1a0] sm:$0xff]
      %v3057 = vld [vmem:[%s2 + $0x1a8] sm:$0xff]
      %v3058 = vld [vmem:[%s2 + $0x1b0] sm:$0xff]
      %v3059 = vld [vmem:[%s2 + $0x1b8] sm:$0xff]
      %v3060 = vld [vmem:[%s2 + $0x1c0] sm:$0xff]
      %v3061 = vld [vmem:[%s2 + $0x1c8] sm:$0xff]
      %v3062 = vld [vmem:[%s2 + $0x1d0] sm:$0xff]
      %v3063 = vld [vmem:[%s2 + $0x1d8] sm:$0xff]
      %v3064 = vld [vmem:[%s2 + $0x1e0] sm:$0xff]
      %v3065 = vld [vmem:[%s2 + $0x1e8] sm:$0xff]
      %v3066 = vld [vmem:[%s2 + $0x1f0] sm:$0xff]
      %v3067 = vld [vmem:[%s2 + $0x1f8] sm:$0xff]
      %3068 = vmatprep.subr.mxu0 %v3005
      %3069 = vmatpush1.msra.mxu0 %v3004
      %3070 = vmatprep.subr.mxu0 %v3009
      %3071 = vmatpush1.msra.mxu0 %v3008
      %3072 = vmatprep.subr.mxu0 %v3013
      %3073 = vmatpush1.msra.mxu0 %v3012
      %3074 = vmatprep.subr.mxu0 %v3017
      %3075 = vmatpush1.msra.mxu0 %v3016
      %3076 = vmatprep.subr.mxu0 %v3021
      %3077 = vmatpush1.msra.mxu0 %v3020
      %3078 = vmatprep.subr.mxu0 %v3025
      %3079 = vmatpush1.msra.mxu0 %v3024
      %3080 = vmatprep.subr.mxu0 %v3029
      %3081 = vmatpush1.msra.mxu0 %v3028
      %3082 = vmatprep.subr.mxu0 %v3033
      %3083 = vmatpush1.msra.mxu0 %v3032
      %3084 = vmatprep.subr.mxu0 %v3037
      %3085 = vmatpush1.msra.mxu0 %v3036
      %3086 = vmatprep.subr.mxu0 %v3041
      %3087 = vmatpush1.msra.mxu0 %v3040
      %3088 = vmatprep.subr.mxu0 %v3045
      %3089 = vmatpush1.msra.mxu0 %v3044
      %3090 = vmatprep.subr.mxu0 %v3049
      %3091 = vmatpush1.msra.mxu0 %v3048
      %3092 = vmatprep.subr.mxu0 %v3053
      %3093 = vmatpush1.msra.mxu0 %v3052
      %3094 = vmatprep.subr.mxu0 %v3057
      %3095 = vmatpush1.msra.mxu0 %v3056
      %3096 = vmatprep.subr.mxu0 %v3061
      %3097 = vmatpush1.msra.mxu0 %v3060
      %3098 = vmatprep.subr.mxu0 %v3065
      %3099 = vmatpush1.msra.mxu0 %v3064
      %3100 = vmatprep.subr.mxu0 0.0
      %3101 = vmatpush1.msra.mxu0 0.0
      %3102 = vmatprep.subr.mxu0 0.0
      %3103 = vmatpush1.msra.mxu0 0.0
      %3104 = vmatprep.subr.mxu0 0.0
      %3105 = vmatpush1.msra.mxu0 0.0
      %3106 = vmatprep.subr.mxu0 0.0
      %3107 = vmatpush1.msra.mxu0 0.0
      %3108 = vmatprep.subr.mxu0 0.0
      %3109 = vmatpush1.msra.mxu0 0.0
      %3110 = vmatprep.subr.mxu0 0.0
      %3111 = vmatpush1.msra.mxu0 0.0
      %3112 = vmatprep.subr.mxu0 0.0
      %3113 = vmatpush1.msra.mxu0 0.0
      %3114 = vmatprep.subr.mxu0 0.0
      %3115 = vmatpush1.msra.mxu0 0.0
      %3116 = vmatprep.subr.mxu0 0.0
      %3117 = vmatpush1.msra.mxu0 0.0
      %3118 = vmatprep.subr.mxu0 0.0
      %3119 = vmatpush1.msra.mxu0 0.0
      %3120 = vmatprep.subr.mxu0 0.0
      %3121 = vmatpush1.msra.mxu0 0.0
      %3122 = vmatprep.subr.mxu0 0.0
      %3123 = vmatpush1.msra.mxu0 0.0
      %3124 = vmatprep.subr.mxu0 0.0
      %3125 = vmatpush1.msra.mxu0 0.0
      %3126 = vmatprep.subr.mxu0 0.0
      %3127 = vmatpush1.msra.mxu0 0.0
      %3128 = vmatprep.subr.mxu0 0.0
      %3129 = vmatpush1.msra.mxu0 0.0
      %3130 = vmatprep.subr.mxu0 0.0
      %3131 = vmatpush1.msra.mxu0 0.0
      %3132 = vmatprep.mubr.f32.mxu0 0.0
      %3133 = vmatmul.mubr.f32.gmra.mrb[0].mxu0 %v2991
      %v3134 = vpop.f32.mrb[0].mxu0
      %v3135 = vadd.f32 0.0, %v3134
      %v3136 = vpop.f32.mrb[0].mxu0
      %v3137 = vadd.f32 0.0, %v3136
      %3138 = vdwg.mxu0
      %3139 = vmatprep.subr.mxu0 %v3007
      %3140 = vmatpush1.msra.mxu0 %v3006
      %3141 = vmatprep.subr.mxu0 %v3011
      %3142 = vmatpush1.msra.mxu0 %v3010
      %3143 = vmatprep.subr.mxu0 %v3015
      %3144 = vmatpush1.msra.mxu0 %v3014
      %3145 = vmatprep.subr.mxu0 %v3019
      %3146 = vmatpush1.msra.mxu0 %v3018
      %3147 = vmatprep.subr.mxu0 %v3023
      %3148 = vmatpush1.msra.mxu0 %v3022
      %3149 = vmatprep.subr.mxu0 %v3027
      %3150 = vmatpush1.msra.mxu0 %v3026
      %3151 = vmatprep.subr.mxu0 %v3031
      %3152 = vmatpush1.msra.mxu0 %v3030
      %3153 = vmatprep.subr.mxu0 %v3035
      %3154 = vmatpush1.msra.mxu0 %v3034
      %3155 = vmatprep.subr.mxu0 %v3039
      %3156 = vmatpush1.msra.mxu0 %v3038
      %3157 = vmatprep.subr.mxu0 %v3043
      %3158 = vmatpush1.msra.mxu0 %v3042
      %3159 = vmatprep.subr.mxu0 %v3047
      %3160 = vmatpush1.msra.mxu0 %v3046
      %3161 = vmatprep.subr.mxu0 %v3051
      %3162 = vmatpush1.msra.mxu0 %v3050
      %3163 = vmatprep.subr.mxu0 %v3055
      %3164 = vmatpush1.msra.mxu0 %v3054
      %3165 = vmatprep.subr.mxu0 %v3059
      %3166 = vmatpush1.msra.mxu0 %v3058
      %3167 = vmatprep.subr.mxu0 %v3063
      %3168 = vmatpush1.msra.mxu0 %v3062
      %3169 = vmatprep.subr.mxu0 %v3067
      %3170 = vmatpush1.msra.mxu0 %v3066
      %3171 = vmatprep.subr.mxu0 0.0
      %3172 = vmatpush1.msra.mxu0 0.0
      %3173 = vmatprep.subr.mxu0 0.0
      %3174 = vmatpush1.msra.mxu0 0.0
      %3175 = vmatprep.subr.mxu0 0.0
      %3176 = vmatpush1.msra.mxu0 0.0
      %3177 = vmatprep.subr.mxu0 0.0
      %3178 = vmatpush1.msra.mxu0 0.0
      %3179 = vmatprep.subr.mxu0 0.0
      %3180 = vmatpush1.msra.mxu0 0.0
      %3181 = vmatprep.subr.mxu0 0.0
      %3182 = vmatpush1.msra.mxu0 0.0
      %3183 = vmatprep.subr.mxu0 0.0
      %3184 = vmatpush1.msra.mxu0 0.0
      %3185 = vmatprep.subr.mxu0 0.0
      %3186 = vmatpush1.msra.mxu0 0.0
      %3187 = vmatprep.subr.mxu0 0.0
      %3188 = vmatpush1.msra.mxu0 0.0
      %3189 = vmatprep.subr.mxu0 0.0
      %3190 = vmatpush1.msra.mxu0 0.0
      %3191 = vmatprep.subr.mxu0 0.0
      %3192 = vmatpush1.msra.mxu0 0.0
      %3193 = vmatprep.subr.mxu0 0.0
      %3194 = vmatpush1.msra.mxu0 0.0
      %3195 = vmatprep.subr.mxu0 0.0
      %3196 = vmatpush1.msra.mxu0 0.0
      %3197 = vmatprep.subr.mxu0 0.0
      %3198 = vmatpush1.msra.mxu0 0.0
      %3199 = vmatprep.subr.mxu0 0.0
      %3200 = vmatpush1.msra.mxu0 0.0
      %3201 = vmatprep.subr.mxu0 0.0
      %3202 = vmatpush1.msra.mxu0 0.0
      %3203 = vmatprep.mubr.f32.mxu0 0.0
      %3204 = vmatmul.mubr.f32.gmra.mrb[0].mxu0 %v2991
      %v3205 = vpop.f32.mrb[0].mxu0
      %v3206 = vadd.f32 0.0, %v3205
      %v3207 = vpop.f32.mrb[0].mxu0
      %v3208 = vadd.f32 0.0, %v3207
      %3209 = vdwg.mxu0
      %v3211 = vsel %vm515, %v2995, 0
      %3213 = vmatprep.subr.mxu0 %v2997
      %3214 = vmatpush1.msra.mxu0 %v2996
      %3215 = vmatprep.subr.mxu0 %v3001
      %3216 = vmatpush1.msra.mxu0 %v3000
      %3217 = vmatprep.subr.mxu0 0.0
      %3218 = vmatpush1.msra.mxu0 0.0
      %3219 = vmatprep.subr.mxu0 0.0
      %3220 = vmatpush1.msra.mxu0 0.0
      %3221 = vmatprep.subr.mxu0 0.0
      %3222 = vmatpush1.msra.mxu0 0.0
      %3223 = vmatprep.subr.mxu0 0.0
      %3224 = vmatpush1.msra.mxu0 0.0
      %3225 = vmatprep.subr.mxu0 0.0
      %3226 = vmatpush1.msra.mxu0 0.0
      %3227 = vmatprep.subr.mxu0 0.0
      %3228 = vmatpush1.msra.mxu0 0.0
      %3229 = vmatprep.subr.mxu0 0.0
      %3230 = vmatpush1.msra.mxu0 0.0
      %3231 = vmatprep.subr.mxu0 0.0
      %3232 = vmatpush1.msra.mxu0 0.0
      %3233 = vmatprep.subr.mxu0 0.0
      %3234 = vmatpush1.msra.mxu0 0.0
      %3235 = vmatprep.subr.mxu0 0.0
      %3236 = vmatpush1.msra.mxu0 0.0
      %3237 = vmatprep.subr.mxu0 0.0
      %3238 = vmatpush1.msra.mxu0 0.0
      %3239 = vmatprep.subr.mxu0 0.0
      %3240 = vmatpush1.msra.mxu0 0.0
      %3241 = vmatprep.subr.mxu0 0.0
      %3242 = vmatpush1.msra.mxu0 0.0
      %3243 = vmatprep.subr.mxu0 0.0
      %3244 = vmatpush1.msra.mxu0 0.0
      %3245 = vmatprep.subr.mxu0 0.0
      %3246 = vmatpush1.msra.mxu0 0.0
      %3247 = vmatprep.subr.mxu0 0.0
      %3248 = vmatpush1.msra.mxu0 0.0
      %3249 = vmatprep.subr.mxu0 0.0
      %3250 = vmatpush1.msra.mxu0 0.0
      %3251 = vmatprep.subr.mxu0 0.0
      %3252 = vmatpush1.msra.mxu0 0.0
      %3253 = vmatprep.subr.mxu0 0.0
      %3254 = vmatpush1.msra.mxu0 0.0
      %3255 = vmatprep.subr.mxu0 0.0
      %3256 = vmatpush1.msra.mxu0 0.0
      %3257 = vmatprep.subr.mxu0 0.0
      %3258 = vmatpush1.msra.mxu0 0.0
      %3259 = vmatprep.subr.mxu0 0.0
      %3260 = vmatpush1.msra.mxu0 0.0
      %3261 = vmatprep.subr.mxu0 0.0
      %3262 = vmatpush1.msra.mxu0 0.0
      %3263 = vmatprep.subr.mxu0 0.0
      %3264 = vmatpush1.msra.mxu0 0.0
      %3265 = vmatprep.subr.mxu0 0.0
      %3266 = vmatpush1.msra.mxu0 0.0
      %3267 = vmatprep.subr.mxu0 0.0
      %3268 = vmatpush1.msra.mxu0 0.0
      %3269 = vmatprep.subr.mxu0 0.0
      %3270 = vmatpush1.msra.mxu0 0.0
      %3271 = vmatprep.subr.mxu0 0.0
      %3272 = vmatpush1.msra.mxu0 0.0
      %3273 = vmatprep.subr.mxu0 0.0
      %3274 = vmatpush1.msra.mxu0 0.0
      %3275 = vmatprep.subr.mxu0 0.0
      %3276 = vmatpush1.msra.mxu0 0.0
      %3277 = vmatprep.mubr.f32.mxu0 0.0
      %3278 = vmatmul.mubr.f32.gmra.mrb[0].mxu0 %v3211
      %v3279 = vpop.f32.mrb[0].mxu0
      %v3280 = vadd.f32 %v3135, %v3279
      %v3281 = vpop.f32.mrb[0].mxu0
      %v3282 = vadd.f32 %v3137, %v3281
      %3283 = vdwg.mxu0
      %3284 = vmatprep.subr.mxu0 %v2999
      %3285 = vmatpush1.msra.mxu0 %v2998
      %3286 = vmatprep.subr.mxu0 %v3003
      %3287 = vmatpush1.msra.mxu0 %v3002
      %3288 = vmatprep.subr.mxu0 0.0
      %3289 = vmatpush1.msra.mxu0 0.0
      %3290 = vmatprep.subr.mxu0 0.0
      %3291 = vmatpush1.msra.mxu0 0.0
      %3292 = vmatprep.subr.mxu0 0.0
      %3293 = vmatpush1.msra.mxu0 0.0
      %3294 = vmatprep.subr.mxu0 0.0
      %3295 = vmatpush1.msra.mxu0 0.0
      %3296 = vmatprep.subr.mxu0 0.0
      %3297 = vmatpush1.msra.mxu0 0.0
      %3298 = vmatprep.subr.mxu0 0.0
      %3299 = vmatpush1.msra.mxu0 0.0
      %3300 = vmatprep.subr.mxu0 0.0
      %3301 = vmatpush1.msra.mxu0 0.0
      %3302 = vmatprep.subr.mxu0 0.0
      %3303 = vmatpush1.msra.mxu0 0.0
      %3304 = vmatprep.subr.mxu0 0.0
      %3305 = vmatpush1.msra.mxu0 0.0
      %3306 = vmatprep.subr.mxu0 0.0
      %3307 = vmatpush1.msra.mxu0 0.0
      %3308 = vmatprep.subr.mxu0 0.0
      %3309 = vmatpush1.msra.mxu0 0.0
      %3310 = vmatprep.subr.mxu0 0.0
      %3311 = vmatpush1.msra.mxu0 0.0
      %3312 = vmatprep.subr.mxu0 0.0
      %3313 = vmatpush1.msra.mxu0 0.0
      %3314 = vmatprep.subr.mxu0 0.0
      %3315 = vmatpush1.msra.mxu0 0.0
      %3316 = vmatprep.subr.mxu0 0.0
      %3317 = vmatpush1.msra.mxu0 0.0
      %3318 = vmatprep.subr.mxu0 0.0
      %3319 = vmatpush1.msra.mxu0 0.0
      %3320 = vmatprep.subr.mxu0 0.0
      %3321 = vmatpush1.msra.mxu0 0.0
      %3322 = vmatprep.subr.mxu0 0.0
      %3323 = vmatpush1.msra.mxu0 0.0
      %3324 = vmatprep.subr.mxu0 0.0
      %3325 = vmatpush1.msra.mxu0 0.0
      %3326 = vmatprep.subr.mxu0 0.0
      %3327 = vmatpush1.msra.mxu0 0.0
      %3328 = vmatprep.subr.mxu0 0.0
      %3329 = vmatpush1.msra.mxu0 0.0
      %3330 = vmatprep.subr.mxu0 0.0
      %3331 = vmatpush1.msra.mxu0 0.0
      %3332 = vmatprep.subr.mxu0 0.0
      %3333 = vmatpush1.msra.mxu0 0.0
      %3334 = vmatprep.subr.mxu0 0.0
      %3335 = vmatpush1.msra.mxu0 0.0
      %3336 = vmatprep.subr.mxu0 0.0
      %3337 = vmatpush1.msra.mxu0 0.0
      %3338 = vmatprep.subr.mxu0 0.0
      %3339 = vmatpush1.msra.mxu0 0.0
      %3340 = vmatprep.subr.mxu0 0.0
      %3341 = vmatpush1.msra.mxu0 0.0
      %3342 = vmatprep.subr.mxu0 0.0
      %3343 = vmatpush1.msra.mxu0 0.0
      %3344 = vmatprep.subr.mxu0 0.0
      %3345 = vmatpush1.msra.mxu0 0.0
      %3346 = vmatprep.subr.mxu0 0.0
      %3347 = vmatpush1.msra.mxu0 0.0
      %3348 = vmatprep.mubr.f32.mxu0 0.0
      %3349 = vmatmul.mubr.f32.gmra.mrb[0].mxu0 %v3211
      %v3350 = vpop.f32.mrb[0].mxu0
      %v3351 = vadd.f32 %v3206, %v3350
      %v3352 = vpop.f32.mrb[0].mxu0
      %v3353 = vadd.f32 %v3208, %v3352
      %3354 = vdwg.mxu0
      %v3355 = vadd.f32 %v3280, %v283
      %v3356 = vadd.f32 %v3282, %v287
      %v3357 = vadd.f32 %v3351, %v291
      %v3358 = vadd.f32 %v3353, %v295
      %v3359 = vmul.f32 %v3355, 0.5
      %v3360 = vtanh.pop %v3359
      %v3361 = vmul.f32 %v3360, 0.5
      %v3362 = vadd.f32 %v3361, 0.5
      %v3363 = vmul.f32 %v3356, 0.5
      %v3364 = vtanh.pop %v3363
      %v3365 = vmul.f32 %v3364, 0.5
      %v3366 = vadd.f32 %v3365, 0.5
      %v3367 = vtanh.pop %v3357
      %v3368 = vmul.f32 %v3358, 0.5
      %v3369 = vtanh.pop %v3368
      %v3370 = vmul.f32 %v3369, 0.5
      %v3371 = vadd.f32 %v3370, 0.5
      %v3372 = vmul.f32 %v3362, %v2989
      %v3373 = vmul.f32 %v3366, %v3367
      %v3374 = vadd.f32 %v3372, %v3373
      %v3375 = vtanh.pop %v3374
      %v3376 = vmul.f32 %v3371, %v3375
      %s3377 = scalar_lea.vmem %s264, 56
      %3378 = vst [vmem:[%s3377] sm:$0xff] %v3376
      %3379 = vst [vmem:[#allocation2] sm:$0xff] %v3376
      %3380 = vst [vmem:[#allocation3] sm:$0xff] %v3374
      %p3381 = scmp.eq.s32.totalorder %s22, 1
      // Predicated region
      $region41: #{my_lstm_forward.1} parent=35 // pred_check
        %p3382 = pneg %p3381
      $region42: #{my_lstm_forward.1} parent=35 // pred_check_branch
        %3384 = sbr.rel (%p3382) target = $region44
      $region43: #{my_lstm_forward.1} parent=35 // pred_region
        %3385 = vst [vmem:[%s269] sm:$0xff] %v3374
      $region44: #{my_lstm_forward.1} parent=35 // pred_fallthru
        _
      %s3386 = smul.u32 8, %s22
      %p3387 = scmp.lt.s32.totalorder %s3386, 15
      %s3388 = scalar_select %p3387, %s3386, 15
      %p3389 = scmp.lt.s32.totalorder %s21, 0
      %s3390 = scalar_select %p3389, %s21, 0
      %s3391 = sadd.s32 %s3390, %s3388
      %s3392 = smul.addr %s3391, 8
      %s3393 = scalar_lea.vmem %s4, %s3392
      %p3394 = scmp.lt.s32.totalorder %s21, 0
      %s3395 = scalar_select %p3394, %s21, 0
      %s3396 = smul.addr %s3395, 8
      %s3397 = scalar_lea.vmem %s5, %s3396
      // Predicated region
      $region45: #{my_lstm_forward.1} parent=35 // pred_check
        %p3398 = pneg %p140
      $region46: #{my_lstm_forward.1} parent=35 // pred_check_branch
        %3400 = sbr.rel (%p3398) target = $region48
      $region47: #{my_lstm_forward.1} parent=35 // pred_region
        %s3401 = smul.u32 8, %s22
      $region48: #{my_lstm_forward.1} parent=35 // pred_fallthru
        _
      // Predicated region
      $region49: #{my_lstm_forward.1} parent=35 // pred_check
        %p3402 = pneg %p166
      $region50: #{my_lstm_forward.1} parent=35 // pred_check_branch
        %3404 = sbr.rel (%p3402) target = $region52
      $region51: #{my_lstm_forward.1} parent=35 // pred_region
        _
      $region52: #{my_lstm_forward.1} parent=35 // pred_fallthru
        _
      // Predicated region
      $region53: #{my_lstm_forward.1} parent=35 // pred_check
        %p3405 = pneg %p166
      $region54: #{my_lstm_forward.1} parent=35 // pred_check_branch
        %3407 = sbr.rel (%p3405) target = $region56
      $region55: #{my_lstm_forward.1} parent=35 // pred_region
        %p3408 = scmp.lt.s32.totalorder %s21, 0
        %s3409 = scalar_select %p3408, %s21, 0
        %s3410 = smul.addr %s3409, 8
        %s3411 = scalar_lea.vmem %s5, %s3410
      $region56: #{my_lstm_forward.1} parent=35 // pred_fallthru
        _
    $region36: #{my_lstm_forward.1} parent=5 // pred_fallthru
      _
    %p3412 = scmp.le.s32.totalorder 2, %s12
    // Predicated region
    $region57: #{my_lstm_forward.1} parent=5 // pred_check
      %p3413 = pneg %p3412
    $region58: #{my_lstm_forward.1} parent=5 // pred_check_branch
      %3415 = sbr.rel (%p3413) target = $region60
    $region59: #{my_lstm_forward.1} parent=5 // pred_region
      %s3416 = ssub.s32 %s12, 2
      // Predicated region
      $region61: #{my_lstm_forward.1} parent=59 // pred_check
        %p3417 = pneg %p146
      $region62: #{my_lstm_forward.1} parent=59 // pred_check_branch
        %3419 = sbr.rel (%p3417) target = $region64
      $region63: #{my_lstm_forward.1} parent=59 // pred_region
        %s3420 = smul.u32 8, %s24
        %p3421 = scmp.lt.s32.totalorder %s3420, 15
        %s3422 = scalar_select %p3421, %s3420, 15
        %p3423 = scmp.lt.s32.totalorder %s23, 0
        %s3424 = scalar_select %p3423, %s23, 0
        %s3425 = sadd.s32 %s3424, %s3422
        %s3426 = smul.addr %s3425, 8
        %s3427 = scalar_lea.vmem %s4, %s3426
      $region64: #{my_lstm_forward.1} parent=59 // pred_fallthru
        _
    $region60: #{my_lstm_forward.1} parent=5 // pred_fallthru
      _
  $region6: #{my_lstm_forward.1} parent=0 // loop_footer
    %s16 = sadd.s32 1, %s12
  $region7: #{my_lstm_forward.1} parent=0 // loop_footer_branch
    %11 = sbr.rel target = $region3
  $region8: #{my_lstm_forward.1} parent=0 // loop_exit
    _

// kernel: my_lstm_forward.1
$region0: #{my_lstm_forward.1}
  #allocation0 [shape = 'u32[]', space=smem, size = 0x4, offset = 0x4, fixed_abs, tag = 'smem constant byte address 0x4 - core index']
  #allocation1 [shape = 'u32[144,128]{1,0:T(1,128)}', space=vmem, size = 0x12000, scoped, tag = 'internal scratch']
  #allocation2 [shape = 'f32[8,128]{1,0:T(8,128)}', space=vmem, size = 0x1000, scoped, tag = 'scratch operand']
  #allocation3 [shape = 'f32[8,128]{1,0:T(8,128)}', space=vmem, size = 0x1000, scoped, tag = 'scratch operand']
  %s0 = inlined_call_operand.vmem [shape: f32[16,8,16], index: 0, kind: input, shape index: {}]
  %s1 = inlined_call_operand.vmem [shape: f32[16,512], index: 1, kind: input, shape index: {}]
  %s2 = inlined_call_operand.vmem [shape: f32[128,512], index: 2, kind: input, shape index: {}]
  %s3 = inlined_call_operand.vmem [shape: f32[1,512], index: 3, kind: input, shape index: {}]
  %s4 = inlined_call_operand.vmem [shape: f32[16,8,128], index: 4, kind: output, shape index: {0}]
  %s5 = inlined_call_operand.vmem [shape: f32[8,128], index: 5, kind: output, shape index: {1}]
  %6 = xla_tuple %s4, %s5
  %s7 = sld [smem:[#allocation0]]
  $region65: #{my_lstm_forward.1} parent=0
    _
  %s9 = ssub.s32 1, %s7
  %s10 = scalar_select 0, %s9, %s7
  loop: start=0, step=1, limit=4
  $region2: #{my_lstm_forward.1} parent=0 // loop_pre_header
    _
  $region3: #{my_lstm_forward.1} parent=0 // loop_header
    %s12 = sphi 0, %s16
    %p13 = scmp.ge.s32.totalorder %s12, 4
    %s19 = sphi 0, %s31
    %s20 = sphi 0, %s27
    %s21 = sphi 0, %s19
    %s22 = sphi 0, %s20
    %s23 = sphi 0, %s21
    %s24 = sphi 0, %s22
    %s36 = sphi 0, %s38
    %s39 = sphi 0, %s36
    %s40 = sphi 0, %s39
    %s56 = sphi 0, %s40
    %s60 = sphi 0, %s60
    %s62 = sphi 0, %s60
    %s63 = sphi 0, %s62
    %s77 = sphi 0, %s63
    %s81 = sphi 0, %s81
    %s83 = sphi 0, %s81
    %s84 = sphi 0, %s83
    %s98 = sphi 0, %s84
    %s102 = sphi 0, %s102
    %s104 = sphi 0, %s102
    %s105 = sphi 0, %s104
    %s119 = sphi 0, %s105
    %s127 = sphi 0, %s129
    %s130 = sphi 0, %s127
    %s131 = sphi 0, %s130
    %s147 = sphi 0, %s131
    %s153 = sphi 0, %s155
    %s156 = sphi 0, %s153
    %s157 = sphi 0, %s156
    %s173 = sphi 0, %s157
  $region4: #{my_lstm_forward.1} parent=0 // loop_header_branch
    %15 = sbr.rel (%p13) target = $region8
  $region5: #{my_lstm_forward.1} parent=0 // loop_body
    %s17 = ssub.s32 %s12, 1
    %s18 = ssub.s32 %s12, 2
    %s25 = sadd.s32 1, %s20
    %p26 = scmp.ge.s32.totalorder %s25, 2
    %s27 = scalar_select %p26, 0, %s25
    %s28 = sadd.s32 1, %s19
    %s29 = scalar_select %p26, %s28, %s19
    %p30 = scmp.ge.s32.totalorder %s29, 1
    %s31 = scalar_select %p30, 0, %s29
    %s32 = ssub.s32 %s20, %s27
    %s33 = ssub.s32 %s19, %s31
    %s34 = sor.u32 %s32, %s33
    %p35 = scmp.eq.s32.totalorder %s34, 0
    %s37 = sadd.s32 %s36, 1
    %s38 = scalar_select %p35, %s36, %s37
    %p41 = pneg %p35
    %p42 = scmp.eq.s32.totalorder %s12, 1
    %p43 = por %p41, %p42
    %p44 = scmp.ne.s32.totalorder %s36, %s39
    %p45 = scmp.eq.s32.totalorder %s12, 0
    %p46 = por %p44, %p45
    %p47 = scmp.ne.s32.totalorder %s36, %s39
    %p48 = scmp.eq.s32.totalorder %s17, 1
    %p49 = por %p47, %p48
    %p50 = scmp.ne.s32.totalorder %s39, %s40
    %p51 = scmp.eq.s32.totalorder %s17, 0
    %p52 = por %p50, %p51
    %p53 = scmp.ne.s32.totalorder %s39, %s40
    %p54 = scmp.eq.s32.totalorder %s18, 1
    %p55 = por %p53, %p54
    %p57 = scmp.ne.s32.totalorder %s40, %s56
    %p58 = scmp.eq.s32.totalorder %s18, 0
    %p59 = por %p57, %p58
    %s61 = sadd.s32 %s60, 1
    %p64 = scmp.eq.s32.totalorder %s12, 1
    %p65 = scmp.ne.s32.totalorder %s60, %s62
    %p66 = scmp.eq.s32.totalorder %s12, 0
    %p67 = por %p65, %p66
    %p68 = scmp.ne.s32.totalorder %s60, %s62
    %p69 = scmp.eq.s32.totalorder %s17, 1
    %p70 = por %p68, %p69
    %p71 = scmp.ne.s32.totalorder %s62, %s63
    %p72 = scmp.eq.s32.totalorder %s17, 0
    %p73 = por %p71, %p72
    %p74 = scmp.ne.s32.totalorder %s62, %s63
    %p75 = scmp.eq.s32.totalorder %s18, 1
    %p76 = por %p74, %p75
    %p78 = scmp.ne.s32.totalorder %s63, %s77
    %p79 = scmp.eq.s32.totalorder %s18, 0
    %p80 = por %p78, %p79
    %s82 = sadd.s32 %s81, 1
    %p85 = scmp.eq.s32.totalorder %s12, 1
    %p86 = scmp.ne.s32.totalorder %s81, %s83
    %p87 = scmp.eq.s32.totalorder %s12, 0
    %p88 = por %p86, %p87
    %p89 = scmp.ne.s32.totalorder %s81, %s83
    %p90 = scmp.eq.s32.totalorder %s17, 1
    %p91 = por %p89, %p90
    %p92 = scmp.ne.s32.totalorder %s83, %s84
    %p93 = scmp.eq.s32.totalorder %s17, 0
    %p94 = por %p92, %p93
    %p95 = scmp.ne.s32.totalorder %s83, %s84
    %p96 = scmp.eq.s32.totalorder %s18, 1
    %p97 = por %p95, %p96
    %p99 = scmp.ne.s32.totalorder %s84, %s98
    %p100 = scmp.eq.s32.totalorder %s18, 0
    %p101 = por %p99, %p100
    %s103 = sadd.s32 %s102, 1
    %p106 = scmp.eq.s32.totalorder %s12, 1
    %p107 = scmp.ne.s32.totalorder %s102, %s104
    %p108 = scmp.eq.s32.totalorder %s12, 0
    %p109 = por %p107, %p108
    %p110 = scmp.ne.s32.totalorder %s102, %s104
    %p111 = scmp.eq.s32.totalorder %s17, 1
    %p112 = por %p110, %p111
    %p113 = scmp.ne.s32.totalorder %s104, %s105
    %p114 = scmp.eq.s32.totalorder %s17, 0
    %p115 = por %p113, %p114
    %p116 = scmp.ne.s32.totalorder %s104, %s105
    %p117 = scmp.eq.s32.totalorder %s18, 1
    %p118 = por %p116, %p117
    %p120 = scmp.ne.s32.totalorder %s105, %s119
    %p121 = scmp.eq.s32.totalorder %s18, 0
    %p122 = por %p120, %p121
    %s123 = ssub.s32 %s20, %s27
    %s124 = ssub.s32 %s19, %s31
    %s125 = sor.u32 %s123, %s124
    %p126 = scmp.eq.s32.totalorder %s125, 0
    %s128 = sadd.s32 %s127, 1
    %s129 = scalar_select %p126, %s127, %s128
    %p132 = pneg %p126
    %p133 = scmp.eq.s32.totalorder %s12, 1
    %p134 = por %p132, %p133
    %p135 = scmp.ne.s32.totalorder %s127, %s130
    %p136 = scmp.eq.s32.totalorder %s12, 0
    %p137 = por %p135, %p136
    %p138 = scmp.ne.s32.totalorder %s127, %s130
    %p139 = scmp.eq.s32.totalorder %s17, 1
    %p140 = por %p138, %p139
    %p141 = scmp.ne.s32.totalorder %s130, %s131
    %p142 = scmp.eq.s32.totalorder %s17, 0
    %p143 = por %p141, %p142
    %p144 = scmp.ne.s32.totalorder %s130, %s131
    %p145 = scmp.eq.s32.totalorder %s18, 1
    %p146 = por %p144, %p145
    %p148 = scmp.ne.s32.totalorder %s131, %s147
    %p149 = scmp.eq.s32.totalorder %s18, 0
    %p150 = por %p148, %p149
    %s151 = ssub.s32 %s19, %s31
    %p152 = scmp.eq.s32.totalorder %s151, 0
    %s154 = sadd.s32 %s153, 1
    %s155 = scalar_select %p152, %s153, %s154
    %p158 = pneg %p152
    %p159 = scmp.eq.s32.totalorder %s12, 1
    %p160 = por %p158, %p159
    %p161 = scmp.ne.s32.totalorder %s153, %s156
    %p162 = scmp.eq.s32.totalorder %s12, 0
    %p163 = por %p161, %p162
    %p164 = scmp.ne.s32.totalorder %s153, %s156
    %p165 = scmp.eq.s32.totalorder %s17, 1
    %p166 = por %p164, %p165
    %p167 = scmp.ne.s32.totalorder %s156, %s157
    %p168 = scmp.eq.s32.totalorder %s17, 0
    %p169 = por %p167, %p168
    %p170 = scmp.ne.s32.totalorder %s156, %s157
    %p171 = scmp.eq.s32.totalorder %s18, 1
    %p172 = por %p170, %p171
    %p174 = scmp.ne.s32.totalorder %s157, %s173
    %p175 = scmp.eq.s32.totalorder %s18, 0
    %p176 = por %p174, %p175
    %p177 = scmp.le.s32.totalorder 1, %s12
    %p178 = scmp.lt.s32.totalorder %s12, 3
    %p179 = pnand %p177, %p178
    %p180 = pneg %p179
    // Predicated region
    $region9: #{my_lstm_forward.1} parent=5 // pred_check
      _
    $region10: #{my_lstm_forward.1} parent=5 // pred_check_branch
      %182 = sbr.rel (%p179) target = $region12
    $region11: #{my_lstm_forward.1} parent=5 // pred_region
      %s183 = ssub.s32 %s12, 1
      // Predicated region
      $region13: #{my_lstm_forward.1} parent=11 // pred_check
        %p184 = pneg %p73
      $region14: #{my_lstm_forward.1} parent=11 // pred_check_branch
        %186 = sbr.rel (%p184) target = $region16
      $region15: #{my_lstm_forward.1} parent=11 // pred_region
        _
      $region16: #{my_lstm_forward.1} parent=11 // pred_fallthru
        _
      // Predicated region
      $region17: #{my_lstm_forward.1} parent=11 // pred_check
        %p187 = pneg %p94
      $region18: #{my_lstm_forward.1} parent=11 // pred_check_branch
        %189 = sbr.rel (%p187) target = $region20
      $region19: #{my_lstm_forward.1} parent=11 // pred_region
        _
      $region20: #{my_lstm_forward.1} parent=11 // pred_fallthru
        _
      // Predicated region
      $region21: #{my_lstm_forward.1} parent=11 // pred_check
        %p190 = pneg %p115
      $region22: #{my_lstm_forward.1} parent=11 // pred_check_branch
        %192 = sbr.rel (%p190) target = $region24
      $region23: #{my_lstm_forward.1} parent=11 // pred_region
        _
      $region24: #{my_lstm_forward.1} parent=11 // pred_fallthru
        _
    $region12: #{my_lstm_forward.1} parent=5 // pred_fallthru
      _
    %p193 = scmp.lt.s32.totalorder %s12, 2
    // Predicated region
    $region25: #{my_lstm_forward.1} parent=5 // pred_check
      %p194 = pneg %p193
    $region26: #{my_lstm_forward.1} parent=5 // pred_check_branch
      %196 = sbr.rel (%p194) target = $region28
    $region27: #{my_lstm_forward.1} parent=5 // pred_region
      // Predicated region
      $region29: #{my_lstm_forward.1} parent=27 // pred_check
        %p197 = pneg %p46
      $region30: #{my_lstm_forward.1} parent=27 // pred_check_branch
        %199 = sbr.rel (%p197) target = $region32
      $region31: #{my_lstm_forward.1} parent=27 // pred_region
        %s200 = smul.u32 8, %s20
        %p201 = scmp.lt.s32.totalorder %s200, 15
        %s202 = scalar_select %p201, %s200, 15
        %p203 = scmp.lt.s32.totalorder %s19, 0
        %s204 = scalar_select %p203, %s19, 0
        %s205 = sadd.s32 %s204, %s202
        %s206 = smul.addr %s205, 8
        %s207 = scalar_lea.vmem %s0, %s206
        %s208 = smul.u32 8, %s20
      $region32: #{my_lstm_forward.1} parent=27 // pred_fallthru
        _
    $region28: #{my_lstm_forward.1} parent=5 // pred_fallthru
      _
    %p209 = scmp.le.s32.totalorder 1, %s12
    %p210 = scmp.lt.s32.totalorder %s12, 3
    %p211 = pnand %p209, %p210
    %p212 = pneg %p211
    // Predicated region
    $region33: #{my_lstm_forward.1} parent=5 // pred_check
      _
    $region34: #{my_lstm_forward.1} parent=5 // pred_check_branch
      %214 = sbr.rel (%p211) target = $region36
    $region35: #{my_lstm_forward.1} parent=5 // pred_region
      %s215 = ssub.s32 %s12, 1
      %s216 = smul.u32 8, %s22
      %p217 = scmp.lt.s32.totalorder %s216, 15
      %s218 = scalar_select %p217, %s216, 15
      %p219 = scmp.lt.s32.totalorder %s21, 0
      %s220 = scalar_select %p219, %s21, 0
      %s221 = sadd.s32 %s220, %s218
      %s222 = smul.addr %s221, 8
      %s223 = scalar_lea.vmem %s0, %s222
      %p224 = pneg %p52
      %p225 = pneg %p49
      %p226 = pneg %p73
      %p227 = pneg %p70
      %p228 = pneg %p94
      %p229 = pneg %p91
      %p230 = pneg %p115
      %p231 = pneg %p112
      %p232 = pneg %p143
      %p233 = pneg %p140
      %s234 = smul.u32 8, %s22
      %p235 = scmp.lt.s32.totalorder %s234, 15
      %s236 = scalar_select %p235, %s234, 15
      %p237 = scmp.lt.s32.totalorder %s21, 0
      %s238 = scalar_select %p237, %s21, 0
      %s239 = sadd.s32 %s238, %s236
      %s240 = smul.addr %s239, 8
      %s241 = scalar_lea.vmem %s4, %s240
      %p242 = pneg %p169
      %p243 = pneg %p166
      %p244 = scmp.lt.s32.totalorder %s21, 0
      %s245 = scalar_select %p244, %s21, 0
      %s246 = smul.addr %s245, 8
      %s247 = scalar_lea.vmem %s5, %s246
      %s248 = smul.u32 8, %s22
      %p249 = scmp.lt.s32.totalorder %s248, 15
      %s250 = scalar_select %p249, %s248, 15
      %p251 = scmp.lt.s32.totalorder %s21, 0
      %s252 = scalar_select %p251, %s21, 0
      %s253 = sadd.s32 %s252, %s250
      %s254 = smul.addr %s253, 8
      %s255 = scalar_lea.vmem %s0, %s254
      %s256 = smul.u32 8, %s22
      %s257 = smul.u32 8, %s22
      %p258 = scmp.lt.s32.totalorder %s257, 15
      %s259 = scalar_select %p258, %s257, 15
      %p260 = scmp.lt.s32.totalorder %s21, 0
      %s261 = scalar_select %p260, %s21, 0
      %s262 = sadd.s32 %s261, %s259
      %s263 = smul.addr %s262, 8
      %s264 = scalar_lea.vmem %s4, %s263
      %s265 = smul.u32 8, %s22
      %p266 = scmp.lt.s32.totalorder %s21, 0
      %s267 = scalar_select %p266, %s21, 0
      %s268 = smul.addr %s267, 8
      %s269 = scalar_lea.vmem %s5, %s268
      %p270 = scmp.eq.s32.totalorder %s22, 0
      // Predicated region
      $region37: #{my_lstm_forward.1} parent=35 // pred_check
        %p271 = pneg %p270
      $region38: #{my_lstm_forward.1} parent=35 // pred_check_branch
        %273 = sbr.rel (%p271) target = $region40
      $region39: #{my_lstm_forward.1} parent=35 // pred_region
        %274 = vst [vmem:[#allocation2] sm:$0xff] 0.0
        %275 = vst [vmem:[#allocation3] sm:$0xff] 0.0
      $region40: #{my_lstm_forward.1} parent=35 // pred_fallthru
        _
      %v276 = vld [vmem:[#allocation2] sm:$0xff]
      %v277 = vld [vmem:[#allocation3] sm:$0xff]
      %v278 = vld [vmem:[%s3] sm:$0xf]
      %v280 = vlaneseq
      %v281 = vshrl.u32 %v280, 7
      %v282 = vsub.s32 0, %v281
      %v283 = vrot.slane %v278, %v282
      %v284 = vlaneseq
      %v285 = vshrl.u32 %v284, 7
      %v286 = vsub.s32 1, %v285
      %v287 = vrot.slane %v278, %v286
      %v288 = vlaneseq
      %v289 = vshrl.u32 %v288, 7
      %v290 = vsub.s32 2, %v289
      %v291 = vrot.slane %v278, %v290
      %v292 = vlaneseq
      %v293 = vshrl.u32 %v292, 7
      %v294 = vsub.s32 3, %v293
      %v295 = vrot.slane %v278, %v294
      %v300 = vld [vmem:[%s255] sm:$0xff]
      %v301 = vld [vmem:[%s1] sm:$0xff]
      %v302 = vld [vmem:[%s1 + $0x8] sm:$0xff]
      %v303 = vld [vmem:[%s1 + $0x10] sm:$0xff]
      %v304 = vld [vmem:[%s1 + $0x18] sm:$0xff]
      %v305 = vld [vmem:[%s1 + $0x20] sm:$0xff]
      %v306 = vld [vmem:[%s1 + $0x28] sm:$0xff]
      %v307 = vld [vmem:[%s1 + $0x30] sm:$0xff]
      %v308 = vld [vmem:[%s1 + $0x38] sm:$0xff]
      %v309 = vld [vmem:[%s2] sm:$0xff]
      %v310 = vld [vmem:[%s2 + $0x8] sm:$0xff]
      %v311 = vld [vmem:[%s2 + $0x10] sm:$0xff]
      %v312 = vld [vmem:[%s2 + $0x18] sm:$0xff]
      %v313 = vld [vmem:[%s2 + $0x20] sm:$0xff]
      %v314 = vld [vmem:[%s2 + $0x28] sm:$0xff]
      %v315 = vld [vmem:[%s2 + $0x30] sm:$0xff]
      %v316 = vld [vmem:[%s2 + $0x38] sm:$0xff]
      %v317 = vld [vmem:[%s2 + $0x40] sm:$0xff]
      %v318 = vld [vmem:[%s2 + $0x48] sm:$0xff]
      %v319 = vld [vmem:[%s2 + $0x50] sm:$0xff]
      %v320 = vld [vmem:[%s2 + $0x58] sm:$0xff]
      %v321 = vld [vmem:[%s2 + $0x60] sm:$0xff]
      %v322 = vld [vmem:[%s2 + $0x68] sm:$0xff]
      %v323 = vld [vmem:[%s2 + $0x70] sm:$0xff]
      %v324 = vld [vmem:[%s2 + $0x78] sm:$0xff]
      %v325 = vld [vmem:[%s2 + $0x80] sm:$0xff]
      %v326 = vld [vmem:[%s2 + $0x88] sm:$0xff]
      %v327 = vld [vmem:[%s2 + $0x90] sm:$0xff]
      %v328 = vld [vmem:[%s2 + $0x98] sm:$0xff]
      %v329 = vld [vmem:[%s2 + $0xa0] sm:$0xff]
      %v330 = vld [vmem:[%s2 + $0xa8] sm:$0xff]
      %v331 = vld [vmem:[%s2 + $0xb0] sm:$0xff]
      %v332 = vld [vmem:[%s2 + $0xb8] sm:$0xff]
      %v333 = vld [vmem:[%s2 + $0xc0] sm:$0xff]
      %v334 = vld [vmem:[%s2 + $0xc8] sm:$0xff]
      %v335 = vld [vmem:[%s2 + $0xd0] sm:$0xff]
      %v336 = vld [vmem:[%s2 + $0xd8] sm:$0xff]
      %v337 = vld [vmem:[%s2 + $0xe0] sm:$0xff]
      %v338 = vld [vmem:[%s2 + $0xe8] sm:$0xff]
      %v339 = vld [vmem:[%s2 + $0xf0] sm:$0xff]
      %v340 = vld [vmem:[%s2 + $0xf8] sm:$0xff]
      %v341 = vld [vmem:[%s2 + $0x100] sm:$0xff]
      %v342 = vld [vmem:[%s2 + $0x108] sm:$0xff]
      %v343 = vld [vmem:[%s2 + $0x110] sm:$0xff]
      %v344 = vld [vmem:[%s2 + $0x118] sm:$0xff]
      %v345 = vld [vmem:[%s2 + $0x120] sm:$0xff]
      %v346 = vld [vmem:[%s2 + $0x128] sm:$0xff]
      %v347 = vld [vmem:[%s2 + $0x130] sm:$0xff]
      %v348 = vld [vmem:[%s2 + $0x138] sm:$0xff]
      %v349 = vld [vmem:[%s2 + $0x140] sm:$0xff]
      %v350 = vld [vmem:[%s2 + $0x148] sm:$0xff]
      %v351 = vld [vmem:[%s2 + $0x150] sm:$0xff]
      %v352 = vld [vmem:[%s2 + $0x158] sm:$0xff]
      %v353 = vld [vmem:[%s2 + $0x160] sm:$0xff]
      %v354 = vld [vmem:[%s2 + $0x168] sm:$0xff]
      %v355 = vld [vmem:[%s2 + $0x170] sm:$0xff]
      %v356 = vld [vmem:[%s2 + $0x178] sm:$0xff]
      %v357 = vld [vmem:[%s2 + $0x180] sm:$0xff]
      %v358 = vld [vmem:[%s2 + $0x188] sm:$0xff]
      %v359 = vld [vmem:[%s2 + $0x190] sm:$0xff]
      %v360 = vld [vmem:[%s2 + $0x198] sm:$0xff]
      %v361 = vld [vmem:[%s2 + $0x1a0] sm:$0xff]
      %v362 = vld [vmem:[%s2 + $0x1a8] sm:$0xff]
      %v363 = vld [vmem:[%s2 + $0x1b0] sm:$0xff]
      %v364 = vld [vmem:[%s2 + $0x1b8] sm:$0xff]
      %v365 = vld [vmem:[%s2 + $0x1c0] sm:$0xff]
      %v366 = vld [vmem:[%s2 + $0x1c8] sm:$0xff]
      %v367 = vld [vmem:[%s2 + $0x1d0] sm:$0xff]
      %v368 = vld [vmem:[%s2 + $0x1d8] sm:$0xff]
      %v369 = vld [vmem:[%s2 + $0x1e0] sm:$0xff]
      %v370 = vld [vmem:[%s2 + $0x1e8] sm:$0xff]
      %v371 = vld [vmem:[%s2 + $0x1f0] sm:$0xff]
      %v372 = vld [vmem:[%s2 + $0x1f8] sm:$0xff]
      %373 = vmatprep.subr.mxu0 %v310
      %374 = vmatpush1.msra.mxu0 %v309
      %375 = vmatprep.subr.mxu0 %v314
      %376 = vmatpush1.msra.mxu0 %v313
      %377 = vmatprep.subr.mxu0 %v318
      %378 = vmatpush1.msra.mxu0 %v317
      %379 = vmatprep.subr.mxu0 %v322
      %380 = vmatpush1.msra.mxu0 %v321
      %381 = vmatprep.subr.mxu0 %v326
      %382 = vmatpush1.msra.mxu0 %v325
      %383 = vmatprep.subr.mxu0 %v330
      %384 = vmatpush1.msra.mxu0 %v329
      %385 = vmatprep.subr.mxu0 %v334
      %386 = vmatpush1.msra.mxu0 %v333
      %387 = vmatprep.subr.mxu0 %v338
      %388 = vmatpush1.msra.mxu0 %v337
      %389 = vmatprep.subr.mxu0 %v342
      %390 = vmatpush1.msra.mxu0 %v341
      %391 = vmatprep.subr.mxu0 %v346
      %392 = vmatpush1.msra.mxu0 %v345
      %393 = vmatprep.subr.mxu0 %v350
      %394 = vmatpush1.msra.mxu0 %v349
      %395 = vmatprep.subr.mxu0 %v354
      %396 = vmatpush1.msra.mxu0 %v353
      %397 = vmatprep.subr.mxu0 %v358
      %398 = vmatpush1.msra.mxu0 %v357
      %399 = vmatprep.subr.mxu0 %v362
      %400 = vmatpush1.msra.mxu0 %v361
      %401 = vmatprep.subr.mxu0 %v366
      %402 = vmatpush1.msra.mxu0 %v365
      %403 = vmatprep.subr.mxu0 %v370
      %404 = vmatpush1.msra.mxu0 %v369
      %405 = vmatprep.subr.mxu0 0.0
      %406 = vmatpush1.msra.mxu0 0.0
      %407 = vmatprep.subr.mxu0 0.0
      %408 = vmatpush1.msra.mxu0 0.0
      %409 = vmatprep.subr.mxu0 0.0
      %410 = vmatpush1.msra.mxu0 0.0
      %411 = vmatprep.subr.mxu0 0.0
      %412 = vmatpush1.msra.mxu0 0.0
      %413 = vmatprep.subr.mxu0 0.0
      %414 = vmatpush1.msra.mxu0 0.0
      %415 = vmatprep.subr.mxu0 0.0
      %416 = vmatpush1.msra.mxu0 0.0
      %417 = vmatprep.subr.mxu0 0.0
      %418 = vmatpush1.msra.mxu0 0.0
      %419 = vmatprep.subr.mxu0 0.0
      %420 = vmatpush1.msra.mxu0 0.0
      %421 = vmatprep.subr.mxu0 0.0
      %422 = vmatpush1.msra.mxu0 0.0
      %423 = vmatprep.subr.mxu0 0.0
      %424 = vmatpush1.msra.mxu0 0.0
      %425 = vmatprep.subr.mxu0 0.0
      %426 = vmatpush1.msra.mxu0 0.0
      %427 = vmatprep.subr.mxu0 0.0
      %428 = vmatpush1.msra.mxu0 0.0
      %429 = vmatprep.subr.mxu0 0.0
      %430 = vmatpush1.msra.mxu0 0.0
      %431 = vmatprep.subr.mxu0 0.0
      %432 = vmatpush1.msra.mxu0 0.0
      %433 = vmatprep.subr.mxu0 0.0
      %434 = vmatpush1.msra.mxu0 0.0
      %435 = vmatprep.subr.mxu0 0.0
      %436 = vmatpush1.msra.mxu0 0.0
      %437 = vmatprep.mubr.f32.mxu0 0.0
      %438 = vmatmul.mubr.f32.gmra.mrb[0].mxu0 %v276
      %v439 = vpop.f32.mrb[0].mxu0
      %v440 = vadd.f32 0.0, %v439
      %v441 = vpop.f32.mrb[0].mxu0
      %v442 = vadd.f32 0.0, %v441
      %443 = vdwg.mxu0
      %444 = vmatprep.subr.mxu0 %v312
      %445 = vmatpush1.msra.mxu0 %v311
      %446 = vmatprep.subr.mxu0 %v316
      %447 = vmatpush1.msra.mxu0 %v315
      %448 = vmatprep.subr.mxu0 %v320
      %449 = vmatpush1.msra.mxu0 %v319
      %450 = vmatprep.subr.mxu0 %v324
      %451 = vmatpush1.msra.mxu0 %v323
      %452 = vmatprep.subr.mxu0 %v328
      %453 = vmatpush1.msra.mxu0 %v327
      %454 = vmatprep.subr.mxu0 %v332
      %455 = vmatpush1.msra.mxu0 %v331
      %456 = vmatprep.subr.mxu0 %v336
      %457 = vmatpush1.msra.mxu0 %v335
      %458 = vmatprep.subr.mxu0 %v340
      %459 = vmatpush1.msra.mxu0 %v339
      %460 = vmatprep.subr.mxu0 %v344
      %461 = vmatpush1.msra.mxu0 %v343
      %462 = vmatprep.subr.mxu0 %v348
      %463 = vmatpush1.msra.mxu0 %v347
      %464 = vmatprep.subr.mxu0 %v352
      %465 = vmatpush1.msra.mxu0 %v351
      %466 = vmatprep.subr.mxu0 %v356
      %467 = vmatpush1.msra.mxu0 %v355
      %468 = vmatprep.subr.mxu0 %v360
      %469 = vmatpush1.msra.mxu0 %v359
      %470 = vmatprep.subr.mxu0 %v364
      %471 = vmatpush1.msra.mxu0 %v363
      %472 = vmatprep.subr.mxu0 %v368
      %473 = vmatpush1.msra.mxu0 %v367
      %474 = vmatprep.subr.mxu0 %v372
      %475 = vmatpush1.msra.mxu0 %v371
      %476 = vmatprep.subr.mxu0 0.0
      %477 = vmatpush1.msra.mxu0 0.0
      %478 = vmatprep.subr.mxu0 0.0
      %479 = vmatpush1.msra.mxu0 0.0
      %480 = vmatprep.subr.mxu0 0.0
      %481 = vmatpush1.msra.mxu0 0.0
      %482 = vmatprep.subr.mxu0 0.0
      %483 = vmatpush1.msra.mxu0 0.0
      %484 = vmatprep.subr.mxu0 0.0
      %485 = vmatpush1.msra.mxu0 0.0
      %486 = vmatprep.subr.mxu0 0.0
      %487 = vmatpush1.msra.mxu0 0.0
      %488 = vmatprep.subr.mxu0 0.0
      %489 = vmatpush1.msra.mxu0 0.0
      %490 = vmatprep.subr.mxu0 0.0
      %491 = vmatpush1.msra.mxu0 0.0
      %492 = vmatprep.subr.mxu0 0.0
      %493 = vmatpush1.msra.mxu0 0.0
      %494 = vmatprep.subr.mxu0 0.0
      %495 = vmatpush1.msra.mxu0 0.0
      %496 = vmatprep.subr.mxu0 0.0
      %497 = vmatpush1.msra.mxu0 0.0
      %498 = vmatprep.subr.mxu0 0.0
      %499 = vmatpush1.msra.mxu0 0.0
      %500 = vmatprep.subr.mxu0 0.0
      %501 = vmatpush1.msra.mxu0 0.0
      %502 = vmatprep.subr.mxu0 0.0
      %503 = vmatpush1.msra.mxu0 0.0
      %504 = vmatprep.subr.mxu0 0.0
      %505 = vmatpush1.msra.mxu0 0.0
      %506 = vmatprep.subr.mxu0 0.0
      %507 = vmatpush1.msra.mxu0 0.0
      %508 = vmatprep.mubr.f32.mxu0 0.0
      %509 = vmatmul.mubr.f32.gmra.mrb[0].mxu0 %v276
      %v510 = vpop.f32.mrb[0].mxu0
      %v511 = vadd.f32 0.0, %v510
      %v512 = vpop.f32.mrb[0].mxu0
      %v513 = vadd.f32 0.0, %v512
      %514 = vdwg.mxu0
      %vm515 = vcmask 130048
      %v517 = vsel %vm515, %v300, 0
      %519 = vmatprep.subr.mxu0 %v302
      %520 = vmatpush1.msra.mxu0 %v301
      %521 = vmatprep.subr.mxu0 %v306
      %522 = vmatpush1.msra.mxu0 %v305
      %523 = vmatprep.subr.mxu0 0.0
      %524 = vmatpush1.msra.mxu0 0.0
      %525 = vmatprep.subr.mxu0 0.0
      %526 = vmatpush1.msra.mxu0 0.0
      %527 = vmatprep.subr.mxu0 0.0
      %528 = vmatpush1.msra.mxu0 0.0
      %529 = vmatprep.subr.mxu0 0.0
      %530 = vmatpush1.msra.mxu0 0.0
      %531 = vmatprep.subr.mxu0 0.0
      %532 = vmatpush1.msra.mxu0 0.0
      %533 = vmatprep.subr.mxu0 0.0
      %534 = vmatpush1.msra.mxu0 0.0
      %535 = vmatprep.subr.mxu0 0.0
      %536 = vmatpush1.msra.mxu0 0.0
      %537 = vmatprep.subr.mxu0 0.0
      %538 = vmatpush1.msra.mxu0 0.0
      %539 = vmatprep.subr.mxu0 0.0
      %540 = vmatpush1.msra.mxu0 0.0
      %541 = vmatprep.subr.mxu0 0.0
      %542 = vmatpush1.msra.mxu0 0.0
      %543 = vmatprep.subr.mxu0 0.0
      %544 = vmatpush1.msra.mxu0 0.0
      %545 = vmatprep.subr.mxu0 0.0
      %546 = vmatpush1.msra.mxu0 0.0
      %547 = vmatprep.subr.mxu0 0.0
      %548 = vmatpush1.msra.mxu0 0.0
      %549 = vmatprep.subr.mxu0 0.0
      %550 = vmatpush1.msra.mxu0 0.0
      %551 = vmatprep.subr.mxu0 0.0
      %552 = vmatpush1.msra.mxu0 0.0
      %553 = vmatprep.subr.mxu0 0.0
      %554 = vmatpush1.msra.mxu0 0.0
      %555 = vmatprep.subr.mxu0 0.0
      %556 = vmatpush1.msra.mxu0 0.0
      %557 = vmatprep.subr.mxu0 0.0
      %558 = vmatpush1.msra.mxu0 0.0
      %559 = vmatprep.subr.mxu0 0.0
      %560 = vmatpush1.msra.mxu0 0.0
      %561 = vmatprep.subr.mxu0 0.0
      %562 = vmatpush1.msra.mxu0 0.0
      %563 = vmatprep.subr.mxu0 0.0
      %564 = vmatpush1.msra.mxu0 0.0
      %565 = vmatprep.subr.mxu0 0.0
      %566 = vmatpush1.msra.mxu0 0.0
      %567 = vmatprep.subr.mxu0 0.0
      %568 = vmatpush1.msra.mxu0 0.0
      %569 = vmatprep.subr.mxu0 0.0
      %570 = vmatpush1.msra.mxu0 0.0
      %571 = vmatprep.subr.mxu0 0.0
      %572 = vmatpush1.msra.mxu0 0.0
      %573 = vmatprep.subr.mxu0 0.0
      %574 = vmatpush1.msra.mxu0 0.0
      %575 = vmatprep.subr.mxu0 0.0
      %576 = vmatpush1.msra.mxu0 0.0
      %577 = vmatprep.subr.mxu0 0.0
      %578 = vmatpush1.msra.mxu0 0.0
      %579 = vmatprep.subr.mxu0 0.0
      %580 = vmatpush1.msra.mxu0 0.0
      %581 = vmatprep.subr.mxu0 0.0
      %582 = vmatpush1.msra.mxu0 0.0
      %583 = vmatprep.mubr.f32.mxu0 0.0
      %584 = vmatmul.mubr.f32.gmra.mrb[0].mxu0 %v517
      %v585 = vpop.f32.mrb[0].mxu0
      %v586 = vadd.f32 %v440, %v585
      %v587 = vpop.f32.mrb[0].mxu0
      %v588 = vadd.f32 %v442, %v587
      %589 = vdwg.mxu0
      %590 = vmatprep.subr.mxu0 %v304
      %591 = vmatpush1.msra.mxu0 %v303
      %592 = vmatprep.subr.mxu0 %v308
      %593 = vmatpush1.msra.mxu0 %v307
      %594 = vmatprep.subr.mxu0 0.0
      %595 = vmatpush1.msra.mxu0 0.0
      %596 = vmatprep.subr.mxu0 0.0
      %597 = vmatpush1.msra.mxu0 0.0
      %598 = vmatprep.subr.mxu0 0.0
      %599 = vmatpush1.msra.mxu0 0.0
      %600 = vmatprep.subr.mxu0 0.0
      %601 = vmatpush1.msra.mxu0 0.0
      %602 = vmatprep.subr.mxu0 0.0
      %603 = vmatpush1.msra.mxu0 0.0
      %604 = vmatprep.subr.mxu0 0.0
      %605 = vmatpush1.msra.mxu0 0.0
      %606 = vmatprep.subr.mxu0 0.0
      %607 = vmatpush1.msra.mxu0 0.0
      %608 = vmatprep.subr.mxu0 0.0
      %609 = vmatpush1.msra.mxu0 0.0
      %610 = vmatprep.subr.mxu0 0.0
      %611 = vmatpush1.msra.mxu0 0.0
      %612 = vmatprep.subr.mxu0 0.0
      %613 = vmatpush1.msra.mxu0 0.0
      %614 = vmatprep.subr.mxu0 0.0
      %615 = vmatpush1.msra.mxu0 0.0
      %616 = vmatprep.subr.mxu0 0.0
      %617 = vmatpush1.msra.mxu0 0.0
      %618 = vmatprep.subr.mxu0 0.0
      %619 = vmatpush1.msra.mxu0 0.0
      %620 = vmatprep.subr.mxu0 0.0
      %621 = vmatpush1.msra.mxu0 0.0
      %622 = vmatprep.subr.mxu0 0.0
      %623 = vmatpush1.msra.mxu0 0.0
      %624 = vmatprep.subr.mxu0 0.0
      %625 = vmatpush1.msra.mxu0 0.0
      %626 = vmatprep.subr.mxu0 0.0
      %627 = vmatpush1.msra.mxu0 0.0
      %628 = vmatprep.subr.mxu0 0.0
      %629 = vmatpush1.msra.mxu0 0.0
      %630 = vmatprep.subr.mxu0 0.0
      %631 = vmatpush1.msra.mxu0 0.0
      %632 = vmatprep.subr.mxu0 0.0
      %633 = vmatpush1.msra.mxu0 0.0
      %634 = vmatprep.subr.mxu0 0.0
      %635 = vmatpush1.msra.mxu0 0.0
      %636 = vmatprep.subr.mxu0 0.0
      %637 = vmatpush1.msra.mxu0 0.0
      %638 = vmatprep.subr.mxu0 0.0
      %639 = vmatpush1.msra.mxu0 0.0
      %640 = vmatprep.subr.mxu0 0.0
      %641 = vmatpush1.msra.mxu0 0.0
      %642 = vmatprep.subr.mxu0 0.0
      %643 = vmatpush1.msra.mxu0 0.0
      %644 = vmatprep.subr.mxu0 0.0
      %645 = vmatpush1.msra.mxu0 0.0
      %646 = vmatprep.subr.mxu0 0.0
      %647 = vmatpush1.msra.mxu0 0.0
      %648 = vmatprep.subr.mxu0 0.0
      %649 = vmatpush1.msra.mxu0 0.0
      %650 = vmatprep.subr.mxu0 0.0
      %651 = vmatpush1.msra.mxu0 0.0
      %652 = vmatprep.subr.mxu0 0.0
      %653 = vmatpush1.msra.mxu0 0.0
      %654 = vmatprep.mubr.f32.mxu0 0.0
      %655 = vmatmul.mubr.f32.gmra.mrb[0].mxu0 %v517
      %v656 = vpop.f32.mrb[0].mxu0
      %v657 = vadd.f32 %v511, %v656
      %v658 = vpop.f32.mrb[0].mxu0
      %v659 = vadd.f32 %v513, %v658
      %660 = vdwg.mxu0
      %v661 = vadd.f32 %v586, %v283
      %v662 = vadd.f32 %v588, %v287
      %v663 = vadd.f32 %v657, %v291
      %v664 = vadd.f32 %v659, %v295
      %v665 = vmul.f32 %v661, 0.5
      %v666 = vtanh.pop %v665
      %v667 = vmul.f32 %v666, 0.5
      %v668 = vadd.f32 %v667, 0.5
      %v669 = vmul.f32 %v662, 0.5
      %v670 = vtanh.pop %v669
      %v671 = vmul.f32 %v670, 0.5
      %v672 = vadd.f32 %v671, 0.5
      %v673 = vtanh.pop %v663
      %v674 = vmul.f32 %v664, 0.5
      %v675 = vtanh.pop %v674
      %v676 = vmul.f32 %v675, 0.5
      %v677 = vadd.f32 %v676, 0.5
      %v678 = vmul.f32 %v668, %v277
      %v679 = vmul.f32 %v672, %v673
      %v680 = vadd.f32 %v678, %v679
      %v681 = vtanh.pop %v680
      %v682 = vmul.f32 %v677, %v681
      %683 = vst [vmem:[%s264] sm:$0xff] %v682
      %s684 = scalar_lea.vmem %s255, 8
      %v685 = vld [vmem:[%s684] sm:$0xff]
      %v686 = vld [vmem:[%s1] sm:$0xff]
      %v687 = vld [vmem:[%s1 + $0x8] sm:$0xff]
      %v688 = vld [vmem:[%s1 + $0x10] sm:$0xff]
      %v689 = vld [vmem:[%s1 + $0x18] sm:$0xff]
      %v690 = vld [vmem:[%s1 + $0x20] sm:$0xff]
      %v691 = vld [vmem:[%s1 + $0x28] sm:$0xff]
      %v692 = vld [vmem:[%s1 + $0x30] sm:$0xff]
      %v693 = vld [vmem:[%s1 + $0x38] sm:$0xff]
      %v694 = vld [vmem:[%s2] sm:$0xff]
      %v695 = vld [vmem:[%s2 + $0x8] sm:$0xff]
      %v696 = vld [vmem:[%s2 + $0x10] sm:$0xff]
      %v697 = vld [vmem:[%s2 + $0x18] sm:$0xff]
      %v698 = vld [vmem:[%s2 + $0x20] sm:$0xff]
      %v699 = vld [vmem:[%s2 + $0x28] sm:$0xff]
      %v700 = vld [vmem:[%s2 + $0x30] sm:$0xff]
      %v701 = vld [vmem:[%s2 + $0x38] sm:$0xff]
      %v702 = vld [vmem:[%s2 + $0x40] sm:$0xff]
      %v703 = vld [vmem:[%s2 + $0x48] sm:$0xff]
      %v704 = vld [vmem:[%s2 + $0x50] sm:$0xff]
      %v705 = vld [vmem:[%s2 + $0x58] sm:$0xff]
      %v706 = vld [vmem:[%s2 + $0x60] sm:$0xff]
      %v707 = vld [vmem:[%s2 + $0x68] sm:$0xff]
      %v708 = vld [vmem:[%s2 + $0x70] sm:$0xff]
      %v709 = vld [vmem:[%s2 + $0x78] sm:$0xff]
      %v710 = vld [vmem:[%s2 + $0x80] sm:$0xff]
      %v711 = vld [vmem:[%s2 + $0x88] sm:$0xff]
      %v712 = vld [vmem:[%s2 + $0x90] sm:$0xff]
      %v713 = vld [vmem:[%s2 + $0x98] sm:$0xff]
      %v714 = vld [vmem:[%s2 + $0xa0] sm:$0xff]
      %v715 = vld [vmem:[%s2 + $0xa8] sm:$0xff]
      %v716 = vld [vmem:[%s2 + $0xb0] sm:$0xff]
      %v717 = vld [vmem:[%s2 + $0xb8] sm:$0xff]
      %v718 = vld [vmem:[%s2 + $0xc0] sm:$0xff]
      %v719 = vld [vmem:[%s2 + $0xc8] sm:$0xff]
      %v720 = vld [vmem:[%s2 + $0xd0] sm:$0xff]
      %v721 = vld [vmem:[%s2 + $0xd8] sm:$0xff]
      %v722 = vld [vmem:[%s2 + $0xe0] sm:$0xff]
      %v723 = vld [vmem:[%s2 + $0xe8] sm:$0xff]
      %v724 = vld [vmem:[%s2 + $0xf0] sm:$0xff]
      %v725 = vld [vmem:[%s2 + $0xf8] sm:$0xff]
      %v726 = vld [vmem:[%s2 + $0x100] sm:$0xff]
      %v727 = vld [vmem:[%s2 + $0x108] sm:$0xff]
      %v728 = vld [vmem:[%s2 + $0x110] sm:$0xff]
      %v729 = vld [vmem:[%s2 + $0x118] sm:$0xff]
      %v730 = vld [vmem:[%s2 + $0x120] sm:$0xff]
      %v731 = vld [vmem:[%s2 + $0x128] sm:$0xff]
      %v732 = vld [vmem:[%s2 + $0x130] sm:$0xff]
      %v733 = vld [vmem:[%s2 + $0x138] sm:$0xff]
      %v734 = vld [vmem:[%s2 + $0x140] sm:$0xff]
      %v735 = vld [vmem:[%s2 + $0x148] sm:$0xff]
      %v736 = vld [vmem:[%s2 + $0x150] sm:$0xff]
      %v737 = vld [vmem:[%s2 + $0x158] sm:$0xff]
      %v738 = vld [vmem:[%s2 + $0x160] sm:$0xff]
      %v739 = vld [vmem:[%s2 + $0x168] sm:$0xff]
      %v740 = vld [vmem:[%s2 + $0x170] sm:$0xff]
      %v741 = vld [vmem:[%s2 + $0x178] sm:$0xff]
      %v742 = vld [vmem:[%s2 + $0x180] sm:$0xff]
      %v743 = vld [vmem:[%s2 + $0x188] sm:$0xff]
      %v744 = vld [vmem:[%s2 + $0x190] sm:$0xff]
      %v745 = vld [vmem:[%s2 + $0x198] sm:$0xff]
      %v746 = vld [vmem:[%s2 + $0x1a0] sm:$0xff]
      %v747 = vld [vmem:[%s2 + $0x1a8] sm:$0xff]
      %v748 = vld [vmem:[%s2 + $0x1b0] sm:$0xff]
      %v749 = vld [vmem:[%s2 + $0x1b8] sm:$0xff]
      %v750 = vld [vmem:[%s2 + $0x1c0] sm:$0xff]
      %v751 = vld [vmem:[%s2 + $0x1c8] sm:$0xff]
      %v752 = vld [vmem:[%s2 + $0x1d0] sm:$0xff]
      %v753 = vld [vmem:[%s2 + $0x1d8] sm:$0xff]
      %v754 = vld [vmem:[%s2 + $0x1e0] sm:$0xff]
      %v755 = vld [vmem:[%s2 + $0x1e8] sm:$0xff]
      %v756 = vld [vmem:[%s2 + $0x1f0] sm:$0xff]
      %v757 = vld [vmem:[%s2 + $0x1f8] sm:$0xff]
      %758 = vmatprep.subr.mxu0 %v695
      %759 = vmatpush1.msra.mxu0 %v694
      %760 = vmatprep.subr.mxu0 %v699
      %761 = vmatpush1.msra.mxu0 %v698
      %762 = vmatprep.subr.mxu0 %v703
      %763 = vmatpush1.msra.mxu0 %v702
      %764 = vmatprep.subr.mxu0 %v707
      %765 = vmatpush1.msra.mxu0 %v706
      %766 = vmatprep.subr.mxu0 %v711
      %767 = vmatpush1.msra.mxu0 %v710
      %768 = vmatprep.subr.mxu0 %v715
      %769 = vmatpush1.msra.mxu0 %v714
      %770 = vmatprep.subr.mxu0 %v719
      %771 = vmatpush1.msra.mxu0 %v718
      %772 = vmatprep.subr.mxu0 %v723
      %773 = vmatpush1.msra.mxu0 %v722
      %774 = vmatprep.subr.mxu0 %v727
      %775 = vmatpush1.msra.mxu0 %v726
      %776 = vmatprep.subr.mxu0 %v731
      %777 = vmatpush1.msra.mxu0 %v730
      %778 = vmatprep.subr.mxu0 %v735
      %779 = vmatpush1.msra.mxu0 %v734
      %780 = vmatprep.subr.mxu0 %v739
      %781 = vmatpush1.msra.mxu0 %v738
      %782 = vmatprep.subr.mxu0 %v743
      %783 = vmatpush1.msra.mxu0 %v742
      %784 = vmatprep.subr.mxu0 %v747
      %785 = vmatpush1.msra.mxu0 %v746
      %786 = vmatprep.subr.mxu0 %v751
      %787 = vmatpush1.msra.mxu0 %v750
      %788 = vmatprep.subr.mxu0 %v755
      %789 = vmatpush1.msra.mxu0 %v754
      %790 = vmatprep.subr.mxu0 0.0
      %791 = vmatpush1.msra.mxu0 0.0
      %792 = vmatprep.subr.mxu0 0.0
      %793 = vmatpush1.msra.mxu0 0.0
      %794 = vmatprep.subr.mxu0 0.0
      %795 = vmatpush1.msra.mxu0 0.0
      %796 = vmatprep.subr.mxu0 0.0
      %797 = vmatpush1.msra.mxu0 0.0
      %798 = vmatprep.subr.mxu0 0.0
      %799 = vmatpush1.msra.mxu0 0.0
      %800 = vmatprep.subr.mxu0 0.0
      %801 = vmatpush1.msra.mxu0 0.0
      %802 = vmatprep.subr.mxu0 0.0
      %803 = vmatpush1.msra.mxu0 0.0
      %804 = vmatprep.subr.mxu0 0.0
      %805 = vmatpush1.msra.mxu0 0.0
      %806 = vmatprep.subr.mxu0 0.0
      %807 = vmatpush1.msra.mxu0 0.0
      %808 = vmatprep.subr.mxu0 0.0
      %809 = vmatpush1.msra.mxu0 0.0
      %810 = vmatprep.subr.mxu0 0.0
      %811 = vmatpush1.msra.mxu0 0.0
      %812 = vmatprep.subr.mxu0 0.0
      %813 = vmatpush1.msra.mxu0 0.0
      %814 = vmatprep.subr.mxu0 0.0
      %815 = vmatpush1.msra.mxu0 0.0
      %816 = vmatprep.subr.mxu0 0.0
      %817 = vmatpush1.msra.mxu0 0.0
      %818 = vmatprep.subr.mxu0 0.0
      %819 = vmatpush1.msra.mxu0 0.0
      %820 = vmatprep.subr.mxu0 0.0
      %821 = vmatpush1.msra.mxu0 0.0
      %822 = vmatprep.mubr.f32.mxu0 0.0
      %823 = vmatmul.mubr.f32.gmra.mrb[0].mxu0 %v682
      %v824 = vpop.f32.mrb[0].mxu0
      %v825 = vadd.f32 0.0, %v824
      %v826 = vpop.f32.mrb[0].mxu0
      %v827 = vadd.f32 0.0, %v826
      %828 = vdwg.mxu0
      %829 = vmatprep.subr.mxu0 %v697
      %830 = vmatpush1.msra.mxu0 %v696
      %831 = vmatprep.subr.mxu0 %v701
      %832 = vmatpush1.msra.mxu0 %v700
      %833 = vmatprep.subr.mxu0 %v705
      %834 = vmatpush1.msra.mxu0 %v704
      %835 = vmatprep.subr.mxu0 %v709
      %836 = vmatpush1.msra.mxu0 %v708
      %837 = vmatprep.subr.mxu0 %v713
      %838 = vmatpush1.msra.mxu0 %v712
      %839 = vmatprep.subr.mxu0 %v717
      %840 = vmatpush1.msra.mxu0 %v716
      %841 = vmatprep.subr.mxu0 %v721
      %842 = vmatpush1.msra.mxu0 %v720
      %843 = vmatprep.subr.mxu0 %v725
      %844 = vmatpush1.msra.mxu0 %v724
      %845 = vmatprep.subr.mxu0 %v729
      %846 = vmatpush1.msra.mxu0 %v728
      %847 = vmatprep.subr.mxu0 %v733
      %848 = vmatpush1.msra.mxu0 %v732
      %849 = vmatprep.subr.mxu0 %v737
      %850 = vmatpush1.msra.mxu0 %v736
      %851 = vmatprep.subr.mxu0 %v741
      %852 = vmatpush1.msra.mxu0 %v740
      %853 = vmatprep.subr.mxu0 %v745
      %854 = vmatpush1.msra.mxu0 %v744
      %855 = vmatprep.subr.mxu0 %v749
      %856 = vmatpush1.msra.mxu0 %v748
      %857 = vmatprep.subr.mxu0 %v753
      %858 = vmatpush1.msra.mxu0 %v752
      %859 = vmatprep.subr.mxu0 %v757
      %860 = vmatpush1.msra.mxu0 %v756
      %861 = vmatprep.subr.mxu0 0.0
      %862 = vmatpush1.msra.mxu0 0.0
      %863 = vmatprep.subr.mxu0 0.0
      %864 = vmatpush1.msra.mxu0 0.0
      %865 = vmatprep.subr.mxu0 0.0
      %866 = vmatpush1.msra.mxu0 0.0
      %867 = vmatprep.subr.mxu0 0.0
      %868 = vmatpush1.msra.mxu0 0.0
      %869 = vmatprep.subr.mxu0 0.0
      %870 = vmatpush1.msra.mxu0 0.0
      %871 = vmatprep.subr.mxu0 0.0
      %872 = vmatpush1.msra.mxu0 0.0
      %873 = vmatprep.subr.mxu0 0.0
      %874 = vmatpush1.msra.mxu0 0.0
      %875 = vmatprep.subr.mxu0 0.0
      %876 = vmatpush1.msra.mxu0 0.0
      %877 = vmatprep.subr.mxu0 0.0
      %878 = vmatpush1.msra.mxu0 0.0
      %879 = vmatprep.subr.mxu0 0.0
      %880 = vmatpush1.msra.mxu0 0.0
      %881 = vmatprep.subr.mxu0 0.0
      %882 = vmatpush1.msra.mxu0 0.0
      %883 = vmatprep.subr.mxu0 0.0
      %884 = vmatpush1.msra.mxu0 0.0
      %885 = vmatprep.subr.mxu0 0.0
      %886 = vmatpush1.msra.mxu0 0.0
      %887 = vmatprep.subr.mxu0 0.0
      %888 = vmatpush1.msra.mxu0 0.0
      %889 = vmatprep.subr.mxu0 0.0
      %890 = vmatpush1.msra.mxu0 0.0
      %891 = vmatprep.subr.mxu0 0.0
      %892 = vmatpush1.msra.mxu0 0.0
      %893 = vmatprep.mubr.f32.mxu0 0.0
      %894 = vmatmul.mubr.f32.gmra.mrb[0].mxu0 %v682
      %v895 = vpop.f32.mrb[0].mxu0
      %v896 = vadd.f32 0.0, %v895
      %v897 = vpop.f32.mrb[0].mxu0
      %v898 = vadd.f32 0.0, %v897
      %899 = vdwg.mxu0
      %v901 = vsel %vm515, %v685, 0
      %903 = vmatprep.subr.mxu0 %v687
      %904 = vmatpush1.msra.mxu0 %v686
      %905 = vmatprep.subr.mxu0 %v691
      %906 = vmatpush1.msra.mxu0 %v690
      %907 = vmatprep.subr.mxu0 0.0
      %908 = vmatpush1.msra.mxu0 0.0
      %909 = vmatprep.subr.mxu0 0.0
      %910 = vmatpush1.msra.mxu0 0.0
      %911 = vmatprep.subr.mxu0 0.0
      %912 = vmatpush1.msra.mxu0 0.0
      %913 = vmatprep.subr.mxu0 0.0
      %914 = vmatpush1.msra.mxu0 0.0
      %915 = vmatprep.subr.mxu0 0.0
      %916 = vmatpush1.msra.mxu0 0.0
      %917 = vmatprep.subr.mxu0 0.0
      %918 = vmatpush1.msra.mxu0 0.0
      %919 = vmatprep.subr.mxu0 0.0
      %920 = vmatpush1.msra.mxu0 0.0
      %921 = vmatprep.subr.mxu0 0.0
      %922 = vmatpush1.msra.mxu0 0.0
      %923 = vmatprep.subr.mxu0 0.0
      %924 = vmatpush1.msra.mxu0 0.0
      %925 = vmatprep.subr.mxu0 0.0
      %926 = vmatpush1.msra.mxu0 0.0
      %927 = vmatprep.subr.mxu0 0.0
      %928 = vmatpush1.msra.mxu0 0.0
      %929 = vmatprep.subr.mxu0 0.0
      %930 = vmatpush1.msra.mxu0 0.0
      %931 = vmatprep.subr.mxu0 0.0
      %932 = vmatpush1.msra.mxu0 0.0
      %933 = vmatprep.subr.mxu0 0.0
      %934 = vmatpush1.msra.mxu0 0.0
      %935 = vmatprep.subr.mxu0 0.0
      %936 = vmatpush1.msra.mxu0 0.0
      %937 = vmatprep.subr.mxu0 0.0
      %938 = vmatpush1.msra.mxu0 0.0
      %939 = vmatprep.subr.mxu0 0.0
      %940 = vmatpush1.msra.mxu0 0.0
      %941 = vmatprep.subr.mxu0 0.0
      %942 = vmatpush1.msra.mxu0 0.0
      %943 = vmatprep.subr.mxu0 0.0
      %944 = vmatpush1.msra.mxu0 0.0
      %945 = vmatprep.subr.mxu0 0.0
      %946 = vmatpush1.msra.mxu0 0.0
      %947 = vmatprep.subr.mxu0 0.0
      %948 = vmatpush1.msra.mxu0 0.0
      %949 = vmatprep.subr.mxu0 0.0
      %950 = vmatpush1.msra.mxu0 0.0
      %951 = vmatprep.subr.mxu0 0.0
      %952 = vmatpush1.msra.mxu0 0.0
      %953 = vmatprep.subr.mxu0 0.0
      %954 = vmatpush1.msra.mxu0 0.0
      %955 = vmatprep.subr.mxu0 0.0
      %956 = vmatpush1.msra.mxu0 0.0
      %957 = vmatprep.subr.mxu0 0.0
      %958 = vmatpush1.msra.mxu0 0.0
      %959 = vmatprep.subr.mxu0 0.0
      %960 = vmatpush1.msra.mxu0 0.0
      %961 = vmatprep.subr.mxu0 0.0
      %962 = vmatpush1.msra.mxu0 0.0
      %963 = vmatprep.subr.mxu0 0.0
      %964 = vmatpush1.msra.mxu0 0.0
      %965 = vmatprep.subr.mxu0 0.0
      %966 = vmatpush1.msra.mxu0 0.0
      %967 = vmatprep.mubr.f32.mxu0 0.0
      %968 = vmatmul.mubr.f32.gmra.mrb[0].mxu0 %v901
      %v969 = vpop.f32.mrb[0].mxu0
      %v970 = vadd.f32 %v825, %v969
      %v971 = vpop.f32.mrb[0].mxu0
      %v972 = vadd.f32 %v827, %v971
      %973 = vdwg.mxu0
      %974 = vmatprep.subr.mxu0 %v689
      %975 = vmatpush1.msra.mxu0 %v688
      %976 = vmatprep.subr.mxu0 %v693
      %977 = vmatpush1.msra.mxu0 %v692
      %978 = vmatprep.subr.mxu0 0.0
      %979 = vmatpush1.msra.mxu0 0.0
      %980 = vmatprep.subr.mxu0 0.0
      %981 = vmatpush1.msra.mxu0 0.0
      %982 = vmatprep.subr.mxu0 0.0
      %983 = vmatpush1.msra.mxu0 0.0
      %984 = vmatprep.subr.mxu0 0.0
      %985 = vmatpush1.msra.mxu0 0.0
      %986 = vmatprep.subr.mxu0 0.0
      %987 = vmatpush1.msra.mxu0 0.0
      %988 = vmatprep.subr.mxu0 0.0
      %989 = vmatpush1.msra.mxu0 0.0
      %990 = vmatprep.subr.mxu0 0.0
      %991 = vmatpush1.msra.mxu0 0.0
      %992 = vmatprep.subr.mxu0 0.0
      %993 = vmatpush1.msra.mxu0 0.0
      %994 = vmatprep.subr.mxu0 0.0
      %995 = vmatpush1.msra.mxu0 0.0
      %996 = vmatprep.subr.mxu0 0.0
      %997 = vmatpush1.msra.mxu0 0.0
      %998 = vmatprep.subr.mxu0 0.0
      %999 = vmatpush1.msra.mxu0 0.0
      %1000 = vmatprep.subr.mxu0 0.0
      %1001 = vmatpush1.msra.mxu0 0.0
      %1002 = vmatprep.subr.mxu0 0.0
      %1003 = vmatpush1.msra.mxu0 0.0
      %1004 = vmatprep.subr.mxu0 0.0
      %1005 = vmatpush1.msra.mxu0 0.0
      %1006 = vmatprep.subr.mxu0 0.0
      %1007 = vmatpush1.msra.mxu0 0.0
      %1008 = vmatprep.subr.mxu0 0.0
      %1009 = vmatpush1.msra.mxu0 0.0
      %1010 = vmatprep.subr.mxu0 0.0
      %1011 = vmatpush1.msra.mxu0 0.0
      %1012 = vmatprep.subr.mxu0 0.0
      %1013 = vmatpush1.msra.mxu0 0.0
      %1014 = vmatprep.subr.mxu0 0.0
      %1015 = vmatpush1.msra.mxu0 0.0
      %1016 = vmatprep.subr.mxu0 0.0
      %1017 = vmatpush1.msra.mxu0 0.0
      %1018 = vmatprep.subr.mxu0 0.0
      %1019 = vmatpush1.msra.mxu0 0.0
      %1020 = vmatprep.subr.mxu0 0.0
      %1021 = vmatpush1.msra.mxu0 0.0
      %1022 = vmatprep.subr.mxu0 0.0
      %1023 = vmatpush1.msra.mxu0 0.0
      %1024 = vmatprep.subr.mxu0 0.0
      %1025 = vmatpush1.msra.mxu0 0.0
      %1026 = vmatprep.subr.mxu0 0.0
      %1027 = vmatpush1.msra.mxu0 0.0
      %1028 = vmatprep.subr.mxu0 0.0
      %1029 = vmatpush1.msra.mxu0 0.0
      %1030 = vmatprep.subr.mxu0 0.0
      %1031 = vmatpush1.msra.mxu0 0.0
      %1032 = vmatprep.subr.mxu0 0.0
      %1033 = vmatpush1.msra.mxu0 0.0
      %1034 = vmatprep.subr.mxu0 0.0
      %1035 = vmatpush1.msra.mxu0 0.0
      %1036 = vmatprep.subr.mxu0 0.0
      %1037 = vmatpush1.msra.mxu0 0.0
      %1038 = vmatprep.mubr.f32.mxu0 0.0
      %1039 = vmatmul.mubr.f32.gmra.mrb[0].mxu0 %v901
      %v1040 = vpop.f32.mrb[0].mxu0
      %v1041 = vadd.f32 %v896, %v1040
      %v1042 = vpop.f32.mrb[0].mxu0
      %v1043 = vadd.f32 %v898, %v1042
      %1044 = vdwg.mxu0
      %v1045 = vadd.f32 %v970, %v283
      %v1046 = vadd.f32 %v972, %v287
      %v1047 = vadd.f32 %v1041, %v291
      %v1048 = vadd.f32 %v1043, %v295
      %v1049 = vmul.f32 %v1045, 0.5
      %v1050 = vtanh.pop %v1049
      %v1051 = vmul.f32 %v1050, 0.5
      %v1052 = vadd.f32 %v1051, 0.5
      %v1053 = vmul.f32 %v1046, 0.5
      %v1054 = vtanh.pop %v1053
      %v1055 = vmul.f32 %v1054, 0.5
      %v1056 = vadd.f32 %v1055, 0.5
      %v1057 = vtanh.pop %v1047
      %v1058 = vmul.f32 %v1048, 0.5
      %v1059 = vtanh.pop %v1058
      %v1060 = vmul.f32 %v1059, 0.5
      %v1061 = vadd.f32 %v1060, 0.5
      %v1062 = vmul.f32 %v1052, %v680
      %v1063 = vmul.f32 %v1056, %v1057
      %v1064 = vadd.f32 %v1062, %v1063
      %v1065 = vtanh.pop %v1064
      %v1066 = vmul.f32 %v1061, %v1065
      %s1067 = scalar_lea.vmem %s264, 8
      %1068 = vst [vmem:[%s1067] sm:$0xff] %v1066
      %s1069 = scalar_lea.vmem %s255, 16
      %v1070 = vld [vmem:[%s1069] sm:$0xff]
      %v1071 = vld [vmem:[%s1] sm:$0xff]
      %v1072 = vld [vmem:[%s1 + $0x8] sm:$0xff]
      %v1073 = vld [vmem:[%s1 + $0x10] sm:$0xff]
      %v1074 = vld [vmem:[%s1 + $0x18] sm:$0xff]
      %v1075 = vld [vmem:[%s1 + $0x20] sm:$0xff]
      %v1076 = vld [vmem:[%s1 + $0x28] sm:$0xff]
      %v1077 = vld [vmem:[%s1 + $0x30] sm:$0xff]
      %v1078 = vld [vmem:[%s1 + $0x38] sm:$0xff]
      %v1079 = vld [vmem:[%s2] sm:$0xff]
      %v1080 = vld [vmem:[%s2 + $0x8] sm:$0xff]
      %v1081 = vld [vmem:[%s2 + $0x10] sm:$0xff]
      %v1082 = vld [vmem:[%s2 + $0x18] sm:$0xff]
      %v1083 = vld [vmem:[%s2 + $0x20] sm:$0xff]
      %v1084 = vld [vmem:[%s2 + $0x28] sm:$0xff]
      %v1085 = vld [vmem:[%s2 + $0x30] sm:$0xff]
      %v1086 = vld [vmem:[%s2 + $0x38] sm:$0xff]
      %v1087 = vld [vmem:[%s2 + $0x40] sm:$0xff]
      %v1088 = vld [vmem:[%s2 + $0x48] sm:$0xff]
      %v1089 = vld [vmem:[%s2 + $0x50] sm:$0xff]
      %v1090 = vld [vmem:[%s2 + $0x58] sm:$0xff]
      %v1091 = vld [vmem:[%s2 + $0x60] sm:$0xff]
      %v1092 = vld [vmem:[%s2 + $0x68] sm:$0xff]
      %v1093 = vld [vmem:[%s2 + $0x70] sm:$0xff]
      %v1094 = vld [vmem:[%s2 + $0x78] sm:$0xff]
      %v1095 = vld [vmem:[%s2 + $0x80] sm:$0xff]
      %v1096 = vld [vmem:[%s2 + $0x88] sm:$0xff]
      %v1097 = vld [vmem:[%s2 + $0x90] sm:$0xff]
      %v1098 = vld [vmem:[%s2 + $0x98] sm:$0xff]
      %v1099 = vld [vmem:[%s2 + $0xa0] sm:$0xff]
      %v1100 = vld [vmem:[%s2 + $0xa8] sm:$0xff]
      %v1101 = vld [vmem:[%s2 + $0xb0] sm:$0xff]
      %v1102 = vld [vmem:[%s2 + $0xb8] sm:$0xff]
      %v1103 = vld [vmem:[%s2 + $0xc0] sm:$0xff]
      %v1104 = vld [vmem:[%s2 + $0xc8] sm:$0xff]
      %v1105 = vld [vmem:[%s2 + $0xd0] sm:$0xff]
      %v1106 = vld [vmem:[%s2 + $0xd8] sm:$0xff]
      %v1107 = vld [vmem:[%s2 + $0xe0] sm:$0xff]
      %v1108 = vld [vmem:[%s2 + $0xe8] sm:$0xff]
      %v1109 = vld [vmem:[%s2 + $0xf0] sm:$0xff]
      %v1110 = vld [vmem:[%s2 + $0xf8] sm:$0xff]
      %v1111 = vld [vmem:[%s2 + $0x100] sm:$0xff]
      %v1112 = vld [vmem:[%s2 + $0x108] sm:$0xff]
      %v1113 = vld [vmem:[%s2 + $0x110] sm:$0xff]
      %v1114 = vld [vmem:[%s2 + $0x118] sm:$0xff]
      %v1115 = vld [vmem:[%s2 + $0x120] sm:$0xff]
      %v1116 = vld [vmem:[%s2 + $0x128] sm:$0xff]
      %v1117 = vld [vmem:[%s2 + $0x130] sm:$0xff]
      %v1118 = vld [vmem:[%s2 + $0x138] sm:$0xff]
      %v1119 = vld [vmem:[%s2 + $0x140] sm:$0xff]
      %v1120 = vld [vmem:[%s2 + $0x148] sm:$0xff]
      %v1121 = vld [vmem:[%s2 + $0x150] sm:$0xff]
      %v1122 = vld [vmem:[%s2 + $0x158] sm:$0xff]
      %v1123 = vld [vmem:[%s2 + $0x160] sm:$0xff]
      %v1124 = vld [vmem:[%s2 + $0x168] sm:$0xff]
      %v1125 = vld [vmem:[%s2 + $0x170] sm:$0xff]
      %v1126 = vld [vmem:[%s2 + $0x178] sm:$0xff]
      %v1127 = vld [vmem:[%s2 + $0x180] sm:$0xff]
      %v1128 = vld [vmem:[%s2 + $0x188] sm:$0xff]
      %v1129 = vld [vmem:[%s2 + $0x190] sm:$0xff]
      %v1130 = vld [vmem:[%s2 + $0x198] sm:$0xff]
      %v1131 = vld [vmem:[%s2 + $0x1a0] sm:$0xff]
      %v1132 = vld [vmem:[%s2 + $0x1a8] sm:$0xff]
      %v1133 = vld [vmem:[%s2 + $0x1b0] sm:$0xff]
      %v1134 = vld [vmem:[%s2 + $0x1b8] sm:$0xff]
      %v1135 = vld [vmem:[%s2 + $0x1c0] sm:$0xff]
      %v1136 = vld [vmem:[%s2 + $0x1c8] sm:$0xff]
      %v1137 = vld [vmem:[%s2 + $0x1d0] sm:$0xff]
      %v1138 = vld [vmem:[%s2 + $0x1d8] sm:$0xff]
      %v1139 = vld [vmem:[%s2 + $0x1e0] sm:$0xff]
      %v1140 = vld [vmem:[%s2 + $0x1e8] sm:$0xff]
      %v1141 = vld [vmem:[%s2 + $0x1f0] sm:$0xff]
      %v1142 = vld [vmem:[%s2 + $0x1f8] sm:$0xff]
      %1143 = vmatprep.subr.mxu0 %v1080
      %1144 = vmatpush1.msra.mxu0 %v1079
      %1145 = vmatprep.subr.mxu0 %v1084
      %1146 = vmatpush1.msra.mxu0 %v1083
      %1147 = vmatprep.subr.mxu0 %v1088
      %1148 = vmatpush1.msra.mxu0 %v1087
      %1149 = vmatprep.subr.mxu0 %v1092
      %1150 = vmatpush1.msra.mxu0 %v1091
      %1151 = vmatprep.subr.mxu0 %v1096
      %1152 = vmatpush1.msra.mxu0 %v1095
      %1153 = vmatprep.subr.mxu0 %v1100
      %1154 = vmatpush1.msra.mxu0 %v1099
      %1155 = vmatprep.subr.mxu0 %v1104
      %1156 = vmatpush1.msra.mxu0 %v1103
      %1157 = vmatprep.subr.mxu0 %v1108
      %1158 = vmatpush1.msra.mxu0 %v1107
      %1159 = vmatprep.subr.mxu0 %v1112
      %1160 = vmatpush1.msra.mxu0 %v1111
      %1161 = vmatprep.subr.mxu0 %v1116
      %1162 = vmatpush1.msra.mxu0 %v1115
      %1163 = vmatprep.subr.mxu0 %v1120
      %1164 = vmatpush1.msra.mxu0 %v1119
      %1165 = vmatprep.subr.mxu0 %v1124
      %1166 = vmatpush1.msra.mxu0 %v1123
      %1167 = vmatprep.subr.mxu0 %v1128
      %1168 = vmatpush1.msra.mxu0 %v1127
      %1169 = vmatprep.subr.mxu0 %v1132
      %1170 = vmatpush1.msra.mxu0 %v1131
      %1171 = vmatprep.subr.mxu0 %v1136
      %1172 = vmatpush1.msra.mxu0 %v1135
      %1173 = vmatprep.subr.mxu0 %v1140
      %1174 = vmatpush1.msra.mxu0 %v1139
      %1175 = vmatprep.subr.mxu0 0.0
      %1176 = vmatpush1.msra.mxu0 0.0
      %1177 = vmatprep.subr.mxu0 0.0
      %1178 = vmatpush1.msra.mxu0 0.0
      %1179 = vmatprep.subr.mxu0 0.0
      %1180 = vmatpush1.msra.mxu0 0.0
      %1181 = vmatprep.subr.mxu0 0.0
      %1182 = vmatpush1.msra.mxu0 0.0
      %1183 = vmatprep.subr.mxu0 0.0
      %1184 = vmatpush1.msra.mxu0 0.0
      %1185 = vmatprep.subr.mxu0 0.0
      %1186 = vmatpush1.msra.mxu0 0.0
      %1187 = vmatprep.subr.mxu0 0.0
      %1188 = vmatpush1.msra.mxu0 0.0
      %1189 = vmatprep.subr.mxu0 0.0
      %1190 = vmatpush1.msra.mxu0 0.0
      %1191 = vmatprep.subr.mxu0 0.0
      %1192 = vmatpush1.msra.mxu0 0.0
      %1193 = vmatprep.subr.mxu0 0.0
      %1194 = vmatpush1.msra.mxu0 0.0
      %1195 = vmatprep.subr.mxu0 0.0
      %1196 = vmatpush1.msra.mxu0 0.0
      %1197 = vmatprep.subr.mxu0 0.0
      %1198 = vmatpush1.msra.mxu0 0.0
      %1199 = vmatprep.subr.mxu0 0.0
      %1200 = vmatpush1.msra.mxu0 0.0
      %1201 = vmatprep.subr.mxu0 0.0
      %1202 = vmatpush1.msra.mxu0 0.0
      %1203 = vmatprep.subr.mxu0 0.0
      %1204 = vmatpush1.msra.mxu0 0.0
      %1205 = vmatprep.subr.mxu0 0.0
      %1206 = vmatpush1.msra.mxu0 0.0
      %1207 = vmatprep.mubr.f32.mxu0 0.0
      %1208 = vmatmul.mubr.f32.gmra.mrb[0].mxu0 %v1066
      %v1209 = vpop.f32.mrb[0].mxu0
      %v1210 = vadd.f32 0.0, %v1209
      %v1211 = vpop.f32.mrb[0].mxu0
      %v1212 = vadd.f32 0.0, %v1211
      %1213 = vdwg.mxu0
      %1214 = vmatprep.subr.mxu0 %v1082
      %1215 = vmatpush1.msra.mxu0 %v1081
      %1216 = vmatprep.subr.mxu0 %v1086
      %1217 = vmatpush1.msra.mxu0 %v1085
      %1218 = vmatprep.subr.mxu0 %v1090
      %1219 = vmatpush1.msra.mxu0 %v1089
      %1220 = vmatprep.subr.mxu0 %v1094
      %1221 = vmatpush1.msra.mxu0 %v1093
      %1222 = vmatprep.subr.mxu0 %v1098
      %1223 = vmatpush1.msra.mxu0 %v1097
      %1224 = vmatprep.subr.mxu0 %v1102
      %1225 = vmatpush1.msra.mxu0 %v1101
      %1226 = vmatprep.subr.mxu0 %v1106
      %1227 = vmatpush1.msra.mxu0 %v1105
      %1228 = vmatprep.subr.mxu0 %v1110
      %1229 = vmatpush1.msra.mxu0 %v1109
      %1230 = vmatprep.subr.mxu0 %v1114
      %1231 = vmatpush1.msra.mxu0 %v1113
      %1232 = vmatprep.subr.mxu0 %v1118
      %1233 = vmatpush1.msra.mxu0 %v1117
      %1234 = vmatprep.subr.mxu0 %v1122
      %1235 = vmatpush1.msra.mxu0 %v1121
      %1236 = vmatprep.subr.mxu0 %v1126
      %1237 = vmatpush1.msra.mxu0 %v1125
      %1238 = vmatprep.subr.mxu0 %v1130
      %1239 = vmatpush1.msra.mxu0 %v1129
      %1240 = vmatprep.subr.mxu0 %v1134
      %1241 = vmatpush1.msra.mxu0 %v1133
      %1242 = vmatprep.subr.mxu0 %v1138
      %1243 = vmatpush1.msra.mxu0 %v1137
      %1244 = vmatprep.subr.mxu0 %v1142
      %1245 = vmatpush1.msra.mxu0 %v1141
      %1246 = vmatprep.subr.mxu0 0.0
      %1247 = vmatpush1.msra.mxu0 0.0
      %1248 = vmatprep.subr.mxu0 0.0
      %1249 = vmatpush1.msra.mxu0 0.0
      %1250 = vmatprep.subr.mxu0 0.0
      %1251 = vmatpush1.msra.mxu0 0.0
      %1252 = vmatprep.subr.mxu0 0.0
      %1253 = vmatpush1.msra.mxu0 0.0
      %1254 = vmatprep.subr.mxu0 0.0
      %1255 = vmatpush1.msra.mxu0 0.0
      %1256 = vmatprep.subr.mxu0 0.0
      %1257 = vmatpush1.msra.mxu0 0.0
      %1258 = vmatprep.subr.mxu0 0.0
      %1259 = vmatpush1.msra.mxu0 0.0
      %1260 = vmatprep.subr.mxu0 0.0
      %1261 = vmatpush1.msra.mxu0 0.0
      %1262 = vmatprep.subr.mxu0 0.0
      %1263 = vmatpush1.msra.mxu0 0.0
      %1264 = vmatprep.subr.mxu0 0.0
      %1265 = vmatpush1.msra.mxu0 0.0
      %1266 = vmatprep.subr.mxu0 0.0
      %1267 = vmatpush1.msra.mxu0 0.0
      %1268 = vmatprep.subr.mxu0 0.0
      %1269 = vmatpush1.msra.mxu0 0.0
      %1270 = vmatprep.subr.mxu0 0.0
      %1271 = vmatpush1.msra.mxu0 0.0
      %1272 = vmatprep.subr.mxu0 0.0
      %1273 = vmatpush1.msra.mxu0 0.0
      %1274 = vmatprep.subr.mxu0 0.0
      %1275 = vmatpush1.msra.mxu0 0.0
      %1276 = vmatprep.subr.mxu0 0.0
      %1277 = vmatpush1.msra.mxu0 0.0
      %1278 = vmatprep.mubr.f32.mxu0 0.0
      %1279 = vmatmul.mubr.f32.gmra.mrb[0].mxu0 %v1066
      %v1280 = vpop.f32.mrb[0].mxu0
      %v1281 = vadd.f32 0.0, %v1280
      %v1282 = vpop.f32.mrb[0].mxu0
      %v1283 = vadd.f32 0.0, %v1282
      %1284 = vdwg.mxu0
      %v1286 = vsel %vm515, %v1070, 0
      %1288 = vmatprep.subr.mxu0 %v1072
      %1289 = vmatpush1.msra.mxu0 %v1071
      %1290 = vmatprep.subr.mxu0 %v1076
      %1291 = vmatpush1.msra.mxu0 %v1075
      %1292 = vmatprep.subr.mxu0 0.0
      %1293 = vmatpush1.msra.mxu0 0.0
      %1294 = vmatprep.subr.mxu0 0.0
      %1295 = vmatpush1.msra.mxu0 0.0
      %1296 = vmatprep.subr.mxu0 0.0
      %1297 = vmatpush1.msra.mxu0 0.0
      %1298 = vmatprep.subr.mxu0 0.0
      %1299 = vmatpush1.msra.mxu0 0.0
      %1300 = vmatprep.subr.mxu0 0.0
      %1301 = vmatpush1.msra.mxu0 0.0
      %1302 = vmatprep.subr.mxu0 0.0
      %1303 = vmatpush1.msra.mxu0 0.0
      %1304 = vmatprep.subr.mxu0 0.0
      %1305 = vmatpush1.msra.mxu0 0.0
      %1306 = vmatprep.subr.mxu0 0.0
      %1307 = vmatpush1.msra.mxu0 0.0
      %1308 = vmatprep.subr.mxu0 0.0
      %1309 = vmatpush1.msra.mxu0 0.0
      %1310 = vmatprep.subr.mxu0 0.0
      %1311 = vmatpush1.msra.mxu0 0.0
      %1312 = vmatprep.subr.mxu0 0.0
      %1313 = vmatpush1.msra.mxu0 0.0
      %1314 = vmatprep.subr.mxu0 0.0
      %1315 = vmatpush1.msra.mxu0 0.0
      %1316 = vmatprep.subr.mxu0 0.0
      %1317 = vmatpush1.msra.mxu0 0.0
      %1318 = vmatprep.subr.mxu0 0.0
      %1319 = vmatpush1.msra.mxu0 0.0
      %1320 = vmatprep.subr.mxu0 0.0
      %1321 = vmatpush1.msra.mxu0 0.0
      %1322 = vmatprep.subr.mxu0 0.0
      %1323 = vmatpush1.msra.mxu0 0.0
      %1324 = vmatprep.subr.mxu0 0.0
      %1325 = vmatpush1.msra.mxu0 0.0
      %1326 = vmatprep.subr.mxu0 0.0
      %1327 = vmatpush1.msra.mxu0 0.0
      %1328 = vmatprep.subr.mxu0 0.0
      %1329 = vmatpush1.msra.mxu0 0.0
      %1330 = vmatprep.subr.mxu0 0.0
      %1331 = vmatpush1.msra.mxu0 0.0
      %1332 = vmatprep.subr.mxu0 0.0
      %1333 = vmatpush1.msra.mxu0 0.0
      %1334 = vmatprep.subr.mxu0 0.0
      %1335 = vmatpush1.msra.mxu0 0.0
      %1336 = vmatprep.subr.mxu0 0.0
      %1337 = vmatpush1.msra.mxu0 0.0
      %1338 = vmatprep.subr.mxu0 0.0
      %1339 = vmatpush1.msra.mxu0 0.0
      %1340 = vmatprep.subr.mxu0 0.0
      %1341 = vmatpush1.msra.mxu0 0.0
      %1342 = vmatprep.subr.mxu0 0.0
      %1343 = vmatpush1.msra.mxu0 0.0
      %1344 = vmatprep.subr.mxu0 0.0
      %1345 = vmatpush1.msra.mxu0 0.0
      %1346 = vmatprep.subr.mxu0 0.0
      %1347 = vmatpush1.msra.mxu0 0.0
      %1348 = vmatprep.subr.mxu0 0.0
      %1349 = vmatpush1.msra.mxu0 0.0
      %1350 = vmatprep.subr.mxu0 0.0
      %1351 = vmatpush1.msra.mxu0 0.0
      %1352 = vmatprep.mubr.f32.mxu0 0.0
      %1353 = vmatmul.mubr.f32.gmra.mrb[0].mxu0 %v1286
      %v1354 = vpop.f32.mrb[0].mxu0
      %v1355 = vadd.f32 %v1210, %v1354
      %v1356 = vpop.f32.mrb[0].mxu0
      %v1357 = vadd.f32 %v1212, %v1356
      %1358 = vdwg.mxu0
      %1359 = vmatprep.subr.mxu0 %v1074
      %1360 = vmatpush1.msra.mxu0 %v1073
      %1361 = vmatprep.subr.mxu0 %v1078
      %1362 = vmatpush1.msra.mxu0 %v1077
      %1363 = vmatprep.subr.mxu0 0.0
      %1364 = vmatpush1.msra.mxu0 0.0
      %1365 = vmatprep.subr.mxu0 0.0
      %1366 = vmatpush1.msra.mxu0 0.0
      %1367 = vmatprep.subr.mxu0 0.0
      %1368 = vmatpush1.msra.mxu0 0.0
      %1369 = vmatprep.subr.mxu0 0.0
      %1370 = vmatpush1.msra.mxu0 0.0
      %1371 = vmatprep.subr.mxu0 0.0
      %1372 = vmatpush1.msra.mxu0 0.0
      %1373 = vmatprep.subr.mxu0 0.0
      %1374 = vmatpush1.msra.mxu0 0.0
      %1375 = vmatprep.subr.mxu0 0.0
      %1376 = vmatpush1.msra.mxu0 0.0
      %1377 = vmatprep.subr.mxu0 0.0
      %1378 = vmatpush1.msra.mxu0 0.0
      %1379 = vmatprep.subr.mxu0 0.0
      %1380 = vmatpush1.msra.mxu0 0.0
      %1381 = vmatprep.subr.mxu0 0.0
      %1382 = vmatpush1.msra.mxu0 0.0
      %1383 = vmatprep.subr.mxu0 0.0
      %1384 = vmatpush1.msra.mxu0 0.0
      %1385 = vmatprep.subr.mxu0 0.0
      %1386 = vmatpush1.msra.mxu0 0.0
      %1387 = vmatprep.subr.mxu0 0.0
      %1388 = vmatpush1.msra.mxu0 0.0
      %1389 = vmatprep.subr.mxu0 0.0
      %1390 = vmatpush1.msra.mxu0 0.0
      %1391 = vmatprep.subr.mxu0 0.0
      %1392 = vmatpush1.msra.mxu0 0.0
      %1393 = vmatprep.subr.mxu0 0.0
      %1394 = vmatpush1.msra.mxu0 0.0
      %1395 = vmatprep.subr.mxu0 0.0
      %1396 = vmatpush1.msra.mxu0 0.0
      %1397 = vmatprep.subr.mxu0 0.0
      %1398 = vmatpush1.msra.mxu0 0.0
      %1399 = vmatprep.subr.mxu0 0.0
      %1400 = vmatpush1.msra.mxu0 0.0
      %1401 = vmatprep.subr.mxu0 0.0
      %1402 = vmatpush1.msra.mxu0 0.0
      %1403 = vmatprep.subr.mxu0 0.0
      %1404 = vmatpush1.msra.mxu0 0.0
      %1405 = vmatprep.subr.mxu0 0.0
      %1406 = vmatpush1.msra.mxu0 0.0
      %1407 = vmatprep.subr.mxu0 0.0
      %1408 = vmatpush1.msra.mxu0 0.0
      %1409 = vmatprep.subr.mxu0 0.0
      %1410 = vmatpush1.msra.mxu0 0.0
      %1411 = vmatprep.subr.mxu0 0.0
      %1412 = vmatpush1.msra.mxu0 0.0
      %1413 = vmatprep.subr.mxu0 0.0
      %1414 = vmatpush1.msra.mxu0 0.0
      %1415 = vmatprep.subr.mxu0 0.0
      %1416 = vmatpush1.msra.mxu0 0.0
      %1417 = vmatprep.subr.mxu0 0.0
      %1418 = vmatpush1.msra.mxu0 0.0
      %1419 = vmatprep.subr.mxu0 0.0
      %1420 = vmatpush1.msra.mxu0 0.0
      %1421 = vmatprep.subr.mxu0 0.0
      %1422 = vmatpush1.msra.mxu0 0.0
      %1423 = vmatprep.mubr.f32.mxu0 0.0
      %1424 = vmatmul.mubr.f32.gmra.mrb[0].mxu0 %v1286
      %v1425 = vpop.f32.mrb[0].mxu0
      %v1426 = vadd.f32 %v1281, %v1425
      %v1427 = vpop.f32.mrb[0].mxu0
      %v1428 = vadd.f32 %v1283, %v1427
      %1429 = vdwg.mxu0
      %v1430 = vadd.f32 %v1355, %v283
      %v1431 = vadd.f32 %v1357, %v287
      %v1432 = vadd.f32 %v1426, %v291
      %v1433 = vadd.f32 %v1428, %v295
      %v1434 = vmul.f32 %v1430, 0.5
      %v1435 = vtanh.pop %v1434
      %v1436 = vmul.f32 %v1435, 0.5
      %v1437 = vadd.f32 %v1436, 0.5
      %v1438 = vmul.f32 %v1431, 0.5
      %v1439 = vtanh.pop %v1438
      %v1440 = vmul.f32 %v1439, 0.5
      %v1441 = vadd.f32 %v1440, 0.5
      %v1442 = vtanh.pop %v1432
      %v1443 = vmul.f32 %v1433, 0.5
      %v1444 = vtanh.pop %v1443
      %v1445 = vmul.f32 %v1444, 0.5
      %v1446 = vadd.f32 %v1445, 0.5
      %v1447 = vmul.f32 %v1437, %v1064
      %v1448 = vmul.f32 %v1441, %v1442
      %v1449 = vadd.f32 %v1447, %v1448
      %v1450 = vtanh.pop %v1449
      %v1451 = vmul.f32 %v1446, %v1450
      %s1452 = scalar_lea.vmem %s264, 16
      %1453 = vst [vmem:[%s1452] sm:$0xff] %v1451
      %s1454 = scalar_lea.vmem %s255, 24
      %v1455 = vld [vmem:[%s1454] sm:$0xff]
      %v1456 = vld [vmem:[%s1] sm:$0xff]
      %v1457 = vld [vmem:[%s1 + $0x8] sm:$0xff]
      %v1458 = vld [vmem:[%s1 + $0x10] sm:$0xff]
      %v1459 = vld [vmem:[%s1 + $0x18] sm:$0xff]
      %v1460 = vld [vmem:[%s1 + $0x20] sm:$0xff]
      %v1461 = vld [vmem:[%s1 + $0x28] sm:$0xff]
      %v1462 = vld [vmem:[%s1 + $0x30] sm:$0xff]
      %v1463 = vld [vmem:[%s1 + $0x38] sm:$0xff]
      %v1464 = vld [vmem:[%s2] sm:$0xff]
      %v1465 = vld [vmem:[%s2 + $0x8] sm:$0xff]
      %v1466 = vld [vmem:[%s2 + $0x10] sm:$0xff]
      %v1467 = vld [vmem:[%s2 + $0x18] sm:$0xff]
      %v1468 = vld [vmem:[%s2 + $0x20] sm:$0xff]
      %v1469 = vld [vmem:[%s2 + $0x28] sm:$0xff]
      %v1470 = vld [vmem:[%s2 + $0x30] sm:$0xff]
      %v1471 = vld [vmem:[%s2 + $0x38] sm:$0xff]
      %v1472 = vld [vmem:[%s2 + $0x40] sm:$0xff]
      %v1473 = vld [vmem:[%s2 + $0x48] sm:$0xff]
      %v1474 = vld [vmem:[%s2 + $0x50] sm:$0xff]
      %v1475 = vld [vmem:[%s2 + $0x58] sm:$0xff]
      %v1476 = vld [vmem:[%s2 + $0x60] sm:$0xff]
      %v1477 = vld [vmem:[%s2 + $0x68] sm:$0xff]
      %v1478 = vld [vmem:[%s2 + $0x70] sm:$0xff]
      %v1479 = vld [vmem:[%s2 + $0x78] sm:$0xff]
      %v1480 = vld [vmem:[%s2 + $0x80] sm:$0xff]
      %v1481 = vld [vmem:[%s2 + $0x88] sm:$0xff]
      %v1482 = vld [vmem:[%s2 + $0x90] sm:$0xff]
      %v1483 = vld [vmem:[%s2 + $0x98] sm:$0xff]
      %v1484 = vld [vmem:[%s2 + $0xa0] sm:$0xff]
      %v1485 = vld [vmem:[%s2 + $0xa8] sm:$0xff]
      %v1486 = vld [vmem:[%s2 + $0xb0] sm:$0xff]
      %v1487 = vld [vmem:[%s2 + $0xb8] sm:$0xff]
      %v1488 = vld [vmem:[%s2 + $0xc0] sm:$0xff]
      %v1489 = vld [vmem:[%s2 + $0xc8] sm:$0xff]
      %v1490 = vld [vmem:[%s2 + $0xd0] sm:$0xff]
      %v1491 = vld [vmem:[%s2 + $0xd8] sm:$0xff]
      %v1492 = vld [vmem:[%s2 + $0xe0] sm:$0xff]
      %v1493 = vld [vmem:[%s2 + $0xe8] sm:$0xff]
      %v1494 = vld [vmem:[%s2 + $0xf0] sm:$0xff]
      %v1495 = vld [vmem:[%s2 + $0xf8] sm:$0xff]
      %v1496 = vld [vmem:[%s2 + $0x100] sm:$0xff]
      %v1497 = vld [vmem:[%s2 + $0x108] sm:$0xff]
      %v1498 = vld [vmem:[%s2 + $0x110] sm:$0xff]
      %v1499 = vld [vmem:[%s2 + $0x118] sm:$0xff]
      %v1500 = vld [vmem:[%s2 + $0x120] sm:$0xff]
      %v1501 = vld [vmem:[%s2 + $0x128] sm:$0xff]
      %v1502 = vld [vmem:[%s2 + $0x130] sm:$0xff]
      %v1503 = vld [vmem:[%s2 + $0x138] sm:$0xff]
      %v1504 = vld [vmem:[%s2 + $0x140] sm:$0xff]
      %v1505 = vld [vmem:[%s2 + $0x148] sm:$0xff]
      %v1506 = vld [vmem:[%s2 + $0x150] sm:$0xff]
      %v1507 = vld [vmem:[%s2 + $0x158] sm:$0xff]
      %v1508 = vld [vmem:[%s2 + $0x160] sm:$0xff]
      %v1509 = vld [vmem:[%s2 + $0x168] sm:$0xff]
      %v1510 = vld [vmem:[%s2 + $0x170] sm:$0xff]
      %v1511 = vld [vmem:[%s2 + $0x178] sm:$0xff]
      %v1512 = vld [vmem:[%s2 + $0x180] sm:$0xff]
      %v1513 = vld [vmem:[%s2 + $0x188] sm:$0xff]
      %v1514 = vld [vmem:[%s2 + $0x190] sm:$0xff]
      %v1515 = vld [vmem:[%s2 + $0x198] sm:$0xff]
      %v1516 = vld [vmem:[%s2 + $0x1a0] sm:$0xff]
      %v1517 = vld [vmem:[%s2 + $0x1a8] sm:$0xff]
      %v1518 = vld [vmem:[%s2 + $0x1b0] sm:$0xff]
      %v1519 = vld [vmem:[%s2 + $0x1b8] sm:$0xff]
      %v1520 = vld [vmem:[%s2 + $0x1c0] sm:$0xff]
      %v1521 = vld [vmem:[%s2 + $0x1c8] sm:$0xff]
      %v1522 = vld [vmem:[%s2 + $0x1d0] sm:$0xff]
      %v1523 = vld [vmem:[%s2 + $0x1d8] sm:$0xff]
      %v1524 = vld [vmem:[%s2 + $0x1e0] sm:$0xff]
      %v1525 = vld [vmem:[%s2 + $0x1e8] sm:$0xff]
      %v1526 = vld [vmem:[%s2 + $0x1f0] sm:$0xff]
      %v1527 = vld [vmem:[%s2 + $0x1f8] sm:$0xff]
      %1528 = vmatprep.subr.mxu0 %v1465
      %1529 = vmatpush1.msra.mxu0 %v1464
      %1530 = vmatprep.subr.mxu0 %v1469
      %1531 = vmatpush1.msra.mxu0 %v1468
      %1532 = vmatprep.subr.mxu0 %v1473
      %1533 = vmatpush1.msra.mxu0 %v1472
      %1534 = vmatprep.subr.mxu0 %v1477
      %1535 = vmatpush1.msra.mxu0 %v1476
      %1536 = vmatprep.subr.mxu0 %v1481
      %1537 = vmatpush1.msra.mxu0 %v1480
      %1538 = vmatprep.subr.mxu0 %v1485
      %1539 = vmatpush1.msra.mxu0 %v1484
      %1540 = vmatprep.subr.mxu0 %v1489
      %1541 = vmatpush1.msra.mxu0 %v1488
      %1542 = vmatprep.subr.mxu0 %v1493
      %1543 = vmatpush1.msra.mxu0 %v1492
      %1544 = vmatprep.subr.mxu0 %v1497
      %1545 = vmatpush1.msra.mxu0 %v1496
      %1546 = vmatprep.subr.mxu0 %v1501
      %1547 = vmatpush1.msra.mxu0 %v1500
      %1548 = vmatprep.subr.mxu0 %v1505
      %1549 = vmatpush1.msra.mxu0 %v1504
      %1550 = vmatprep.subr.mxu0 %v1509
      %1551 = vmatpush1.msra.mxu0 %v1508
      %1552 = vmatprep.subr.mxu0 %v1513
      %1553 = vmatpush1.msra.mxu0 %v1512
      %1554 = vmatprep.subr.mxu0 %v1517
      %1555 = vmatpush1.msra.mxu0 %v1516
      %1556 = vmatprep.subr.mxu0 %v1521
      %1557 = vmatpush1.msra.mxu0 %v1520
      %1558 = vmatprep.subr.mxu0 %v1525
      %1559 = vmatpush1.msra.mxu0 %v1524
      %1560 = vmatprep.subr.mxu0 0.0
      %1561 = vmatpush1.msra.mxu0 0.0
      %1562 = vmatprep.subr.mxu0 0.0
      %1563 = vmatpush1.msra.mxu0 0.0
      %1564 = vmatprep.subr.mxu0 0.0
      %1565 = vmatpush1.msra.mxu0 0.0
      %1566 = vmatprep.subr.mxu0 0.0
      %1567 = vmatpush1.msra.mxu0 0.0
      %1568 = vmatprep.subr.mxu0 0.0
      %1569 = vmatpush1.msra.mxu0 0.0
      %1570 = vmatprep.subr.mxu0 0.0
      %1571 = vmatpush1.msra.mxu0 0.0
      %1572 = vmatprep.subr.mxu0 0.0
      %1573 = vmatpush1.msra.mxu0 0.0
      %1574 = vmatprep.subr.mxu0 0.0
      %1575 = vmatpush1.msra.mxu0 0.0
      %1576 = vmatprep.subr.mxu0 0.0
      %1577 = vmatpush1.msra.mxu0 0.0
      %1578 = vmatprep.subr.mxu0 0.0
      %1579 = vmatpush1.msra.mxu0 0.0
      %1580 = vmatprep.subr.mxu0 0.0
      %1581 = vmatpush1.msra.mxu0 0.0
      %1582 = vmatprep.subr.mxu0 0.0
      %1583 = vmatpush1.msra.mxu0 0.0
      %1584 = vmatprep.subr.mxu0 0.0
      %1585 = vmatpush1.msra.mxu0 0.0
      %1586 = vmatprep.subr.mxu0 0.0
      %1587 = vmatpush1.msra.mxu0 0.0
      %1588 = vmatprep.subr.mxu0 0.0
      %1589 = vmatpush1.msra.mxu0 0.0
      %1590 = vmatprep.subr.mxu0 0.0
      %1591 = vmatpush1.msra.mxu0 0.0
      %1592 = vmatprep.mubr.f32.mxu0 0.0
      %1593 = vmatmul.mubr.f32.gmra.mrb[0].mxu0 %v1451
      %v1594 = vpop.f32.mrb[0].mxu0
      %v1595 = vadd.f32 0.0, %v1594
      %v1596 = vpop.f32.mrb[0].mxu0
      %v1597 = vadd.f32 0.0, %v1596
      %1598 = vdwg.mxu0
      %1599 = vmatprep.subr.mxu0 %v1467
      %1600 = vmatpush1.msra.mxu0 %v1466
      %1601 = vmatprep.subr.mxu0 %v1471
      %1602 = vmatpush1.msra.mxu0 %v1470
      %1603 = vmatprep.subr.mxu0 %v1475
      %1604 = vmatpush1.msra.mxu0 %v1474
      %1605 = vmatprep.subr.mxu0 %v1479
      %1606 = vmatpush1.msra.mxu0 %v1478
      %1607 = vmatprep.subr.mxu0 %v1483
      %1608 = vmatpush1.msra.mxu0 %v1482
      %1609 = vmatprep.subr.mxu0 %v1487
      %1610 = vmatpush1.msra.mxu0 %v1486
      %1611 = vmatprep.subr.mxu0 %v1491
      %1612 = vmatpush1.msra.mxu0 %v1490
      %1613 = vmatprep.subr.mxu0 %v1495
      %1614 = vmatpush1.msra.mxu0 %v1494
      %1615 = vmatprep.subr.mxu0 %v1499
      %1616 = vmatpush1.msra.mxu0 %v1498
      %1617 = vmatprep.subr.mxu0 %v1503
      %1618 = vmatpush1.msra.mxu0 %v1502
      %1619 = vmatprep.subr.mxu0 %v1507
      %1620 = vmatpush1.msra.mxu0 %v1506
      %1621 = vmatprep.subr.mxu0 %v1511
      %1622 = vmatpush1.msra.mxu0 %v1510
      %1623 = vmatprep.subr.mxu0 %v1515
      %1624 = vmatpush1.msra.mxu0 %v1514
      %1625 = vmatprep.subr.mxu0 %v1519
      %1626 = vmatpush1.msra.mxu0 %v1518
      %1627 = vmatprep.subr.mxu0 %v1523
      %1628 = vmatpush1.msra.mxu0 %v1522
      %1629 = vmatprep.subr.mxu0 %v1527
      %1630 = vmatpush1.msra.mxu0 %v1526
      %1631 = vmatprep.subr.mxu0 0.0
      %1632 = vmatpush1.msra.mxu0 0.0
      %1633 = vmatprep.subr.mxu0 0.0
      %1634 = vmatpush1.msra.mxu0 0.0
      %1635 = vmatprep.subr.mxu0 0.0
      %1636 = vmatpush1.msra.mxu0 0.0
      %1637 = vmatprep.subr.mxu0 0.0
      %1638 = vmatpush1.msra.mxu0 0.0
      %1639 = vmatprep.subr.mxu0 0.0
      %1640 = vmatpush1.msra.mxu0 0.0
      %1641 = vmatprep.subr.mxu0 0.0
      %1642 = vmatpush1.msra.mxu0 0.0
      %1643 = vmatprep.subr.mxu0 0.0
      %1644 = vmatpush1.msra.mxu0 0.0
      %1645 = vmatprep.subr.mxu0 0.0
      %1646 = vmatpush1.msra.mxu0 0.0
      %1647 = vmatprep.subr.mxu0 0.0
      %1648 = vmatpush1.msra.mxu0 0.0
      %1649 = vmatprep.subr.mxu0 0.0
      %1650 = vmatpush1.msra.mxu0 0.0
      %1651 = vmatprep.subr.mxu0 0.0
      %1652 = vmatpush1.msra.mxu0 0.0
      %1653 = vmatprep.subr.mxu0 0.0
      %1654 = vmatpush1.msra.mxu0 0.0
      %1655 = vmatprep.subr.mxu0 0.0
      %1656 = vmatpush1.msra.mxu0 0.0
      %1657 = vmatprep.subr.mxu0 0.0
      %1658 = vmatpush1.msra.mxu0 0.0
      %1659 = vmatprep.subr.mxu0 0.0
      %1660 = vmatpush1.msra.mxu0 0.0
      %1661 = vmatprep.subr.mxu0 0.0
      %1662 = vmatpush1.msra.mxu0 0.0
      %1663 = vmatprep.mubr.f32.mxu0 0.0
      %1664 = vmatmul.mubr.f32.gmra.mrb[0].mxu0 %v1451
      %v1665 = vpop.f32.mrb[0].mxu0
      %v1666 = vadd.f32 0.0, %v1665
      %v1667 = vpop.f32.mrb[0].mxu0
      %v1668 = vadd.f32 0.0, %v1667
      %1669 = vdwg.mxu0
      %v1671 = vsel %vm515, %v1455, 0
      %1673 = vmatprep.subr.mxu0 %v1457
      %1674 = vmatpush1.msra.mxu0 %v1456
      %1675 = vmatprep.subr.mxu0 %v1461
      %1676 = vmatpush1.msra.mxu0 %v1460
      %1677 = vmatprep.subr.mxu0 0.0
      %1678 = vmatpush1.msra.mxu0 0.0
      %1679 = vmatprep.subr.mxu0 0.0
      %1680 = vmatpush1.msra.mxu0 0.0
      %1681 = vmatprep.subr.mxu0 0.0
      %1682 = vmatpush1.msra.mxu0 0.0
      %1683 = vmatprep.subr.mxu0 0.0
      %1684 = vmatpush1.msra.mxu0 0.0
      %1685 = vmatprep.subr.mxu0 0.0
      %1686 = vmatpush1.msra.mxu0 0.0
      %1687 = vmatprep.subr.mxu0 0.0
      %1688 = vmatpush1.msra.mxu0 0.0
      %1689 = vmatprep.subr.mxu0 0.0
      %1690 = vmatpush1.msra.mxu0 0.0
      %1691 = vmatprep.subr.mxu0 0.0
      %1692 = vmatpush1.msra.mxu0 0.0
      %1693 = vmatprep.subr.mxu0 0.0
      %1694 = vmatpush1.msra.mxu0 0.0
      %1695 = vmatprep.subr.mxu0 0.0
      %1696 = vmatpush1.msra.mxu0 0.0
      %1697 = vmatprep.subr.mxu0 0.0
      %1698 = vmatpush1.msra.mxu0 0.0
      %1699 = vmatprep.subr.mxu0 0.0
      %1700 = vmatpush1.msra.mxu0 0.0
      %1701 = vmatprep.subr.mxu0 0.0
      %1702 = vmatpush1.msra.mxu0 0.0
      %1703 = vmatprep.subr.mxu0 0.0
      %1704 = vmatpush1.msra.mxu0 0.0
      %1705 = vmatprep.subr.mxu0 0.0
      %1706 = vmatpush1.msra.mxu0 0.0
      %1707 = vmatprep.subr.mxu0 0.0
      %1708 = vmatpush1.msra.mxu0 0.0
      %1709 = vmatprep.subr.mxu0 0.0
      %1710 = vmatpush1.msra.mxu0 0.0
      %1711 = vmatprep.subr.mxu0 0.0
      %1712 = vmatpush1.msra.mxu0 0.0
      %1713 = vmatprep.subr.mxu0 0.0
      %1714 = vmatpush1.msra.mxu0 0.0
      %1715 = vmatprep.subr.mxu0 0.0
      %1716 = vmatpush1.msra.mxu0 0.0
      %1717 = vmatprep.subr.mxu0 0.0
      %1718 = vmatpush1.msra.mxu0 0.0
      %1719 = vmatprep.subr.mxu0 0.0
      %1720 = vmatpush1.msra.mxu0 0.0
      %1721 = vmatprep.subr.mxu0 0.0
      %1722 = vmatpush1.msra.mxu0 0.0
      %1723 = vmatprep.subr.mxu0 0.0
      %1724 = vmatpush1.msra.mxu0 0.0
      %1725 = vmatprep.subr.mxu0 0.0
      %1726 = vmatpush1.msra.mxu0 0.0
      %1727 = vmatprep.subr.mxu0 0.0
      %1728 = vmatpush1.msra.mxu0 0.0
      %1729 = vmatprep.subr.mxu0 0.0
      %1730 = vmatpush1.msra.mxu0 0.0
      %1731 = vmatprep.subr.mxu0 0.0
      %1732 = vmatpush1.msra.mxu0 0.0
      %1733 = vmatprep.subr.mxu0 0.0
      %1734 = vmatpush1.msra.mxu0 0.0
      %1735 = vmatprep.subr.mxu0 0.0
      %1736 = vmatpush1.msra.mxu0 0.0
      %1737 = vmatprep.mubr.f32.mxu0 0.0
      %1738 = vmatmul.mubr.f32.gmra.mrb[0].mxu0 %v1671
      %v1739 = vpop.f32.mrb[0].mxu0
      %v1740 = vadd.f32 %v1595, %v1739
      %v1741 = vpop.f32.mrb[0].mxu0
      %v1742 = vadd.f32 %v1597, %v1741
      %1743 = vdwg.mxu0
      %1744 = vmatprep.subr.mxu0 %v1459
      %1745 = vmatpush1.msra.mxu0 %v1458
      %1746 = vmatprep.subr.mxu0 %v1463
      %1747 = vmatpush1.msra.mxu0 %v1462
      %1748 = vmatprep.subr.mxu0 0.0
      %1749 = vmatpush1.msra.mxu0 0.0
      %1750 = vmatprep.subr.mxu0 0.0
      %1751 = vmatpush1.msra.mxu0 0.0
      %1752 = vmatprep.subr.mxu0 0.0
      %1753 = vmatpush1.msra.mxu0 0.0
      %1754 = vmatprep.subr.mxu0 0.0
      %1755 = vmatpush1.msra.mxu0 0.0
      %1756 = vmatprep.subr.mxu0 0.0
      %1757 = vmatpush1.msra.mxu0 0.0
      %1758 = vmatprep.subr.mxu0 0.0
      %1759 = vmatpush1.msra.mxu0 0.0
      %1760 = vmatprep.subr.mxu0 0.0
      %1761 = vmatpush1.msra.mxu0 0.0
      %1762 = vmatprep.subr.mxu0 0.0
      %1763 = vmatpush1.msra.mxu0 0.0
      %1764 = vmatprep.subr.mxu0 0.0
      %1765 = vmatpush1.msra.mxu0 0.0
      %1766 = vmatprep.subr.mxu0 0.0
      %1767 = vmatpush1.msra.mxu0 0.0
      %1768 = vmatprep.subr.mxu0 0.0
      %1769 = vmatpush1.msra.mxu0 0.0
      %1770 = vmatprep.subr.mxu0 0.0
      %1771 = vmatpush1.msra.mxu0 0.0
      %1772 = vmatprep.subr.mxu0 0.0
      %1773 = vmatpush1.msra.mxu0 0.0
      %1774 = vmatprep.subr.mxu0 0.0
      %1775 = vmatpush1.msra.mxu0 0.0
      %1776 = vmatprep.subr.mxu0 0.0
      %1777 = vmatpush1.msra.mxu0 0.0
      %1778 = vmatprep.subr.mxu0 0.0
      %1779 = vmatpush1.msra.mxu0 0.0
      %1780 = vmatprep.subr.mxu0 0.0
      %1781 = vmatpush1.msra.mxu0 0.0
      %1782 = vmatprep.subr.mxu0 0.0
      %1783 = vmatpush1.msra.mxu0 0.0
      %1784 = vmatprep.subr.mxu0 0.0
      %1785 = vmatpush1.msra.mxu0 0.0
      %1786 = vmatprep.subr.mxu0 0.0
      %1787 = vmatpush1.msra.mxu0 0.0
      %1788 = vmatprep.subr.mxu0 0.0
      %1789 = vmatpush1.msra.mxu0 0.0
      %1790 = vmatprep.subr.mxu0 0.0
      %1791 = vmatpush1.msra.mxu0 0.0
      %1792 = vmatprep.subr.mxu0 0.0
      %1793 = vmatpush1.msra.mxu0 0.0
      %1794 = vmatprep.subr.mxu0 0.0
      %1795 = vmatpush1.msra.mxu0 0.0
      %1796 = vmatprep.subr.mxu0 0.0
      %1797 = vmatpush1.msra.mxu0 0.0
      %1798 = vmatprep.subr.mxu0 0.0
      %1799 = vmatpush1.msra.mxu0 0.0
      %1800 = vmatprep.subr.mxu0 0.0
      %1801 = vmatpush1.msra.mxu0 0.0
      %1802 = vmatprep.subr.mxu0 0.0
      %1803 = vmatpush1.msra.mxu0 0.0
      %1804 = vmatprep.subr.mxu0 0.0
      %1805 = vmatpush1.msra.mxu0 0.0
      %1806 = vmatprep.subr.mxu0 0.0
      %1807 = vmatpush1.msra.mxu0 0.0
      %1808 = vmatprep.mubr.f32.mxu0 0.0
      %1809 = vmatmul.mubr.f32.gmra.mrb[0].mxu0 %v1671
      %v1810 = vpop.f32.mrb[0].mxu0
      %v1811 = vadd.f32 %v1666, %v1810
      %v1812 = vpop.f32.mrb[0].mxu0
      %v1813 = vadd.f32 %v1668, %v1812
      %1814 = vdwg.mxu0
      %v1815 = vadd.f32 %v1740, %v283
      %v1816 = vadd.f32 %v1742, %v287
      %v1817 = vadd.f32 %v1811, %v291
      %v1818 = vadd.f32 %v1813, %v295
      %v1819 = vmul.f32 %v1815, 0.5
      %v1820 = vtanh.pop %v1819
      %v1821 = vmul.f32 %v1820, 0.5
      %v1822 = vadd.f32 %v1821, 0.5
      %v1823 = vmul.f32 %v1816, 0.5
      %v1824 = vtanh.pop %v1823
      %v1825 = vmul.f32 %v1824, 0.5
      %v1826 = vadd.f32 %v1825, 0.5
      %v1827 = vtanh.pop %v1817
      %v1828 = vmul.f32 %v1818, 0.5
      %v1829 = vtanh.pop %v1828
      %v1830 = vmul.f32 %v1829, 0.5
      %v1831 = vadd.f32 %v1830, 0.5
      %v1832 = vmul.f32 %v1822, %v1449
      %v1833 = vmul.f32 %v1826, %v1827
      %v1834 = vadd.f32 %v1832, %v1833
      %v1835 = vtanh.pop %v1834
      %v1836 = vmul.f32 %v1831, %v1835
      %s1837 = scalar_lea.vmem %s264, 24
      %1838 = vst [vmem:[%s1837] sm:$0xff] %v1836
      %s1839 = scalar_lea.vmem %s255, 32
      %v1840 = vld [vmem:[%s1839] sm:$0xff]
      %v1841 = vld [vmem:[%s1] sm:$0xff]
      %v1842 = vld [vmem:[%s1 + $0x8] sm:$0xff]
      %v1843 = vld [vmem:[%s1 + $0x10] sm:$0xff]
      %v1844 = vld [vmem:[%s1 + $0x18] sm:$0xff]
      %v1845 = vld [vmem:[%s1 + $0x20] sm:$0xff]
      %v1846 = vld [vmem:[%s1 + $0x28] sm:$0xff]
      %v1847 = vld [vmem:[%s1 + $0x30] sm:$0xff]
      %v1848 = vld [vmem:[%s1 + $0x38] sm:$0xff]
      %v1849 = vld [vmem:[%s2] sm:$0xff]
      %v1850 = vld [vmem:[%s2 + $0x8] sm:$0xff]
      %v1851 = vld [vmem:[%s2 + $0x10] sm:$0xff]
      %v1852 = vld [vmem:[%s2 + $0x18] sm:$0xff]
      %v1853 = vld [vmem:[%s2 + $0x20] sm:$0xff]
      %v1854 = vld [vmem:[%s2 + $0x28] sm:$0xff]
      %v1855 = vld [vmem:[%s2 + $0x30] sm:$0xff]
      %v1856 = vld [vmem:[%s2 + $0x38] sm:$0xff]
      %v1857 = vld [vmem:[%s2 + $0x40] sm:$0xff]
      %v1858 = vld [vmem:[%s2 + $0x48] sm:$0xff]
      %v1859 = vld [vmem:[%s2 + $0x50] sm:$0xff]
      %v1860 = vld [vmem:[%s2 + $0x58] sm:$0xff]
      %v1861 = vld [vmem:[%s2 + $0x60] sm:$0xff]
      %v1862 = vld [vmem:[%s2 + $0x68] sm:$0xff]
      %v1863 = vld [vmem:[%s2 + $0x70] sm:$0xff]
      %v1864 = vld [vmem:[%s2 + $0x78] sm:$0xff]
      %v1865 = vld [vmem:[%s2 + $0x80] sm:$0xff]
      %v1866 = vld [vmem:[%s2 + $0x88] sm:$0xff]
      %v1867 = vld [vmem:[%s2 + $0x90] sm:$0xff]
      %v1868 = vld [vmem:[%s2 + $0x98] sm:$0xff]
      %v1869 = vld [vmem:[%s2 + $0xa0] sm:$0xff]
      %v1870 = vld [vmem:[%s2 + $0xa8] sm:$0xff]
      %v1871 = vld [vmem:[%s2 + $0xb0] sm:$0xff]
      %v1872 = vld [vmem:[%s2 + $0xb8] sm:$0xff]
      %v1873 = vld [vmem:[%s2 + $0xc0] sm:$0xff]
      %v1874 = vld [vmem:[%s2 + $0xc8] sm:$0xff]
      %v1875 = vld [vmem:[%s2 + $0xd0] sm:$0xff]
      %v1876 = vld [vmem:[%s2 + $0xd8] sm:$0xff]
      %v1877 = vld [vmem:[%s2 + $0xe0] sm:$0xff]
      %v1878 = vld [vmem:[%s2 + $0xe8] sm:$0xff]
      %v1879 = vld [vmem:[%s2 + $0xf0] sm:$0xff]
      %v1880 = vld [vmem:[%s2 + $0xf8] sm:$0xff]
      %v1881 = vld [vmem:[%s2 + $0x100] sm:$0xff]
      %v1882 = vld [vmem:[%s2 + $0x108] sm:$0xff]
      %v1883 = vld [vmem:[%s2 + $0x110] sm:$0xff]
      %v1884 = vld [vmem:[%s2 + $0x118] sm:$0xff]
      %v1885 = vld [vmem:[%s2 + $0x120] sm:$0xff]
      %v1886 = vld [vmem:[%s2 + $0x128] sm:$0xff]
      %v1887 = vld [vmem:[%s2 + $0x130] sm:$0xff]
      %v1888 = vld [vmem:[%s2 + $0x138] sm:$0xff]
      %v1889 = vld [vmem:[%s2 + $0x140] sm:$0xff]
      %v1890 = vld [vmem:[%s2 + $0x148] sm:$0xff]
      %v1891 = vld [vmem:[%s2 + $0x150] sm:$0xff]
      %v1892 = vld [vmem:[%s2 + $0x158] sm:$0xff]
      %v1893 = vld [vmem:[%s2 + $0x160] sm:$0xff]
      %v1894 = vld [vmem:[%s2 + $0x168] sm:$0xff]
      %v1895 = vld [vmem:[%s2 + $0x170] sm:$0xff]
      %v1896 = vld [vmem:[%s2 + $0x178] sm:$0xff]
      %v1897 = vld [vmem:[%s2 + $0x180] sm:$0xff]
      %v1898 = vld [vmem:[%s2 + $0x188] sm:$0xff]
      %v1899 = vld [vmem:[%s2 + $0x190] sm:$0xff]
      %v1900 = vld [vmem:[%s2 + $0x198] sm:$0xff]
      %v1901 = vld [vmem:[%s2 + $0x1a0] sm:$0xff]
      %v1902 = vld [vmem:[%s2 + $0x1a8] sm:$0xff]
      %v1903 = vld [vmem:[%s2 + $0x1b0] sm:$0xff]
      %v1904 = vld [vmem:[%s2 + $0x1b8] sm:$0xff]
      %v1905 = vld [vmem:[%s2 + $0x1c0] sm:$0xff]
      %v1906 = vld [vmem:[%s2 + $0x1c8] sm:$0xff]
      %v1907 = vld [vmem:[%s2 + $0x1d0] sm:$0xff]
      %v1908 = vld [vmem:[%s2 + $0x1d8] sm:$0xff]
      %v1909 = vld [vmem:[%s2 + $0x1e0] sm:$0xff]
      %v1910 = vld [vmem:[%s2 + $0x1e8] sm:$0xff]
      %v1911 = vld [vmem:[%s2 + $0x1f0] sm:$0xff]
      %v1912 = vld [vmem:[%s2 + $0x1f8] sm:$0xff]
      %1913 = vmatprep.subr.mxu0 %v1850
      %1914 = vmatpush1.msra.mxu0 %v1849
      %1915 = vmatprep.subr.mxu0 %v1854
      %1916 = vmatpush1.msra.mxu0 %v1853
      %1917 = vmatprep.subr.mxu0 %v1858
      %1918 = vmatpush1.msra.mxu0 %v1857
      %1919 = vmatprep.subr.mxu0 %v1862
      %1920 = vmatpush1.msra.mxu0 %v1861
      %1921 = vmatprep.subr.mxu0 %v1866
      %1922 = vmatpush1.msra.mxu0 %v1865
      %1923 = vmatprep.subr.mxu0 %v1870
      %1924 = vmatpush1.msra.mxu0 %v1869
      %1925 = vmatprep.subr.mxu0 %v1874
      %1926 = vmatpush1.msra.mxu0 %v1873
      %1927 = vmatprep.subr.mxu0 %v1878
      %1928 = vmatpush1.msra.mxu0 %v1877
      %1929 = vmatprep.subr.mxu0 %v1882
      %1930 = vmatpush1.msra.mxu0 %v1881
      %1931 = vmatprep.subr.mxu0 %v1886
      %1932 = vmatpush1.msra.mxu0 %v1885
      %1933 = vmatprep.subr.mxu0 %v1890
      %1934 = vmatpush1.msra.mxu0 %v1889
      %1935 = vmatprep.subr.mxu0 %v1894
      %1936 = vmatpush1.msra.mxu0 %v1893
      %1937 = vmatprep.subr.mxu0 %v1898
      %1938 = vmatpush1.msra.mxu0 %v1897
      %1939 = vmatprep.subr.mxu0 %v1902
      %1940 = vmatpush1.msra.mxu0 %v1901
      %1941 = vmatprep.subr.mxu0 %v1906
      %1942 = vmatpush1.msra.mxu0 %v1905
      %1943 = vmatprep.subr.mxu0 %v1910
      %1944 = vmatpush1.msra.mxu0 %v1909
      %1945 = vmatprep.subr.mxu0 0.0
      %1946 = vmatpush1.msra.mxu0 0.0
      %1947 = vmatprep.subr.mxu0 0.0
      %1948 = vmatpush1.msra.mxu0 0.0
      %1949 = vmatprep.subr.mxu0 0.0
      %1950 = vmatpush1.msra.mxu0 0.0
      %1951 = vmatprep.subr.mxu0 0.0
      %1952 = vmatpush1.msra.mxu0 0.0
      %1953 = vmatprep.subr.mxu0 0.0
      %1954 = vmatpush1.msra.mxu0 0.0
      %1955 = vmatprep.subr.mxu0 0.0
      %1956 = vmatpush1.msra.mxu0 0.0
      %1957 = vmatprep.subr.mxu0 0.0
      %1958 = vmatpush1.msra.mxu0 0.0
      %1959 = vmatprep.subr.mxu0 0.0
      %1960 = vmatpush1.msra.mxu0 0.0
      %1961 = vmatprep.subr.mxu0 0.0
      %1962 = vmatpush1.msra.mxu0 0.0
      %1963 = vmatprep.subr.mxu0 0.0
      %1964 = vmatpush1.msra.mxu0 0.0
      %1965 = vmatprep.subr.mxu0 0.0
      %1966 = vmatpush1.msra.mxu0 0.0
      %1967 = vmatprep.subr.mxu0 0.0
      %1968 = vmatpush1.msra.mxu0 0.0
      %1969 = vmatprep.subr.mxu0 0.0
      %1970 = vmatpush1.msra.mxu0 0.0
      %1971 = vmatprep.subr.mxu0 0.0
      %1972 = vmatpush1.msra.mxu0 0.0
      %1973 = vmatprep.subr.mxu0 0.0
      %1974 = vmatpush1.msra.mxu0 0.0
      %1975 = vmatprep.subr.mxu0 0.0
      %1976 = vmatpush1.msra.mxu0 0.0
      %1977 = vmatprep.mubr.f32.mxu0 0.0
      %1978 = vmatmul.mubr.f32.gmra.mrb[0].mxu0 %v1836
      %v1979 = vpop.f32.mrb[0].mxu0
      %v1980 = vadd.f32 0.0, %v1979
      %v1981 = vpop.f32.mrb[0].mxu0
      %v1982 = vadd.f32 0.0, %v1981
      %1983 = vdwg.mxu0
      %1984 = vmatprep.subr.mxu0 %v1852
      %1985 = vmatpush1.msra.mxu0 %v1851
      %1986 = vmatprep.subr.mxu0 %v1856
      %1987 = vmatpush1.msra.mxu0 %v1855
      %1988 = vmatprep.subr.mxu0 %v1860
      %1989 = vmatpush1.msra.mxu0 %v1859
      %1990 = vmatprep.subr.mxu0 %v1864
      %1991 = vmatpush1.msra.mxu0 %v1863
      %1992 = vmatprep.subr.mxu0 %v1868
      %1993 = vmatpush1.msra.mxu0 %v1867
      %1994 = vmatprep.subr.mxu0 %v1872
      %1995 = vmatpush1.msra.mxu0 %v1871
      %1996 = vmatprep.subr.mxu0 %v1876
      %1997 = vmatpush1.msra.mxu0 %v1875
      %1998 = vmatprep.subr.mxu0 %v1880
      %1999 = vmatpush1.msra.mxu0 %v1879
      %2000 = vmatprep.subr.mxu0 %v1884
      %2001 = vmatpush1.msra.mxu0 %v1883
      %2002 = vmatprep.subr.mxu0 %v1888
      %2003 = vmatpush1.msra.mxu0 %v1887
      %2004 = vmatprep.subr.mxu0 %v1892
      %2005 = vmatpush1.msra.mxu0 %v1891
      %2006 = vmatprep.subr.mxu0 %v1896
      %2007 = vmatpush1.msra.mxu0 %v1895
      %2008 = vmatprep.subr.mxu0 %v1900
      %2009 = vmatpush1.msra.mxu0 %v1899
      %2010 = vmatprep.subr.mxu0 %v1904
      %2011 = vmatpush1.msra.mxu0 %v1903
      %2012 = vmatprep.subr.mxu0 %v1908
      %2013 = vmatpush1.msra.mxu0 %v1907
      %2014 = vmatprep.subr.mxu0 %v1912
      %2015 = vmatpush1.msra.mxu0 %v1911
      %2016 = vmatprep.subr.mxu0 0.0
      %2017 = vmatpush1.msra.mxu0 0.0
      %2018 = vmatprep.subr.mxu0 0.0
      %2019 = vmatpush1.msra.mxu0 0.0
      %2020 = vmatprep.subr.mxu0 0.0
      %2021 = vmatpush1.msra.mxu0 0.0
      %2022 = vmatprep.subr.mxu0 0.0
      %2023 = vmatpush1.msra.mxu0 0.0
      %2024 = vmatprep.subr.mxu0 0.0
      %2025 = vmatpush1.msra.mxu0 0.0
      %2026 = vmatprep.subr.mxu0 0.0
      %2027 = vmatpush1.msra.mxu0 0.0
      %2028 = vmatprep.subr.mxu0 0.0
      %2029 = vmatpush1.msra.mxu0 0.0
      %2030 = vmatprep.subr.mxu0 0.0
      %2031 = vmatpush1.msra.mxu0 0.0
      %2032 = vmatprep.subr.mxu0 0.0
      %2033 = vmatpush1.msra.mxu0 0.0
      %2034 = vmatprep.subr.mxu0 0.0
      %2035 = vmatpush1.msra.mxu0 0.0
      %2036 = vmatprep.subr.mxu0 0.0
      %2037 = vmatpush1.msra.mxu0 0.0
      %2038 = vmatprep.subr.mxu0 0.0
      %2039 = vmatpush1.msra.mxu0 0.0
      %2040 = vmatprep.subr.mxu0 0.0
      %2041 = vmatpush1.msra.mxu0 0.0
      %2042 = vmatprep.subr.mxu0 0.0
      %2043 = vmatpush1.msra.mxu0 0.0
      %2044 = vmatprep.subr.mxu0 0.0
      %2045 = vmatpush1.msra.mxu0 0.0
      %2046 = vmatprep.subr.mxu0 0.0
      %2047 = vmatpush1.msra.mxu0 0.0
      %2048 = vmatprep.mubr.f32.mxu0 0.0
      %2049 = vmatmul.mubr.f32.gmra.mrb[0].mxu0 %v1836
      %v2050 = vpop.f32.mrb[0].mxu0
      %v2051 = vadd.f32 0.0, %v2050
      %v2052 = vpop.f32.mrb[0].mxu0
      %v2053 = vadd.f32 0.0, %v2052
      %2054 = vdwg.mxu0
      %v2056 = vsel %vm515, %v1840, 0
      %2058 = vmatprep.subr.mxu0 %v1842
      %2059 = vmatpush1.msra.mxu0 %v1841
      %2060 = vmatprep.subr.mxu0 %v1846
      %2061 = vmatpush1.msra.mxu0 %v1845
      %2062 = vmatprep.subr.mxu0 0.0
      %2063 = vmatpush1.msra.mxu0 0.0
      %2064 = vmatprep.subr.mxu0 0.0
      %2065 = vmatpush1.msra.mxu0 0.0
      %2066 = vmatprep.subr.mxu0 0.0
      %2067 = vmatpush1.msra.mxu0 0.0
      %2068 = vmatprep.subr.mxu0 0.0
      %2069 = vmatpush1.msra.mxu0 0.0
      %2070 = vmatprep.subr.mxu0 0.0
      %2071 = vmatpush1.msra.mxu0 0.0
      %2072 = vmatprep.subr.mxu0 0.0
      %2073 = vmatpush1.msra.mxu0 0.0
      %2074 = vmatprep.subr.mxu0 0.0
      %2075 = vmatpush1.msra.mxu0 0.0
      %2076 = vmatprep.subr.mxu0 0.0
      %2077 = vmatpush1.msra.mxu0 0.0
      %2078 = vmatprep.subr.mxu0 0.0
      %2079 = vmatpush1.msra.mxu0 0.0
      %2080 = vmatprep.subr.mxu0 0.0
      %2081 = vmatpush1.msra.mxu0 0.0
      %2082 = vmatprep.subr.mxu0 0.0
      %2083 = vmatpush1.msra.mxu0 0.0
      %2084 = vmatprep.subr.mxu0 0.0
      %2085 = vmatpush1.msra.mxu0 0.0
      %2086 = vmatprep.subr.mxu0 0.0
      %2087 = vmatpush1.msra.mxu0 0.0
      %2088 = vmatprep.subr.mxu0 0.0
      %2089 = vmatpush1.msra.mxu0 0.0
      %2090 = vmatprep.subr.mxu0 0.0
      %2091 = vmatpush1.msra.mxu0 0.0
      %2092 = vmatprep.subr.mxu0 0.0
      %2093 = vmatpush1.msra.mxu0 0.0
      %2094 = vmatprep.subr.mxu0 0.0
      %2095 = vmatpush1.msra.mxu0 0.0
      %2096 = vmatprep.subr.mxu0 0.0
      %2097 = vmatpush1.msra.mxu0 0.0
      %2098 = vmatprep.subr.mxu0 0.0
      %2099 = vmatpush1.msra.mxu0 0.0
      %2100 = vmatprep.subr.mxu0 0.0
      %2101 = vmatpush1.msra.mxu0 0.0
      %2102 = vmatprep.subr.mxu0 0.0
      %2103 = vmatpush1.msra.mxu0 0.0
      %2104 = vmatprep.subr.mxu0 0.0
      %2105 = vmatpush1.msra.mxu0 0.0
      %2106 = vmatprep.subr.mxu0 0.0
      %2107 = vmatpush1.msra.mxu0 0.0
      %2108 = vmatprep.subr.mxu0 0.0
      %2109 = vmatpush1.msra.mxu0 0.0
      %2110 = vmatprep.subr.mxu0 0.0
      %2111 = vmatpush1.msra.mxu0 0.0
      %2112 = vmatprep.subr.mxu0 0.0
      %2113 = vmatpush1.msra.mxu0 0.0
      %2114 = vmatprep.subr.mxu0 0.0
      %2115 = vmatpush1.msra.mxu0 0.0
      %2116 = vmatprep.subr.mxu0 0.0
      %2117 = vmatpush1.msra.mxu0 0.0
      %2118 = vmatprep.subr.mxu0 0.0
      %2119 = vmatpush1.msra.mxu0 0.0
      %2120 = vmatprep.subr.mxu0 0.0
      %2121 = vmatpush1.msra.mxu0 0.0
      %2122 = vmatprep.mubr.f32.mxu0 0.0
      %2123 = vmatmul.mubr.f32.gmra.mrb[0].mxu0 %v2056
      %v2124 = vpop.f32.mrb[0].mxu0
      %v2125 = vadd.f32 %v1980, %v2124
      %v2126 = vpop.f32.mrb[0].mxu0
      %v2127 = vadd.f32 %v1982, %v2126
      %2128 = vdwg.mxu0
      %2129 = vmatprep.subr.mxu0 %v1844
      %2130 = vmatpush1.msra.mxu0 %v1843
      %2131 = vmatprep.subr.mxu0 %v1848
      %2132 = vmatpush1.msra.mxu0 %v1847
      %2133 = vmatprep.subr.mxu0 0.0
      %2134 = vmatpush1.msra.mxu0 0.0
      %2135 = vmatprep.subr.mxu0 0.0
      %2136 = vmatpush1.msra.mxu0 0.0
      %2137 = vmatprep.subr.mxu0 0.0
      %2138 = vmatpush1.msra.mxu0 0.0
      %2139 = vmatprep.subr.mxu0 0.0
      %2140 = vmatpush1.msra.mxu0 0.0
      %2141 = vmatprep.subr.mxu0 0.0
      %2142 = vmatpush1.msra.mxu0 0.0
      %2143 = vmatprep.subr.mxu0 0.0
      %2144 = vmatpush1.msra.mxu0 0.0
      %2145 = vmatprep.subr.mxu0 0.0
      %2146 = vmatpush1.msra.mxu0 0.0
      %2147 = vmatprep.subr.mxu0 0.0
      %2148 = vmatpush1.msra.mxu0 0.0
      %2149 = vmatprep.subr.mxu0 0.0
      %2150 = vmatpush1.msra.mxu0 0.0
      %2151 = vmatprep.subr.mxu0 0.0
      %2152 = vmatpush1.msra.mxu0 0.0
      %2153 = vmatprep.subr.mxu0 0.0
      %2154 = vmatpush1.msra.mxu0 0.0
      %2155 = vmatprep.subr.mxu0 0.0
      %2156 = vmatpush1.msra.mxu0 0.0
      %2157 = vmatprep.subr.mxu0 0.0
      %2158 = vmatpush1.msra.mxu0 0.0
      %2159 = vmatprep.subr.mxu0 0.0
      %2160 = vmatpush1.msra.mxu0 0.0
      %2161 = vmatprep.subr.mxu0 0.0
      %2162 = vmatpush1.msra.mxu0 0.0
      %2163 = vmatprep.subr.mxu0 0.0
      %2164 = vmatpush1.msra.mxu0 0.0
      %2165 = vmatprep.subr.mxu0 0.0
      %2166 = vmatpush1.msra.mxu0 0.0
      %2167 = vmatprep.subr.mxu0 0.0
      %2168 = vmatpush1.msra.mxu0 0.0
      %2169 = vmatprep.subr.mxu0 0.0
      %2170 = vmatpush1.msra.mxu0 0.0
      %2171 = vmatprep.subr.mxu0 0.0
      %2172 = vmatpush1.msra.mxu0 0.0
      %2173 = vmatprep.subr.mxu0 0.0
      %2174 = vmatpush1.msra.mxu0 0.0
      %2175 = vmatprep.subr.mxu0 0.0
      %2176 = vmatpush1.msra.mxu0 0.0
      %2177 = vmatprep.subr.mxu0 0.0
      %2178 = vmatpush1.msra.mxu0 0.0
      %2179 = vmatprep.subr.mxu0 0.0
      %2180 = vmatpush1.msra.mxu0 0.0
      %2181 = vmatprep.subr.mxu0 0.0
      %2182 = vmatpush1.msra.mxu0 0.0
      %2183 = vmatprep.subr.mxu0 0.0
      %2184 = vmatpush1.msra.mxu0 0.0
      %2185 = vmatprep.subr.mxu0 0.0
      %2186 = vmatpush1.msra.mxu0 0.0
      %2187 = vmatprep.subr.mxu0 0.0
      %2188 = vmatpush1.msra.mxu0 0.0
      %2189 = vmatprep.subr.mxu0 0.0
      %2190 = vmatpush1.msra.mxu0 0.0
      %2191 = vmatprep.subr.mxu0 0.0
      %2192 = vmatpush1.msra.mxu0 0.0
      %2193 = vmatprep.mubr.f32.mxu0 0.0
      %2194 = vmatmul.mubr.f32.gmra.mrb[0].mxu0 %v2056
      %v2195 = vpop.f32.mrb[0].mxu0
      %v2196 = vadd.f32 %v2051, %v2195
      %v2197 = vpop.f32.mrb[0].mxu0
      %v2198 = vadd.f32 %v2053, %v2197
      %2199 = vdwg.mxu0
      %v2200 = vadd.f32 %v2125, %v283
      %v2201 = vadd.f32 %v2127, %v287
      %v2202 = vadd.f32 %v2196, %v291
      %v2203 = vadd.f32 %v2198, %v295
      %v2204 = vmul.f32 %v2200, 0.5
      %v2205 = vtanh.pop %v2204
      %v2206 = vmul.f32 %v2205, 0.5
      %v2207 = vadd.f32 %v2206, 0.5
      %v2208 = vmul.f32 %v2201, 0.5
      %v2209 = vtanh.pop %v2208
      %v2210 = vmul.f32 %v2209, 0.5
      %v2211 = vadd.f32 %v2210, 0.5
      %v2212 = vtanh.pop %v2202
      %v2213 = vmul.f32 %v2203, 0.5
      %v2214 = vtanh.pop %v2213
      %v2215 = vmul.f32 %v2214, 0.5
      %v2216 = vadd.f32 %v2215, 0.5
      %v2217 = vmul.f32 %v2207, %v1834
      %v2218 = vmul.f32 %v2211, %v2212
      %v2219 = vadd.f32 %v2217, %v2218
      %v2220 = vtanh.pop %v2219
      %v2221 = vmul.f32 %v2216, %v2220
      %s2222 = scalar_lea.vmem %s264, 32
      %2223 = vst [vmem:[%s2222] sm:$0xff] %v2221
      %s2224 = scalar_lea.vmem %s255, 40
      %v2225 = vld [vmem:[%s2224] sm:$0xff]
      %v2226 = vld [vmem:[%s1] sm:$0xff]
      %v2227 = vld [vmem:[%s1 + $0x8] sm:$0xff]
      %v2228 = vld [vmem:[%s1 + $0x10] sm:$0xff]
      %v2229 = vld [vmem:[%s1 + $0x18] sm:$0xff]
      %v2230 = vld [vmem:[%s1 + $0x20] sm:$0xff]
      %v2231 = vld [vmem:[%s1 + $0x28] sm:$0xff]
      %v2232 = vld [vmem:[%s1 + $0x30] sm:$0xff]
      %v2233 = vld [vmem:[%s1 + $0x38] sm:$0xff]
      %v2234 = vld [vmem:[%s2] sm:$0xff]
      %v2235 = vld [vmem:[%s2 + $0x8] sm:$0xff]
      %v2236 = vld [vmem:[%s2 + $0x10] sm:$0xff]
      %v2237 = vld [vmem:[%s2 + $0x18] sm:$0xff]
      %v2238 = vld [vmem:[%s2 + $0x20] sm:$0xff]
      %v2239 = vld [vmem:[%s2 + $0x28] sm:$0xff]
      %v2240 = vld [vmem:[%s2 + $0x30] sm:$0xff]
      %v2241 = vld [vmem:[%s2 + $0x38] sm:$0xff]
      %v2242 = vld [vmem:[%s2 + $0x40] sm:$0xff]
      %v2243 = vld [vmem:[%s2 + $0x48] sm:$0xff]
      %v2244 = vld [vmem:[%s2 + $0x50] sm:$0xff]
      %v2245 = vld [vmem:[%s2 + $0x58] sm:$0xff]
      %v2246 = vld [vmem:[%s2 + $0x60] sm:$0xff]
      %v2247 = vld [vmem:[%s2 + $0x68] sm:$0xff]
      %v2248 = vld [vmem:[%s2 + $0x70] sm:$0xff]
      %v2249 = vld [vmem:[%s2 + $0x78] sm:$0xff]
      %v2250 = vld [vmem:[%s2 + $0x80] sm:$0xff]
      %v2251 = vld [vmem:[%s2 + $0x88] sm:$0xff]
      %v2252 = vld [vmem:[%s2 + $0x90] sm:$0xff]
      %v2253 = vld [vmem:[%s2 + $0x98] sm:$0xff]
      %v2254 = vld [vmem:[%s2 + $0xa0] sm:$0xff]
      %v2255 = vld [vmem:[%s2 + $0xa8] sm:$0xff]
      %v2256 = vld [vmem:[%s2 + $0xb0] sm:$0xff]
      %v2257 = vld [vmem:[%s2 + $0xb8] sm:$0xff]
      %v2258 = vld [vmem:[%s2 + $0xc0] sm:$0xff]
      %v2259 = vld [vmem:[%s2 + $0xc8] sm:$0xff]
      %v2260 = vld [vmem:[%s2 + $0xd0] sm:$0xff]
      %v2261 = vld [vmem:[%s2 + $0xd8] sm:$0xff]
      %v2262 = vld [vmem:[%s2 + $0xe0] sm:$0xff]
      %v2263 = vld [vmem:[%s2 + $0xe8] sm:$0xff]
      %v2264 = vld [vmem:[%s2 + $0xf0] sm:$0xff]
      %v2265 = vld [vmem:[%s2 + $0xf8] sm:$0xff]
      %v2266 = vld [vmem:[%s2 + $0x100] sm:$0xff]
      %v2267 = vld [vmem:[%s2 + $0x108] sm:$0xff]
      %v2268 = vld [vmem:[%s2 + $0x110] sm:$0xff]
      %v2269 = vld [vmem:[%s2 + $0x118] sm:$0xff]
      %v2270 = vld [vmem:[%s2 + $0x120] sm:$0xff]
      %v2271 = vld [vmem:[%s2 + $0x128] sm:$0xff]
      %v2272 = vld [vmem:[%s2 + $0x130] sm:$0xff]
      %v2273 = vld [vmem:[%s2 + $0x138] sm:$0xff]
      %v2274 = vld [vmem:[%s2 + $0x140] sm:$0xff]
      %v2275 = vld [vmem:[%s2 + $0x148] sm:$0xff]
      %v2276 = vld [vmem:[%s2 + $0x150] sm:$0xff]
      %v2277 = vld [vmem:[%s2 + $0x158] sm:$0xff]
      %v2278 = vld [vmem:[%s2 + $0x160] sm:$0xff]
      %v2279 = vld [vmem:[%s2 + $0x168] sm:$0xff]
      %v2280 = vld [vmem:[%s2 + $0x170] sm:$0xff]
      %v2281 = vld [vmem:[%s2 + $0x178] sm:$0xff]
      %v2282 = vld [vmem:[%s2 + $0x180] sm:$0xff]
      %v2283 = vld [vmem:[%s2 + $0x188] sm:$0xff]
      %v2284 = vld [vmem:[%s2 + $0x190] sm:$0xff]
      %v2285 = vld [vmem:[%s2 + $0x198] sm:$0xff]
      %v2286 = vld [vmem:[%s2 + $0x1a0] sm:$0xff]
      %v2287 = vld [vmem:[%s2 + $0x1a8] sm:$0xff]
      %v2288 = vld [vmem:[%s2 + $0x1b0] sm:$0xff]
      %v2289 = vld [vmem:[%s2 + $0x1b8] sm:$0xff]
      %v2290 = vld [vmem:[%s2 + $0x1c0] sm:$0xff]
      %v2291 = vld [vmem:[%s2 + $0x1c8] sm:$0xff]
      %v2292 = vld [vmem:[%s2 + $0x1d0] sm:$0xff]
      %v2293 = vld [vmem:[%s2 + $0x1d8] sm:$0xff]
      %v2294 = vld [vmem:[%s2 + $0x1e0] sm:$0xff]
      %v2295 = vld [vmem:[%s2 + $0x1e8] sm:$0xff]
      %v2296 = vld [vmem:[%s2 + $0x1f0] sm:$0xff]
      %v2297 = vld [vmem:[%s2 + $0x1f8] sm:$0xff]
      %2298 = vmatprep.subr.mxu0 %v2235
      %2299 = vmatpush1.msra.mxu0 %v2234
      %2300 = vmatprep.subr.mxu0 %v2239
      %2301 = vmatpush1.msra.mxu0 %v2238
      %2302 = vmatprep.subr.mxu0 %v2243
      %2303 = vmatpush1.msra.mxu0 %v2242
      %2304 = vmatprep.subr.mxu0 %v2247
      %2305 = vmatpush1.msra.mxu0 %v2246
      %2306 = vmatprep.subr.mxu0 %v2251
      %2307 = vmatpush1.msra.mxu0 %v2250
      %2308 = vmatprep.subr.mxu0 %v2255
      %2309 = vmatpush1.msra.mxu0 %v2254
      %2310 = vmatprep.subr.mxu0 %v2259
      %2311 = vmatpush1.msra.mxu0 %v2258
      %2312 = vmatprep.subr.mxu0 %v2263
      %2313 = vmatpush1.msra.mxu0 %v2262
      %2314 = vmatprep.subr.mxu0 %v2267
      %2315 = vmatpush1.msra.mxu0 %v2266
      %2316 = vmatprep.subr.mxu0 %v2271
      %2317 = vmatpush1.msra.mxu0 %v2270
      %2318 = vmatprep.subr.mxu0 %v2275
      %2319 = vmatpush1.msra.mxu0 %v2274
      %2320 = vmatprep.subr.mxu0 %v2279
      %2321 = vmatpush1.msra.mxu0 %v2278
      %2322 = vmatprep.subr.mxu0 %v2283
      %2323 = vmatpush1.msra.mxu0 %v2282
      %2324 = vmatprep.subr.mxu0 %v2287
      %2325 = vmatpush1.msra.mxu0 %v2286
      %2326 = vmatprep.subr.mxu0 %v2291
      %2327 = vmatpush1.msra.mxu0 %v2290
      %2328 = vmatprep.subr.mxu0 %v2295
      %2329 = vmatpush1.msra.mxu0 %v2294
      %2330 = vmatprep.subr.mxu0 0.0
      %2331 = vmatpush1.msra.mxu0 0.0
      %2332 = vmatprep.subr.mxu0 0.0
      %2333 = vmatpush1.msra.mxu0 0.0
      %2334 = vmatprep.subr.mxu0 0.0
      %2335 = vmatpush1.msra.mxu0 0.0
      %2336 = vmatprep.subr.mxu0 0.0
      %2337 = vmatpush1.msra.mxu0 0.0
      %2338 = vmatprep.subr.mxu0 0.0
      %2339 = vmatpush1.msra.mxu0 0.0
      %2340 = vmatprep.subr.mxu0 0.0
      %2341 = vmatpush1.msra.mxu0 0.0
      %2342 = vmatprep.subr.mxu0 0.0
      %2343 = vmatpush1.msra.mxu0 0.0
      %2344 = vmatprep.subr.mxu0 0.0
      %2345 = vmatpush1.msra.mxu0 0.0
      %2346 = vmatprep.subr.mxu0 0.0
      %2347 = vmatpush1.msra.mxu0 0.0
      %2348 = vmatprep.subr.mxu0 0.0
      %2349 = vmatpush1.msra.mxu0 0.0
      %2350 = vmatprep.subr.mxu0 0.0
      %2351 = vmatpush1.msra.mxu0 0.0
      %2352 = vmatprep.subr.mxu0 0.0
      %2353 = vmatpush1.msra.mxu0 0.0
      %2354 = vmatprep.subr.mxu0 0.0
      %2355 = vmatpush1.msra.mxu0 0.0
      %2356 = vmatprep.subr.mxu0 0.0
      %2357 = vmatpush1.msra.mxu0 0.0
      %2358 = vmatprep.subr.mxu0 0.0
      %2359 = vmatpush1.msra.mxu0 0.0
      %2360 = vmatprep.subr.mxu0 0.0
      %2361 = vmatpush1.msra.mxu0 0.0
      %2362 = vmatprep.mubr.f32.mxu0 0.0
      %2363 = vmatmul.mubr.f32.gmra.mrb[0].mxu0 %v2221
      %v2364 = vpop.f32.mrb[0].mxu0
      %v2365 = vadd.f32 0.0, %v2364
      %v2366 = vpop.f32.mrb[0].mxu0
      %v2367 = vadd.f32 0.0, %v2366
      %2368 = vdwg.mxu0
      %2369 = vmatprep.subr.mxu0 %v2237
      %2370 = vmatpush1.msra.mxu0 %v2236
      %2371 = vmatprep.subr.mxu0 %v2241
      %2372 = vmatpush1.msra.mxu0 %v2240
      %2373 = vmatprep.subr.mxu0 %v2245
      %2374 = vmatpush1.msra.mxu0 %v2244
      %2375 = vmatprep.subr.mxu0 %v2249
      %2376 = vmatpush1.msra.mxu0 %v2248
      %2377 = vmatprep.subr.mxu0 %v2253
      %2378 = vmatpush1.msra.mxu0 %v2252
      %2379 = vmatprep.subr.mxu0 %v2257
      %2380 = vmatpush1.msra.mxu0 %v2256
      %2381 = vmatprep.subr.mxu0 %v2261
      %2382 = vmatpush1.msra.mxu0 %v2260
      %2383 = vmatprep.subr.mxu0 %v2265
      %2384 = vmatpush1.msra.mxu0 %v2264
      %2385 = vmatprep.subr.mxu0 %v2269
      %2386 = vmatpush1.msra.mxu0 %v2268
      %2387 = vmatprep.subr.mxu0 %v2273
      %2388 = vmatpush1.msra.mxu0 %v2272
      %2389 = vmatprep.subr.mxu0 %v2277
      %2390 = vmatpush1.msra.mxu0 %v2276
      %2391 = vmatprep.subr.mxu0 %v2281
      %2392 = vmatpush1.msra.mxu0 %v2280
      %2393 = vmatprep.subr.mxu0 %v2285
      %2394 = vmatpush1.msra.mxu0 %v2284
      %2395 = vmatprep.subr.mxu0 %v2289
      %2396 = vmatpush1.msra.mxu0 %v2288
      %2397 = vmatprep.subr.mxu0 %v2293
      %2398 = vmatpush1.msra.mxu0 %v2292
      %2399 = vmatprep.subr.mxu0 %v2297
      %2400 = vmatpush1.msra.mxu0 %v2296
      %2401 = vmatprep.subr.mxu0 0.0
      %2402 = vmatpush1.msra.mxu0 0.0
      %2403 = vmatprep.subr.mxu0 0.0
      %2404 = vmatpush1.msra.mxu0 0.0
      %2405 = vmatprep.subr.mxu0 0.0
      %2406 = vmatpush1.msra.mxu0 0.0
      %2407 = vmatprep.subr.mxu0 0.0
      %2408 = vmatpush1.msra.mxu0 0.0
      %2409 = vmatprep.subr.mxu0 0.0
      %2410 = vmatpush1.msra.mxu0 0.0
      %2411 = vmatprep.subr.mxu0 0.0
      %2412 = vmatpush1.msra.mxu0 0.0
      %2413 = vmatprep.subr.mxu0 0.0
      %2414 = vmatpush1.msra.mxu0 0.0
      %2415 = vmatprep.subr.mxu0 0.0
      %2416 = vmatpush1.msra.mxu0 0.0
      %2417 = vmatprep.subr.mxu0 0.0
      %2418 = vmatpush1.msra.mxu0 0.0
      %2419 = vmatprep.subr.mxu0 0.0
      %2420 = vmatpush1.msra.mxu0 0.0
      %2421 = vmatprep.subr.mxu0 0.0
      %2422 = vmatpush1.msra.mxu0 0.0
      %2423 = vmatprep.subr.mxu0 0.0
      %2424 = vmatpush1.msra.mxu0 0.0
      %2425 = vmatprep.subr.mxu0 0.0
      %2426 = vmatpush1.msra.mxu0 0.0
      %2427 = vmatprep.subr.mxu0 0.0
      %2428 = vmatpush1.msra.mxu0 0.0
      %2429 = vmatprep.subr.mxu0 0.0
      %2430 = vmatpush1.msra.mxu0 0.0
      %2431 = vmatprep.subr.mxu0 0.0
      %2432 = vmatpush1.msra.mxu0 0.0
      %2433 = vmatprep.mubr.f32.mxu0 0.0
      %2434 = vmatmul.mubr.f32.gmra.mrb[0].mxu0 %v2221
      %v2435 = vpop.f32.mrb[0].mxu0
      %v2436 = vadd.f32 0.0, %v2435
      %v2437 = vpop.f32.mrb[0].mxu0
      %v2438 = vadd.f32 0.0, %v2437
      %2439 = vdwg.mxu0
      %v2441 = vsel %vm515, %v2225, 0
      %2443 = vmatprep.subr.mxu0 %v2227
      %2444 = vmatpush1.msra.mxu0 %v2226
      %2445 = vmatprep.subr.mxu0 %v2231
      %2446 = vmatpush1.msra.mxu0 %v2230
      %2447 = vmatprep.subr.mxu0 0.0
      %2448 = vmatpush1.msra.mxu0 0.0
      %2449 = vmatprep.subr.mxu0 0.0
      %2450 = vmatpush1.msra.mxu0 0.0
      %2451 = vmatprep.subr.mxu0 0.0
      %2452 = vmatpush1.msra.mxu0 0.0
      %2453 = vmatprep.subr.mxu0 0.0
      %2454 = vmatpush1.msra.mxu0 0.0
      %2455 = vmatprep.subr.mxu0 0.0
      %2456 = vmatpush1.msra.mxu0 0.0
      %2457 = vmatprep.subr.mxu0 0.0
      %2458 = vmatpush1.msra.mxu0 0.0
      %2459 = vmatprep.subr.mxu0 0.0
      %2460 = vmatpush1.msra.mxu0 0.0
      %2461 = vmatprep.subr.mxu0 0.0
      %2462 = vmatpush1.msra.mxu0 0.0
      %2463 = vmatprep.subr.mxu0 0.0
      %2464 = vmatpush1.msra.mxu0 0.0
      %2465 = vmatprep.subr.mxu0 0.0
      %2466 = vmatpush1.msra.mxu0 0.0
      %2467 = vmatprep.subr.mxu0 0.0
      %2468 = vmatpush1.msra.mxu0 0.0
      %2469 = vmatprep.subr.mxu0 0.0
      %2470 = vmatpush1.msra.mxu0 0.0
      %2471 = vmatprep.subr.mxu0 0.0
      %2472 = vmatpush1.msra.mxu0 0.0
      %2473 = vmatprep.subr.mxu0 0.0
      %2474 = vmatpush1.msra.mxu0 0.0
      %2475 = vmatprep.subr.mxu0 0.0
      %2476 = vmatpush1.msra.mxu0 0.0
      %2477 = vmatprep.subr.mxu0 0.0
      %2478 = vmatpush1.msra.mxu0 0.0
      %2479 = vmatprep.subr.mxu0 0.0
      %2480 = vmatpush1.msra.mxu0 0.0
      %2481 = vmatprep.subr.mxu0 0.0
      %2482 = vmatpush1.msra.mxu0 0.0
      %2483 = vmatprep.subr.mxu0 0.0
      %2484 = vmatpush1.msra.mxu0 0.0
      %2485 = vmatprep.subr.mxu0 0.0
      %2486 = vmatpush1.msra.mxu0 0.0
      %2487 = vmatprep.subr.mxu0 0.0
      %2488 = vmatpush1.msra.mxu0 0.0
      %2489 = vmatprep.subr.mxu0 0.0
      %2490 = vmatpush1.msra.mxu0 0.0
      %2491 = vmatprep.subr.mxu0 0.0
      %2492 = vmatpush1.msra.mxu0 0.0
      %2493 = vmatprep.subr.mxu0 0.0
      %2494 = vmatpush1.msra.mxu0 0.0
      %2495 = vmatprep.subr.mxu0 0.0
      %2496 = vmatpush1.msra.mxu0 0.0
      %2497 = vmatprep.subr.mxu0 0.0
      %2498 = vmatpush1.msra.mxu0 0.0
      %2499 = vmatprep.subr.mxu0 0.0
      %2500 = vmatpush1.msra.mxu0 0.0
      %2501 = vmatprep.subr.mxu0 0.0
      %2502 = vmatpush1.msra.mxu0 0.0
      %2503 = vmatprep.subr.mxu0 0.0
      %2504 = vmatpush1.msra.mxu0 0.0
      %2505 = vmatprep.subr.mxu0 0.0
      %2506 = vmatpush1.msra.mxu0 0.0
      %2507 = vmatprep.mubr.f32.mxu0 0.0
      %2508 = vmatmul.mubr.f32.gmra.mrb[0].mxu0 %v2441
      %v2509 = vpop.f32.mrb[0].mxu0
      %v2510 = vadd.f32 %v2365, %v2509
      %v2511 = vpop.f32.mrb[0].mxu0
      %v2512 = vadd.f32 %v2367, %v2511
      %2513 = vdwg.mxu0
      %2514 = vmatprep.subr.mxu0 %v2229
      %2515 = vmatpush1.msra.mxu0 %v2228
      %2516 = vmatprep.subr.mxu0 %v2233
      %2517 = vmatpush1.msra.mxu0 %v2232
      %2518 = vmatprep.subr.mxu0 0.0
      %2519 = vmatpush1.msra.mxu0 0.0
      %2520 = vmatprep.subr.mxu0 0.0
      %2521 = vmatpush1.msra.mxu0 0.0
      %2522 = vmatprep.subr.mxu0 0.0
      %2523 = vmatpush1.msra.mxu0 0.0
      %2524 = vmatprep.subr.mxu0 0.0
      %2525 = vmatpush1.msra.mxu0 0.0
      %2526 = vmatprep.subr.mxu0 0.0
      %2527 = vmatpush1.msra.mxu0 0.0
      %2528 = vmatprep.subr.mxu0 0.0
      %2529 = vmatpush1.msra.mxu0 0.0
      %2530 = vmatprep.subr.mxu0 0.0
      %2531 = vmatpush1.msra.mxu0 0.0
      %2532 = vmatprep.subr.mxu0 0.0
      %2533 = vmatpush1.msra.mxu0 0.0
      %2534 = vmatprep.subr.mxu0 0.0
      %2535 = vmatpush1.msra.mxu0 0.0
      %2536 = vmatprep.subr.mxu0 0.0
      %2537 = vmatpush1.msra.mxu0 0.0
      %2538 = vmatprep.subr.mxu0 0.0
      %2539 = vmatpush1.msra.mxu0 0.0
      %2540 = vmatprep.subr.mxu0 0.0
      %2541 = vmatpush1.msra.mxu0 0.0
      %2542 = vmatprep.subr.mxu0 0.0
      %2543 = vmatpush1.msra.mxu0 0.0
      %2544 = vmatprep.subr.mxu0 0.0
      %2545 = vmatpush1.msra.mxu0 0.0
      %2546 = vmatprep.subr.mxu0 0.0
      %2547 = vmatpush1.msra.mxu0 0.0
      %2548 = vmatprep.subr.mxu0 0.0
      %2549 = vmatpush1.msra.mxu0 0.0
      %2550 = vmatprep.subr.mxu0 0.0
      %2551 = vmatpush1.msra.mxu0 0.0
      %2552 = vmatprep.subr.mxu0 0.0
      %2553 = vmatpush1.msra.mxu0 0.0
      %2554 = vmatprep.subr.mxu0 0.0
      %2555 = vmatpush1.msra.mxu0 0.0
      %2556 = vmatprep.subr.mxu0 0.0
      %2557 = vmatpush1.msra.mxu0 0.0
      %2558 = vmatprep.subr.mxu0 0.0
      %2559 = vmatpush1.msra.mxu0 0.0
      %2560 = vmatprep.subr.mxu0 0.0
      %2561 = vmatpush1.msra.mxu0 0.0
      %2562 = vmatprep.subr.mxu0 0.0
      %2563 = vmatpush1.msra.mxu0 0.0
      %2564 = vmatprep.subr.mxu0 0.0
      %2565 = vmatpush1.msra.mxu0 0.0
      %2566 = vmatprep.subr.mxu0 0.0
      %2567 = vmatpush1.msra.mxu0 0.0
      %2568 = vmatprep.subr.mxu0 0.0
      %2569 = vmatpush1.msra.mxu0 0.0
      %2570 = vmatprep.subr.mxu0 0.0
      %2571 = vmatpush1.msra.mxu0 0.0
      %2572 = vmatprep.subr.mxu0 0.0
      %2573 = vmatpush1.msra.mxu0 0.0
      %2574 = vmatprep.subr.mxu0 0.0
      %2575 = vmatpush1.msra.mxu0 0.0
      %2576 = vmatprep.subr.mxu0 0.0
      %2577 = vmatpush1.msra.mxu0 0.0
      %2578 = vmatprep.mubr.f32.mxu0 0.0
      %2579 = vmatmul.mubr.f32.gmra.mrb[0].mxu0 %v2441
      %v2580 = vpop.f32.mrb[0].mxu0
      %v2581 = vadd.f32 %v2436, %v2580
      %v2582 = vpop.f32.mrb[0].mxu0
      %v2583 = vadd.f32 %v2438, %v2582
      %2584 = vdwg.mxu0
      %v2585 = vadd.f32 %v2510, %v283
      %v2586 = vadd.f32 %v2512, %v287
      %v2587 = vadd.f32 %v2581, %v291
      %v2588 = vadd.f32 %v2583, %v295
      %v2589 = vmul.f32 %v2585, 0.5
      %v2590 = vtanh.pop %v2589
      %v2591 = vmul.f32 %v2590, 0.5
      %v2592 = vadd.f32 %v2591, 0.5
      %v2593 = vmul.f32 %v2586, 0.5
      %v2594 = vtanh.pop %v2593
      %v2595 = vmul.f32 %v2594, 0.5
      %v2596 = vadd.f32 %v2595, 0.5
      %v2597 = vtanh.pop %v2587
      %v2598 = vmul.f32 %v2588, 0.5
      %v2599 = vtanh.pop %v2598
      %v2600 = vmul.f32 %v2599, 0.5
      %v2601 = vadd.f32 %v2600, 0.5
      %v2602 = vmul.f32 %v2592, %v2219
      %v2603 = vmul.f32 %v2596, %v2597
      %v2604 = vadd.f32 %v2602, %v2603
      %v2605 = vtanh.pop %v2604
      %v2606 = vmul.f32 %v2601, %v2605
      %s2607 = scalar_lea.vmem %s264, 40
      %2608 = vst [vmem:[%s2607] sm:$0xff] %v2606
      %s2609 = scalar_lea.vmem %s255, 48
      %v2610 = vld [vmem:[%s2609] sm:$0xff]
      %v2611 = vld [vmem:[%s1] sm:$0xff]
      %v2612 = vld [vmem:[%s1 + $0x8] sm:$0xff]
      %v2613 = vld [vmem:[%s1 + $0x10] sm:$0xff]
      %v2614 = vld [vmem:[%s1 + $0x18] sm:$0xff]
      %v2615 = vld [vmem:[%s1 + $0x20] sm:$0xff]
      %v2616 = vld [vmem:[%s1 + $0x28] sm:$0xff]
      %v2617 = vld [vmem:[%s1 + $0x30] sm:$0xff]
      %v2618 = vld [vmem:[%s1 + $0x38] sm:$0xff]
      %v2619 = vld [vmem:[%s2] sm:$0xff]
      %v2620 = vld [vmem:[%s2 + $0x8] sm:$0xff]
      %v2621 = vld [vmem:[%s2 + $0x10] sm:$0xff]
      %v2622 = vld [vmem:[%s2 + $0x18] sm:$0xff]
      %v2623 = vld [vmem:[%s2 + $0x20] sm:$0xff]
      %v2624 = vld [vmem:[%s2 + $0x28] sm:$0xff]
      %v2625 = vld [vmem:[%s2 + $0x30] sm:$0xff]
      %v2626 = vld [vmem:[%s2 + $0x38] sm:$0xff]
      %v2627 = vld [vmem:[%s2 + $0x40] sm:$0xff]
      %v2628 = vld [vmem:[%s2 + $0x48] sm:$0xff]
      %v2629 = vld [vmem:[%s2 + $0x50] sm:$0xff]
      %v2630 = vld [vmem:[%s2 + $0x58] sm:$0xff]
      %v2631 = vld [vmem:[%s2 + $0x60] sm:$0xff]
      %v2632 = vld [vmem:[%s2 + $0x68] sm:$0xff]
      %v2633 = vld [vmem:[%s2 + $0x70] sm:$0xff]
      %v2634 = vld [vmem:[%s2 + $0x78] sm:$0xff]
      %v2635 = vld [vmem:[%s2 + $0x80] sm:$0xff]
      %v2636 = vld [vmem:[%s2 + $0x88] sm:$0xff]
      %v2637 = vld [vmem:[%s2 + $0x90] sm:$0xff]
      %v2638 = vld [vmem:[%s2 + $0x98] sm:$0xff]
      %v2639 = vld [vmem:[%s2 + $0xa0] sm:$0xff]
      %v2640 = vld [vmem:[%s2 + $0xa8] sm:$0xff]
      %v2641 = vld [vmem:[%s2 + $0xb0] sm:$0xff]
      %v2642 = vld [vmem:[%s2 + $0xb8] sm:$0xff]
      %v2643 = vld [vmem:[%s2 + $0xc0] sm:$0xff]
      %v2644 = vld [vmem:[%s2 + $0xc8] sm:$0xff]
      %v2645 = vld [vmem:[%s2 + $0xd0] sm:$0xff]
      %v2646 = vld [vmem:[%s2 + $0xd8] sm:$0xff]
      %v2647 = vld [vmem:[%s2 + $0xe0] sm:$0xff]
      %v2648 = vld [vmem:[%s2 + $0xe8] sm:$0xff]
      %v2649 = vld [vmem:[%s2 + $0xf0] sm:$0xff]
      %v2650 = vld [vmem:[%s2 + $0xf8] sm:$0xff]
      %v2651 = vld [vmem:[%s2 + $0x100] sm:$0xff]
      %v2652 = vld [vmem:[%s2 + $0x108] sm:$0xff]
      %v2653 = vld [vmem:[%s2 + $0x110] sm:$0xff]
      %v2654 = vld [vmem:[%s2 + $0x118] sm:$0xff]
      %v2655 = vld [vmem:[%s2 + $0x120] sm:$0xff]
      %v2656 = vld [vmem:[%s2 + $0x128] sm:$0xff]
      %v2657 = vld [vmem:[%s2 + $0x130] sm:$0xff]
      %v2658 = vld [vmem:[%s2 + $0x138] sm:$0xff]
      %v2659 = vld [vmem:[%s2 + $0x140] sm:$0xff]
      %v2660 = vld [vmem:[%s2 + $0x148] sm:$0xff]
      %v2661 = vld [vmem:[%s2 + $0x150] sm:$0xff]
      %v2662 = vld [vmem:[%s2 + $0x158] sm:$0xff]
      %v2663 = vld [vmem:[%s2 + $0x160] sm:$0xff]
      %v2664 = vld [vmem:[%s2 + $0x168] sm:$0xff]
      %v2665 = vld [vmem:[%s2 + $0x170] sm:$0xff]
      %v2666 = vld [vmem:[%s2 + $0x178] sm:$0xff]
      %v2667 = vld [vmem:[%s2 + $0x180] sm:$0xff]
      %v2668 = vld [vmem:[%s2 + $0x188] sm:$0xff]
      %v2669 = vld [vmem:[%s2 + $0x190] sm:$0xff]
      %v2670 = vld [vmem:[%s2 + $0x198] sm:$0xff]
      %v2671 = vld [vmem:[%s2 + $0x1a0] sm:$0xff]
      %v2672 = vld [vmem:[%s2 + $0x1a8] sm:$0xff]
      %v2673 = vld [vmem:[%s2 + $0x1b0] sm:$0xff]
      %v2674 = vld [vmem:[%s2 + $0x1b8] sm:$0xff]
      %v2675 = vld [vmem:[%s2 + $0x1c0] sm:$0xff]
      %v2676 = vld [vmem:[%s2 + $0x1c8] sm:$0xff]
      %v2677 = vld [vmem:[%s2 + $0x1d0] sm:$0xff]
      %v2678 = vld [vmem:[%s2 + $0x1d8] sm:$0xff]
      %v2679 = vld [vmem:[%s2 + $0x1e0] sm:$0xff]
      %v2680 = vld [vmem:[%s2 + $0x1e8] sm:$0xff]
      %v2681 = vld [vmem:[%s2 + $0x1f0] sm:$0xff]
      %v2682 = vld [vmem:[%s2 + $0x1f8] sm:$0xff]
      %2683 = vmatprep.subr.mxu0 %v2620
      %2684 = vmatpush1.msra.mxu0 %v2619
      %2685 = vmatprep.subr.mxu0 %v2624
      %2686 = vmatpush1.msra.mxu0 %v2623
      %2687 = vmatprep.subr.mxu0 %v2628
      %2688 = vmatpush1.msra.mxu0 %v2627
      %2689 = vmatprep.subr.mxu0 %v2632
      %2690 = vmatpush1.msra.mxu0 %v2631
      %2691 = vmatprep.subr.mxu0 %v2636
      %2692 = vmatpush1.msra.mxu0 %v2635
      %2693 = vmatprep.subr.mxu0 %v2640
      %2694 = vmatpush1.msra.mxu0 %v2639
      %2695 = vmatprep.subr.mxu0 %v2644
      %2696 = vmatpush1.msra.mxu0 %v2643
      %2697 = vmatprep.subr.mxu0 %v2648
      %2698 = vmatpush1.msra.mxu0 %v2647
      %2699 = vmatprep.subr.mxu0 %v2652
      %2700 = vmatpush1.msra.mxu0 %v2651
      %2701 = vmatprep.subr.mxu0 %v2656
      %2702 = vmatpush1.msra.mxu0 %v2655
      %2703 = vmatprep.subr.mxu0 %v2660
      %2704 = vmatpush1.msra.mxu0 %v2659
      %2705 = vmatprep.subr.mxu0 %v2664
      %2706 = vmatpush1.msra.mxu0 %v2663
      %2707 = vmatprep.subr.mxu0 %v2668
      %2708 = vmatpush1.msra.mxu0 %v2667
      %2709 = vmatprep.subr.mxu0 %v2672
      %2710 = vmatpush1.msra.mxu0 %v2671
      %2711 = vmatprep.subr.mxu0 %v2676
      %2712 = vmatpush1.msra.mxu0 %v2675
      %2713 = vmatprep.subr.mxu0 %v2680
      %2714 = vmatpush1.msra.mxu0 %v2679
      %2715 = vmatprep.subr.mxu0 0.0
      %2716 = vmatpush1.msra.mxu0 0.0
      %2717 = vmatprep.subr.mxu0 0.0
      %2718 = vmatpush1.msra.mxu0 0.0
      %2719 = vmatprep.subr.mxu0 0.0
      %2720 = vmatpush1.msra.mxu0 0.0
      %2721 = vmatprep.subr.mxu0 0.0
      %2722 = vmatpush1.msra.mxu0 0.0
      %2723 = vmatprep.subr.mxu0 0.0
      %2724 = vmatpush1.msra.mxu0 0.0
      %2725 = vmatprep.subr.mxu0 0.0
      %2726 = vmatpush1.msra.mxu0 0.0
      %2727 = vmatprep.subr.mxu0 0.0
      %2728 = vmatpush1.msra.mxu0 0.0
      %2729 = vmatprep.subr.mxu0 0.0
      %2730 = vmatpush1.msra.mxu0 0.0
      %2731 = vmatprep.subr.mxu0 0.0
      %2732 = vmatpush1.msra.mxu0 0.0
      %2733 = vmatprep.subr.mxu0 0.0
      %2734 = vmatpush1.msra.mxu0 0.0
      %2735 = vmatprep.subr.mxu0 0.0
      %2736 = vmatpush1.msra.mxu0 0.0
      %2737 = vmatprep.subr.mxu0 0.0
      %2738 = vmatpush1.msra.mxu0 0.0
      %2739 = vmatprep.subr.mxu0 0.0
      %2740 = vmatpush1.msra.mxu0 0.0
      %2741 = vmatprep.subr.mxu0 0.0
      %2742 = vmatpush1.msra.mxu0 0.0
      %2743 = vmatprep.subr.mxu0 0.0
      %2744 = vmatpush1.msra.mxu0 0.0
      %2745 = vmatprep.subr.mxu0 0.0
      %2746 = vmatpush1.msra.mxu0 0.0
      %2747 = vmatprep.mubr.f32.mxu0 0.0
      %2748 = vmatmul.mubr.f32.gmra.mrb[0].mxu0 %v2606
      %v2749 = vpop.f32.mrb[0].mxu0
      %v2750 = vadd.f32 0.0, %v2749
      %v2751 = vpop.f32.mrb[0].mxu0
      %v2752 = vadd.f32 0.0, %v2751
      %2753 = vdwg.mxu0
      %2754 = vmatprep.subr.mxu0 %v2622
      %2755 = vmatpush1.msra.mxu0 %v2621
      %2756 = vmatprep.subr.mxu0 %v2626
      %2757 = vmatpush1.msra.mxu0 %v2625
      %2758 = vmatprep.subr.mxu0 %v2630
      %2759 = vmatpush1.msra.mxu0 %v2629
      %2760 = vmatprep.subr.mxu0 %v2634
      %2761 = vmatpush1.msra.mxu0 %v2633
      %2762 = vmatprep.subr.mxu0 %v2638
      %2763 = vmatpush1.msra.mxu0 %v2637
      %2764 = vmatprep.subr.mxu0 %v2642
      %2765 = vmatpush1.msra.mxu0 %v2641
      %2766 = vmatprep.subr.mxu0 %v2646
      %2767 = vmatpush1.msra.mxu0 %v2645
      %2768 = vmatprep.subr.mxu0 %v2650
      %2769 = vmatpush1.msra.mxu0 %v2649
      %2770 = vmatprep.subr.mxu0 %v2654
      %2771 = vmatpush1.msra.mxu0 %v2653
      %2772 = vmatprep.subr.mxu0 %v2658
      %2773 = vmatpush1.msra.mxu0 %v2657
      %2774 = vmatprep.subr.mxu0 %v2662
      %2775 = vmatpush1.msra.mxu0 %v2661
      %2776 = vmatprep.subr.mxu0 %v2666
      %2777 = vmatpush1.msra.mxu0 %v2665
      %2778 = vmatprep.subr.mxu0 %v2670
      %2779 = vmatpush1.msra.mxu0 %v2669
      %2780 = vmatprep.subr.mxu0 %v2674
      %2781 = vmatpush1.msra.mxu0 %v2673
      %2782 = vmatprep.subr.mxu0 %v2678
      %2783 = vmatpush1.msra.mxu0 %v2677
      %2784 = vmatprep.subr.mxu0 %v2682
      %2785 = vmatpush1.msra.mxu0 %v2681
      %2786 = vmatprep.subr.mxu0 0.0
      %2787 = vmatpush1.msra.mxu0 0.0
      %2788 = vmatprep.subr.mxu0 0.0
      %2789 = vmatpush1.msra.mxu0 0.0
      %2790 = vmatprep.subr.mxu0 0.0
      %2791 = vmatpush1.msra.mxu0 0.0
      %2792 = vmatprep.subr.mxu0 0.0
      %2793 = vmatpush1.msra.mxu0 0.0
      %2794 = vmatprep.subr.mxu0 0.0
      %2795 = vmatpush1.msra.mxu0 0.0
      %2796 = vmatprep.subr.mxu0 0.0
      %2797 = vmatpush1.msra.mxu0 0.0
      %2798 = vmatprep.subr.mxu0 0.0
      %2799 = vmatpush1.msra.mxu0 0.0
      %2800 = vmatprep.subr.mxu0 0.0
      %2801 = vmatpush1.msra.mxu0 0.0
      %2802 = vmatprep.subr.mxu0 0.0
      %2803 = vmatpush1.msra.mxu0 0.0
      %2804 = vmatprep.subr.mxu0 0.0
      %2805 = vmatpush1.msra.mxu0 0.0
      %2806 = vmatprep.subr.mxu0 0.0
      %2807 = vmatpush1.msra.mxu0 0.0
      %2808 = vmatprep.subr.mxu0 0.0
      %2809 = vmatpush1.msra.mxu0 0.0
      %2810 = vmatprep.subr.mxu0 0.0
      %2811 = vmatpush1.msra.mxu0 0.0
      %2812 = vmatprep.subr.mxu0 0.0
      %2813 = vmatpush1.msra.mxu0 0.0
      %2814 = vmatprep.subr.mxu0 0.0
      %2815 = vmatpush1.msra.mxu0 0.0
      %2816 = vmatprep.subr.mxu0 0.0
      %2817 = vmatpush1.msra.mxu0 0.0
      %2818 = vmatprep.mubr.f32.mxu0 0.0
      %2819 = vmatmul.mubr.f32.gmra.mrb[0].mxu0 %v2606
      %v2820 = vpop.f32.mrb[0].mxu0
      %v2821 = vadd.f32 0.0, %v2820
      %v2822 = vpop.f32.mrb[0].mxu0
      %v2823 = vadd.f32 0.0, %v2822
      %2824 = vdwg.mxu0
      %v2826 = vsel %vm515, %v2610, 0
      %2828 = vmatprep.subr.mxu0 %v2612
      %2829 = vmatpush1.msra.mxu0 %v2611
      %2830 = vmatprep.subr.mxu0 %v2616
      %2831 = vmatpush1.msra.mxu0 %v2615
      %2832 = vmatprep.subr.mxu0 0.0
      %2833 = vmatpush1.msra.mxu0 0.0
      %2834 = vmatprep.subr.mxu0 0.0
      %2835 = vmatpush1.msra.mxu0 0.0
      %2836 = vmatprep.subr.mxu0 0.0
      %2837 = vmatpush1.msra.mxu0 0.0
      %2838 = vmatprep.subr.mxu0 0.0
      %2839 = vmatpush1.msra.mxu0 0.0
      %2840 = vmatprep.subr.mxu0 0.0
      %2841 = vmatpush1.msra.mxu0 0.0
      %2842 = vmatprep.subr.mxu0 0.0
      %2843 = vmatpush1.msra.mxu0 0.0
      %2844 = vmatprep.subr.mxu0 0.0
      %2845 = vmatpush1.msra.mxu0 0.0
      %2846 = vmatprep.subr.mxu0 0.0
      %2847 = vmatpush1.msra.mxu0 0.0
      %2848 = vmatprep.subr.mxu0 0.0
      %2849 = vmatpush1.msra.mxu0 0.0
      %2850 = vmatprep.subr.mxu0 0.0
      %2851 = vmatpush1.msra.mxu0 0.0
      %2852 = vmatprep.subr.mxu0 0.0
      %2853 = vmatpush1.msra.mxu0 0.0
      %2854 = vmatprep.subr.mxu0 0.0
      %2855 = vmatpush1.msra.mxu0 0.0
      %2856 = vmatprep.subr.mxu0 0.0
      %2857 = vmatpush1.msra.mxu0 0.0
      %2858 = vmatprep.subr.mxu0 0.0
      %2859 = vmatpush1.msra.mxu0 0.0
      %2860 = vmatprep.subr.mxu0 0.0
      %2861 = vmatpush1.msra.mxu0 0.0
      %2862 = vmatprep.subr.mxu0 0.0
      %2863 = vmatpush1.msra.mxu0 0.0
      %2864 = vmatprep.subr.mxu0 0.0
      %2865 = vmatpush1.msra.mxu0 0.0
      %2866 = vmatprep.subr.mxu0 0.0
      %2867 = vmatpush1.msra.mxu0 0.0
      %2868 = vmatprep.subr.mxu0 0.0
      %2869 = vmatpush1.msra.mxu0 0.0
      %2870 = vmatprep.subr.mxu0 0.0
      %2871 = vmatpush1.msra.mxu0 0.0
      %2872 = vmatprep.subr.mxu0 0.0
      %2873 = vmatpush1.msra.mxu0 0.0
      %2874 = vmatprep.subr.mxu0 0.0
      %2875 = vmatpush1.msra.mxu0 0.0
      %2876 = vmatprep.subr.mxu0 0.0
      %2877 = vmatpush1.msra.mxu0 0.0
      %2878 = vmatprep.subr.mxu0 0.0
      %2879 = vmatpush1.msra.mxu0 0.0
      %2880 = vmatprep.subr.mxu0 0.0
      %2881 = vmatpush1.msra.mxu0 0.0
      %2882 = vmatprep.subr.mxu0 0.0
      %2883 = vmatpush1.msra.mxu0 0.0
      %2884 = vmatprep.subr.mxu0 0.0
      %2885 = vmatpush1.msra.mxu0 0.0
      %2886 = vmatprep.subr.mxu0 0.0
      %2887 = vmatpush1.msra.mxu0 0.0
      %2888 = vmatprep.subr.mxu0 0.0
      %2889 = vmatpush1.msra.mxu0 0.0
      %2890 = vmatprep.subr.mxu0 0.0
      %2891 = vmatpush1.msra.mxu0 0.0
      %2892 = vmatprep.mubr.f32.mxu0 0.0
      %2893 = vmatmul.mubr.f32.gmra.mrb[0].mxu0 %v2826
      %v2894 = vpop.f32.mrb[0].mxu0
      %v2895 = vadd.f32 %v2750, %v2894
      %v2896 = vpop.f32.mrb[0].mxu0
      %v2897 = vadd.f32 %v2752, %v2896
      %2898 = vdwg.mxu0
      %2899 = vmatprep.subr.mxu0 %v2614
      %2900 = vmatpush1.msra.mxu0 %v2613
      %2901 = vmatprep.subr.mxu0 %v2618
      %2902 = vmatpush1.msra.mxu0 %v2617
      %2903 = vmatprep.subr.mxu0 0.0
      %2904 = vmatpush1.msra.mxu0 0.0
      %2905 = vmatprep.subr.mxu0 0.0
      %2906 = vmatpush1.msra.mxu0 0.0
      %2907 = vmatprep.subr.mxu0 0.0
      %2908 = vmatpush1.msra.mxu0 0.0
      %2909 = vmatprep.subr.mxu0 0.0
      %2910 = vmatpush1.msra.mxu0 0.0
      %2911 = vmatprep.subr.mxu0 0.0
      %2912 = vmatpush1.msra.mxu0 0.0
      %2913 = vmatprep.subr.mxu0 0.0
      %2914 = vmatpush1.msra.mxu0 0.0
      %2915 = vmatprep.subr.mxu0 0.0
      %2916 = vmatpush1.msra.mxu0 0.0
      %2917 = vmatprep.subr.mxu0 0.0
      %2918 = vmatpush1.msra.mxu0 0.0
      %2919 = vmatprep.subr.mxu0 0.0
      %2920 = vmatpush1.msra.mxu0 0.0
      %2921 = vmatprep.subr.mxu0 0.0
      %2922 = vmatpush1.msra.mxu0 0.0
      %2923 = vmatprep.subr.mxu0 0.0
      %2924 = vmatpush1.msra.mxu0 0.0
      %2925 = vmatprep.subr.mxu0 0.0
      %2926 = vmatpush1.msra.mxu0 0.0
      %2927 = vmatprep.subr.mxu0 0.0
      %2928 = vmatpush1.msra.mxu0 0.0
      %2929 = vmatprep.subr.mxu0 0.0
      %2930 = vmatpush1.msra.mxu0 0.0
      %2931 = vmatprep.subr.mxu0 0.0
      %2932 = vmatpush1.msra.mxu0 0.0
      %2933 = vmatprep.subr.mxu0 0.0
      %2934 = vmatpush1.msra.mxu0 0.0
      %2935 = vmatprep.subr.mxu0 0.0
      %2936 = vmatpush1.msra.mxu0 0.0
      %2937 = vmatprep.subr.mxu0 0.0
      %2938 = vmatpush1.msra.mxu0 0.0
      %2939 = vmatprep.subr.mxu0 0.0
      %2940 = vmatpush1.msra.mxu0 0.0
      %2941 = vmatprep.subr.mxu0 0.0
      %2942 = vmatpush1.msra.mxu0 0.0
      %2943 = vmatprep.subr.mxu0 0.0
      %2944 = vmatpush1.msra.mxu0 0.0
      %2945 = vmatprep.subr.mxu0 0.0
      %2946 = vmatpush1.msra.mxu0 0.0
      %2947 = vmatprep.subr.mxu0 0.0
      %2948 = vmatpush1.msra.mxu0 0.0
      %2949 = vmatprep.subr.mxu0 0.0
      %2950 = vmatpush1.msra.mxu0 0.0
      %2951 = vmatprep.subr.mxu0 0.0
      %2952 = vmatpush1.msra.mxu0 0.0
      %2953 = vmatprep.subr.mxu0 0.0
      %2954 = vmatpush1.msra.mxu0 0.0
      %2955 = vmatprep.subr.mxu0 0.0
      %2956 = vmatpush1.msra.mxu0 0.0
      %2957 = vmatprep.subr.mxu0 0.0
      %2958 = vmatpush1.msra.mxu0 0.0
      %2959 = vmatprep.subr.mxu0 0.0
      %2960 = vmatpush1.msra.mxu0 0.0
      %2961 = vmatprep.subr.mxu0 0.0
      %2962 = vmatpush1.msra.mxu0 0.0
      %2963 = vmatprep.mubr.f32.mxu0 0.0
      %2964 = vmatmul.mubr.f32.gmra.mrb[0].mxu0 %v2826
      %v2965 = vpop.f32.mrb[0].mxu0
      %v2966 = vadd.f32 %v2821, %v2965
      %v2967 = vpop.f32.mrb[0].mxu0
      %v2968 = vadd.f32 %v2823, %v2967
      %2969 = vdwg.mxu0
      %v2970 = vadd.f32 %v2895, %v283
      %v2971 = vadd.f32 %v2897, %v287
      %v2972 = vadd.f32 %v2966, %v291
      %v2973 = vadd.f32 %v2968, %v295
      %v2974 = vmul.f32 %v2970, 0.5
      %v2975 = vtanh.pop %v2974
      %v2976 = vmul.f32 %v2975, 0.5
      %v2977 = vadd.f32 %v2976, 0.5
      %v2978 = vmul.f32 %v2971, 0.5
      %v2979 = vtanh.pop %v2978
      %v2980 = vmul.f32 %v2979, 0.5
      %v2981 = vadd.f32 %v2980, 0.5
      %v2982 = vtanh.pop %v2972
      %v2983 = vmul.f32 %v2973, 0.5
      %v2984 = vtanh.pop %v2983
      %v2985 = vmul.f32 %v2984, 0.5
      %v2986 = vadd.f32 %v2985, 0.5
      %v2987 = vmul.f32 %v2977, %v2604
      %v2988 = vmul.f32 %v2981, %v2982
      %v2989 = vadd.f32 %v2987, %v2988
      %v2990 = vtanh.pop %v2989
      %v2991 = vmul.f32 %v2986, %v2990
      %s2992 = scalar_lea.vmem %s264, 48
      %2993 = vst [vmem:[%s2992] sm:$0xff] %v2991
      %s2994 = scalar_lea.vmem %s255, 56
      %v2995 = vld [vmem:[%s2994] sm:$0xff]
      %v2996 = vld [vmem:[%s1] sm:$0xff]
      %v2997 = vld [vmem:[%s1 + $0x8] sm:$0xff]
      %v2998 = vld [vmem:[%s1 + $0x10] sm:$0xff]
      %v2999 = vld [vmem:[%s1 + $0x18] sm:$0xff]
      %v3000 = vld [vmem:[%s1 + $0x20] sm:$0xff]
      %v3001 = vld [vmem:[%s1 + $0x28] sm:$0xff]
      %v3002 = vld [vmem:[%s1 + $0x30] sm:$0xff]
      %v3003 = vld [vmem:[%s1 + $0x38] sm:$0xff]
      %v3004 = vld [vmem:[%s2] sm:$0xff]
      %v3005 = vld [vmem:[%s2 + $0x8] sm:$0xff]
      %v3006 = vld [vmem:[%s2 + $0x10] sm:$0xff]
      %v3007 = vld [vmem:[%s2 + $0x18] sm:$0xff]
      %v3008 = vld [vmem:[%s2 + $0x20] sm:$0xff]
      %v3009 = vld [vmem:[%s2 + $0x28] sm:$0xff]
      %v3010 = vld [vmem:[%s2 + $0x30] sm:$0xff]
      %v3011 = vld [vmem:[%s2 + $0x38] sm:$0xff]
      %v3012 = vld [vmem:[%s2 + $0x40] sm:$0xff]
      %v3013 = vld [vmem:[%s2 + $0x48] sm:$0xff]
      %v3014 = vld [vmem:[%s2 + $0x50] sm:$0xff]
      %v3015 = vld [vmem:[%s2 + $0x58] sm:$0xff]
      %v3016 = vld [vmem:[%s2 + $0x60] sm:$0xff]
      %v3017 = vld [vmem:[%s2 + $0x68] sm:$0xff]
      %v3018 = vld [vmem:[%s2 + $0x70] sm:$0xff]
      %v3019 = vld [vmem:[%s2 + $0x78] sm:$0xff]
      %v3020 = vld [vmem:[%s2 + $0x80] sm:$0xff]
      %v3021 = vld [vmem:[%s2 + $0x88] sm:$0xff]
      %v3022 = vld [vmem:[%s2 + $0x90] sm:$0xff]
      %v3023 = vld [vmem:[%s2 + $0x98] sm:$0xff]
      %v3024 = vld [vmem:[%s2 + $0xa0] sm:$0xff]
      %v3025 = vld [vmem:[%s2 + $0xa8] sm:$0xff]
      %v3026 = vld [vmem:[%s2 + $0xb0] sm:$0xff]
      %v3027 = vld [vmem:[%s2 + $0xb8] sm:$0xff]
      %v3028 = vld [vmem:[%s2 + $0xc0] sm:$0xff]
      %v3029 = vld [vmem:[%s2 + $0xc8] sm:$0xff]
      %v3030 = vld [vmem:[%s2 + $0xd0] sm:$0xff]
      %v3031 = vld [vmem:[%s2 + $0xd8] sm:$0xff]
      %v3032 = vld [vmem:[%s2 + $0xe0] sm:$0xff]
      %v3033 = vld [vmem:[%s2 + $0xe8] sm:$0xff]
      %v3034 = vld [vmem:[%s2 + $0xf0] sm:$0xff]
      %v3035 = vld [vmem:[%s2 + $0xf8] sm:$0xff]
      %v3036 = vld [vmem:[%s2 + $0x100] sm:$0xff]
      %v3037 = vld [vmem:[%s2 + $0x108] sm:$0xff]
      %v3038 = vld [vmem:[%s2 + $0x110] sm:$0xff]
      %v3039 = vld [vmem:[%s2 + $0x118] sm:$0xff]
      %v3040 = vld [vmem:[%s2 + $0x120] sm:$0xff]
      %v3041 = vld [vmem:[%s2 + $0x128] sm:$0xff]
      %v3042 = vld [vmem:[%s2 + $0x130] sm:$0xff]
      %v3043 = vld [vmem:[%s2 + $0x138] sm:$0xff]
      %v3044 = vld [vmem:[%s2 + $0x140] sm:$0xff]
      %v3045 = vld [vmem:[%s2 + $0x148] sm:$0xff]
      %v3046 = vld [vmem:[%s2 + $0x150] sm:$0xff]
      %v3047 = vld [vmem:[%s2 + $0x158] sm:$0xff]
      %v3048 = vld [vmem:[%s2 + $0x160] sm:$0xff]
      %v3049 = vld [vmem:[%s2 + $0x168] sm:$0xff]
      %v3050 = vld [vmem:[%s2 + $0x170] sm:$0xff]
      %v3051 = vld [vmem:[%s2 + $0x178] sm:$0xff]
      %v3052 = vld [vmem:[%s2 + $0x180] sm:$0xff]
      %v3053 = vld [vmem:[%s2 + $0x188] sm:$0xff]
      %v3054 = vld [vmem:[%s2 + $0x190] sm:$0xff]
      %v3055 = vld [vmem:[%s2 + $0x198] sm:$0xff]
      %v3056 = vld [vmem:[%s2 + $0x1a0] sm:$0xff]
      %v3057 = vld [vmem:[%s2 + $0x1a8] sm:$0xff]
      %v3058 = vld [vmem:[%s2 + $0x1b0] sm:$0xff]
      %v3059 = vld [vmem:[%s2 + $0x1b8] sm:$0xff]
      %v3060 = vld [vmem:[%s2 + $0x1c0] sm:$0xff]
      %v3061 = vld [vmem:[%s2 + $0x1c8] sm:$0xff]
      %v3062 = vld [vmem:[%s2 + $0x1d0] sm:$0xff]
      %v3063 = vld [vmem:[%s2 + $0x1d8] sm:$0xff]
      %v3064 = vld [vmem:[%s2 + $0x1e0] sm:$0xff]
      %v3065 = vld [vmem:[%s2 + $0x1e8] sm:$0xff]
      %v3066 = vld [vmem:[%s2 + $0x1f0] sm:$0xff]
      %v3067 = vld [vmem:[%s2 + $0x1f8] sm:$0xff]
      %3068 = vmatprep.subr.mxu0 %v3005
      %3069 = vmatpush1.msra.mxu0 %v3004
      %3070 = vmatprep.subr.mxu0 %v3009
      %3071 = vmatpush1.msra.mxu0 %v3008
      %3072 = vmatprep.subr.mxu0 %v3013
      %3073 = vmatpush1.msra.mxu0 %v3012
      %3074 = vmatprep.subr.mxu0 %v3017
      %3075 = vmatpush1.msra.mxu0 %v3016
      %3076 = vmatprep.subr.mxu0 %v3021
      %3077 = vmatpush1.msra.mxu0 %v3020
      %3078 = vmatprep.subr.mxu0 %v3025
      %3079 = vmatpush1.msra.mxu0 %v3024
      %3080 = vmatprep.subr.mxu0 %v3029
      %3081 = vmatpush1.msra.mxu0 %v3028
      %3082 = vmatprep.subr.mxu0 %v3033
      %3083 = vmatpush1.msra.mxu0 %v3032
      %3084 = vmatprep.subr.mxu0 %v3037
      %3085 = vmatpush1.msra.mxu0 %v3036
      %3086 = vmatprep.subr.mxu0 %v3041
      %3087 = vmatpush1.msra.mxu0 %v3040
      %3088 = vmatprep.subr.mxu0 %v3045
      %3089 = vmatpush1.msra.mxu0 %v3044
      %3090 = vmatprep.subr.mxu0 %v3049
      %3091 = vmatpush1.msra.mxu0 %v3048
      %3092 = vmatprep.subr.mxu0 %v3053
      %3093 = vmatpush1.msra.mxu0 %v3052
      %3094 = vmatprep.subr.mxu0 %v3057
      %3095 = vmatpush1.msra.mxu0 %v3056
      %3096 = vmatprep.subr.mxu0 %v3061
      %3097 = vmatpush1.msra.mxu0 %v3060
      %3098 = vmatprep.subr.mxu0 %v3065
      %3099 = vmatpush1.msra.mxu0 %v3064
      %3100 = vmatprep.subr.mxu0 0.0
      %3101 = vmatpush1.msra.mxu0 0.0
      %3102 = vmatprep.subr.mxu0 0.0
      %3103 = vmatpush1.msra.mxu0 0.0
      %3104 = vmatprep.subr.mxu0 0.0
      %3105 = vmatpush1.msra.mxu0 0.0
      %3106 = vmatprep.subr.mxu0 0.0
      %3107 = vmatpush1.msra.mxu0 0.0
      %3108 = vmatprep.subr.mxu0 0.0
      %3109 = vmatpush1.msra.mxu0 0.0
      %3110 = vmatprep.subr.mxu0 0.0
      %3111 = vmatpush1.msra.mxu0 0.0
      %3112 = vmatprep.subr.mxu0 0.0
      %3113 = vmatpush1.msra.mxu0 0.0
      %3114 = vmatprep.subr.mxu0 0.0
      %3115 = vmatpush1.msra.mxu0 0.0
      %3116 = vmatprep.subr.mxu0 0.0
      %3117 = vmatpush1.msra.mxu0 0.0
      %3118 = vmatprep.subr.mxu0 0.0
      %3119 = vmatpush1.msra.mxu0 0.0
      %3120 = vmatprep.subr.mxu0 0.0
      %3121 = vmatpush1.msra.mxu0 0.0
      %3122 = vmatprep.subr.mxu0 0.0
      %3123 = vmatpush1.msra.mxu0 0.0
      %3124 = vmatprep.subr.mxu0 0.0
      %3125 = vmatpush1.msra.mxu0 0.0
      %3126 = vmatprep.subr.mxu0 0.0
      %3127 = vmatpush1.msra.mxu0 0.0
      %3128 = vmatprep.subr.mxu0 0.0
      %3129 = vmatpush1.msra.mxu0 0.0
      %3130 = vmatprep.subr.mxu0 0.0
      %3131 = vmatpush1.msra.mxu0 0.0
      %3132 = vmatprep.mubr.f32.mxu0 0.0
      %3133 = vmatmul.mubr.f32.gmra.mrb[0].mxu0 %v2991
      %v3134 = vpop.f32.mrb[0].mxu0
      %v3135 = vadd.f32 0.0, %v3134
      %v3136 = vpop.f32.mrb[0].mxu0
      %v3137 = vadd.f32 0.0, %v3136
      %3138 = vdwg.mxu0
      %3139 = vmatprep.subr.mxu0 %v3007
      %3140 = vmatpush1.msra.mxu0 %v3006
      %3141 = vmatprep.subr.mxu0 %v3011
      %3142 = vmatpush1.msra.mxu0 %v3010
      %3143 = vmatprep.subr.mxu0 %v3015
      %3144 = vmatpush1.msra.mxu0 %v3014
      %3145 = vmatprep.subr.mxu0 %v3019
      %3146 = vmatpush1.msra.mxu0 %v3018
      %3147 = vmatprep.subr.mxu0 %v3023
      %3148 = vmatpush1.msra.mxu0 %v3022
      %3149 = vmatprep.subr.mxu0 %v3027
      %3150 = vmatpush1.msra.mxu0 %v3026
      %3151 = vmatprep.subr.mxu0 %v3031
      %3152 = vmatpush1.msra.mxu0 %v3030
      %3153 = vmatprep.subr.mxu0 %v3035
      %3154 = vmatpush1.msra.mxu0 %v3034
      %3155 = vmatprep.subr.mxu0 %v3039
      %3156 = vmatpush1.msra.mxu0 %v3038
      %3157 = vmatprep.subr.mxu0 %v3043
      %3158 = vmatpush1.msra.mxu0 %v3042
      %3159 = vmatprep.subr.mxu0 %v3047
      %3160 = vmatpush1.msra.mxu0 %v3046
      %3161 = vmatprep.subr.mxu0 %v3051
      %3162 = vmatpush1.msra.mxu0 %v3050
      %3163 = vmatprep.subr.mxu0 %v3055
      %3164 = vmatpush1.msra.mxu0 %v3054
      %3165 = vmatprep.subr.mxu0 %v3059
      %3166 = vmatpush1.msra.mxu0 %v3058
      %3167 = vmatprep.subr.mxu0 %v3063
      %3168 = vmatpush1.msra.mxu0 %v3062
      %3169 = vmatprep.subr.mxu0 %v3067
      %3170 = vmatpush1.msra.mxu0 %v3066
      %3171 = vmatprep.subr.mxu0 0.0
      %3172 = vmatpush1.msra.mxu0 0.0
      %3173 = vmatprep.subr.mxu0 0.0
      %3174 = vmatpush1.msra.mxu0 0.0
      %3175 = vmatprep.subr.mxu0 0.0
      %3176 = vmatpush1.msra.mxu0 0.0
      %3177 = vmatprep.subr.mxu0 0.0
      %3178 = vmatpush1.msra.mxu0 0.0
      %3179 = vmatprep.subr.mxu0 0.0
      %3180 = vmatpush1.msra.mxu0 0.0
      %3181 = vmatprep.subr.mxu0 0.0
      %3182 = vmatpush1.msra.mxu0 0.0
      %3183 = vmatprep.subr.mxu0 0.0
      %3184 = vmatpush1.msra.mxu0 0.0
      %3185 = vmatprep.subr.mxu0 0.0
      %3186 = vmatpush1.msra.mxu0 0.0
      %3187 = vmatprep.subr.mxu0 0.0
      %3188 = vmatpush1.msra.mxu0 0.0
      %3189 = vmatprep.subr.mxu0 0.0
      %3190 = vmatpush1.msra.mxu0 0.0
      %3191 = vmatprep.subr.mxu0 0.0
      %3192 = vmatpush1.msra.mxu0 0.0
      %3193 = vmatprep.subr.mxu0 0.0
      %3194 = vmatpush1.msra.mxu0 0.0
      %3195 = vmatprep.subr.mxu0 0.0
      %3196 = vmatpush1.msra.mxu0 0.0
      %3197 = vmatprep.subr.mxu0 0.0
      %3198 = vmatpush1.msra.mxu0 0.0
      %3199 = vmatprep.subr.mxu0 0.0
      %3200 = vmatpush1.msra.mxu0 0.0
      %3201 = vmatprep.subr.mxu0 0.0
      %3202 = vmatpush1.msra.mxu0 0.0
      %3203 = vmatprep.mubr.f32.mxu0 0.0
      %3204 = vmatmul.mubr.f32.gmra.mrb[0].mxu0 %v2991
      %v3205 = vpop.f32.mrb[0].mxu0
      %v3206 = vadd.f32 0.0, %v3205
      %v3207 = vpop.f32.mrb[0].mxu0
      %v3208 = vadd.f32 0.0, %v3207
      %3209 = vdwg.mxu0
      %v3211 = vsel %vm515, %v2995, 0
      %3213 = vmatprep.subr.mxu0 %v2997
      %3214 = vmatpush1.msra.mxu0 %v2996
      %3215 = vmatprep.subr.mxu0 %v3001
      %3216 = vmatpush1.msra.mxu0 %v3000
      %3217 = vmatprep.subr.mxu0 0.0
      %3218 = vmatpush1.msra.mxu0 0.0
      %3219 = vmatprep.subr.mxu0 0.0
      %3220 = vmatpush1.msra.mxu0 0.0
      %3221 = vmatprep.subr.mxu0 0.0
      %3222 = vmatpush1.msra.mxu0 0.0
      %3223 = vmatprep.subr.mxu0 0.0
      %3224 = vmatpush1.msra.mxu0 0.0
      %3225 = vmatprep.subr.mxu0 0.0
      %3226 = vmatpush1.msra.mxu0 0.0
      %3227 = vmatprep.subr.mxu0 0.0
      %3228 = vmatpush1.msra.mxu0 0.0
      %3229 = vmatprep.subr.mxu0 0.0
      %3230 = vmatpush1.msra.mxu0 0.0
      %3231 = vmatprep.subr.mxu0 0.0
      %3232 = vmatpush1.msra.mxu0 0.0
      %3233 = vmatprep.subr.mxu0 0.0
      %3234 = vmatpush1.msra.mxu0 0.0
      %3235 = vmatprep.subr.mxu0 0.0
      %3236 = vmatpush1.msra.mxu0 0.0
      %3237 = vmatprep.subr.mxu0 0.0
      %3238 = vmatpush1.msra.mxu0 0.0
      %3239 = vmatprep.subr.mxu0 0.0
      %3240 = vmatpush1.msra.mxu0 0.0
      %3241 = vmatprep.subr.mxu0 0.0
      %3242 = vmatpush1.msra.mxu0 0.0
      %3243 = vmatprep.subr.mxu0 0.0
      %3244 = vmatpush1.msra.mxu0 0.0
      %3245 = vmatprep.subr.mxu0 0.0
      %3246 = vmatpush1.msra.mxu0 0.0
      %3247 = vmatprep.subr.mxu0 0.0
      %3248 = vmatpush1.msra.mxu0 0.0
      %3249 = vmatprep.subr.mxu0 0.0
      %3250 = vmatpush1.msra.mxu0 0.0
      %3251 = vmatprep.subr.mxu0 0.0
      %3252 = vmatpush1.msra.mxu0 0.0
      %3253 = vmatprep.subr.mxu0 0.0
      %3254 = vmatpush1.msra.mxu0 0.0
      %3255 = vmatprep.subr.mxu0 0.0
      %3256 = vmatpush1.msra.mxu0 0.0
      %3257 = vmatprep.subr.mxu0 0.0
      %3258 = vmatpush1.msra.mxu0 0.0
      %3259 = vmatprep.subr.mxu0 0.0
      %3260 = vmatpush1.msra.mxu0 0.0
      %3261 = vmatprep.subr.mxu0 0.0
      %3262 = vmatpush1.msra.mxu0 0.0
      %3263 = vmatprep.subr.mxu0 0.0
      %3264 = vmatpush1.msra.mxu0 0.0
      %3265 = vmatprep.subr.mxu0 0.0
      %3266 = vmatpush1.msra.mxu0 0.0
      %3267 = vmatprep.subr.mxu0 0.0
      %3268 = vmatpush1.msra.mxu0 0.0
      %3269 = vmatprep.subr.mxu0 0.0
      %3270 = vmatpush1.msra.mxu0 0.0
      %3271 = vmatprep.subr.mxu0 0.0
      %3272 = vmatpush1.msra.mxu0 0.0
      %3273 = vmatprep.subr.mxu0 0.0
      %3274 = vmatpush1.msra.mxu0 0.0
      %3275 = vmatprep.subr.mxu0 0.0
      %3276 = vmatpush1.msra.mxu0 0.0
      %3277 = vmatprep.mubr.f32.mxu0 0.0
      %3278 = vmatmul.mubr.f32.gmra.mrb[0].mxu0 %v3211
      %v3279 = vpop.f32.mrb[0].mxu0
      %v3280 = vadd.f32 %v3135, %v3279
      %v3281 = vpop.f32.mrb[0].mxu0
      %v3282 = vadd.f32 %v3137, %v3281
      %3283 = vdwg.mxu0
      %3284 = vmatprep.subr.mxu0 %v2999
      %3285 = vmatpush1.msra.mxu0 %v2998
      %3286 = vmatprep.subr.mxu0 %v3003
      %3287 = vmatpush1.msra.mxu0 %v3002
      %3288 = vmatprep.subr.mxu0 0.0
      %3289 = vmatpush1.msra.mxu0 0.0
      %3290 = vmatprep.subr.mxu0 0.0
      %3291 = vmatpush1.msra.mxu0 0.0
      %3292 = vmatprep.subr.mxu0 0.0
      %3293 = vmatpush1.msra.mxu0 0.0
      %3294 = vmatprep.subr.mxu0 0.0
      %3295 = vmatpush1.msra.mxu0 0.0
      %3296 = vmatprep.subr.mxu0 0.0
      %3297 = vmatpush1.msra.mxu0 0.0
      %3298 = vmatprep.subr.mxu0 0.0
      %3299 = vmatpush1.msra.mxu0 0.0
      %3300 = vmatprep.subr.mxu0 0.0
      %3301 = vmatpush1.msra.mxu0 0.0
      %3302 = vmatprep.subr.mxu0 0.0
      %3303 = vmatpush1.msra.mxu0 0.0
      %3304 = vmatprep.subr.mxu0 0.0
      %3305 = vmatpush1.msra.mxu0 0.0
      %3306 = vmatprep.subr.mxu0 0.0
      %3307 = vmatpush1.msra.mxu0 0.0
      %3308 = vmatprep.subr.mxu0 0.0
      %3309 = vmatpush1.msra.mxu0 0.0
      %3310 = vmatprep.subr.mxu0 0.0
      %3311 = vmatpush1.msra.mxu0 0.0
      %3312 = vmatprep.subr.mxu0 0.0
      %3313 = vmatpush1.msra.mxu0 0.0
      %3314 = vmatprep.subr.mxu0 0.0
      %3315 = vmatpush1.msra.mxu0 0.0
      %3316 = vmatprep.subr.mxu0 0.0
      %3317 = vmatpush1.msra.mxu0 0.0
      %3318 = vmatprep.subr.mxu0 0.0
      %3319 = vmatpush1.msra.mxu0 0.0
      %3320 = vmatprep.subr.mxu0 0.0
      %3321 = vmatpush1.msra.mxu0 0.0
      %3322 = vmatprep.subr.mxu0 0.0
      %3323 = vmatpush1.msra.mxu0 0.0
      %3324 = vmatprep.subr.mxu0 0.0
      %3325 = vmatpush1.msra.mxu0 0.0
      %3326 = vmatprep.subr.mxu0 0.0
      %3327 = vmatpush1.msra.mxu0 0.0
      %3328 = vmatprep.subr.mxu0 0.0
      %3329 = vmatpush1.msra.mxu0 0.0
      %3330 = vmatprep.subr.mxu0 0.0
      %3331 = vmatpush1.msra.mxu0 0.0
      %3332 = vmatprep.subr.mxu0 0.0
      %3333 = vmatpush1.msra.mxu0 0.0
      %3334 = vmatprep.subr.mxu0 0.0
      %3335 = vmatpush1.msra.mxu0 0.0
      %3336 = vmatprep.subr.mxu0 0.0
      %3337 = vmatpush1.msra.mxu0 0.0
      %3338 = vmatprep.subr.mxu0 0.0
      %3339 = vmatpush1.msra.mxu0 0.0
      %3340 = vmatprep.subr.mxu0 0.0
      %3341 = vmatpush1.msra.mxu0 0.0
      %3342 = vmatprep.subr.mxu0 0.0
      %3343 = vmatpush1.msra.mxu0 0.0
      %3344 = vmatprep.subr.mxu0 0.0
      %3345 = vmatpush1.msra.mxu0 0.0
      %3346 = vmatprep.subr.mxu0 0.0
      %3347 = vmatpush1.msra.mxu0 0.0
      %3348 = vmatprep.mubr.f32.mxu0 0.0
      %3349 = vmatmul.mubr.f32.gmra.mrb[0].mxu0 %v3211
      %v3350 = vpop.f32.mrb[0].mxu0
      %v3351 = vadd.f32 %v3206, %v3350
      %v3352 = vpop.f32.mrb[0].mxu0
      %v3353 = vadd.f32 %v3208, %v3352
      %3354 = vdwg.mxu0
      %v3355 = vadd.f32 %v3280, %v283
      %v3356 = vadd.f32 %v3282, %v287
      %v3357 = vadd.f32 %v3351, %v291
      %v3358 = vadd.f32 %v3353, %v295
      %v3359 = vmul.f32 %v3355, 0.5
      %v3360 = vtanh.pop %v3359
      %v3361 = vmul.f32 %v3360, 0.5
      %v3362 = vadd.f32 %v3361, 0.5
      %v3363 = vmul.f32 %v3356, 0.5
      %v3364 = vtanh.pop %v3363
      %v3365 = vmul.f32 %v3364, 0.5
      %v3366 = vadd.f32 %v3365, 0.5
      %v3367 = vtanh.pop %v3357
      %v3368 = vmul.f32 %v3358, 0.5
      %v3369 = vtanh.pop %v3368
      %v3370 = vmul.f32 %v3369, 0.5
      %v3371 = vadd.f32 %v3370, 0.5
      %v3372 = vmul.f32 %v3362, %v2989
      %v3373 = vmul.f32 %v3366, %v3367
      %v3374 = vadd.f32 %v3372, %v3373
      %v3375 = vtanh.pop %v3374
      %v3376 = vmul.f32 %v3371, %v3375
      %s3377 = scalar_lea.vmem %s264, 56
      %3378 = vst [vmem:[%s3377] sm:$0xff] %v3376
      %3379 = vst [vmem:[#allocation2] sm:$0xff] %v3376
      %3380 = vst [vmem:[#allocation3] sm:$0xff] %v3374
      %p3381 = scmp.eq.s32.totalorder %s22, 1
      // Predicated region
      $region41: #{my_lstm_forward.1} parent=35 // pred_check
        %p3382 = pneg %p3381
      $region42: #{my_lstm_forward.1} parent=35 // pred_check_branch
        %3384 = sbr.rel (%p3382) target = $region44
      $region43: #{my_lstm_forward.1} parent=35 // pred_region
        %3385 = vst [vmem:[%s269] sm:$0xff] %v3374
      $region44: #{my_lstm_forward.1} parent=35 // pred_fallthru
        _
      %s3386 = smul.u32 8, %s22
      %p3387 = scmp.lt.s32.totalorder %s3386, 15
      %s3388 = scalar_select %p3387, %s3386, 15
      %p3389 = scmp.lt.s32.totalorder %s21, 0
      %s3390 = scalar_select %p3389, %s21, 0
      %s3391 = sadd.s32 %s3390, %s3388
      %s3392 = smul.addr %s3391, 8
      %s3393 = scalar_lea.vmem %s4, %s3392
      %p3394 = scmp.lt.s32.totalorder %s21, 0
      %s3395 = scalar_select %p3394, %s21, 0
      %s3396 = smul.addr %s3395, 8
      %s3397 = scalar_lea.vmem %s5, %s3396
      // Predicated region
      $region45: #{my_lstm_forward.1} parent=35 // pred_check
        %p3398 = pneg %p140
      $region46: #{my_lstm_forward.1} parent=35 // pred_check_branch
        %3400 = sbr.rel (%p3398) target = $region48
      $region47: #{my_lstm_forward.1} parent=35 // pred_region
        %s3401 = smul.u32 8, %s22
      $region48: #{my_lstm_forward.1} parent=35 // pred_fallthru
        _
      // Predicated region
      $region49: #{my_lstm_forward.1} parent=35 // pred_check
        %p3402 = pneg %p166
      $region50: #{my_lstm_forward.1} parent=35 // pred_check_branch
        %3404 = sbr.rel (%p3402) target = $region52
      $region51: #{my_lstm_forward.1} parent=35 // pred_region
        _
      $region52: #{my_lstm_forward.1} parent=35 // pred_fallthru
        _
      // Predicated region
      $region53: #{my_lstm_forward.1} parent=35 // pred_check
        %p3405 = pneg %p166
      $region54: #{my_lstm_forward.1} parent=35 // pred_check_branch
        %3407 = sbr.rel (%p3405) target = $region56
      $region55: #{my_lstm_forward.1} parent=35 // pred_region
        %p3408 = scmp.lt.s32.totalorder %s21, 0
        %s3409 = scalar_select %p3408, %s21, 0
        %s3410 = smul.addr %s3409, 8
        %s3411 = scalar_lea.vmem %s5, %s3410
      $region56: #{my_lstm_forward.1} parent=35 // pred_fallthru
        _
    $region36: #{my_lstm_forward.1} parent=5 // pred_fallthru
      _
    %p3412 = scmp.le.s32.totalorder 2, %s12
    // Predicated region
    $region57: #{my_lstm_forward.1} parent=5 // pred_check
      %p3413 = pneg %p3412
    $region58: #{my_lstm_forward.1} parent=5 // pred_check_branch
      %3415 = sbr.rel (%p3413) target = $region60
    $region59: #{my_lstm_forward.1} parent=5 // pred_region
      %s3416 = ssub.s32 %s12, 2
      // Predicated region
      $region61: #{my_lstm_forward.1} parent=59 // pred_check
        %p3417 = pneg %p146
      $region62: #{my_lstm_forward.1} parent=59 // pred_check_branch
        %3419 = sbr.rel (%p3417) target = $region64
      $region63: #{my_lstm_forward.1} parent=59 // pred_region
        %s3420 = smul.u32 8, %s24
        %p3421 = scmp.lt.s32.totalorder %s3420, 15
        %s3422 = scalar_select %p3421, %s3420, 15
        %p3423 = scmp.lt.s32.totalorder %s23, 0
        %s3424 = scalar_select %p3423, %s23, 0
        %s3425 = sadd.s32 %s3424, %s3422
        %s3426 = smul.addr %s3425, 8
        %s3427 = scalar_lea.vmem %s4, %s3426
      $region64: #{my_lstm_forward.1} parent=59 // pred_fallthru
        _
    $region60: #{my_lstm_forward.1} parent=5 // pred_fallthru
      _
  $region6: #{my_lstm_forward.1} parent=0 // loop_footer
    %s16 = sadd.s32 1, %s12
  $region7: #{my_lstm_forward.1} parent=0 // loop_footer_branch
    %11 = sbr.rel target = $region3
  $region8: #{my_lstm_forward.1} parent=0 // loop_exit
    _

</llo_original>
